<compile_context>
chip_gen: v6e
topology: v6e:2x2x1
jax: 0.10.0
libtpu: 0.0.40
codegen_flags: <defaults>
</compile_context>

<pallas_src>
import functools

import jax
import jax.numpy as jnp
from jax import lax
from jax.experimental import pallas as pl
from jax.experimental.pallas import tpu as pltpu

_LANE = 128
# Set to jnp.float32 to reproduce PyTorch f32 numerics (slower on the MXU).
_MXU_DTYPE = jnp.bfloat16


# ------------------------------- utilities ---------------------------------- #

def _round_up(x, m):
    return (x + m - 1) // m * m


def _vmem_budget_bytes():
    """Generation-aware scoped-VMEM budget (~3/4 of physical, capped)."""
    cap = None
    try:
        info = pltpu.get_tpu_info()
        cap = getattr(info, "vmem_capacity_bytes", None)
    except Exception:
        cap = None
    if not cap:
        cap = 64 * 1024 * 1024          # conservative fallback = v7x physical
    return int(min(int(cap) * 3 // 4, 112 * 1024 * 1024))


def _pick_tile(n_pad, limit):
    """Largest tile from a lane/sublane-friendly menu dividing n_pad, <= limit."""
    limit = max(int(limit), 128)
    for t in (2048, 1024, 512, 256, 128):
        if t <= limit and n_pad % t == 0:
            return t
    return n_pad                         # unreachable: n_pad is a multiple of 128


# --------------------------------------------------------------------------- #
# Kernel 1: CommunityAE — all 6 nn.Linear layers fused, row-tiled over nodes.  #
# --------------------------------------------------------------------------- #

def _community_ae_kernel(b_ref,
                         w1, b1, w2, b2, w3, b3, w4, b4, w5, b5, w6, b6,
                         h1_ref, h2_ref, za_ref, bhat_ref):
    def lin(x, w_ref, bias_ref):
        # (bf16 x bf16) -> f32 accumulate on the MXU; bias + activation in f32.
        return jnp.dot(x.astype(w_ref.dtype), w_ref[...],
                       preferred_element_type=jnp.float32) + bias_ref[...]

    x = b_ref[...]                                    # [tm, N_pad] row tile of B
    h1 = jnp.maximum(lin(x, w1, b1), 0.0)             # [tm, n1]
    h2 = jnp.maximum(lin(h1, w2, b2), 0.0)            # [tm, n2]
    za = jnp.maximum(lin(h2, w3, b3), 0.0)            # [tm, n3]
    s1 = jnp.maximum(lin(za, w4, b4), 0.0)            # [tm, n2]
    s2 = jnp.maximum(lin(s1, w5, b5), 0.0)            # [tm, n1]
    bh = jax.nn.sigmoid(lin(s2, w6, b6))              # [tm, N_pad]

    h1_ref[...] = h1
    h2_ref[...] = h2
    za_ref[...] = za
    bhat_ref[...] = bh


def community_ae(B_pad, wb, *, n1, n2, n3, vmem_budget):
    Np = B_pad.shape[0]
    b_bytes = B_pad.dtype.itemsize

    # Budget-derived row tile:  B tile + B_hat tile dominate (double-buffered).
    w_bytes = sum(int(a.size) * a.dtype.itemsize for a in wb)
    per_row = 2 * b_bytes * Np + 2 * 4 * Np + 2 * 4 * (n1 + n2 + n3)
    tm_limit = (int(vmem_budget * 0.7) - 2 * w_bytes) // max(per_row, 1)
    tm = _pick_tile(Np, tm_limit)
    grid = (Np // tm,)

    def _const(arr):
        # Constant block index -> same tile reused for every grid step.
        return pl.BlockSpec(arr.shape, lambda i: (0, 0))

    in_specs = [pl.BlockSpec((tm, Np), lambda i: (i, 0))]
    in_specs += [_const(a) for a in wb]

    def _row(width):
        return pl.BlockSpec((tm, width), lambda i: (i, 0))

    out_specs = (_row(n1), _row(n2), _row(n3),
                 pl.BlockSpec((tm, Np), lambda i: (i, 0)))
    out_shape = (jax.ShapeDtypeStruct((Np, n1), jnp.float32),
                 jax.ShapeDtypeStruct((Np, n2), jnp.float32),
                 jax.ShapeDtypeStruct((Np, n3), jnp.float32),
                 jax.ShapeDtypeStruct((Np, Np), jnp.float32))

    flops = 2 * Np * (Np * n1 + n1 * n2 + n2 * n3 + n3 * n2 + n2 * n1 + n1 * Np)
    bytes_accessed = (b_bytes * Np * Np + w_bytes
                      + 4 * Np * (n1 + n2 + n3) + 4 * Np * Np)
    cost = pl.CostEstimate(flops=int(flops), transcendentals=int(Np * Np),
                           bytes_accessed=int(bytes_accessed))

    return pl.pallas_call(
        _community_ae_kernel,
        grid=grid,
        in_specs=in_specs,
        out_specs=out_specs,
        out_shape=out_shape,
        compiler_params=pltpu.CompilerParams(
            dimension_semantics=("parallel",),     # node rows are independent
            vmem_limit_bytes=int(vmem_budget)),
        cost_estimate=cost,
    )(B_pad, *wb)


# --------------------------------------------------------------------------- #
# Kernel 2: one GraphConv layer  Y = relu(A @ ((x0 + x1 + ...) @ W) + b)       #
#   grid = (row tiles of A  [parallel], column tiles of A  [arbitrary K-loop]) #
# --------------------------------------------------------------------------- #

def _graph_conv_kernel(*refs, num_x):
    a_ref = refs[0]
    x_refs = refs[1:1 + num_x]
    w_ref = refs[1 + num_x]
    b_ref = refs[2 + num_x]
    o_ref = refs[3 + num_x]
    acc_ref = refs[4 + num_x]

    k = pl.program_id(1)

    @pl.when(k == 0)
    def _():
        acc_ref[...] = jnp.zeros_like(acc_ref)

    # Fused residual add (x_i + B_enc_i) in f32, then bf16 for the MXU.
    x = x_refs[0][...]
    for xr in x_refs[1:]:
        x = x + xr[...]
    xw = jnp.dot(x.astype(w_ref.dtype), w_ref[...],
                 preferred_element_type=jnp.float32)           # [tk, out]
    acc_ref[...] += jnp.dot(a_ref[...], xw.astype(a_ref.dtype),
                            preferred_element_type=jnp.float32)  # [tm, out]

    @pl.when(k == pl.num_programs(1) - 1)
    def _():
        o_ref[...] = jnp.maximum(acc_ref[...] + b_ref[...], 0.0).astype(o_ref.dtype)


def graph_conv(a_pad, xs, w, b, *, vmem_budget):
    Np = a_pad.shape[0]
    in_f = xs[0].shape[1]
    out_f = w.shape[1]
    a_bytes = a_pad.dtype.itemsize

    tm = _pick_tile(Np, 1024)
    # The streamed a_norm tile (double-buffered) dominates per-step VMEM.
    tk_limit = (int(vmem_budget) // 2) // max(2 * a_bytes * tm, 1)
    tk = _pick_tile(Np, min(tk_limit, 2048))
    grid = (Np // tm, Np // tk)

    in_specs = [pl.BlockSpec((tm, tk), lambda i, k: (i, k))]
    in_specs += [pl.BlockSpec((tk, in_f), lambda i, k: (k, 0)) for _ in xs]
    in_specs += [pl.BlockSpec(w.shape, lambda i, k: (0, 0)),
                 pl.BlockSpec(b.shape, lambda i, k: (0, 0))]
    out_specs = pl.BlockSpec((tm, out_f), lambda i, k: (i, 0))

    flops = 2 * Np * Np * out_f + 2 * Np * in_f * out_f * (Np // tm) * len(xs)
    bytes_accessed = (a_bytes * Np * Np
                      + 4 * Np * in_f * len(xs) * (Np // tm)
                      + 4 * Np * out_f)
    cost = pl.CostEstimate(flops=int(flops), transcendentals=0,
                           bytes_accessed=int(bytes_accessed))

    kernel = functools.partial(_graph_conv_kernel, num_x=len(xs))
    return pl.pallas_call(
        kernel,
        grid=grid,
        in_specs=in_specs,
        out_specs=out_specs,
        out_shape=jax.ShapeDtypeStruct((Np, out_f), jnp.float32),
        scratch_shapes=[pltpu.VMEM((tm, out_f), jnp.float32)],
        compiler_params=pltpu.CompilerParams(
            dimension_semantics=("parallel", "arbitrary"),
            vmem_limit_bytes=int(vmem_budget)),
        cost_estimate=cost,
    )(a_pad, *xs, w, b)


# --------------------------------------------------------------------------- #
# Kernel 3: StruDecoder  A_hat = sigmoid(z z^T), 2-D tiled over the output.    #
# --------------------------------------------------------------------------- #

def _stru_decoder_kernel(zr_ref, zc_ref, o_ref):
    # Contract the last dims of both operands -> no explicit z^T materialized.
    s = lax.dot_general(zr_ref[...], zc_ref[...], (((1,), (1,)), ((), ())),
                        preferred_element_type=jnp.float32)
    o_ref[...] = jax.nn.sigmoid(s)


def stru_decoder(z_pad, *, vmem_budget):
    Np, n3 = z_pad.shape
    tm = _pick_tile(Np, 512)
    tn = _pick_tile(Np, 512)          # lane-dense (multiple of 128) output tile
    grid = (Np // tm, Np // tn)

    cost = pl.CostEstimate(flops=int(2 * Np * Np * n3),
                           transcendentals=int(Np * Np),
                           bytes_accessed=int(4 * (2 * Np * n3 * (Np // tm)
                                                   + Np * Np)))
    return pl.pallas_call(
        _stru_decoder_kernel,
        grid=grid,
        in_specs=[pl.BlockSpec((tm, n3), lambda i, j: (i, 0)),
                  pl.BlockSpec((tn, n3), lambda i, j: (j, 0))],
        out_specs=pl.BlockSpec((tm, tn), lambda i, j: (i, j)),
        out_shape=jax.ShapeDtypeStruct((Np, Np), jnp.float32),
        compiler_params=pltpu.CompilerParams(
            dimension_semantics=("parallel", "parallel"),
            vmem_limit_bytes=int(vmem_budget)),
        cost_estimate=cost,
    )(z_pad, z_pad)


# --------------------------- parameter construction ------------------------- #

def _xavier_uniform(key, fan_in, fan_out, shape):
    bound = (6.0 / (fan_in + fan_out)) ** 0.5
    return jax.random.uniform(key, shape, jnp.float32, -bound, bound)


def init_params(key, num_nodes, num_feats, n1, n2, n3):
    """Xavier-uniform weights (stored [in, out]), zero biases ([1, out])."""
    keys = jax.random.split(key, 16)
    k = iter(keys)
    p = {}

    def lin(name, fin, fout):
        p[name + "_w"] = _xavier_uniform(next(k), fin, fout, (fin, fout))
        p[name + "_b"] = jnp.zeros((1, fout), jnp.float32)

    # CommunityAE (nn.Linear)
    lin("c_enc1", num_nodes, n1); lin("c_enc2", n1, n2); lin("c_enc3", n2, n3)
    lin("c_dec1", n3, n2); lin("c_dec2", n2, n1); lin("c_dec3", n1, num_nodes)
    # tGCNEncoder (GraphConv)
    lin("t_enc1", num_feats, n1); lin("t_enc2", n1, n2)
    lin("t_enc3", n2, n3); lin("t_enc4", n3, n3)
    # AttrDecoder (GraphConv)
    lin("a_dec1", n3, n3); lin("a_dec2", n3, n2)
    lin("a_dec3", n2, n1); lin("a_dec4", n1, num_feats)
    return p


# ------------------------------- forward pass ------------------------------- #

def comga_forward(a_norm, x, B, params, *, n1, n2, n3):
    # TODO(synk): dropout p=0.0 is assumed (identity); a stateful-PRNG dropout
    # path would use pltpu.prng_seed / stateful_bernoulli inside the kernels.
    N = B.shape[0]
    Np = _round_up(N, _LANE)
    pad = Np - N
    budget = _vmem_budget_bytes()

    # Zero-pad graph-sized operands: every contraction against padded rows/cols
    # multiplies by zero, so real rows are unaffected; padding is sliced off.
    B_pad = jnp.pad(B, ((0, pad), (0, pad))).astype(_MXU_DTYPE)
    a_pad = jnp.pad(a_norm, ((0, pad), (0, pad))).astype(_MXU_DTYPE)
    x_pad = jnp.pad(x, ((0, pad), (0, 0))).astype(jnp.float32)

    def wpad(name, pad_rows=0, pad_cols=0):
        w = params[name + "_w"]
        b = params[name + "_b"]
        if pad_rows or pad_cols:
            w = jnp.pad(w, ((0, pad_rows), (0, pad_cols)))
            b = jnp.pad(b, ((0, 0), (0, pad_cols)))
        return w.astype(_MXU_DTYPE), b.astype(jnp.float32)

    # CommunityAE weights: enc1 consumes N columns of B (pad its rows); dec3
    # emits the N columns of B_hat (pad its columns + bias).
    c_wb = []
    c_wb += wpad("c_enc1", pad_rows=pad)
    c_wb += wpad("c_enc2"); c_wb += wpad("c_enc3")
    c_wb += wpad("c_dec1"); c_wb += wpad("c_dec2")
    c_wb += wpad("c_dec3", pad_cols=pad)

    h1, h2, za, B_hat_pad = community_ae(B_pad, c_wb, n1=n1, n2=n2, n3=n3,
                                         vmem_budget=budget)

    def gw(name):
        return params[name + "_w"].astype(_MXU_DTYPE), \
               params[name + "_b"].astype(jnp.float32)

    # tGCNEncoder: 4 GraphConvs with the community encodings fused as residual adds.
    x1 = graph_conv(a_pad, (x_pad,), *gw("t_enc1"), vmem_budget=budget)
    x2 = graph_conv(a_pad, (x1, h1), *gw("t_enc2"), vmem_budget=budget)
    x3 = graph_conv(a_pad, (x2, h2), *gw("t_enc3"), vmem_budget=budget)
    z_pad = graph_conv(a_pad, (x3, za), *gw("t_enc4"), vmem_budget=budget)

    # AttrDecoder: 4 GraphConvs.
    d1 = graph_conv(a_pad, (z_pad,), *gw("a_dec1"), vmem_budget=budget)
    d2 = graph_conv(a_pad, (d1,), *gw("a_dec2"), vmem_budget=budget)
    d3 = graph_conv(a_pad, (d2,), *gw("a_dec3"), vmem_budget=budget)
    X_hat_pad = graph_conv(a_pad, (d3,), *gw("a_dec4"), vmem_budget=budget)

    # StruDecoder: sigmoid(z z^T), tiled over the [N, N] output.
    A_hat_pad = stru_decoder(z_pad, vmem_budget=budget)

    return (A_hat_pad[:N, :N], X_hat_pad[:N], B_hat_pad[:N, :N],
            z_pad[:N], za[:N])


# ---------------------------- pure-jnp reference ----------------------------- #

def comga_reference(a_norm, x, B, p, *, n1, n2, n3):
    relu = lambda v: jnp.maximum(v, 0.0)
    lin = lambda v, name: v @ p[name + "_w"] + p[name + "_b"]
    gconv = lambda v, name: relu(a_norm @ (v @ p[name + "_w"]) + p[name + "_b"])

    h1 = relu(lin(B, "c_enc1")); h2 = relu(lin(h1, "c_enc2"))
    za = relu(lin(h2, "c_enc3"))
    s1 = relu(lin(za, "c_dec1")); s2 = relu(lin(s1, "c_dec2"))
    B_hat = jax.nn.sigmoid(lin(s2, "c_dec3"))

    x1 = gconv(x, "t_enc1"); x2 = gconv(x1 + h1, "t_enc2")
    x3 = gconv(x2 + h2, "t_enc3"); z = gconv(x3 + za, "t_enc4")
    d = gconv(z, "a_dec1"); d = gconv(d, "a_dec2"); d = gconv(d, "a_dec3")
    X_hat = gconv(d, "a_dec4")
    A_hat = jax.nn.sigmoid(z @ z.T)
    return A_hat, X_hat, B_hat, z, za


# ----------------------------------- main ------------------------------------ #

if __name__ == "__main__":
    # N deliberately not a multiple of 128 to exercise the padding path.
    num_nodes, num_feats = 200, 24
    n_enc_1, n_enc_2, n_enc_3 = 32, 16, 8

    key = jax.random.PRNGKey(0)
    k_adj, k_x, k_params = jax.random.split(key, 3)

    # Random symmetric graph with self-loops, then D^-1/2 A D^-1/2 normalization.
    adj = (jax.random.uniform(k_adj, (num_nodes, num_nodes)) < 0.1).astype(jnp.float32)
    adj = jnp.maximum(adj, adj.T)
    adj = jnp.maximum(adj, jnp.eye(num_nodes, dtype=jnp.float32))
    deg = adj.sum(axis=1)
    d_inv_sqrt = 1.0 / jnp.sqrt(deg)
    a_norm = adj * d_inv_sqrt[:, None] * d_inv_sqrt[None, :]

    # Modularity matrix B = A - k k^T / (2m)
    two_m = adj.sum()
    B = adj - jnp.outer(deg, deg) / two_m

    x = jax.random.normal(k_x, (num_nodes, num_feats), jnp.float32)
    params = init_params(k_params, num_nodes, num_feats, n_enc_1, n_enc_2, n_enc_3)

    fwd = jax.jit(functools.partial(comga_forward,
                                    n1=n_enc_1, n2=n_enc_2, n3=n_enc_3))
    outs = jax.block_until_ready(fwd(a_norm, x, B, params))
    A_hat, X_hat, B_hat, z, z_a = outs

    assert A_hat.shape == (num_nodes, num_nodes)
    assert X_hat.shape == (num_nodes, num_feats)
    assert B_hat.shape == (num_nodes, num_nodes)
    assert z.shape == (num_nodes, n_enc_3)
    assert z_a.shape == (num_nodes, n_enc_3)
    assert all(bool(jnp.isfinite(o).all()) for o in outs)

    # Tolerance-checked against the f32 jnp reference (bf16 MXU path).
    refs = comga_reference(a_norm, x, B, params,
                           n1=n_enc_1, n2=n_enc_2, n3=n_enc_3)
    for got, want in zip(outs, refs):
        assert jnp.allclose(got, want, rtol=5e-2, atol=5e-2), \
            f"mismatch: max abs err {float(jnp.abs(got - want).max())}"

    print("KERNEL_OK")
</pallas_src>

<mosaic_0001>
module attributes {stable_mosaic.version = 11 : i64} {
  func.func @_graph_conv_kernel(%arg0: i32, %arg1: i32, %arg2: memref<256x256xbf16, #tpu.memory_space<vmem>>, %arg3: memref<256x24xf32, #tpu.memory_space<vmem>>, %arg4: memref<24x32xbf16, #tpu.memory_space<vmem>>, %arg5: memref<1x32xf32, #tpu.memory_space<vmem>>, %arg6: memref<256x32xf32, #tpu.memory_space<vmem>>, %arg7: memref<256x32xf32, #tpu.memory_space<vmem>>) attributes {dimension_semantics = [#tpu.dimension_semantics<parallel>, #tpu.dimension_semantics<arbitrary>], iteration_bounds = array<i64: 1, 1>, scalar_prefetch = 0 : i64, scratch_operands = 1 : i64, tpu.core_type = #tpu.core_type<tc>, window_params = [{transform_indices = @transform_0, window_bounds = array<i64: 256, 256>}, {transform_indices = @transform_1, window_bounds = array<i64: 256, 24>}, {pipeline_mode = #tpu.pipeline_mode<synchronous>, transform_indices = @transform_2, window_bounds = array<i64: 24, 32>}, {pipeline_mode = #tpu.pipeline_mode<synchronous>, transform_indices = @transform_3, window_bounds = array<i64: 1, 32>}, {transform_indices = @transform_4, window_bounds = array<i64: 256, 32>}]} {
    %c0_i32 = arith.constant 0 : i32
    %0 = arith.cmpi eq, %arg1, %c0_i32 : i32
    %1 = arith.extui %0 : i1 to i32
    %c0_i32_0 = arith.constant 0 : i32
    %2 = arith.cmpi ne, %1, %c0_i32_0 : i32
    scf.if %2 {
      %cst_13 = arith.constant 0.000000e+00 : f32
      %16 = vector.broadcast %cst_13 : f32 to vector<256x32xf32>
      %c0_14 = arith.constant 0 : index
      %c0_15 = arith.constant 0 : index
      %17 = vector.load %arg7[%c0_14, %c0_15] : memref<256x32xf32, #tpu.memory_space<vmem>>, vector<256x32xf32>
      tpu.vector_store %arg7[%c0_14, %c0_15], %16 {strides = array<i32>} : memref<256x32xf32, #tpu.memory_space<vmem>>, vector<256x32xf32>,
    } else {
    }
    %c0 = arith.constant 0 : index
    %c0_1 = arith.constant 0 : index
    %3 = vector.load %arg3[%c0, %c0_1] : memref<256x24xf32, #tpu.memory_space<vmem>>, vector<256x24xf32>
    %4 = arith.truncf %3 : vector<256x24xf32> to vector<256x24xbf16>
    %c0_2 = arith.constant 0 : index
    %c0_3 = arith.constant 0 : index
    %5 = vector.load %arg4[%c0_2, %c0_3] : memref<24x32xbf16, #tpu.memory_space<vmem>>, vector<24x32xbf16>
    %cst = arith.constant dense<0.000000e+00> : vector<256x32xf32>
    %6 = tpu.matmul %4, %5, %cst {dimension_numbers = #tpu.dot_dimension_numbers<[1], [0], [0], [1], [0, 0, 1, 1], [], []>} : vector<256x24xbf16>, vector<24x32xbf16>, vector<256x32xf32> -> vector<256x32xf32>
    %c0_4 = arith.constant 0 : index
    %c0_5 = arith.constant 0 : index
    %7 = vector.load %arg7[%c0_4, %c0_5] : memref<256x32xf32, #tpu.memory_space<vmem>>, vector<256x32xf32>
    %c0_6 = arith.constant 0 : index
    %c0_7 = arith.constant 0 : index
    %8 = vector.load %arg2[%c0_6, %c0_7] : memref<256x256xbf16, #tpu.memory_space<vmem>>, vector<256x256xbf16>
    %9 = arith.truncf %6 : vector<256x32xf32> to vector<256x32xbf16>
    %cst_8 = arith.constant dense<0.000000e+00> : vector<256x32xf32>
    %10 = tpu.matmul %8, %9, %cst_8 {dimension_numbers = #tpu.dot_dimension_numbers<[1], [0], [0], [1], [0, 0, 1, 1], [], []>} : vector<256x256xbf16>, vector<256x32xbf16>, vector<256x32xf32> -> vector<256x32xf32>
    %11 = arith.addf %7, %10 : vector<256x32xf32>
    %c0_9 = arith.constant 0 : index
    %c0_10 = arith.constant 0 : index
    %12 = vector.load %arg7[%c0_9, %c0_10] : memref<256x32xf32, #tpu.memory_space<vmem>>, vector<256x32xf32>
    tpu.vector_store %arg7[%c0_9, %c0_10], %11 {strides = array<i32>} : memref<256x32xf32, #tpu.memory_space<vmem>>, vector<256x32xf32>,
    %c0_i32_11 = arith.constant 0 : i32
    %13 = arith.cmpi eq, %arg1, %c0_i32_11 : i32
    %14 = arith.extui %13 : i1 to i32
    %c0_i32_12 = arith.constant 0 : i32
    %15 = arith.cmpi ne, %14, %c0_i32_12 : i32
    scf.if %15 {
      %c0_13 = arith.constant 0 : index
      %c0_14 = arith.constant 0 : index
      %16 = vector.load %arg7[%c0_13, %c0_14] : memref<256x32xf32, #tpu.memory_space<vmem>>, vector<256x32xf32>
      %c0_15 = arith.constant 0 : index
      %c0_16 = arith.constant 0 : index
      %17 = vector.load %arg5[%c0_15, %c0_16] : memref<1x32xf32, #tpu.memory_space<vmem>>, vector<1x32xf32>
      %18 = vector.broadcast %17 : vector<1x32xf32> to vector<256x32xf32>
      %19 = arith.addf %16, %18 : vector<256x32xf32>
      %cst_17 = arith.constant 0.000000e+00 : f32
      %20 = vector.broadcast %cst_17 : f32 to vector<256x32xf32>
      %21 = arith.maximumf %19, %20 : vector<256x32xf32>
      %c0_18 = arith.constant 0 : index
      %c0_19 = arith.constant 0 : index
      %22 = vector.load %arg6[%c0_18, %c0_19] : memref<256x32xf32, #tpu.memory_space<vmem>>, vector<256x32xf32>
      tpu.vector_store %arg6[%c0_18, %c0_19], %21 {strides = array<i32>} : memref<256x32xf32, #tpu.memory_space<vmem>>, vector<256x32xf32>,
    } else {
    }
    return
  }
  func.func @transform_0(%arg0: i32, %arg1: i32) -> (i32, i32) {
    %c0_i32 = arith.constant 0 : i32
    return %arg0, %arg1 : i32, i32
  }
  func.func @transform_1(%arg0: i32, %arg1: i32) -> (i32, i32) {
    %c0_i32 = arith.constant 0 : i32
    %c0_i32_0 = arith.constant 0 : i32
    return %arg1, %c0_i32 : i32, i32
  }
  func.func @transform_2(%arg0: i32, %arg1: i32) -> (i32, i32) {
    %c0_i32 = arith.constant 0 : i32
    %c0_i32_0 = arith.constant 0 : i32
    %c0_i32_1 = arith.constant 0 : i32
    return %c0_i32, %c0_i32_0 : i32, i32
  }
  func.func @transform_3(%arg0: i32, %arg1: i32) -> (i32, i32) {
    %c0_i32 = arith.constant 0 : i32
    %c0_i32_0 = arith.constant 0 : i32
    %c0_i32_1 = arith.constant 0 : i32
    return %c0_i32, %c0_i32_0 : i32, i32
  }
  func.func @transform_4(%arg0: i32, %arg1: i32) -> (i32, i32) {
    %c0_i32 = arith.constant 0 : i32
    %c0_i32_0 = arith.constant 0 : i32
    return %arg0, %c0_i32 : i32, i32
  }
}

module attributes {stable_mosaic.version = 11 : i64} {
  func.func @_graph_conv_kernel(%arg0: i32, %arg1: i32, %arg2: memref<256x256xbf16, #tpu.memory_space<vmem>>, %arg3: memref<256x16xf32, #tpu.memory_space<vmem>>, %arg4: memref<256x16xf32, #tpu.memory_space<vmem>>, %arg5: memref<16x8xbf16, #tpu.memory_space<vmem>>, %arg6: memref<1x8xf32, #tpu.memory_space<vmem>>, %arg7: memref<256x8xf32, #tpu.memory_space<vmem>>, %arg8: memref<256x8xf32, #tpu.memory_space<vmem>>) attributes {dimension_semantics = [#tpu.dimension_semantics<parallel>, #tpu.dimension_semantics<arbitrary>], iteration_bounds = array<i64: 1, 1>, scalar_prefetch = 0 : i64, scratch_operands = 1 : i64, tpu.core_type = #tpu.core_type<tc>, window_params = [{transform_indices = @transform_0, window_bounds = array<i64: 256, 256>}, {transform_indices = @transform_1, window_bounds = array<i64: 256, 16>}, {transform_indices = @transform_2, window_bounds = array<i64: 256, 16>}, {pipeline_mode = #tpu.pipeline_mode<synchronous>, transform_indices = @transform_3, window_bounds = array<i64: 16, 8>}, {pipeline_mode = #tpu.pipeline_mode<synchronous>, transform_indices = @transform_4, window_bounds = array<i64: 1, 8>}, {transform_indices = @transform_5, window_bounds = array<i64: 256, 8>}]} {
    %c0_i32 = arith.constant 0 : i32
    %0 = arith.cmpi eq, %arg1, %c0_i32 : i32
    %1 = arith.extui %0 : i1 to i32
    %c0_i32_0 = arith.constant 0 : i32
    %2 = arith.cmpi ne, %1, %c0_i32_0 : i32
    scf.if %2 {
      %cst_15 = arith.constant 0.000000e+00 : f32
      %18 = vector.broadcast %cst_15 : f32 to vector<256x8xf32>
      %c0_16 = arith.constant 0 : index
      %c0_17 = arith.constant 0 : index
      %19 = vector.load %arg8[%c0_16, %c0_17] : memref<256x8xf32, #tpu.memory_space<vmem>>, vector<256x8xf32>
      tpu.vector_store %arg8[%c0_16, %c0_17], %18 {strides = array<i32>} : memref<256x8xf32, #tpu.memory_space<vmem>>, vector<256x8xf32>,
    } else {
    }
    %c0 = arith.constant 0 : index
    %c0_1 = arith.constant 0 : index
    %3 = vector.load %arg3[%c0, %c0_1] : memref<256x16xf32, #tpu.memory_space<vmem>>, vector<256x16xf32>
    %c0_2 = arith.constant 0 : index
    %c0_3 = arith.constant 0 : index
    %4 = vector.load %arg4[%c0_2, %c0_3] : memref<256x16xf32, #tpu.memory_space<vmem>>, vector<256x16xf32>
    %5 = arith.addf %3, %4 : vector<256x16xf32>
    %6 = arith.truncf %5 : vector<256x16xf32> to vector<256x16xbf16>
    %c0_4 = arith.constant 0 : index
    %c0_5 = arith.constant 0 : index
    %7 = vector.load %arg5[%c0_4, %c0_5] : memref<16x8xbf16, #tpu.memory_space<vmem>>, vector<16x8xbf16>
    %cst = arith.constant dense<0.000000e+00> : vector<256x8xf32>
    %8 = tpu.matmul %6, %7, %cst {dimension_numbers = #tpu.dot_dimension_numbers<[1], [0], [0], [1], [0, 0, 1, 1], [], []>} : vector<256x16xbf16>, vector<16x8xbf16>, vector<256x8xf32> -> vector<256x8xf32>
    %c0_6 = arith.constant 0 : index
    %c0_7 = arith.constant 0 : index
    %9 = vector.load %arg8[%c0_6, %c0_7] : memref<256x8xf32, #tpu.memory_space<vmem>>, vector<256x8xf32>
    %c0_8 = arith.constant 0 : index
    %c0_9 = arith.constant 0 : index
    %10 = vector.load %arg2[%c0_8, %c0_9] : memref<256x256xbf16, #tpu.memory_space<vmem>>, vector<256x256xbf16>
    %11 = arith.truncf %8 : vector<256x8xf32> to vector<256x8xbf16>
    %cst_10 = arith.constant dense<0.000000e+00> : vector<256x8xf32>
    %12 = tpu.matmul %10, %11, %cst_10 {dimension_numbers = #tpu.dot_dimension_numbers<[1], [0], [0], [1], [0, 0, 1, 1], [], []>} : vector<256x256xbf16>, vector<256x8xbf16>, vector<256x8xf32> -> vector<256x8xf32>
    %13 = arith.addf %9, %12 : vector<256x8xf32>
    %c0_11 = arith.constant 0 : index
    %c0_12 = arith.constant 0 : index
    %14 = vector.load %arg8[%c0_11, %c0_12] : memref<256x8xf32, #tpu.memory_space<vmem>>, vector<256x8xf32>
    tpu.vector_store %arg8[%c0_11, %c0_12], %13 {strides = array<i32>} : memref<256x8xf32, #tpu.memory_space<vmem>>, vector<256x8xf32>,
    %c0_i32_13 = arith.constant 0 : i32
    %15 = arith.cmpi eq, %arg1, %c0_i32_13 : i32
    %16 = arith.extui %15 : i1 to i32
    %c0_i32_14 = arith.constant 0 : i32
    %17 = arith.cmpi ne, %16, %c0_i32_14 : i32
    scf.if %17 {
      %c0_15 = arith.constant 0 : index
      %c0_16 = arith.constant 0 : index
      %18 = vector.load %arg8[%c0_15, %c0_16] : memref<256x8xf32, #tpu.memory_space<vmem>>, vector<256x8xf32>
      %c0_17 = arith.constant 0 : index
      %c0_18 = arith.constant 0 : index
      %19 = vector.load %arg6[%c0_17, %c0_18] : memref<1x8xf32, #tpu.memory_space<vmem>>, vector<1x8xf32>
      %20 = vector.broadcast %19 : vector<1x8xf32> to vector<256x8xf32>
      %21 = arith.addf %18, %20 : vector<256x8xf32>
      %cst_19 = arith.constant 0.000000e+00 : f32
      %22 = vector.broadcast %cst_19 : f32 to vector<256x8xf32>
      %23 = arith.maximumf %21, %22 : vector<256x8xf32>
      %c0_20 = arith.constant 0 : index
      %c0_21 = arith.constant 0 : index
      %24 = vector.load %arg7[%c0_20, %c0_21] : memref<256x8xf32, #tpu.memory_space<vmem>>, vector<256x8xf32>
      tpu.vector_store %arg7[%c0_20, %c0_21], %23 {strides = array<i32>} : memref<256x8xf32, #tpu.memory_space<vmem>>, vector<256x8xf32>,
    } else {
    }
    return
  }
  func.func @transform_0(%arg0: i32, %arg1: i32) -> (i32, i32) {
    %c0_i32 = arith.constant 0 : i32
    return %arg0, %arg1 : i32, i32
  }
  func.func @transform_1(%arg0: i32, %arg1: i32) -> (i32, i32) {
    %c0_i32 = arith.constant 0 : i32
    %c0_i32_0 = arith.constant 0 : i32
    return %arg1, %c0_i32 : i32, i32
  }
  func.func @transform_2(%arg0: i32, %arg1: i32) -> (i32, i32) {
    %c0_i32 = arith.constant 0 : i32
    %c0_i32_0 = arith.constant 0 : i32
    return %arg1, %c0_i32 : i32, i32
  }
  func.func @transform_3(%arg0: i32, %arg1: i32) -> (i32, i32) {
    %c0_i32 = arith.constant 0 : i32
    %c0_i32_0 = arith.constant 0 : i32
    %c0_i32_1 = arith.constant 0 : i32
    return %c0_i32, %c0_i32_0 : i32, i32
  }
  func.func @transform_4(%arg0: i32, %arg1: i32) -> (i32, i32) {
    %c0_i32 = arith.constant 0 : i32
    %c0_i32_0 = arith.constant 0 : i32
    %c0_i32_1 = arith.constant 0 : i32
    return %c0_i32, %c0_i32_0 : i32, i32
  }
  func.func @transform_5(%arg0: i32, %arg1: i32) -> (i32, i32) {
    %c0_i32 = arith.constant 0 : i32
    %c0_i32_0 = arith.constant 0 : i32
    return %arg0, %c0_i32 : i32, i32
  }
}

module attributes {stable_mosaic.version = 11 : i64} {
  func.func @_community_ae_kernel(%arg0: i32, %arg1: memref<256x256xbf16, #tpu.memory_space<vmem>>, %arg2: memref<256x32xbf16, #tpu.memory_space<vmem>>, %arg3: memref<1x32xf32, #tpu.memory_space<vmem>>, %arg4: memref<32x16xbf16, #tpu.memory_space<vmem>>, %arg5: memref<1x16xf32, #tpu.memory_space<vmem>>, %arg6: memref<16x8xbf16, #tpu.memory_space<vmem>>, %arg7: memref<1x8xf32, #tpu.memory_space<vmem>>, %arg8: memref<8x16xbf16, #tpu.memory_space<vmem>>, %arg9: memref<1x16xf32, #tpu.memory_space<vmem>>, %arg10: memref<16x32xbf16, #tpu.memory_space<vmem>>, %arg11: memref<1x32xf32, #tpu.memory_space<vmem>>, %arg12: memref<32x256xbf16, #tpu.memory_space<vmem>>, %arg13: memref<1x256xf32, #tpu.memory_space<vmem>>, %arg14: memref<256x32xf32, #tpu.memory_space<vmem>>, %arg15: memref<256x16xf32, #tpu.memory_space<vmem>>, %arg16: memref<256x8xf32, #tpu.memory_space<vmem>>, %arg17: memref<256x256xf32, #tpu.memory_space<vmem>>) attributes {dimension_semantics = [#tpu.dimension_semantics<parallel>], iteration_bounds = array<i64: 1>, scalar_prefetch = 0 : i64, scratch_operands = 0 : i64, tpu.core_type = #tpu.core_type<tc>, window_params = [{transform_indices = @transform_0, window_bounds = array<i64: 256, 256>}, {pipeline_mode = #tpu.pipeline_mode<synchronous>, transform_indices = @transform_1, window_bounds = array<i64: 256, 32>}, {pipeline_mode = #tpu.pipeline_mode<synchronous>, transform_indices = @transform_2, window_bounds = array<i64: 1, 32>}, {pipeline_mode = #tpu.pipeline_mode<synchronous>, transform_indices = @transform_3, window_bounds = array<i64: 32, 16>}, {pipeline_mode = #tpu.pipeline_mode<synchronous>, transform_indices = @transform_4, window_bounds = array<i64: 1, 16>}, {pipeline_mode = #tpu.pipeline_mode<synchronous>, transform_indices = @transform_5, window_bounds = array<i64: 16, 8>}, {pipeline_mode = #tpu.pipeline_mode<synchronous>, transform_indices = @transform_6, window_bounds = array<i64: 1, 8>}, {pipeline_mode = #tpu.pipeline_mode<synchronous>, transform_indices = @transform_7, window_bounds = array<i64: 8, 16>}, {pipeline_mode = #tpu.pipeline_mode<synchronous>, transform_indices = @transform_8, window_bounds = array<i64: 1, 16>}, {pipeline_mode = #tpu.pipeline_mode<synchronous>, transform_indices = @transform_9, window_bounds = array<i64: 16, 32>}, {pipeline_mode = #tpu.pipeline_mode<synchronous>, transform_indices = @transform_10, window_bounds = array<i64: 1, 32>}, {pipeline_mode = #tpu.pipeline_mode<synchronous>, transform_indices = @transform_11, window_bounds = array<i64: 32, 256>}, {pipeline_mode = #tpu.pipeline_mode<synchronous>, transform_indices = @transform_12, window_bounds = array<i64: 1, 256>}, {transform_indices = @transform_13, window_bounds = array<i64: 256, 32>}, {transform_indices = @transform_14, window_bounds = array<i64: 256, 16>}, {transform_indices = @transform_15, window_bounds = array<i64: 256, 8>}, {transform_indices = @transform_16, window_bounds = array<i64: 256, 256>}]} {
    %c0 = arith.constant 0 : index
    %c0_0 = arith.constant 0 : index
    %0 = vector.load %arg1[%c0, %c0_0] : memref<256x256xbf16, #tpu.memory_space<vmem>>, vector<256x256xbf16>
    %c0_1 = arith.constant 0 : index
    %c0_2 = arith.constant 0 : index
    %1 = vector.load %arg2[%c0_1, %c0_2] : memref<256x32xbf16, #tpu.memory_space<vmem>>, vector<256x32xbf16>
    %cst = arith.constant dense<0.000000e+00> : vector<256x32xf32>
    %2 = tpu.matmul %0, %1, %cst {dimension_numbers = #tpu.dot_dimension_numbers<[1], [0], [0], [1], [0, 0, 1, 1], [], []>} : vector<256x256xbf16>, vector<256x32xbf16>, vector<256x32xf32> -> vector<256x32xf32>
    %c0_3 = arith.constant 0 : index
    %c0_4 = arith.constant 0 : index
    %3 = vector.load %arg3[%c0_3, %c0_4] : memref<1x32xf32, #tpu.memory_space<vmem>>, vector<1x32xf32>
    %4 = vector.broadcast %3 : vector<1x32xf32> to vector<256x32xf32>
    %5 = arith.addf %2, %4 : vector<256x32xf32>
    %cst_5 = arith.constant 0.000000e+00 : f32
    %6 = vector.broadcast %cst_5 : f32 to vector<256x32xf32>
    %7 = arith.maximumf %5, %6 : vector<256x32xf32>
    %8 = arith.truncf %7 : vector<256x32xf32> to vector<256x32xbf16>
    %c0_6 = arith.constant 0 : index
    %c0_7 = arith.constant 0 : index
    %9 = vector.load %arg4[%c0_6, %c0_7] : memref<32x16xbf16, #tpu.memory_space<vmem>>, vector<32x16xbf16>
    %cst_8 = arith.constant dense<0.000000e+00> : vector<256x16xf32>
    %10 = tpu.matmul %8, %9, %cst_8 {dimension_numbers = #tpu.dot_dimension_numbers<[1], [0], [0], [1], [0, 0, 1, 1], [], []>} : vector<256x32xbf16>, vector<32x16xbf16>, vector<256x16xf32> -> vector<256x16xf32>
    %c0_9 = arith.constant 0 : index
    %c0_10 = arith.constant 0 : index
    %11 = vector.load %arg5[%c0_9, %c0_10] : memref<1x16xf32, #tpu.memory_space<vmem>>, vector<1x16xf32>
    %12 = vector.broadcast %11 : vector<1x16xf32> to vector<256x16xf32>
    %13 = arith.addf %10, %12 : vector<256x16xf32>
    %cst_11 = arith.constant 0.000000e+00 : f32
    %14 = vector.broadcast %cst_11 : f32 to vector<256x16xf32>
    %15 = arith.maximumf %13, %14 : vector<256x16xf32>
    %16 = arith.truncf %15 : vector<256x16xf32> to vector<256x16xbf16>
    %c0_12 = arith.constant 0 : index
    %c0_13 = arith.constant 0 : index
    %17 = vector.load %arg6[%c0_12, %c0_13] : memref<16x8xbf16, #tpu.memory_space<vmem>>, vector<16x8xbf16>
    %cst_14 = arith.constant dense<0.000000e+00> : vector<256x8xf32>
    %18 = tpu.matmul %16, %17, %cst_14 {dimension_numbers = #tpu.dot_dimension_numbers<[1], [0], [0], [1], [0, 0, 1, 1], [], []>} : vector<256x16xbf16>, vector<16x8xbf16>, vector<256x8xf32> -> vector<256x8xf32>
    %c0_15 = arith.constant 0 : index
    %c0_16 = arith.constant 0 : index
    %19 = vector.load %arg7[%c0_15, %c0_16] : memref<1x8xf32, #tpu.memory_space<vmem>>, vector<1x8xf32>
    %20 = vector.broadcast %19 : vector<1x8xf32> to vector<256x8xf32>
    %21 = arith.addf %18, %20 : vector<256x8xf32>
    %cst_17 = arith.constant 0.000000e+00 : f32
    %22 = vector.broadcast %cst_17 : f32 to vector<256x8xf32>
    %23 = arith.maximumf %21, %22 : vector<256x8xf32>
    %24 = arith.truncf %23 : vector<256x8xf32> to vector<256x8xbf16>
    %c0_18 = arith.constant 0 : index
    %c0_19 = arith.constant 0 : index
    %25 = vector.load %arg8[%c0_18, %c0_19] : memref<8x16xbf16, #tpu.memory_space<vmem>>, vector<8x16xbf16>
    %cst_20 = arith.constant dense<0.000000e+00> : vector<256x16xf32>
    %26 = tpu.matmul %24, %25, %cst_20 {dimension_numbers = #tpu.dot_dimension_numbers<[1], [0], [0], [1], [0, 0, 1, 1], [], []>} : vector<256x8xbf16>, vector<8x16xbf16>, vector<256x16xf32> -> vector<256x16xf32>
    %c0_21 = arith.constant 0 : index
    %c0_22 = arith.constant 0 : index
    %27 = vector.load %arg9[%c0_21, %c0_22] : memref<1x16xf32, #tpu.memory_space<vmem>>, vector<1x16xf32>
    %28 = vector.broadcast %27 : vector<1x16xf32> to vector<256x16xf32>
    %29 = arith.addf %26, %28 : vector<256x16xf32>
    %cst_23 = arith.constant 0.000000e+00 : f32
    %30 = vector.broadcast %cst_23 : f32 to vector<256x16xf32>
    %31 = arith.maximumf %29, %30 : vector<256x16xf32>
    %32 = arith.truncf %31 : vector<256x16xf32> to vector<256x16xbf16>
    %c0_24 = arith.constant 0 : index
    %c0_25 = arith.constant 0 : index
    %33 = vector.load %arg10[%c0_24, %c0_25] : memref<16x32xbf16, #tpu.memory_space<vmem>>, vector<16x32xbf16>
    %cst_26 = arith.constant dense<0.000000e+00> : vector<256x32xf32>
    %34 = tpu.matmul %32, %33, %cst_26 {dimension_numbers = #tpu.dot_dimension_numbers<[1], [0], [0], [1], [0, 0, 1, 1], [], []>} : vector<256x16xbf16>, vector<16x32xbf16>, vector<256x32xf32> -> vector<256x32xf32>
    %c0_27 = arith.constant 0 : index
    %c0_28 = arith.constant 0 : index
    %35 = vector.load %arg11[%c0_27, %c0_28] : memref<1x32xf32, #tpu.memory_space<vmem>>, vector<1x32xf32>
    %36 = vector.broadcast %35 : vector<1x32xf32> to vector<256x32xf32>
    %37 = arith.addf %34, %36 : vector<256x32xf32>
    %cst_29 = arith.constant 0.000000e+00 : f32
    %38 = vector.broadcast %cst_29 : f32 to vector<256x32xf32>
    %39 = arith.maximumf %37, %38 : vector<256x32xf32>
    %40 = arith.truncf %39 : vector<256x32xf32> to vector<256x32xbf16>
    %c0_30 = arith.constant 0 : index
    %c0_31 = arith.constant 0 : index
    %41 = vector.load %arg12[%c0_30, %c0_31] : memref<32x256xbf16, #tpu.memory_space<vmem>>, vector<32x256xbf16>
    %cst_32 = arith.constant dense<0.000000e+00> : vector<256x256xf32>
    %42 = tpu.matmul %40, %41, %cst_32 {dimension_numbers = #tpu.dot_dimension_numbers<[1], [0], [0], [1], [0, 0, 1, 1], [], []>} : vector<256x32xbf16>, vector<32x256xbf16>, vector<256x256xf32> -> vector<256x256xf32>
    %c0_33 = arith.constant 0 : index
    %c0_34 = arith.constant 0 : index
    %43 = vector.load %arg13[%c0_33, %c0_34] : memref<1x256xf32, #tpu.memory_space<vmem>>, vector<1x256xf32>
    %44 = vector.broadcast %43 : vector<1x256xf32> to vector<256x256xf32>
    %45 = arith.addf %42, %44 : vector<256x256xf32>
    %46 = arith.negf %45 : vector<256x256xf32>
    %47 = math.exp %46 : vector<256x256xf32>
    %cst_35 = arith.constant 1.000000e+00 : f32
    %48 = vector.broadcast %cst_35 : f32 to vector<256x256xf32>
    %49 = arith.addf %48, %47 : vector<256x256xf32>
    %50 = arith.divf %48, %49 : vector<256x256xf32>
    %c0_36 = arith.constant 0 : index
    %c0_37 = arith.constant 0 : index
    %51 = vector.load %arg14[%c0_36, %c0_37] : memref<256x32xf32, #tpu.memory_space<vmem>>, vector<256x32xf32>
    tpu.vector_store %arg14[%c0_36, %c0_37], %7 {strides = array<i32>} : memref<256x32xf32, #tpu.memory_space<vmem>>, vector<256x32xf32>,
    %c0_38 = arith.constant 0 : index
    %c0_39 = arith.constant 0 : index
    %52 = vector.load %arg15[%c0_38, %c0_39] : memref<256x16xf32, #tpu.memory_space<vmem>>, vector<256x16xf32>
    tpu.vector_store %arg15[%c0_38, %c0_39], %15 {strides = array<i32>} : memref<256x16xf32, #tpu.memory_space<vmem>>, vector<256x16xf32>,
    %c0_40 = arith.constant 0 : index
    %c0_41 = arith.constant 0 : index
    %53 = vector.load %arg16[%c0_40, %c0_41] : memref<256x8xf32, #tpu.memory_space<vmem>>, vector<256x8xf32>
    tpu.vector_store %arg16[%c0_40, %c0_41], %23 {strides = array<i32>} : memref<256x8xf32, #tpu.memory_space<vmem>>, vector<256x8xf32>,
    %c0_42 = arith.constant 0 : index
    %c0_43 = arith.constant 0 : index
    %54 = vector.load %arg17[%c0_42, %c0_43] : memref<256x256xf32, #tpu.memory_space<vmem>>, vector<256x256xf32>
    tpu.vector_store %arg17[%c0_42, %c0_43], %50 {strides = array<i32>} : memref<256x256xf32, #tpu.memory_space<vmem>>, vector<256x256xf32>,
    return
  }
  func.func @transform_0(%arg0: i32) -> (i32, i32) {
    %c0_i32 = arith.constant 0 : i32
    %c0_i32_0 = arith.constant 0 : i32
    return %arg0, %c0_i32 : i32, i32
  }
  func.func @transform_1(%arg0: i32) -> (i32, i32) {
    %c0_i32 = arith.constant 0 : i32
    %c0_i32_0 = arith.constant 0 : i32
    %c0_i32_1 = arith.constant 0 : i32
    return %c0_i32, %c0_i32_0 : i32, i32
  }
  func.func @transform_2(%arg0: i32) -> (i32, i32) {
    %c0_i32 = arith.constant 0 : i32
    %c0_i32_0 = arith.constant 0 : i32
    %c0_i32_1 = arith.constant 0 : i32
    return %c0_i32, %c0_i32_0 : i32, i32
  }
  func.func @transform_3(%arg0: i32) -> (i32, i32) {
    %c0_i32 = arith.constant 0 : i32
    %c0_i32_0 = arith.constant 0 : i32
    %c0_i32_1 = arith.constant 0 : i32
    return %c0_i32, %c0_i32_0 : i32, i32
  }
  func.func @transform_4(%arg0: i32) -> (i32, i32) {
    %c0_i32 = arith.constant 0 : i32
    %c0_i32_0 = arith.constant 0 : i32
    %c0_i32_1 = arith.constant 0 : i32
    return %c0_i32, %c0_i32_0 : i32, i32
  }
  func.func @transform_5(%arg0: i32) -> (i32, i32) {
    %c0_i32 = arith.constant 0 : i32
    %c0_i32_0 = arith.constant 0 : i32
    %c0_i32_1 = arith.constant 0 : i32
    return %c0_i32, %c0_i32_0 : i32, i32
  }
  func.func @transform_6(%arg0: i32) -> (i32, i32) {
    %c0_i32 = arith.constant 0 : i32
    %c0_i32_0 = arith.constant 0 : i32
    %c0_i32_1 = arith.constant 0 : i32
    return %c0_i32, %c0_i32_0 : i32, i32
  }
  func.func @transform_7(%arg0: i32) -> (i32, i32) {
    %c0_i32 = arith.constant 0 : i32
    %c0_i32_0 = arith.constant 0 : i32
    %c0_i32_1 = arith.constant 0 : i32
    return %c0_i32, %c0_i32_0 : i32, i32
  }
  func.func @transform_8(%arg0: i32) -> (i32, i32) {
    %c0_i32 = arith.constant 0 : i32
    %c0_i32_0 = arith.constant 0 : i32
    %c0_i32_1 = arith.constant 0 : i32
    return %c0_i32, %c0_i32_0 : i32, i32
  }
  func.func @transform_9(%arg0: i32) -> (i32, i32) {
    %c0_i32 = arith.constant 0 : i32
    %c0_i32_0 = arith.constant 0 : i32
    %c0_i32_1 = arith.constant 0 : i32
    return %c0_i32, %c0_i32_0 : i32, i32
  }
  func.func @transform_10(%arg0: i32) -> (i32, i32) {
    %c0_i32 = arith.constant 0 : i32
    %c0_i32_0 = arith.constant 0 : i32
    %c0_i32_1 = arith.constant 0 : i32
    return %c0_i32, %c0_i32_0 : i32, i32
  }
  func.func @transform_11(%arg0: i32) -> (i32, i32) {
    %c0_i32 = arith.constant 0 : i32
    %c0_i32_0 = arith.constant 0 : i32
    %c0_i32_1 = arith.constant 0 : i32
    return %c0_i32, %c0_i32_0 : i32, i32
  }
  func.func @transform_12(%arg0: i32) -> (i32, i32) {
    %c0_i32 = arith.constant 0 : i32
    %c0_i32_0 = arith.constant 0 : i32
    %c0_i32_1 = arith.constant 0 : i32
    return %c0_i32, %c0_i32_0 : i32, i32
  }
  func.func @transform_13(%arg0: i32) -> (i32, i32) {
    %c0_i32 = arith.constant 0 : i32
    %c0_i32_0 = arith.constant 0 : i32
    return %arg0, %c0_i32 : i32, i32
  }
  func.func @transform_14(%arg0: i32) -> (i32, i32) {
    %c0_i32 = arith.constant 0 : i32
    %c0_i32_0 = arith.constant 0 : i32
    return %arg0, %c0_i32 : i32, i32
  }
  func.func @transform_15(%arg0: i32) -> (i32, i32) {
    %c0_i32 = arith.constant 0 : i32
    %c0_i32_0 = arith.constant 0 : i32
    return %arg0, %c0_i32 : i32, i32
  }
  func.func @transform_16(%arg0: i32) -> (i32, i32) {
    %c0_i32 = arith.constant 0 : i32
    %c0_i32_0 = arith.constant 0 : i32
    return %arg0, %c0_i32 : i32, i32
  }
}

module attributes {stable_mosaic.version = 11 : i64} {
  func.func @_graph_conv_kernel(%arg0: i32, %arg1: i32, %arg2: memref<256x256xbf16, #tpu.memory_space<vmem>>, %arg3: memref<256x32xf32, #tpu.memory_space<vmem>>, %arg4: memref<256x32xf32, #tpu.memory_space<vmem>>, %arg5: memref<32x16xbf16, #tpu.memory_space<vmem>>, %arg6: memref<1x16xf32, #tpu.memory_space<vmem>>, %arg7: memref<256x16xf32, #tpu.memory_space<vmem>>, %arg8: memref<256x16xf32, #tpu.memory_space<vmem>>) attributes {dimension_semantics = [#tpu.dimension_semantics<parallel>, #tpu.dimension_semantics<arbitrary>], iteration_bounds = array<i64: 1, 1>, scalar_prefetch = 0 : i64, scratch_operands = 1 : i64, tpu.core_type = #tpu.core_type<tc>, window_params = [{transform_indices = @transform_0, window_bounds = array<i64: 256, 256>}, {transform_indices = @transform_1, window_bounds = array<i64: 256, 32>}, {transform_indices = @transform_2, window_bounds = array<i64: 256, 32>}, {pipeline_mode = #tpu.pipeline_mode<synchronous>, transform_indices = @transform_3, window_bounds = array<i64: 32, 16>}, {pipeline_mode = #tpu.pipeline_mode<synchronous>, transform_indices = @transform_4, window_bounds = array<i64: 1, 16>}, {transform_indices = @transform_5, window_bounds = array<i64: 256, 16>}]} {
    %c0_i32 = arith.constant 0 : i32
    %0 = arith.cmpi eq, %arg1, %c0_i32 : i32
    %1 = arith.extui %0 : i1 to i32
    %c0_i32_0 = arith.constant 0 : i32
    %2 = arith.cmpi ne, %1, %c0_i32_0 : i32
    scf.if %2 {
      %cst_15 = arith.constant 0.000000e+00 : f32
      %18 = vector.broadcast %cst_15 : f32 to vector<256x16xf32>
      %c0_16 = arith.constant 0 : index
      %c0_17 = arith.constant 0 : index
      %19 = vector.load %arg8[%c0_16, %c0_17] : memref<256x16xf32, #tpu.memory_space<vmem>>, vector<256x16xf32>
      tpu.vector_store %arg8[%c0_16, %c0_17], %18 {strides = array<i32>} : memref<256x16xf32, #tpu.memory_space<vmem>>, vector<256x16xf32>,
    } else {
    }
    %c0 = arith.constant 0 : index
    %c0_1 = arith.constant 0 : index
    %3 = vector.load %arg3[%c0, %c0_1] : memref<256x32xf32, #tpu.memory_space<vmem>>, vector<256x32xf32>
    %c0_2 = arith.constant 0 : index
    %c0_3 = arith.constant 0 : index
    %4 = vector.load %arg4[%c0_2, %c0_3] : memref<256x32xf32, #tpu.memory_space<vmem>>, vector<256x32xf32>
    %5 = arith.addf %3, %4 : vector<256x32xf32>
    %6 = arith.truncf %5 : vector<256x32xf32> to vector<256x32xbf16>
    %c0_4 = arith.constant 0 : index
    %c0_5 = arith.constant 0 : index
    %7 = vector.load %arg5[%c0_4, %c0_5] : memref<32x16xbf16, #tpu.memory_space<vmem>>, vector<32x16xbf16>
    %cst = arith.constant dense<0.000000e+00> : vector<256x16xf32>
    %8 = tpu.matmul %6, %7, %cst {dimension_numbers = #tpu.dot_dimension_numbers<[1], [0], [0], [1], [0, 0, 1, 1], [], []>} : vector<256x32xbf16>, vector<32x16xbf16>, vector<256x16xf32> -> vector<256x16xf32>
    %c0_6 = arith.constant 0 : index
    %c0_7 = arith.constant 0 : index
    %9 = vector.load %arg8[%c0_6, %c0_7] : memref<256x16xf32, #tpu.memory_space<vmem>>, vector<256x16xf32>
    %c0_8 = arith.constant 0 : index
    %c0_9 = arith.constant 0 : index
    %10 = vector.load %arg2[%c0_8, %c0_9] : memref<256x256xbf16, #tpu.memory_space<vmem>>, vector<256x256xbf16>
    %11 = arith.truncf %8 : vector<256x16xf32> to vector<256x16xbf16>
    %cst_10 = arith.constant dense<0.000000e+00> : vector<256x16xf32>
    %12 = tpu.matmul %10, %11, %cst_10 {dimension_numbers = #tpu.dot_dimension_numbers<[1], [0], [0], [1], [0, 0, 1, 1], [], []>} : vector<256x256xbf16>, vector<256x16xbf16>, vector<256x16xf32> -> vector<256x16xf32>
    %13 = arith.addf %9, %12 : vector<256x16xf32>
    %c0_11 = arith.constant 0 : index
    %c0_12 = arith.constant 0 : index
    %14 = vector.load %arg8[%c0_11, %c0_12] : memref<256x16xf32, #tpu.memory_space<vmem>>, vector<256x16xf32>
    tpu.vector_store %arg8[%c0_11, %c0_12], %13 {strides = array<i32>} : memref<256x16xf32, #tpu.memory_space<vmem>>, vector<256x16xf32>,
    %c0_i32_13 = arith.constant 0 : i32
    %15 = arith.cmpi eq, %arg1, %c0_i32_13 : i32
    %16 = arith.extui %15 : i1 to i32
    %c0_i32_14 = arith.constant 0 : i32
    %17 = arith.cmpi ne, %16, %c0_i32_14 : i32
    scf.if %17 {
      %c0_15 = arith.constant 0 : index
      %c0_16 = arith.constant 0 : index
      %18 = vector.load %arg8[%c0_15, %c0_16] : memref<256x16xf32, #tpu.memory_space<vmem>>, vector<256x16xf32>
      %c0_17 = arith.constant 0 : index
      %c0_18 = arith.constant 0 : index
      %19 = vector.load %arg6[%c0_17, %c0_18] : memref<1x16xf32, #tpu.memory_space<vmem>>, vector<1x16xf32>
      %20 = vector.broadcast %19 : vector<1x16xf32> to vector<256x16xf32>
      %21 = arith.addf %18, %20 : vector<256x16xf32>
      %cst_19 = arith.constant 0.000000e+00 : f32
      %22 = vector.broadcast %cst_19 : f32 to vector<256x16xf32>
      %23 = arith.maximumf %21, %22 : vector<256x16xf32>
      %c0_20 = arith.constant 0 : index
      %c0_21 = arith.constant 0 : index
      %24 = vector.load %arg7[%c0_20, %c0_21] : memref<256x16xf32, #tpu.memory_space<vmem>>, vector<256x16xf32>
      tpu.vector_store %arg7[%c0_20, %c0_21], %23 {strides = array<i32>} : memref<256x16xf32, #tpu.memory_space<vmem>>, vector<256x16xf32>,
    } else {
    }
    return
  }
  func.func @transform_0(%arg0: i32, %arg1: i32) -> (i32, i32) {
    %c0_i32 = arith.constant 0 : i32
    return %arg0, %arg1 : i32, i32
  }
  func.func @transform_1(%arg0: i32, %arg1: i32) -> (i32, i32) {
    %c0_i32 = arith.constant 0 : i32
    %c0_i32_0 = arith.constant 0 : i32
    return %arg1, %c0_i32 : i32, i32
  }
  func.func @transform_2(%arg0: i32, %arg1: i32) -> (i32, i32) {
    %c0_i32 = arith.constant 0 : i32
    %c0_i32_0 = arith.constant 0 : i32
    return %arg1, %c0_i32 : i32, i32
  }
  func.func @transform_3(%arg0: i32, %arg1: i32) -> (i32, i32) {
    %c0_i32 = arith.constant 0 : i32
    %c0_i32_0 = arith.constant 0 : i32
    %c0_i32_1 = arith.constant 0 : i32
    return %c0_i32, %c0_i32_0 : i32, i32
  }
  func.func @transform_4(%arg0: i32, %arg1: i32) -> (i32, i32) {
    %c0_i32 = arith.constant 0 : i32
    %c0_i32_0 = arith.constant 0 : i32
    %c0_i32_1 = arith.constant 0 : i32
    return %c0_i32, %c0_i32_0 : i32, i32
  }
  func.func @transform_5(%arg0: i32, %arg1: i32) -> (i32, i32) {
    %c0_i32 = arith.constant 0 : i32
    %c0_i32_0 = arith.constant 0 : i32
    return %arg0, %c0_i32 : i32, i32
  }
}

module attributes {stable_mosaic.version = 11 : i64} {
  func.func @_graph_conv_kernel(%arg0: i32, %arg1: i32, %arg2: memref<256x256xbf16, #tpu.memory_space<vmem>>, %arg3: memref<256x8xf32, #tpu.memory_space<vmem>>, %arg4: memref<256x8xf32, #tpu.memory_space<vmem>>, %arg5: memref<8x8xbf16, #tpu.memory_space<vmem>>, %arg6: memref<1x8xf32, #tpu.memory_space<vmem>>, %arg7: memref<256x8xf32, #tpu.memory_space<vmem>>, %arg8: memref<256x8xf32, #tpu.memory_space<vmem>>) attributes {dimension_semantics = [#tpu.dimension_semantics<parallel>, #tpu.dimension_semantics<arbitrary>], iteration_bounds = array<i64: 1, 1>, scalar_prefetch = 0 : i64, scratch_operands = 1 : i64, tpu.core_type = #tpu.core_type<tc>, window_params = [{transform_indices = @transform_0, window_bounds = array<i64: 256, 256>}, {transform_indices = @transform_1, window_bounds = array<i64: 256, 8>}, {transform_indices = @transform_2, window_bounds = array<i64: 256, 8>}, {pipeline_mode = #tpu.pipeline_mode<synchronous>, transform_indices = @transform_3, window_bounds = array<i64: 8, 8>}, {pipeline_mode = #tpu.pipeline_mode<synchronous>, transform_indices = @transform_4, window_bounds = array<i64: 1, 8>}, {transform_indices = @transform_5, window_bounds = array<i64: 256, 8>}]} {
    %c0_i32 = arith.constant 0 : i32
    %0 = arith.cmpi eq, %arg1, %c0_i32 : i32
    %1 = arith.extui %0 : i1 to i32
    %c0_i32_0 = arith.constant 0 : i32
    %2 = arith.cmpi ne, %1, %c0_i32_0 : i32
    scf.if %2 {
      %cst_15 = arith.constant 0.000000e+00 : f32
      %18 = vector.broadcast %cst_15 : f32 to vector<256x8xf32>
      %c0_16 = arith.constant 0 : index
      %c0_17 = arith.constant 0 : index
      %19 = vector.load %arg8[%c0_16, %c0_17] : memref<256x8xf32, #tpu.memory_space<vmem>>, vector<256x8xf32>
      tpu.vector_store %arg8[%c0_16, %c0_17], %18 {strides = array<i32>} : memref<256x8xf32, #tpu.memory_space<vmem>>, vector<256x8xf32>,
    } else {
    }
    %c0 = arith.constant 0 : index
    %c0_1 = arith.constant 0 : index
    %3 = vector.load %arg3[%c0, %c0_1] : memref<256x8xf32, #tpu.memory_space<vmem>>, vector<256x8xf32>
    %c0_2 = arith.constant 0 : index
    %c0_3 = arith.constant 0 : index
    %4 = vector.load %arg4[%c0_2, %c0_3] : memref<256x8xf32, #tpu.memory_space<vmem>>, vector<256x8xf32>
    %5 = arith.addf %3, %4 : vector<256x8xf32>
    %6 = arith.truncf %5 : vector<256x8xf32> to vector<256x8xbf16>
    %c0_4 = arith.constant 0 : index
    %c0_5 = arith.constant 0 : index
    %7 = vector.load %arg5[%c0_4, %c0_5] : memref<8x8xbf16, #tpu.memory_space<vmem>>, vector<8x8xbf16>
    %cst = arith.constant dense<0.000000e+00> : vector<256x8xf32>
    %8 = tpu.matmul %6, %7, %cst {dimension_numbers = #tpu.dot_dimension_numbers<[1], [0], [0], [1], [0, 0, 1, 1], [], []>} : vector<256x8xbf16>, vector<8x8xbf16>, vector<256x8xf32> -> vector<256x8xf32>
    %c0_6 = arith.constant 0 : index
    %c0_7 = arith.constant 0 : index
    %9 = vector.load %arg8[%c0_6, %c0_7] : memref<256x8xf32, #tpu.memory_space<vmem>>, vector<256x8xf32>
    %c0_8 = arith.constant 0 : index
    %c0_9 = arith.constant 0 : index
    %10 = vector.load %arg2[%c0_8, %c0_9] : memref<256x256xbf16, #tpu.memory_space<vmem>>, vector<256x256xbf16>
    %11 = arith.truncf %8 : vector<256x8xf32> to vector<256x8xbf16>
    %cst_10 = arith.constant dense<0.000000e+00> : vector<256x8xf32>
    %12 = tpu.matmul %10, %11, %cst_10 {dimension_numbers = #tpu.dot_dimension_numbers<[1], [0], [0], [1], [0, 0, 1, 1], [], []>} : vector<256x256xbf16>, vector<256x8xbf16>, vector<256x8xf32> -> vector<256x8xf32>
    %13 = arith.addf %9, %12 : vector<256x8xf32>
    %c0_11 = arith.constant 0 : index
    %c0_12 = arith.constant 0 : index
    %14 = vector.load %arg8[%c0_11, %c0_12] : memref<256x8xf32, #tpu.memory_space<vmem>>, vector<256x8xf32>
    tpu.vector_store %arg8[%c0_11, %c0_12], %13 {strides = array<i32>} : memref<256x8xf32, #tpu.memory_space<vmem>>, vector<256x8xf32>,
    %c0_i32_13 = arith.constant 0 : i32
    %15 = arith.cmpi eq, %arg1, %c0_i32_13 : i32
    %16 = arith.extui %15 : i1 to i32
    %c0_i32_14 = arith.constant 0 : i32
    %17 = arith.cmpi ne, %16, %c0_i32_14 : i32
    scf.if %17 {
      %c0_15 = arith.constant 0 : index
      %c0_16 = arith.constant 0 : index
      %18 = vector.load %arg8[%c0_15, %c0_16] : memref<256x8xf32, #tpu.memory_space<vmem>>, vector<256x8xf32>
      %c0_17 = arith.constant 0 : index
      %c0_18 = arith.constant 0 : index
      %19 = vector.load %arg6[%c0_17, %c0_18] : memref<1x8xf32, #tpu.memory_space<vmem>>, vector<1x8xf32>
      %20 = vector.broadcast %19 : vector<1x8xf32> to vector<256x8xf32>
      %21 = arith.addf %18, %20 : vector<256x8xf32>
      %cst_19 = arith.constant 0.000000e+00 : f32
      %22 = vector.broadcast %cst_19 : f32 to vector<256x8xf32>
      %23 = arith.maximumf %21, %22 : vector<256x8xf32>
      %c0_20 = arith.constant 0 : index
      %c0_21 = arith.constant 0 : index
      %24 = vector.load %arg7[%c0_20, %c0_21] : memref<256x8xf32, #tpu.memory_space<vmem>>, vector<256x8xf32>
      tpu.vector_store %arg7[%c0_20, %c0_21], %23 {strides = array<i32>} : memref<256x8xf32, #tpu.memory_space<vmem>>, vector<256x8xf32>,
    } else {
    }
    return
  }
  func.func @transform_0(%arg0: i32, %arg1: i32) -> (i32, i32) {
    %c0_i32 = arith.constant 0 : i32
    return %arg0, %arg1 : i32, i32
  }
  func.func @transform_1(%arg0: i32, %arg1: i32) -> (i32, i32) {
    %c0_i32 = arith.constant 0 : i32
    %c0_i32_0 = arith.constant 0 : i32
    return %arg1, %c0_i32 : i32, i32
  }
  func.func @transform_2(%arg0: i32, %arg1: i32) -> (i32, i32) {
    %c0_i32 = arith.constant 0 : i32
    %c0_i32_0 = arith.constant 0 : i32
    return %arg1, %c0_i32 : i32, i32
  }
  func.func @transform_3(%arg0: i32, %arg1: i32) -> (i32, i32) {
    %c0_i32 = arith.constant 0 : i32
    %c0_i32_0 = arith.constant 0 : i32
    %c0_i32_1 = arith.constant 0 : i32
    return %c0_i32, %c0_i32_0 : i32, i32
  }
  func.func @transform_4(%arg0: i32, %arg1: i32) -> (i32, i32) {
    %c0_i32 = arith.constant 0 : i32
    %c0_i32_0 = arith.constant 0 : i32
    %c0_i32_1 = arith.constant 0 : i32
    return %c0_i32, %c0_i32_0 : i32, i32
  }
  func.func @transform_5(%arg0: i32, %arg1: i32) -> (i32, i32) {
    %c0_i32 = arith.constant 0 : i32
    %c0_i32_0 = arith.constant 0 : i32
    return %arg0, %c0_i32 : i32, i32
  }
}

module attributes {stable_mosaic.version = 11 : i64} {
  func.func @_graph_conv_kernel(%arg0: i32, %arg1: i32, %arg2: memref<256x256xbf16, #tpu.memory_space<vmem>>, %arg3: memref<256x8xf32, #tpu.memory_space<vmem>>, %arg4: memref<8x8xbf16, #tpu.memory_space<vmem>>, %arg5: memref<1x8xf32, #tpu.memory_space<vmem>>, %arg6: memref<256x8xf32, #tpu.memory_space<vmem>>, %arg7: memref<256x8xf32, #tpu.memory_space<vmem>>) attributes {dimension_semantics = [#tpu.dimension_semantics<parallel>, #tpu.dimension_semantics<arbitrary>], iteration_bounds = array<i64: 1, 1>, scalar_prefetch = 0 : i64, scratch_operands = 1 : i64, tpu.core_type = #tpu.core_type<tc>, window_params = [{transform_indices = @transform_0, window_bounds = array<i64: 256, 256>}, {transform_indices = @transform_1, window_bounds = array<i64: 256, 8>}, {pipeline_mode = #tpu.pipeline_mode<synchronous>, transform_indices = @transform_2, window_bounds = array<i64: 8, 8>}, {pipeline_mode = #tpu.pipeline_mode<synchronous>, transform_indices = @transform_3, window_bounds = array<i64: 1, 8>}, {transform_indices = @transform_4, window_bounds = array<i64: 256, 8>}]} {
    %c0_i32 = arith.constant 0 : i32
    %0 = arith.cmpi eq, %arg1, %c0_i32 : i32
    %1 = arith.extui %0 : i1 to i32
    %c0_i32_0 = arith.constant 0 : i32
    %2 = arith.cmpi ne, %1, %c0_i32_0 : i32
    scf.if %2 {
      %cst_13 = arith.constant 0.000000e+00 : f32
      %16 = vector.broadcast %cst_13 : f32 to vector<256x8xf32>
      %c0_14 = arith.constant 0 : index
      %c0_15 = arith.constant 0 : index
      %17 = vector.load %arg7[%c0_14, %c0_15] : memref<256x8xf32, #tpu.memory_space<vmem>>, vector<256x8xf32>
      tpu.vector_store %arg7[%c0_14, %c0_15], %16 {strides = array<i32>} : memref<256x8xf32, #tpu.memory_space<vmem>>, vector<256x8xf32>,
    } else {
    }
    %c0 = arith.constant 0 : index
    %c0_1 = arith.constant 0 : index
    %3 = vector.load %arg3[%c0, %c0_1] : memref<256x8xf32, #tpu.memory_space<vmem>>, vector<256x8xf32>
    %4 = arith.truncf %3 : vector<256x8xf32> to vector<256x8xbf16>
    %c0_2 = arith.constant 0 : index
    %c0_3 = arith.constant 0 : index
    %5 = vector.load %arg4[%c0_2, %c0_3] : memref<8x8xbf16, #tpu.memory_space<vmem>>, vector<8x8xbf16>
    %cst = arith.constant dense<0.000000e+00> : vector<256x8xf32>
    %6 = tpu.matmul %4, %5, %cst {dimension_numbers = #tpu.dot_dimension_numbers<[1], [0], [0], [1], [0, 0, 1, 1], [], []>} : vector<256x8xbf16>, vector<8x8xbf16>, vector<256x8xf32> -> vector<256x8xf32>
    %c0_4 = arith.constant 0 : index
    %c0_5 = arith.constant 0 : index
    %7 = vector.load %arg7[%c0_4, %c0_5] : memref<256x8xf32, #tpu.memory_space<vmem>>, vector<256x8xf32>
    %c0_6 = arith.constant 0 : index
    %c0_7 = arith.constant 0 : index
    %8 = vector.load %arg2[%c0_6, %c0_7] : memref<256x256xbf16, #tpu.memory_space<vmem>>, vector<256x256xbf16>
    %9 = arith.truncf %6 : vector<256x8xf32> to vector<256x8xbf16>
    %cst_8 = arith.constant dense<0.000000e+00> : vector<256x8xf32>
    %10 = tpu.matmul %8, %9, %cst_8 {dimension_numbers = #tpu.dot_dimension_numbers<[1], [0], [0], [1], [0, 0, 1, 1], [], []>} : vector<256x256xbf16>, vector<256x8xbf16>, vector<256x8xf32> -> vector<256x8xf32>
    %11 = arith.addf %7, %10 : vector<256x8xf32>
    %c0_9 = arith.constant 0 : index
    %c0_10 = arith.constant 0 : index
    %12 = vector.load %arg7[%c0_9, %c0_10] : memref<256x8xf32, #tpu.memory_space<vmem>>, vector<256x8xf32>
    tpu.vector_store %arg7[%c0_9, %c0_10], %11 {strides = array<i32>} : memref<256x8xf32, #tpu.memory_space<vmem>>, vector<256x8xf32>,
    %c0_i32_11 = arith.constant 0 : i32
    %13 = arith.cmpi eq, %arg1, %c0_i32_11 : i32
    %14 = arith.extui %13 : i1 to i32
    %c0_i32_12 = arith.constant 0 : i32
    %15 = arith.cmpi ne, %14, %c0_i32_12 : i32
    scf.if %15 {
      %c0_13 = arith.constant 0 : index
      %c0_14 = arith.constant 0 : index
      %16 = vector.load %arg7[%c0_13, %c0_14] : memref<256x8xf32, #tpu.memory_space<vmem>>, vector<256x8xf32>
      %c0_15 = arith.constant 0 : index
      %c0_16 = arith.constant 0 : index
      %17 = vector.load %arg5[%c0_15, %c0_16] : memref<1x8xf32, #tpu.memory_space<vmem>>, vector<1x8xf32>
      %18 = vector.broadcast %17 : vector<1x8xf32> to vector<256x8xf32>
      %19 = arith.addf %16, %18 : vector<256x8xf32>
      %cst_17 = arith.constant 0.000000e+00 : f32
      %20 = vector.broadcast %cst_17 : f32 to vector<256x8xf32>
      %21 = arith.maximumf %19, %20 : vector<256x8xf32>
      %c0_18 = arith.constant 0 : index
      %c0_19 = arith.constant 0 : index
      %22 = vector.load %arg6[%c0_18, %c0_19] : memref<256x8xf32, #tpu.memory_space<vmem>>, vector<256x8xf32>
      tpu.vector_store %arg6[%c0_18, %c0_19], %21 {strides = array<i32>} : memref<256x8xf32, #tpu.memory_space<vmem>>, vector<256x8xf32>,
    } else {
    }
    return
  }
  func.func @transform_0(%arg0: i32, %arg1: i32) -> (i32, i32) {
    %c0_i32 = arith.constant 0 : i32
    return %arg0, %arg1 : i32, i32
  }
  func.func @transform_1(%arg0: i32, %arg1: i32) -> (i32, i32) {
    %c0_i32 = arith.constant 0 : i32
    %c0_i32_0 = arith.constant 0 : i32
    return %arg1, %c0_i32 : i32, i32
  }
  func.func @transform_2(%arg0: i32, %arg1: i32) -> (i32, i32) {
    %c0_i32 = arith.constant 0 : i32
    %c0_i32_0 = arith.constant 0 : i32
    %c0_i32_1 = arith.constant 0 : i32
    return %c0_i32, %c0_i32_0 : i32, i32
  }
  func.func @transform_3(%arg0: i32, %arg1: i32) -> (i32, i32) {
    %c0_i32 = arith.constant 0 : i32
    %c0_i32_0 = arith.constant 0 : i32
    %c0_i32_1 = arith.constant 0 : i32
    return %c0_i32, %c0_i32_0 : i32, i32
  }
  func.func @transform_4(%arg0: i32, %arg1: i32) -> (i32, i32) {
    %c0_i32 = arith.constant 0 : i32
    %c0_i32_0 = arith.constant 0 : i32
    return %arg0, %c0_i32 : i32, i32
  }
}

module attributes {stable_mosaic.version = 11 : i64} {
  func.func @_graph_conv_kernel(%arg0: i32, %arg1: i32, %arg2: memref<256x256xbf16, #tpu.memory_space<vmem>>, %arg3: memref<256x8xf32, #tpu.memory_space<vmem>>, %arg4: memref<8x16xbf16, #tpu.memory_space<vmem>>, %arg5: memref<1x16xf32, #tpu.memory_space<vmem>>, %arg6: memref<256x16xf32, #tpu.memory_space<vmem>>, %arg7: memref<256x16xf32, #tpu.memory_space<vmem>>) attributes {dimension_semantics = [#tpu.dimension_semantics<parallel>, #tpu.dimension_semantics<arbitrary>], iteration_bounds = array<i64: 1, 1>, scalar_prefetch = 0 : i64, scratch_operands = 1 : i64, tpu.core_type = #tpu.core_type<tc>, window_params = [{transform_indices = @transform_0, window_bounds = array<i64: 256, 256>}, {transform_indices = @transform_1, window_bounds = array<i64: 256, 8>}, {pipeline_mode = #tpu.pipeline_mode<synchronous>, transform_indices = @transform_2, window_bounds = array<i64: 8, 16>}, {pipeline_mode = #tpu.pipeline_mode<synchronous>, transform_indices = @transform_3, window_bounds = array<i64: 1, 16>}, {transform_indices = @transform_4, window_bounds = array<i64: 256, 16>}]} {
    %c0_i32 = arith.constant 0 : i32
    %0 = arith.cmpi eq, %arg1, %c0_i32 : i32
    %1 = arith.extui %0 : i1 to i32
    %c0_i32_0 = arith.constant 0 : i32
    %2 = arith.cmpi ne, %1, %c0_i32_0 : i32
    scf.if %2 {
      %cst_13 = arith.constant 0.000000e+00 : f32
      %16 = vector.broadcast %cst_13 : f32 to vector<256x16xf32>
      %c0_14 = arith.constant 0 : index
      %c0_15 = arith.constant 0 : index
      %17 = vector.load %arg7[%c0_14, %c0_15] : memref<256x16xf32, #tpu.memory_space<vmem>>, vector<256x16xf32>
      tpu.vector_store %arg7[%c0_14, %c0_15], %16 {strides = array<i32>} : memref<256x16xf32, #tpu.memory_space<vmem>>, vector<256x16xf32>,
    } else {
    }
    %c0 = arith.constant 0 : index
    %c0_1 = arith.constant 0 : index
    %3 = vector.load %arg3[%c0, %c0_1] : memref<256x8xf32, #tpu.memory_space<vmem>>, vector<256x8xf32>
    %4 = arith.truncf %3 : vector<256x8xf32> to vector<256x8xbf16>
    %c0_2 = arith.constant 0 : index
    %c0_3 = arith.constant 0 : index
    %5 = vector.load %arg4[%c0_2, %c0_3] : memref<8x16xbf16, #tpu.memory_space<vmem>>, vector<8x16xbf16>
    %cst = arith.constant dense<0.000000e+00> : vector<256x16xf32>
    %6 = tpu.matmul %4, %5, %cst {dimension_numbers = #tpu.dot_dimension_numbers<[1], [0], [0], [1], [0, 0, 1, 1], [], []>} : vector<256x8xbf16>, vector<8x16xbf16>, vector<256x16xf32> -> vector<256x16xf32>
    %c0_4 = arith.constant 0 : index
    %c0_5 = arith.constant 0 : index
    %7 = vector.load %arg7[%c0_4, %c0_5] : memref<256x16xf32, #tpu.memory_space<vmem>>, vector<256x16xf32>
    %c0_6 = arith.constant 0 : index
    %c0_7 = arith.constant 0 : index
    %8 = vector.load %arg2[%c0_6, %c0_7] : memref<256x256xbf16, #tpu.memory_space<vmem>>, vector<256x256xbf16>
    %9 = arith.truncf %6 : vector<256x16xf32> to vector<256x16xbf16>
    %cst_8 = arith.constant dense<0.000000e+00> : vector<256x16xf32>
    %10 = tpu.matmul %8, %9, %cst_8 {dimension_numbers = #tpu.dot_dimension_numbers<[1], [0], [0], [1], [0, 0, 1, 1], [], []>} : vector<256x256xbf16>, vector<256x16xbf16>, vector<256x16xf32> -> vector<256x16xf32>
    %11 = arith.addf %7, %10 : vector<256x16xf32>
    %c0_9 = arith.constant 0 : index
    %c0_10 = arith.constant 0 : index
    %12 = vector.load %arg7[%c0_9, %c0_10] : memref<256x16xf32, #tpu.memory_space<vmem>>, vector<256x16xf32>
    tpu.vector_store %arg7[%c0_9, %c0_10], %11 {strides = array<i32>} : memref<256x16xf32, #tpu.memory_space<vmem>>, vector<256x16xf32>,
    %c0_i32_11 = arith.constant 0 : i32
    %13 = arith.cmpi eq, %arg1, %c0_i32_11 : i32
    %14 = arith.extui %13 : i1 to i32
    %c0_i32_12 = arith.constant 0 : i32
    %15 = arith.cmpi ne, %14, %c0_i32_12 : i32
    scf.if %15 {
      %c0_13 = arith.constant 0 : index
      %c0_14 = arith.constant 0 : index
      %16 = vector.load %arg7[%c0_13, %c0_14] : memref<256x16xf32, #tpu.memory_space<vmem>>, vector<256x16xf32>
      %c0_15 = arith.constant 0 : index
      %c0_16 = arith.constant 0 : index
      %17 = vector.load %arg5[%c0_15, %c0_16] : memref<1x16xf32, #tpu.memory_space<vmem>>, vector<1x16xf32>
      %18 = vector.broadcast %17 : vector<1x16xf32> to vector<256x16xf32>
      %19 = arith.addf %16, %18 : vector<256x16xf32>
      %cst_17 = arith.constant 0.000000e+00 : f32
      %20 = vector.broadcast %cst_17 : f32 to vector<256x16xf32>
      %21 = arith.maximumf %19, %20 : vector<256x16xf32>
      %c0_18 = arith.constant 0 : index
      %c0_19 = arith.constant 0 : index
      %22 = vector.load %arg6[%c0_18, %c0_19] : memref<256x16xf32, #tpu.memory_space<vmem>>, vector<256x16xf32>
      tpu.vector_store %arg6[%c0_18, %c0_19], %21 {strides = array<i32>} : memref<256x16xf32, #tpu.memory_space<vmem>>, vector<256x16xf32>,
    } else {
    }
    return
  }
  func.func @transform_0(%arg0: i32, %arg1: i32) -> (i32, i32) {
    %c0_i32 = arith.constant 0 : i32
    return %arg0, %arg1 : i32, i32
  }
  func.func @transform_1(%arg0: i32, %arg1: i32) -> (i32, i32) {
    %c0_i32 = arith.constant 0 : i32
    %c0_i32_0 = arith.constant 0 : i32
    return %arg1, %c0_i32 : i32, i32
  }
  func.func @transform_2(%arg0: i32, %arg1: i32) -> (i32, i32) {
    %c0_i32 = arith.constant 0 : i32
    %c0_i32_0 = arith.constant 0 : i32
    %c0_i32_1 = arith.constant 0 : i32
    return %c0_i32, %c0_i32_0 : i32, i32
  }
  func.func @transform_3(%arg0: i32, %arg1: i32) -> (i32, i32) {
    %c0_i32 = arith.constant 0 : i32
    %c0_i32_0 = arith.constant 0 : i32
    %c0_i32_1 = arith.constant 0 : i32
    return %c0_i32, %c0_i32_0 : i32, i32
  }
  func.func @transform_4(%arg0: i32, %arg1: i32) -> (i32, i32) {
    %c0_i32 = arith.constant 0 : i32
    %c0_i32_0 = arith.constant 0 : i32
    return %arg0, %c0_i32 : i32, i32
  }
}

module attributes {stable_mosaic.version = 11 : i64} {
  func.func @_graph_conv_kernel(%arg0: i32, %arg1: i32, %arg2: memref<256x256xbf16, #tpu.memory_space<vmem>>, %arg3: memref<256x16xf32, #tpu.memory_space<vmem>>, %arg4: memref<16x32xbf16, #tpu.memory_space<vmem>>, %arg5: memref<1x32xf32, #tpu.memory_space<vmem>>, %arg6: memref<256x32xf32, #tpu.memory_space<vmem>>, %arg7: memref<256x32xf32, #tpu.memory_space<vmem>>) attributes {dimension_semantics = [#tpu.dimension_semantics<parallel>, #tpu.dimension_semantics<arbitrary>], iteration_bounds = array<i64: 1, 1>, scalar_prefetch = 0 : i64, scratch_operands = 1 : i64, tpu.core_type = #tpu.core_type<tc>, window_params = [{transform_indices = @transform_0, window_bounds = array<i64: 256, 256>}, {transform_indices = @transform_1, window_bounds = array<i64: 256, 16>}, {pipeline_mode = #tpu.pipeline_mode<synchronous>, transform_indices = @transform_2, window_bounds = array<i64: 16, 32>}, {pipeline_mode = #tpu.pipeline_mode<synchronous>, transform_indices = @transform_3, window_bounds = array<i64: 1, 32>}, {transform_indices = @transform_4, window_bounds = array<i64: 256, 32>}]} {
    %c0_i32 = arith.constant 0 : i32
    %0 = arith.cmpi eq, %arg1, %c0_i32 : i32
    %1 = arith.extui %0 : i1 to i32
    %c0_i32_0 = arith.constant 0 : i32
    %2 = arith.cmpi ne, %1, %c0_i32_0 : i32
    scf.if %2 {
      %cst_13 = arith.constant 0.000000e+00 : f32
      %16 = vector.broadcast %cst_13 : f32 to vector<256x32xf32>
      %c0_14 = arith.constant 0 : index
      %c0_15 = arith.constant 0 : index
      %17 = vector.load %arg7[%c0_14, %c0_15] : memref<256x32xf32, #tpu.memory_space<vmem>>, vector<256x32xf32>
      tpu.vector_store %arg7[%c0_14, %c0_15], %16 {strides = array<i32>} : memref<256x32xf32, #tpu.memory_space<vmem>>, vector<256x32xf32>,
    } else {
    }
    %c0 = arith.constant 0 : index
    %c0_1 = arith.constant 0 : index
    %3 = vector.load %arg3[%c0, %c0_1] : memref<256x16xf32, #tpu.memory_space<vmem>>, vector<256x16xf32>
    %4 = arith.truncf %3 : vector<256x16xf32> to vector<256x16xbf16>
    %c0_2 = arith.constant 0 : index
    %c0_3 = arith.constant 0 : index
    %5 = vector.load %arg4[%c0_2, %c0_3] : memref<16x32xbf16, #tpu.memory_space<vmem>>, vector<16x32xbf16>
    %cst = arith.constant dense<0.000000e+00> : vector<256x32xf32>
    %6 = tpu.matmul %4, %5, %cst {dimension_numbers = #tpu.dot_dimension_numbers<[1], [0], [0], [1], [0, 0, 1, 1], [], []>} : vector<256x16xbf16>, vector<16x32xbf16>, vector<256x32xf32> -> vector<256x32xf32>
    %c0_4 = arith.constant 0 : index
    %c0_5 = arith.constant 0 : index
    %7 = vector.load %arg7[%c0_4, %c0_5] : memref<256x32xf32, #tpu.memory_space<vmem>>, vector<256x32xf32>
    %c0_6 = arith.constant 0 : index
    %c0_7 = arith.constant 0 : index
    %8 = vector.load %arg2[%c0_6, %c0_7] : memref<256x256xbf16, #tpu.memory_space<vmem>>, vector<256x256xbf16>
    %9 = arith.truncf %6 : vector<256x32xf32> to vector<256x32xbf16>
    %cst_8 = arith.constant dense<0.000000e+00> : vector<256x32xf32>
    %10 = tpu.matmul %8, %9, %cst_8 {dimension_numbers = #tpu.dot_dimension_numbers<[1], [0], [0], [1], [0, 0, 1, 1], [], []>} : vector<256x256xbf16>, vector<256x32xbf16>, vector<256x32xf32> -> vector<256x32xf32>
    %11 = arith.addf %7, %10 : vector<256x32xf32>
    %c0_9 = arith.constant 0 : index
    %c0_10 = arith.constant 0 : index
    %12 = vector.load %arg7[%c0_9, %c0_10] : memref<256x32xf32, #tpu.memory_space<vmem>>, vector<256x32xf32>
    tpu.vector_store %arg7[%c0_9, %c0_10], %11 {strides = array<i32>} : memref<256x32xf32, #tpu.memory_space<vmem>>, vector<256x32xf32>,
    %c0_i32_11 = arith.constant 0 : i32
    %13 = arith.cmpi eq, %arg1, %c0_i32_11 : i32
    %14 = arith.extui %13 : i1 to i32
    %c0_i32_12 = arith.constant 0 : i32
    %15 = arith.cmpi ne, %14, %c0_i32_12 : i32
    scf.if %15 {
      %c0_13 = arith.constant 0 : index
      %c0_14 = arith.constant 0 : index
      %16 = vector.load %arg7[%c0_13, %c0_14] : memref<256x32xf32, #tpu.memory_space<vmem>>, vector<256x32xf32>
      %c0_15 = arith.constant 0 : index
      %c0_16 = arith.constant 0 : index
      %17 = vector.load %arg5[%c0_15, %c0_16] : memref<1x32xf32, #tpu.memory_space<vmem>>, vector<1x32xf32>
      %18 = vector.broadcast %17 : vector<1x32xf32> to vector<256x32xf32>
      %19 = arith.addf %16, %18 : vector<256x32xf32>
      %cst_17 = arith.constant 0.000000e+00 : f32
      %20 = vector.broadcast %cst_17 : f32 to vector<256x32xf32>
      %21 = arith.maximumf %19, %20 : vector<256x32xf32>
      %c0_18 = arith.constant 0 : index
      %c0_19 = arith.constant 0 : index
      %22 = vector.load %arg6[%c0_18, %c0_19] : memref<256x32xf32, #tpu.memory_space<vmem>>, vector<256x32xf32>
      tpu.vector_store %arg6[%c0_18, %c0_19], %21 {strides = array<i32>} : memref<256x32xf32, #tpu.memory_space<vmem>>, vector<256x32xf32>,
    } else {
    }
    return
  }
  func.func @transform_0(%arg0: i32, %arg1: i32) -> (i32, i32) {
    %c0_i32 = arith.constant 0 : i32
    return %arg0, %arg1 : i32, i32
  }
  func.func @transform_1(%arg0: i32, %arg1: i32) -> (i32, i32) {
    %c0_i32 = arith.constant 0 : i32
    %c0_i32_0 = arith.constant 0 : i32
    return %arg1, %c0_i32 : i32, i32
  }
  func.func @transform_2(%arg0: i32, %arg1: i32) -> (i32, i32) {
    %c0_i32 = arith.constant 0 : i32
    %c0_i32_0 = arith.constant 0 : i32
    %c0_i32_1 = arith.constant 0 : i32
    return %c0_i32, %c0_i32_0 : i32, i32
  }
  func.func @transform_3(%arg0: i32, %arg1: i32) -> (i32, i32) {
    %c0_i32 = arith.constant 0 : i32
    %c0_i32_0 = arith.constant 0 : i32
    %c0_i32_1 = arith.constant 0 : i32
    return %c0_i32, %c0_i32_0 : i32, i32
  }
  func.func @transform_4(%arg0: i32, %arg1: i32) -> (i32, i32) {
    %c0_i32 = arith.constant 0 : i32
    %c0_i32_0 = arith.constant 0 : i32
    return %arg0, %c0_i32 : i32, i32
  }
}

module attributes {stable_mosaic.version = 11 : i64} {
  func.func @_graph_conv_kernel(%arg0: i32, %arg1: i32, %arg2: memref<256x256xbf16, #tpu.memory_space<vmem>>, %arg3: memref<256x32xf32, #tpu.memory_space<vmem>>, %arg4: memref<32x24xbf16, #tpu.memory_space<vmem>>, %arg5: memref<1x24xf32, #tpu.memory_space<vmem>>, %arg6: memref<256x24xf32, #tpu.memory_space<vmem>>, %arg7: memref<256x24xf32, #tpu.memory_space<vmem>>) attributes {dimension_semantics = [#tpu.dimension_semantics<parallel>, #tpu.dimension_semantics<arbitrary>], iteration_bounds = array<i64: 1, 1>, scalar_prefetch = 0 : i64, scratch_operands = 1 : i64, tpu.core_type = #tpu.core_type<tc>, window_params = [{transform_indices = @transform_0, window_bounds = array<i64: 256, 256>}, {transform_indices = @transform_1, window_bounds = array<i64: 256, 32>}, {pipeline_mode = #tpu.pipeline_mode<synchronous>, transform_indices = @transform_2, window_bounds = array<i64: 32, 24>}, {pipeline_mode = #tpu.pipeline_mode<synchronous>, transform_indices = @transform_3, window_bounds = array<i64: 1, 24>}, {transform_indices = @transform_4, window_bounds = array<i64: 256, 24>}]} {
    %c0_i32 = arith.constant 0 : i32
    %0 = arith.cmpi eq, %arg1, %c0_i32 : i32
    %1 = arith.extui %0 : i1 to i32
    %c0_i32_0 = arith.constant 0 : i32
    %2 = arith.cmpi ne, %1, %c0_i32_0 : i32
    scf.if %2 {
      %cst_13 = arith.constant 0.000000e+00 : f32
      %16 = vector.broadcast %cst_13 : f32 to vector<256x24xf32>
      %c0_14 = arith.constant 0 : index
      %c0_15 = arith.constant 0 : index
      %17 = vector.load %arg7[%c0_14, %c0_15] : memref<256x24xf32, #tpu.memory_space<vmem>>, vector<256x24xf32>
      tpu.vector_store %arg7[%c0_14, %c0_15], %16 {strides = array<i32>} : memref<256x24xf32, #tpu.memory_space<vmem>>, vector<256x24xf32>,
    } else {
    }
    %c0 = arith.constant 0 : index
    %c0_1 = arith.constant 0 : index
    %3 = vector.load %arg3[%c0, %c0_1] : memref<256x32xf32, #tpu.memory_space<vmem>>, vector<256x32xf32>
    %4 = arith.truncf %3 : vector<256x32xf32> to vector<256x32xbf16>
    %c0_2 = arith.constant 0 : index
    %c0_3 = arith.constant 0 : index
    %5 = vector.load %arg4[%c0_2, %c0_3] : memref<32x24xbf16, #tpu.memory_space<vmem>>, vector<32x24xbf16>
    %cst = arith.constant dense<0.000000e+00> : vector<256x24xf32>
    %6 = tpu.matmul %4, %5, %cst {dimension_numbers = #tpu.dot_dimension_numbers<[1], [0], [0], [1], [0, 0, 1, 1], [], []>} : vector<256x32xbf16>, vector<32x24xbf16>, vector<256x24xf32> -> vector<256x24xf32>
    %c0_4 = arith.constant 0 : index
    %c0_5 = arith.constant 0 : index
    %7 = vector.load %arg7[%c0_4, %c0_5] : memref<256x24xf32, #tpu.memory_space<vmem>>, vector<256x24xf32>
    %c0_6 = arith.constant 0 : index
    %c0_7 = arith.constant 0 : index
    %8 = vector.load %arg2[%c0_6, %c0_7] : memref<256x256xbf16, #tpu.memory_space<vmem>>, vector<256x256xbf16>
    %9 = arith.truncf %6 : vector<256x24xf32> to vector<256x24xbf16>
    %cst_8 = arith.constant dense<0.000000e+00> : vector<256x24xf32>
    %10 = tpu.matmul %8, %9, %cst_8 {dimension_numbers = #tpu.dot_dimension_numbers<[1], [0], [0], [1], [0, 0, 1, 1], [], []>} : vector<256x256xbf16>, vector<256x24xbf16>, vector<256x24xf32> -> vector<256x24xf32>
    %11 = arith.addf %7, %10 : vector<256x24xf32>
    %c0_9 = arith.constant 0 : index
    %c0_10 = arith.constant 0 : index
    %12 = vector.load %arg7[%c0_9, %c0_10] : memref<256x24xf32, #tpu.memory_space<vmem>>, vector<256x24xf32>
    tpu.vector_store %arg7[%c0_9, %c0_10], %11 {strides = array<i32>} : memref<256x24xf32, #tpu.memory_space<vmem>>, vector<256x24xf32>,
    %c0_i32_11 = arith.constant 0 : i32
    %13 = arith.cmpi eq, %arg1, %c0_i32_11 : i32
    %14 = arith.extui %13 : i1 to i32
    %c0_i32_12 = arith.constant 0 : i32
    %15 = arith.cmpi ne, %14, %c0_i32_12 : i32
    scf.if %15 {
      %c0_13 = arith.constant 0 : index
      %c0_14 = arith.constant 0 : index
      %16 = vector.load %arg7[%c0_13, %c0_14] : memref<256x24xf32, #tpu.memory_space<vmem>>, vector<256x24xf32>
      %c0_15 = arith.constant 0 : index
      %c0_16 = arith.constant 0 : index
      %17 = vector.load %arg5[%c0_15, %c0_16] : memref<1x24xf32, #tpu.memory_space<vmem>>, vector<1x24xf32>
      %18 = vector.broadcast %17 : vector<1x24xf32> to vector<256x24xf32>
      %19 = arith.addf %16, %18 : vector<256x24xf32>
      %cst_17 = arith.constant 0.000000e+00 : f32
      %20 = vector.broadcast %cst_17 : f32 to vector<256x24xf32>
      %21 = arith.maximumf %19, %20 : vector<256x24xf32>
      %c0_18 = arith.constant 0 : index
      %c0_19 = arith.constant 0 : index
      %22 = vector.load %arg6[%c0_18, %c0_19] : memref<256x24xf32, #tpu.memory_space<vmem>>, vector<256x24xf32>
      tpu.vector_store %arg6[%c0_18, %c0_19], %21 {strides = array<i32>} : memref<256x24xf32, #tpu.memory_space<vmem>>, vector<256x24xf32>,
    } else {
    }
    return
  }
  func.func @transform_0(%arg0: i32, %arg1: i32) -> (i32, i32) {
    %c0_i32 = arith.constant 0 : i32
    return %arg0, %arg1 : i32, i32
  }
  func.func @transform_1(%arg0: i32, %arg1: i32) -> (i32, i32) {
    %c0_i32 = arith.constant 0 : i32
    %c0_i32_0 = arith.constant 0 : i32
    return %arg1, %c0_i32 : i32, i32
  }
  func.func @transform_2(%arg0: i32, %arg1: i32) -> (i32, i32) {
    %c0_i32 = arith.constant 0 : i32
    %c0_i32_0 = arith.constant 0 : i32
    %c0_i32_1 = arith.constant 0 : i32
    return %c0_i32, %c0_i32_0 : i32, i32
  }
  func.func @transform_3(%arg0: i32, %arg1: i32) -> (i32, i32) {
    %c0_i32 = arith.constant 0 : i32
    %c0_i32_0 = arith.constant 0 : i32
    %c0_i32_1 = arith.constant 0 : i32
    return %c0_i32, %c0_i32_0 : i32, i32
  }
  func.func @transform_4(%arg0: i32, %arg1: i32) -> (i32, i32) {
    %c0_i32 = arith.constant 0 : i32
    %c0_i32_0 = arith.constant 0 : i32
    return %arg0, %c0_i32 : i32, i32
  }
}

module attributes {stable_mosaic.version = 11 : i64} {
  func.func @_stru_decoder_kernel(%arg0: i32, %arg1: i32, %arg2: memref<256x8xf32, #tpu.memory_space<vmem>>, %arg3: memref<256x8xf32, #tpu.memory_space<vmem>>, %arg4: memref<256x256xf32, #tpu.memory_space<vmem>>) attributes {dimension_semantics = [#tpu.dimension_semantics<parallel>, #tpu.dimension_semantics<parallel>], iteration_bounds = array<i64: 1, 1>, scalar_prefetch = 0 : i64, scratch_operands = 0 : i64, tpu.core_type = #tpu.core_type<tc>, window_params = [{transform_indices = @transform_0, window_bounds = array<i64: 256, 8>}, {transform_indices = @transform_1, window_bounds = array<i64: 256, 8>}, {transform_indices = @transform_2, window_bounds = array<i64: 256, 256>}]} {
    %c0 = arith.constant 0 : index
    %c0_0 = arith.constant 0 : index
    %0 = vector.load %arg2[%c0, %c0_0] : memref<256x8xf32, #tpu.memory_space<vmem>>, vector<256x8xf32>
    %c0_1 = arith.constant 0 : index
    %c0_2 = arith.constant 0 : index
    %1 = vector.load %arg3[%c0_1, %c0_2] : memref<256x8xf32, #tpu.memory_space<vmem>>, vector<256x8xf32>
    %cst = arith.constant dense<0.000000e+00> : vector<256x256xf32>
    %2 = tpu.matmul %0, %1, %cst {dimension_numbers = #tpu.dot_dimension_numbers<[1], [1], [0], [0], [0, 0, 1, 0], [], []>} : vector<256x8xf32>, vector<256x8xf32>, vector<256x256xf32> -> vector<256x256xf32>
    %3 = arith.negf %2 : vector<256x256xf32>
    %4 = math.exp %3 : vector<256x256xf32>
    %cst_3 = arith.constant 1.000000e+00 : f32
    %5 = vector.broadcast %cst_3 : f32 to vector<256x256xf32>
    %6 = arith.addf %5, %4 : vector<256x256xf32>
    %7 = arith.divf %5, %6 : vector<256x256xf32>
    %c0_4 = arith.constant 0 : index
    %c0_5 = arith.constant 0 : index
    %8 = vector.load %arg4[%c0_4, %c0_5] : memref<256x256xf32, #tpu.memory_space<vmem>>, vector<256x256xf32>
    tpu.vector_store %arg4[%c0_4, %c0_5], %7 {strides = array<i32>} : memref<256x256xf32, #tpu.memory_space<vmem>>, vector<256x256xf32>,
    return
  }
  func.func @transform_0(%arg0: i32, %arg1: i32) -> (i32, i32) {
    %c0_i32 = arith.constant 0 : i32
    %c0_i32_0 = arith.constant 0 : i32
    return %arg0, %c0_i32 : i32, i32
  }
  func.func @transform_1(%arg0: i32, %arg1: i32) -> (i32, i32) {
    %c0_i32 = arith.constant 0 : i32
    %c0_i32_0 = arith.constant 0 : i32
    return %arg1, %c0_i32 : i32, i32
  }
  func.func @transform_2(%arg0: i32, %arg1: i32) -> (i32, i32) {
    %c0_i32 = arith.constant 0 : i32
    return %arg0, %arg1 : i32, i32
  }
}

</mosaic_0001>

<llo_original>
// kernel: comga_forward.11
$region0: #{comga_forward.11}
  #allocation0 [shape = 'u32[]', space=smem, size = 0x4, offset = 0x4, fixed_abs, tag = 'smem constant byte address 0x4 - core index']
  #allocation1 [shape = 'u32[144,128]{1,0:T(1,128)}', space=vmem, size = 0x12000, scoped, tag = 'internal scratch']
  #allocation2 [shape = 'f32[256,32]{1,0:T(8,128)}', space=vmem, size = 0x20000, scoped, tag = 'scratch operand']
  %s0 = inlined_call_operand.vmem [shape: bf16[256,256], index: 0, kind: input, shape index: {}]
  %s1 = inlined_call_operand.vmem [shape: f32[256,24], index: 1, kind: input, shape index: {}]
  %s2 = inlined_call_operand.vmem [shape: bf16[24,32], index: 2, kind: input, shape index: {}]
  %s3 = inlined_call_operand.vmem [shape: f32[1,32], index: 3, kind: input, shape index: {}]
  %s4 = inlined_call_operand.vmem [shape: f32[256,32], index: 4, kind: output, shape index: {}]
  %s5 = sld [smem:[#allocation0]]
  $region34: #{comga_forward.11} parent=0
    _
  %s7 = ssub.s32 1, %s5
  %s8 = scalar_select 0, %s7, %s5
  // Predicated region
  $region2: #{comga_forward.11} parent=0 // pred_check
    _
  $region3: #{comga_forward.11} parent=0 // pred_check_branch
    %10 = sbr.rel (0) target = $region5
  $region4: #{comga_forward.11} parent=0 // pred_region
    _
  $region5: #{comga_forward.11} parent=0 // pred_fallthru
    _
  // Predicated region
  $region6: #{comga_forward.11} parent=0 // pred_check
    _
  $region7: #{comga_forward.11} parent=0 // pred_check_branch
    %12 = sbr.rel (0) target = $region9
  $region8: #{comga_forward.11} parent=0 // pred_region
    _
  $region9: #{comga_forward.11} parent=0 // pred_fallthru
    _
  // Predicated region
  $region10: #{comga_forward.11} parent=0 // pred_check
    _
  $region11: #{comga_forward.11} parent=0 // pred_check_branch
    %14 = sbr.rel (0) target = $region13
  $region12: #{comga_forward.11} parent=0 // pred_region
    _
  $region13: #{comga_forward.11} parent=0 // pred_fallthru
    _
  // Predicated region
  $region14: #{comga_forward.11} parent=0 // pred_check
    _
  $region15: #{comga_forward.11} parent=0 // pred_check_branch
    %16 = sbr.rel (0) target = $region17
  $region16: #{comga_forward.11} parent=0 // pred_region
    _
  $region17: #{comga_forward.11} parent=0 // pred_fallthru
    _
  %p18 = scmp.eq.s32.totalorder 0, 0
  // Predicated region
  $region18: #{comga_forward.11} parent=0 // pred_check
    %p19 = pneg %p18
  $region19: #{comga_forward.11} parent=0 // pred_check_branch
    %21 = sbr.rel (%p19) target = $region21
  $region20: #{comga_forward.11} parent=0 // pred_region
    %vm22 = vcmask 261120
    %23 = vst.msk [vmem:[#allocation2] sm:$0xff] %vm22, 0.0
    %24 = vst.msk [vmem:[#allocation2 + $0x8] sm:$0xff] %vm22, 0.0
    %25 = vst.msk [vmem:[#allocation2 + $0x10] sm:$0xff] %vm22, 0.0
    %26 = vst.msk [vmem:[#allocation2 + $0x18] sm:$0xff] %vm22, 0.0
    %27 = vst.msk [vmem:[#allocation2 + $0x20] sm:$0xff] %vm22, 0.0
    %28 = vst.msk [vmem:[#allocation2 + $0x28] sm:$0xff] %vm22, 0.0
    %29 = vst.msk [vmem:[#allocation2 + $0x30] sm:$0xff] %vm22, 0.0
    %30 = vst.msk [vmem:[#allocation2 + $0x38] sm:$0xff] %vm22, 0.0
    %31 = vst.msk [vmem:[#allocation2 + $0x40] sm:$0xff] %vm22, 0.0
    %32 = vst.msk [vmem:[#allocation2 + $0x48] sm:$0xff] %vm22, 0.0
    %33 = vst.msk [vmem:[#allocation2 + $0x50] sm:$0xff] %vm22, 0.0
    %34 = vst.msk [vmem:[#allocation2 + $0x58] sm:$0xff] %vm22, 0.0
    %35 = vst.msk [vmem:[#allocation2 + $0x60] sm:$0xff] %vm22, 0.0
    %36 = vst.msk [vmem:[#allocation2 + $0x68] sm:$0xff] %vm22, 0.0
    %37 = vst.msk [vmem:[#allocation2 + $0x70] sm:$0xff] %vm22, 0.0
    %38 = vst.msk [vmem:[#allocation2 + $0x78] sm:$0xff] %vm22, 0.0
    %39 = vst.msk [vmem:[#allocation2 + $0x80] sm:$0xff] %vm22, 0.0
    %40 = vst.msk [vmem:[#allocation2 + $0x88] sm:$0xff] %vm22, 0.0
    %41 = vst.msk [vmem:[#allocation2 + $0x90] sm:$0xff] %vm22, 0.0
    %42 = vst.msk [vmem:[#allocation2 + $0x98] sm:$0xff] %vm22, 0.0
    %43 = vst.msk [vmem:[#allocation2 + $0xa0] sm:$0xff] %vm22, 0.0
    %44 = vst.msk [vmem:[#allocation2 + $0xa8] sm:$0xff] %vm22, 0.0
    %45 = vst.msk [vmem:[#allocation2 + $0xb0] sm:$0xff] %vm22, 0.0
    %46 = vst.msk [vmem:[#allocation2 + $0xb8] sm:$0xff] %vm22, 0.0
    %47 = vst.msk [vmem:[#allocation2 + $0xc0] sm:$0xff] %vm22, 0.0
    %48 = vst.msk [vmem:[#allocation2 + $0xc8] sm:$0xff] %vm22, 0.0
    %49 = vst.msk [vmem:[#allocation2 + $0xd0] sm:$0xff] %vm22, 0.0
    %50 = vst.msk [vmem:[#allocation2 + $0xd8] sm:$0xff] %vm22, 0.0
    %51 = vst.msk [vmem:[#allocation2 + $0xe0] sm:$0xff] %vm22, 0.0
    %52 = vst.msk [vmem:[#allocation2 + $0xe8] sm:$0xff] %vm22, 0.0
    %53 = vst.msk [vmem:[#allocation2 + $0xf0] sm:$0xff] %vm22, 0.0
    %54 = vst.msk [vmem:[#allocation2 + $0xf8] sm:$0xff] %vm22, 0.0
  $region21: #{comga_forward.11} parent=0 // pred_fallthru
    _
  %v55 = vld [vmem:[%s1] sm:$0xff]
  %v56 = vld [vmem:[%s1 + $0x8] sm:$0xff]
  %v57 = vld [vmem:[%s1 + $0x10] sm:$0xff]
  %v58 = vld [vmem:[%s1 + $0x18] sm:$0xff]
  %v59 = vld [vmem:[%s1 + $0x20] sm:$0xff]
  %v60 = vld [vmem:[%s1 + $0x28] sm:$0xff]
  %v61 = vld [vmem:[%s1 + $0x30] sm:$0xff]
  %v62 = vld [vmem:[%s1 + $0x38] sm:$0xff]
  %v63 = vld [vmem:[%s1 + $0x40] sm:$0xff]
  %v64 = vld [vmem:[%s1 + $0x48] sm:$0xff]
  %v65 = vld [vmem:[%s1 + $0x50] sm:$0xff]
  %v66 = vld [vmem:[%s1 + $0x58] sm:$0xff]
  %v67 = vld [vmem:[%s1 + $0x60] sm:$0xff]
  %v68 = vld [vmem:[%s1 + $0x68] sm:$0xff]
  %v69 = vld [vmem:[%s1 + $0x70] sm:$0xff]
  %v70 = vld [vmem:[%s1 + $0x78] sm:$0xff]
  %v71 = vld [vmem:[%s1 + $0x80] sm:$0xff]
  %v72 = vld [vmem:[%s1 + $0x88] sm:$0xff]
  %v73 = vld [vmem:[%s1 + $0x90] sm:$0xff]
  %v74 = vld [vmem:[%s1 + $0x98] sm:$0xff]
  %v75 = vld [vmem:[%s1 + $0xa0] sm:$0xff]
  %v76 = vld [vmem:[%s1 + $0xa8] sm:$0xff]
  %v77 = vld [vmem:[%s1 + $0xb0] sm:$0xff]
  %v78 = vld [vmem:[%s1 + $0xb8] sm:$0xff]
  %v79 = vld [vmem:[%s1 + $0xc0] sm:$0xff]
  %v80 = vld [vmem:[%s1 + $0xc8] sm:$0xff]
  %v81 = vld [vmem:[%s1 + $0xd0] sm:$0xff]
  %v82 = vld [vmem:[%s1 + $0xd8] sm:$0xff]
  %v83 = vld [vmem:[%s1 + $0xe0] sm:$0xff]
  %v84 = vld [vmem:[%s1 + $0xe8] sm:$0xff]
  %v85 = vld [vmem:[%s1 + $0xf0] sm:$0xff]
  %v86 = vld [vmem:[%s1 + $0xf8] sm:$0xff]
  %v87 = vpack.c.bf16 %v56, %v55
  %v88 = vpack.c.bf16 %v58, %v57
  %v89 = vpack.c.bf16 %v60, %v59
  %v90 = vpack.c.bf16 %v62, %v61
  %v91 = vpack.c.bf16 %v64, %v63
  %v92 = vpack.c.bf16 %v66, %v65
  %v93 = vpack.c.bf16 %v68, %v67
  %v94 = vpack.c.bf16 %v70, %v69
  %v95 = vpack.c.bf16 %v72, %v71
  %v96 = vpack.c.bf16 %v74, %v73
  %v97 = vpack.c.bf16 %v76, %v75
  %v98 = vpack.c.bf16 %v78, %v77
  %v99 = vpack.c.bf16 %v80, %v79
  %v100 = vpack.c.bf16 %v82, %v81
  %v101 = vpack.c.bf16 %v84, %v83
  %v102 = vpack.c.bf16 %v86, %v85
  %v103 = vld [vmem:[%s2] sm:$0xf]
  %v104 = vld [vmem:[%s2 + $0x4] sm:$0xf]
  %v105 = vld [vmem:[%s2 + $0x8] sm:$0xf]
  %v109 = vunpack.c.l.b16 %v103
  %v110 = vunpack.c.l.b16 %v104
  %v111 = vunpack.c.l.b16 %v105
  %v112 = vpack.c.b16 %v110, %v109
  %v113 = vpack.c.b16 %v111, %v111
  %vm115 = vcmask 195584
  %v117 = vsel %vm115, %v87, 0
  %v120 = vsel %vm115, %v88, 0
  %v123 = vsel %vm115, %v89, 0
  %v126 = vsel %vm115, %v90, 0
  %v129 = vsel %vm115, %v91, 0
  %v132 = vsel %vm115, %v92, 0
  %v135 = vsel %vm115, %v93, 0
  %v138 = vsel %vm115, %v94, 0
  %v141 = vsel %vm115, %v95, 0
  %v144 = vsel %vm115, %v96, 0
  %v147 = vsel %vm115, %v97, 0
  %v150 = vsel %vm115, %v98, 0
  %v153 = vsel %vm115, %v99, 0
  %v156 = vsel %vm115, %v100, 0
  %v159 = vsel %vm115, %v101, 0
  %v162 = vsel %vm115, %v102, 0
  %vm164 = vcmask 1043456
  %v166 = vsel %vm164, %v113, 0
  %168 = vmatprep.subr.bf16.mxu0 0
  %169 = vmatpush1.bf16.msra.mxu0 0
  %170 = vmatprep.subr.bf16.mxu0 0
  %171 = vmatpush1.bf16.msra.mxu0 0
  %172 = vmatprep.subr.bf16.mxu0 0
  %173 = vmatpush1.bf16.msra.mxu0 0
  %174 = vmatprep.subr.bf16.mxu0 0
  %175 = vmatpush1.bf16.msra.mxu0 0
  %176 = vmatprep.subr.bf16.mxu0 0
  %177 = vmatpush1.bf16.msra.mxu0 0
  %178 = vmatprep.subr.bf16.mxu0 0
  %179 = vmatpush1.bf16.msra.mxu0 0
  %180 = vmatprep.subr.bf16.mxu0 0
  %181 = vmatpush1.bf16.msra.mxu0 %v166
  %182 = vmatprep.subr.bf16.mxu0 0
  %183 = vmatpush1.bf16.msra.mxu0 %v112
  %184 = vmatprep.subr.bf16.mxu0 0
  %185 = vmatpush2.bf16.msra.mxu0 0
  %186 = vmatprep.subr.bf16.mxu0 0
  %187 = vmatpush2.bf16.msra.mxu0 0
  %188 = vmatprep.subr.bf16.mxu0 0
  %189 = vmatpush2.bf16.msra.mxu0 0
  %190 = vmatprep.subr.bf16.mxu0 0
  %191 = vmatpush2.bf16.msra.mxu0 0
  %192 = vmatprep.subr.bf16.mxu0 0
  %193 = vmatpush2.bf16.msra.mxu0 0
  %194 = vmatprep.subr.bf16.mxu0 0
  %195 = vmatpush2.bf16.msra.mxu0 0
  %196 = vmatprep.subr.bf16.mxu0 0
  %197 = vmatpush2.bf16.msra.mxu0 0
  %198 = vmatprep.subr.bf16.mxu0 0
  %199 = vmatpush2.bf16.msra.mxu0 0
  %200 = vmatprep.mubr.bf16.mxu0 0
  %201 = vmatmul.mubr.bf16.gmra.mxu0 %v117
  %v202 = vpop.f32.mrf.mxu0
  %v203 = vadd.f32 0.0, %v202
  %v204 = vpop.f32.mrf.mxu0
  %v205 = vpop.f32.mrf.mxu0
  %v206 = vadd.f32 0.0, %v205
  %v207 = vpop.f32.mrf.mxu0
  %208 = vmatprep.mubr.bf16.mxu0 0
  %209 = vmatmul.mubr.bf16.gmra.mxu0 %v120
  %v210 = vpop.f32.mrf.mxu0
  %v211 = vadd.f32 0.0, %v210
  %v212 = vpop.f32.mrf.mxu0
  %v213 = vpop.f32.mrf.mxu0
  %v214 = vadd.f32 0.0, %v213
  %v215 = vpop.f32.mrf.mxu0
  %216 = vmatprep.mubr.bf16.mxu0 0
  %217 = vmatmul.mubr.bf16.gmra.mxu0 %v123
  %v218 = vpop.f32.mrf.mxu0
  %v219 = vadd.f32 0.0, %v218
  %v220 = vpop.f32.mrf.mxu0
  %v221 = vpop.f32.mrf.mxu0
  %v222 = vadd.f32 0.0, %v221
  %v223 = vpop.f32.mrf.mxu0
  %224 = vmatprep.mubr.bf16.mxu0 0
  %225 = vmatmul.mubr.bf16.gmra.mxu0 %v126
  %v226 = vpop.f32.mrf.mxu0
  %v227 = vadd.f32 0.0, %v226
  %v228 = vpop.f32.mrf.mxu0
  %v229 = vpop.f32.mrf.mxu0
  %v230 = vadd.f32 0.0, %v229
  %v231 = vpop.f32.mrf.mxu0
  %232 = vmatprep.mubr.bf16.mxu0 0
  %233 = vmatmul.mubr.bf16.gmra.mxu0 %v129
  %v234 = vpop.f32.mrf.mxu0
  %v235 = vadd.f32 0.0, %v234
  %v236 = vpop.f32.mrf.mxu0
  %v237 = vpop.f32.mrf.mxu0
  %v238 = vadd.f32 0.0, %v237
  %v239 = vpop.f32.mrf.mxu0
  %240 = vmatprep.mubr.bf16.mxu0 0
  %241 = vmatmul.mubr.bf16.gmra.mxu0 %v132
  %v242 = vpop.f32.mrf.mxu0
  %v243 = vadd.f32 0.0, %v242
  %v244 = vpop.f32.mrf.mxu0
  %v245 = vpop.f32.mrf.mxu0
  %v246 = vadd.f32 0.0, %v245
  %v247 = vpop.f32.mrf.mxu0
  %248 = vmatprep.mubr.bf16.mxu0 0
  %249 = vmatmul.mubr.bf16.gmra.mxu0 %v135
  %v250 = vpop.f32.mrf.mxu0
  %v251 = vadd.f32 0.0, %v250
  %v252 = vpop.f32.mrf.mxu0
  %v253 = vpop.f32.mrf.mxu0
  %v254 = vadd.f32 0.0, %v253
  %v255 = vpop.f32.mrf.mxu0
  %256 = vmatprep.mubr.bf16.mxu0 0
  %257 = vmatmul.mubr.bf16.gmra.mxu0 %v138
  %v258 = vpop.f32.mrf.mxu0
  %v259 = vadd.f32 0.0, %v258
  %v260 = vpop.f32.mrf.mxu0
  %v261 = vpop.f32.mrf.mxu0
  %v262 = vadd.f32 0.0, %v261
  %v263 = vpop.f32.mrf.mxu0
  %264 = vmatprep.mubr.bf16.mxu0 0
  %265 = vmatmul.mubr.bf16.gmra.mxu0 %v141
  %v266 = vpop.f32.mrf.mxu0
  %v267 = vadd.f32 0.0, %v266
  %v268 = vpop.f32.mrf.mxu0
  %v269 = vpop.f32.mrf.mxu0
  %v270 = vadd.f32 0.0, %v269
  %v271 = vpop.f32.mrf.mxu0
  %272 = vmatprep.mubr.bf16.mxu0 0
  %273 = vmatmul.mubr.bf16.gmra.mxu0 %v144
  %v274 = vpop.f32.mrf.mxu0
  %v275 = vadd.f32 0.0, %v274
  %v276 = vpop.f32.mrf.mxu0
  %v277 = vpop.f32.mrf.mxu0
  %v278 = vadd.f32 0.0, %v277
  %v279 = vpop.f32.mrf.mxu0
  %280 = vmatprep.mubr.bf16.mxu0 0
  %281 = vmatmul.mubr.bf16.gmra.mxu0 %v147
  %v282 = vpop.f32.mrf.mxu0
  %v283 = vadd.f32 0.0, %v282
  %v284 = vpop.f32.mrf.mxu0
  %v285 = vpop.f32.mrf.mxu0
  %v286 = vadd.f32 0.0, %v285
  %v287 = vpop.f32.mrf.mxu0
  %288 = vmatprep.mubr.bf16.mxu0 0
  %289 = vmatmul.mubr.bf16.gmra.mxu0 %v150
  %v290 = vpop.f32.mrf.mxu0
  %v291 = vadd.f32 0.0, %v290
  %v292 = vpop.f32.mrf.mxu0
  %v293 = vpop.f32.mrf.mxu0
  %v294 = vadd.f32 0.0, %v293
  %v295 = vpop.f32.mrf.mxu0
  %296 = vmatprep.mubr.bf16.mxu0 0
  %297 = vmatmul.mubr.bf16.gmra.mxu0 %v153
  %v298 = vpop.f32.mrf.mxu0
  %v299 = vadd.f32 0.0, %v298
  %v300 = vpop.f32.mrf.mxu0
  %v301 = vpop.f32.mrf.mxu0
  %v302 = vadd.f32 0.0, %v301
  %v303 = vpop.f32.mrf.mxu0
  %304 = vmatprep.mubr.bf16.mxu0 0
  %305 = vmatmul.mubr.bf16.gmra.mxu0 %v156
  %v306 = vpop.f32.mrf.mxu0
  %v307 = vadd.f32 0.0, %v306
  %v308 = vpop.f32.mrf.mxu0
  %v309 = vpop.f32.mrf.mxu0
  %v310 = vadd.f32 0.0, %v309
  %v311 = vpop.f32.mrf.mxu0
  %312 = vmatprep.mubr.bf16.mxu0 0
  %313 = vmatmul.mubr.bf16.gmra.mxu0 %v159
  %v314 = vpop.f32.mrf.mxu0
  %v315 = vadd.f32 0.0, %v314
  %v316 = vpop.f32.mrf.mxu0
  %v317 = vpop.f32.mrf.mxu0
  %v318 = vadd.f32 0.0, %v317
  %v319 = vpop.f32.mrf.mxu0
  %320 = vmatprep.mubr.bf16.mxu0 0
  %321 = vmatmul.mubr.bf16.gmra.mxu0 %v162
  %v322 = vpop.f32.mrf.mxu0
  %v323 = vadd.f32 0.0, %v322
  %v324 = vpop.f32.mrf.mxu0
  %v325 = vpop.f32.mrf.mxu0
  %v326 = vadd.f32 0.0, %v325
  %v327 = vpop.f32.mrf.mxu0
  %328 = vdwg.mxu0
  %v329 = vld [vmem:[#allocation2] sm:$0xff]
  %v330 = vld [vmem:[#allocation2 + $0x8] sm:$0xff]
  %v331 = vld [vmem:[#allocation2 + $0x10] sm:$0xff]
  %v332 = vld [vmem:[#allocation2 + $0x18] sm:$0xff]
  %v333 = vld [vmem:[#allocation2 + $0x20] sm:$0xff]
  %v334 = vld [vmem:[#allocation2 + $0x28] sm:$0xff]
  %v335 = vld [vmem:[#allocation2 + $0x30] sm:$0xff]
  %v336 = vld [vmem:[#allocation2 + $0x38] sm:$0xff]
  %v337 = vld [vmem:[#allocation2 + $0x40] sm:$0xff]
  %v338 = vld [vmem:[#allocation2 + $0x48] sm:$0xff]
  %v339 = vld [vmem:[#allocation2 + $0x50] sm:$0xff]
  %v340 = vld [vmem:[#allocation2 + $0x58] sm:$0xff]
  %v341 = vld [vmem:[#allocation2 + $0x60] sm:$0xff]
  %v342 = vld [vmem:[#allocation2 + $0x68] sm:$0xff]
  %v343 = vld [vmem:[#allocation2 + $0x70] sm:$0xff]
  %v344 = vld [vmem:[#allocation2 + $0x78] sm:$0xff]
  %v345 = vld [vmem:[#allocation2 + $0x80] sm:$0xff]
  %v346 = vld [vmem:[#allocation2 + $0x88] sm:$0xff]
  %v347 = vld [vmem:[#allocation2 + $0x90] sm:$0xff]
  %v348 = vld [vmem:[#allocation2 + $0x98] sm:$0xff]
  %v349 = vld [vmem:[#allocation2 + $0xa0] sm:$0xff]
  %v350 = vld [vmem:[#allocation2 + $0xa8] sm:$0xff]
  %v351 = vld [vmem:[#allocation2 + $0xb0] sm:$0xff]
  %v352 = vld [vmem:[#allocation2 + $0xb8] sm:$0xff]
  %v353 = vld [vmem:[#allocation2 + $0xc0] sm:$0xff]
  %v354 = vld [vmem:[#allocation2 + $0xc8] sm:$0xff]
  %v355 = vld [vmem:[#allocation2 + $0xd0] sm:$0xff]
  %v356 = vld [vmem:[#allocation2 + $0xd8] sm:$0xff]
  %v357 = vld [vmem:[#allocation2 + $0xe0] sm:$0xff]
  %v358 = vld [vmem:[#allocation2 + $0xe8] sm:$0xff]
  %v359 = vld [vmem:[#allocation2 + $0xf0] sm:$0xff]
  %v360 = vld [vmem:[#allocation2 + $0xf8] sm:$0xff]
  %v361 = vld [vmem:[%s0] sm:$0xff]
  %v362 = vld [vmem:[%s0 + $0x8] sm:$0xff]
  %v363 = vld [vmem:[%s0 + $0x10] sm:$0xff]
  %v364 = vld [vmem:[%s0 + $0x18] sm:$0xff]
  %v365 = vld [vmem:[%s0 + $0x20] sm:$0xff]
  %v366 = vld [vmem:[%s0 + $0x28] sm:$0xff]
  %v367 = vld [vmem:[%s0 + $0x30] sm:$0xff]
  %v368 = vld [vmem:[%s0 + $0x38] sm:$0xff]
  %v369 = vld [vmem:[%s0 + $0x40] sm:$0xff]
  %v370 = vld [vmem:[%s0 + $0x48] sm:$0xff]
  %v371 = vld [vmem:[%s0 + $0x50] sm:$0xff]
  %v372 = vld [vmem:[%s0 + $0x58] sm:$0xff]
  %v373 = vld [vmem:[%s0 + $0x60] sm:$0xff]
  %v374 = vld [vmem:[%s0 + $0x68] sm:$0xff]
  %v375 = vld [vmem:[%s0 + $0x70] sm:$0xff]
  %v376 = vld [vmem:[%s0 + $0x78] sm:$0xff]
  %v377 = vld [vmem:[%s0 + $0x80] sm:$0xff]
  %v378 = vld [vmem:[%s0 + $0x88] sm:$0xff]
  %v379 = vld [vmem:[%s0 + $0x90] sm:$0xff]
  %v380 = vld [vmem:[%s0 + $0x98] sm:$0xff]
  %v381 = vld [vmem:[%s0 + $0xa0] sm:$0xff]
  %v382 = vld [vmem:[%s0 + $0xa8] sm:$0xff]
  %v383 = vld [vmem:[%s0 + $0xb0] sm:$0xff]
  %v384 = vld [vmem:[%s0 + $0xb8] sm:$0xff]
  %v385 = vld [vmem:[%s0 + $0xc0] sm:$0xff]
  %v386 = vld [vmem:[%s0 + $0xc8] sm:$0xff]
  %v387 = vld [vmem:[%s0 + $0xd0] sm:$0xff]
  %v388 = vld [vmem:[%s0 + $0xd8] sm:$0xff]
  %v389 = vld [vmem:[%s0 + $0xe0] sm:$0xff]
  %v390 = vld [vmem:[%s0 + $0xe8] sm:$0xff]
  %v391 = vld [vmem:[%s0 + $0xf0] sm:$0xff]
  %v392 = vld [vmem:[%s0 + $0xf8] sm:$0xff]
  %v393 = vpack.c.bf16 %v206, %v203
  %v394 = vpack.c.bf16 %v214, %v211
  %v395 = vpack.c.bf16 %v222, %v219
  %v396 = vpack.c.bf16 %v230, %v227
  %v397 = vpack.c.bf16 %v238, %v235
  %v398 = vpack.c.bf16 %v246, %v243
  %v399 = vpack.c.bf16 %v254, %v251
  %v400 = vpack.c.bf16 %v262, %v259
  %v401 = vpack.c.bf16 %v270, %v267
  %v402 = vpack.c.bf16 %v278, %v275
  %v403 = vpack.c.bf16 %v286, %v283
  %v404 = vpack.c.bf16 %v294, %v291
  %v405 = vpack.c.bf16 %v302, %v299
  %v406 = vpack.c.bf16 %v310, %v307
  %v407 = vpack.c.bf16 %v318, %v315
  %v408 = vpack.c.bf16 %v326, %v323
  %v441 = vunpack.c.l.b16 %v361
  %v442 = vunpack.c.h.b16 %v361
  %v443 = vunpack.c.l.b16 %v362
  %v444 = vunpack.c.h.b16 %v362
  %v445 = vunpack.c.l.b16 %v363
  %v446 = vunpack.c.h.b16 %v363
  %v447 = vunpack.c.l.b16 %v364
  %v448 = vunpack.c.h.b16 %v364
  %v449 = vunpack.c.l.b16 %v365
  %v450 = vunpack.c.h.b16 %v365
  %v451 = vunpack.c.l.b16 %v366
  %v452 = vunpack.c.h.b16 %v366
  %v453 = vunpack.c.l.b16 %v367
  %v454 = vunpack.c.h.b16 %v367
  %v455 = vunpack.c.l.b16 %v368
  %v456 = vunpack.c.h.b16 %v368
  %v457 = vunpack.c.l.b16 %v369
  %v458 = vunpack.c.h.b16 %v369
  %v459 = vunpack.c.l.b16 %v370
  %v460 = vunpack.c.h.b16 %v370
  %v461 = vunpack.c.l.b16 %v371
  %v462 = vunpack.c.h.b16 %v371
  %v463 = vunpack.c.l.b16 %v372
  %v464 = vunpack.c.h.b16 %v372
  %v465 = vunpack.c.l.b16 %v373
  %v466 = vunpack.c.h.b16 %v373
  %v467 = vunpack.c.l.b16 %v374
  %v468 = vunpack.c.h.b16 %v374
  %v469 = vunpack.c.l.b16 %v375
  %v470 = vunpack.c.h.b16 %v375
  %v471 = vunpack.c.l.b16 %v376
  %v472 = vunpack.c.h.b16 %v376
  %v473 = vunpack.c.l.b16 %v377
  %v474 = vunpack.c.h.b16 %v377
  %v475 = vunpack.c.l.b16 %v378
  %v476 = vunpack.c.h.b16 %v378
  %v477 = vunpack.c.l.b16 %v379
  %v478 = vunpack.c.h.b16 %v379
  %v479 = vunpack.c.l.b16 %v380
  %v480 = vunpack.c.h.b16 %v380
  %v481 = vunpack.c.l.b16 %v381
  %v482 = vunpack.c.h.b16 %v381
  %v483 = vunpack.c.l.b16 %v382
  %v484 = vunpack.c.h.b16 %v382
  %v485 = vunpack.c.l.b16 %v383
  %v486 = vunpack.c.h.b16 %v383
  %v487 = vunpack.c.l.b16 %v384
  %v488 = vunpack.c.h.b16 %v384
  %v489 = vunpack.c.l.b16 %v385
  %v490 = vunpack.c.h.b16 %v385
  %v491 = vunpack.c.l.b16 %v386
  %v492 = vunpack.c.h.b16 %v386
  %v493 = vunpack.c.l.b16 %v387
  %v494 = vunpack.c.h.b16 %v387
  %v495 = vunpack.c.l.b16 %v388
  %v496 = vunpack.c.h.b16 %v388
  %v497 = vunpack.c.l.b16 %v389
  %v498 = vunpack.c.h.b16 %v389
  %v499 = vunpack.c.l.b16 %v390
  %v500 = vunpack.c.h.b16 %v390
  %v501 = vunpack.c.l.b16 %v391
  %v502 = vunpack.c.h.b16 %v391
  %v503 = vunpack.c.l.b16 %v392
  %v504 = vunpack.c.h.b16 %v392
  %v505 = vpack.c.b16 %v443, %v441
  %v506 = vpack.c.b16 %v444, %v442
  %v507 = vpack.c.b16 %v447, %v445
  %v508 = vpack.c.b16 %v448, %v446
  %v509 = vpack.c.b16 %v451, %v449
  %v510 = vpack.c.b16 %v452, %v450
  %v511 = vpack.c.b16 %v455, %v453
  %v512 = vpack.c.b16 %v456, %v454
  %v513 = vpack.c.b16 %v459, %v457
  %v514 = vpack.c.b16 %v460, %v458
  %v515 = vpack.c.b16 %v463, %v461
  %v516 = vpack.c.b16 %v464, %v462
  %v517 = vpack.c.b16 %v467, %v465
  %v518 = vpack.c.b16 %v468, %v466
  %v519 = vpack.c.b16 %v471, %v469
  %v520 = vpack.c.b16 %v472, %v470
  %v521 = vpack.c.b16 %v475, %v473
  %v522 = vpack.c.b16 %v476, %v474
  %v523 = vpack.c.b16 %v479, %v477
  %v524 = vpack.c.b16 %v480, %v478
  %v525 = vpack.c.b16 %v483, %v481
  %v526 = vpack.c.b16 %v484, %v482
  %v527 = vpack.c.b16 %v487, %v485
  %v528 = vpack.c.b16 %v488, %v486
  %v529 = vpack.c.b16 %v491, %v489
  %v530 = vpack.c.b16 %v492, %v490
  %v531 = vpack.c.b16 %v495, %v493
  %v532 = vpack.c.b16 %v496, %v494
  %v533 = vpack.c.b16 %v499, %v497
  %v534 = vpack.c.b16 %v500, %v498
  %v535 = vpack.c.b16 %v503, %v501
  %v536 = vpack.c.b16 %v504, %v502
  %569 = vmatprep.subr.bf16.mxu0 0
  %570 = vmatpush1.bf16.msra.mxu0 %v400
  %571 = vmatprep.subr.bf16.mxu0 0
  %572 = vmatpush1.bf16.msra.mxu0 %v399
  %573 = vmatprep.subr.bf16.mxu0 0
  %574 = vmatpush1.bf16.msra.mxu0 %v398
  %575 = vmatprep.subr.bf16.mxu0 0
  %576 = vmatpush1.bf16.msra.mxu0 %v397
  %577 = vmatprep.subr.bf16.mxu0 0
  %578 = vmatpush1.bf16.msra.mxu0 %v396
  %579 = vmatprep.subr.bf16.mxu0 0
  %580 = vmatpush1.bf16.msra.mxu0 %v395
  %581 = vmatprep.subr.bf16.mxu0 0
  %582 = vmatpush1.bf16.msra.mxu0 %v394
  %583 = vmatprep.subr.bf16.mxu0 0
  %584 = vmatpush1.bf16.msra.mxu0 %v393
  %585 = vmatprep.subr.bf16.mxu0 0
  %586 = vmatpush2.bf16.msra.mxu0 %v408
  %587 = vmatprep.subr.bf16.mxu0 0
  %588 = vmatpush2.bf16.msra.mxu0 %v407
  %589 = vmatprep.subr.bf16.mxu0 0
  %590 = vmatpush2.bf16.msra.mxu0 %v406
  %591 = vmatprep.subr.bf16.mxu0 0
  %592 = vmatpush2.bf16.msra.mxu0 %v405
  %593 = vmatprep.subr.bf16.mxu0 0
  %594 = vmatpush2.bf16.msra.mxu0 %v404
  %595 = vmatprep.subr.bf16.mxu0 0
  %596 = vmatpush2.bf16.msra.mxu0 %v403
  %597 = vmatprep.subr.bf16.mxu0 0
  %598 = vmatpush2.bf16.msra.mxu0 %v402
  %599 = vmatprep.subr.bf16.mxu0 0
  %600 = vmatpush2.bf16.msra.mxu0 %v401
  %601 = vmatprep.mubr.bf16.mxu0 %v506
  %602 = vmatmul.mubr.bf16.gmra.mxu0 %v505
  %v603 = vpop.f32.mrf.mxu0
  %v604 = vadd.f32 0.0, %v603
  %v605 = vpop.f32.mrf.mxu0
  %v606 = vpop.f32.mrf.mxu0
  %v607 = vadd.f32 0.0, %v606
  %v608 = vpop.f32.mrf.mxu0
  %609 = vmatprep.mubr.bf16.mxu0 %v508
  %610 = vmatmul.mubr.bf16.gmra.mxu0 %v507
  %v611 = vpop.f32.mrf.mxu0
  %v612 = vadd.f32 0.0, %v611
  %v613 = vpop.f32.mrf.mxu0
  %v614 = vpop.f32.mrf.mxu0
  %v615 = vadd.f32 0.0, %v614
  %v616 = vpop.f32.mrf.mxu0
  %617 = vmatprep.mubr.bf16.mxu0 %v510
  %618 = vmatmul.mubr.bf16.gmra.mxu0 %v509
  %v619 = vpop.f32.mrf.mxu0
  %v620 = vadd.f32 0.0, %v619
  %v621 = vpop.f32.mrf.mxu0
  %v622 = vpop.f32.mrf.mxu0
  %v623 = vadd.f32 0.0, %v622
  %v624 = vpop.f32.mrf.mxu0
  %625 = vmatprep.mubr.bf16.mxu0 %v512
  %626 = vmatmul.mubr.bf16.gmra.mxu0 %v511
  %v627 = vpop.f32.mrf.mxu0
  %v628 = vadd.f32 0.0, %v627
  %v629 = vpop.f32.mrf.mxu0
  %v630 = vpop.f32.mrf.mxu0
  %v631 = vadd.f32 0.0, %v630
  %v632 = vpop.f32.mrf.mxu0
  %633 = vmatprep.mubr.bf16.mxu0 %v514
  %634 = vmatmul.mubr.bf16.gmra.mxu0 %v513
  %v635 = vpop.f32.mrf.mxu0
  %v636 = vadd.f32 0.0, %v635
  %v637 = vpop.f32.mrf.mxu0
  %v638 = vpop.f32.mrf.mxu0
  %v639 = vadd.f32 0.0, %v638
  %v640 = vpop.f32.mrf.mxu0
  %641 = vmatprep.mubr.bf16.mxu0 %v516
  %642 = vmatmul.mubr.bf16.gmra.mxu0 %v515
  %v643 = vpop.f32.mrf.mxu0
  %v644 = vadd.f32 0.0, %v643
  %v645 = vpop.f32.mrf.mxu0
  %v646 = vpop.f32.mrf.mxu0
  %v647 = vadd.f32 0.0, %v646
  %v648 = vpop.f32.mrf.mxu0
  %649 = vmatprep.mubr.bf16.mxu0 %v518
  %650 = vmatmul.mubr.bf16.gmra.mxu0 %v517
  %v651 = vpop.f32.mrf.mxu0
  %v652 = vadd.f32 0.0, %v651
  %v653 = vpop.f32.mrf.mxu0
  %v654 = vpop.f32.mrf.mxu0
  %v655 = vadd.f32 0.0, %v654
  %v656 = vpop.f32.mrf.mxu0
  %657 = vmatprep.mubr.bf16.mxu0 %v520
  %658 = vmatmul.mubr.bf16.gmra.mxu0 %v519
  %v659 = vpop.f32.mrf.mxu0
  %v660 = vadd.f32 0.0, %v659
  %v661 = vpop.f32.mrf.mxu0
  %v662 = vpop.f32.mrf.mxu0
  %v663 = vadd.f32 0.0, %v662
  %v664 = vpop.f32.mrf.mxu0
  %665 = vmatprep.mubr.bf16.mxu0 %v522
  %666 = vmatmul.mubr.bf16.gmra.mxu0 %v521
  %v667 = vpop.f32.mrf.mxu0
  %v668 = vadd.f32 0.0, %v667
  %v669 = vpop.f32.mrf.mxu0
  %v670 = vpop.f32.mrf.mxu0
  %v671 = vadd.f32 0.0, %v670
  %v672 = vpop.f32.mrf.mxu0
  %673 = vmatprep.mubr.bf16.mxu0 %v524
  %674 = vmatmul.mubr.bf16.gmra.mxu0 %v523
  %v675 = vpop.f32.mrf.mxu0
  %v676 = vadd.f32 0.0, %v675
  %v677 = vpop.f32.mrf.mxu0
  %v678 = vpop.f32.mrf.mxu0
  %v679 = vadd.f32 0.0, %v678
  %v680 = vpop.f32.mrf.mxu0
  %681 = vmatprep.mubr.bf16.mxu0 %v526
  %682 = vmatmul.mubr.bf16.gmra.mxu0 %v525
  %v683 = vpop.f32.mrf.mxu0
  %v684 = vadd.f32 0.0, %v683
  %v685 = vpop.f32.mrf.mxu0
  %v686 = vpop.f32.mrf.mxu0
  %v687 = vadd.f32 0.0, %v686
  %v688 = vpop.f32.mrf.mxu0
  %689 = vmatprep.mubr.bf16.mxu0 %v528
  %690 = vmatmul.mubr.bf16.gmra.mxu0 %v527
  %v691 = vpop.f32.mrf.mxu0
  %v692 = vadd.f32 0.0, %v691
  %v693 = vpop.f32.mrf.mxu0
  %v694 = vpop.f32.mrf.mxu0
  %v695 = vadd.f32 0.0, %v694
  %v696 = vpop.f32.mrf.mxu0
  %697 = vmatprep.mubr.bf16.mxu0 %v530
  %698 = vmatmul.mubr.bf16.gmra.mxu0 %v529
  %v699 = vpop.f32.mrf.mxu0
  %v700 = vadd.f32 0.0, %v699
  %v701 = vpop.f32.mrf.mxu0
  %v702 = vpop.f32.mrf.mxu0
  %v703 = vadd.f32 0.0, %v702
  %v704 = vpop.f32.mrf.mxu0
  %705 = vmatprep.mubr.bf16.mxu0 %v532
  %706 = vmatmul.mubr.bf16.gmra.mxu0 %v531
  %v707 = vpop.f32.mrf.mxu0
  %v708 = vadd.f32 0.0, %v707
  %v709 = vpop.f32.mrf.mxu0
  %v710 = vpop.f32.mrf.mxu0
  %v711 = vadd.f32 0.0, %v710
  %v712 = vpop.f32.mrf.mxu0
  %713 = vmatprep.mubr.bf16.mxu0 %v534
  %714 = vmatmul.mubr.bf16.gmra.mxu0 %v533
  %v715 = vpop.f32.mrf.mxu0
  %v716 = vadd.f32 0.0, %v715
  %v717 = vpop.f32.mrf.mxu0
  %v718 = vpop.f32.mrf.mxu0
  %v719 = vadd.f32 0.0, %v718
  %v720 = vpop.f32.mrf.mxu0
  %721 = vmatprep.mubr.bf16.mxu0 %v536
  %722 = vmatmul.mubr.bf16.gmra.mxu0 %v535
  %v723 = vpop.f32.mrf.mxu0
  %v724 = vadd.f32 0.0, %v723
  %v725 = vpop.f32.mrf.mxu0
  %v726 = vpop.f32.mrf.mxu0
  %v727 = vadd.f32 0.0, %v726
  %v728 = vpop.f32.mrf.mxu0
  %729 = vdwg.mxu0
  %v730 = vadd.f32 %v329, %v604
  %v731 = vadd.f32 %v330, %v607
  %v732 = vadd.f32 %v331, %v612
  %v733 = vadd.f32 %v332, %v615
  %v734 = vadd.f32 %v333, %v620
  %v735 = vadd.f32 %v334, %v623
  %v736 = vadd.f32 %v335, %v628
  %v737 = vadd.f32 %v336, %v631
  %v738 = vadd.f32 %v337, %v636
  %v739 = vadd.f32 %v338, %v639
  %v740 = vadd.f32 %v339, %v644
  %v741 = vadd.f32 %v340, %v647
  %v742 = vadd.f32 %v341, %v652
  %v743 = vadd.f32 %v342, %v655
  %v744 = vadd.f32 %v343, %v660
  %v745 = vadd.f32 %v344, %v663
  %v746 = vadd.f32 %v345, %v668
  %v747 = vadd.f32 %v346, %v671
  %v748 = vadd.f32 %v347, %v676
  %v749 = vadd.f32 %v348, %v679
  %v750 = vadd.f32 %v349, %v684
  %v751 = vadd.f32 %v350, %v687
  %v752 = vadd.f32 %v351, %v692
  %v753 = vadd.f32 %v352, %v695
  %v754 = vadd.f32 %v353, %v700
  %v755 = vadd.f32 %v354, %v703
  %v756 = vadd.f32 %v355, %v708
  %v757 = vadd.f32 %v356, %v711
  %v758 = vadd.f32 %v357, %v716
  %v759 = vadd.f32 %v358, %v719
  %v760 = vadd.f32 %v359, %v724
  %v761 = vadd.f32 %v360, %v727
  %vm762 = vcmask 261120
  %763 = vst.msk [vmem:[#allocation2] sm:$0xff] %vm762, %v730
  %764 = vst.msk [vmem:[#allocation2 + $0x8] sm:$0xff] %vm762, %v731
  %765 = vst.msk [vmem:[#allocation2 + $0x10] sm:$0xff] %vm762, %v732
  %766 = vst.msk [vmem:[#allocation2 + $0x18] sm:$0xff] %vm762, %v733
  %767 = vst.msk [vmem:[#allocation2 + $0x20] sm:$0xff] %vm762, %v734
  %768 = vst.msk [vmem:[#allocation2 + $0x28] sm:$0xff] %vm762, %v735
  %769 = vst.msk [vmem:[#allocation2 + $0x30] sm:$0xff] %vm762, %v736
  %770 = vst.msk [vmem:[#allocation2 + $0x38] sm:$0xff] %vm762, %v737
  %771 = vst.msk [vmem:[#allocation2 + $0x40] sm:$0xff] %vm762, %v738
  %772 = vst.msk [vmem:[#allocation2 + $0x48] sm:$0xff] %vm762, %v739
  %773 = vst.msk [vmem:[#allocation2 + $0x50] sm:$0xff] %vm762, %v740
  %774 = vst.msk [vmem:[#allocation2 + $0x58] sm:$0xff] %vm762, %v741
  %775 = vst.msk [vmem:[#allocation2 + $0x60] sm:$0xff] %vm762, %v742
  %776 = vst.msk [vmem:[#allocation2 + $0x68] sm:$0xff] %vm762, %v743
  %777 = vst.msk [vmem:[#allocation2 + $0x70] sm:$0xff] %vm762, %v744
  %778 = vst.msk [vmem:[#allocation2 + $0x78] sm:$0xff] %vm762, %v745
  %779 = vst.msk [vmem:[#allocation2 + $0x80] sm:$0xff] %vm762, %v746
  %780 = vst.msk [vmem:[#allocation2 + $0x88] sm:$0xff] %vm762, %v747
  %781 = vst.msk [vmem:[#allocation2 + $0x90] sm:$0xff] %vm762, %v748
  %782 = vst.msk [vmem:[#allocation2 + $0x98] sm:$0xff] %vm762, %v749
  %783 = vst.msk [vmem:[#allocation2 + $0xa0] sm:$0xff] %vm762, %v750
  %784 = vst.msk [vmem:[#allocation2 + $0xa8] sm:$0xff] %vm762, %v751
  %785 = vst.msk [vmem:[#allocation2 + $0xb0] sm:$0xff] %vm762, %v752
  %786 = vst.msk [vmem:[#allocation2 + $0xb8] sm:$0xff] %vm762, %v753
  %787 = vst.msk [vmem:[#allocation2 + $0xc0] sm:$0xff] %vm762, %v754
  %788 = vst.msk [vmem:[#allocation2 + $0xc8] sm:$0xff] %vm762, %v755
  %789 = vst.msk [vmem:[#allocation2 + $0xd0] sm:$0xff] %vm762, %v756
  %790 = vst.msk [vmem:[#allocation2 + $0xd8] sm:$0xff] %vm762, %v757
  %791 = vst.msk [vmem:[#allocation2 + $0xe0] sm:$0xff] %vm762, %v758
  %792 = vst.msk [vmem:[#allocation2 + $0xe8] sm:$0xff] %vm762, %v759
  %793 = vst.msk [vmem:[#allocation2 + $0xf0] sm:$0xff] %vm762, %v760
  %794 = vst.msk [vmem:[#allocation2 + $0xf8] sm:$0xff] %vm762, %v761
  // Predicated region
  $region22: #{comga_forward.11} parent=0 // pred_check
    %p795 = pneg %p18
  $region23: #{comga_forward.11} parent=0 // pred_check_branch
    %797 = sbr.rel (%p795) target = $region25
  $region24: #{comga_forward.11} parent=0 // pred_region
    %v798 = vld [vmem:[#allocation2] sm:$0xff]
    %v799 = vld [vmem:[#allocation2 + $0x8] sm:$0xff]
    %v800 = vld [vmem:[#allocation2 + $0x10] sm:$0xff]
    %v801 = vld [vmem:[#allocation2 + $0x18] sm:$0xff]
    %v802 = vld [vmem:[#allocation2 + $0x20] sm:$0xff]
    %v803 = vld [vmem:[#allocation2 + $0x28] sm:$0xff]
    %v804 = vld [vmem:[#allocation2 + $0x30] sm:$0xff]
    %v805 = vld [vmem:[#allocation2 + $0x38] sm:$0xff]
    %v806 = vld [vmem:[#allocation2 + $0x40] sm:$0xff]
    %v807 = vld [vmem:[#allocation2 + $0x48] sm:$0xff]
    %v808 = vld [vmem:[#allocation2 + $0x50] sm:$0xff]
    %v809 = vld [vmem:[#allocation2 + $0x58] sm:$0xff]
    %v810 = vld [vmem:[#allocation2 + $0x60] sm:$0xff]
    %v811 = vld [vmem:[#allocation2 + $0x68] sm:$0xff]
    %v812 = vld [vmem:[#allocation2 + $0x70] sm:$0xff]
    %v813 = vld [vmem:[#allocation2 + $0x78] sm:$0xff]
    %v814 = vld [vmem:[#allocation2 + $0x80] sm:$0xff]
    %v815 = vld [vmem:[#allocation2 + $0x88] sm:$0xff]
    %v816 = vld [vmem:[#allocation2 + $0x90] sm:$0xff]
    %v817 = vld [vmem:[#allocation2 + $0x98] sm:$0xff]
    %v818 = vld [vmem:[#allocation2 + $0xa0] sm:$0xff]
    %v819 = vld [vmem:[#allocation2 + $0xa8] sm:$0xff]
    %v820 = vld [vmem:[#allocation2 + $0xb0] sm:$0xff]
    %v821 = vld [vmem:[#allocation2 + $0xb8] sm:$0xff]
    %v822 = vld [vmem:[#allocation2 + $0xc0] sm:$0xff]
    %v823 = vld [vmem:[#allocation2 + $0xc8] sm:$0xff]
    %v824 = vld [vmem:[#allocation2 + $0xd0] sm:$0xff]
    %v825 = vld [vmem:[#allocation2 + $0xd8] sm:$0xff]
    %v826 = vld [vmem:[#allocation2 + $0xe0] sm:$0xff]
    %v827 = vld [vmem:[#allocation2 + $0xe8] sm:$0xff]
    %v828 = vld [vmem:[#allocation2 + $0xf0] sm:$0xff]
    %v829 = vld [vmem:[#allocation2 + $0xf8] sm:$0xff]
    %v830 = vld [vmem:[%s3] sm:$0x1]
    %v832 = vlaneseq
    %v833 = vshrl.u32 %v832, 7
    %v834 = vsub.s32 0, %v833
    %v835 = vrot.slane %v830, %v834
    %v837 = vadd.f32 %v798, %v835
    %v838 = vadd.f32 %v799, %v835
    %v839 = vadd.f32 %v800, %v835
    %v840 = vadd.f32 %v801, %v835
    %v841 = vadd.f32 %v802, %v835
    %v842 = vadd.f32 %v803, %v835
    %v843 = vadd.f32 %v804, %v835
    %v844 = vadd.f32 %v805, %v835
    %v845 = vadd.f32 %v806, %v835
    %v846 = vadd.f32 %v807, %v835
    %v847 = vadd.f32 %v808, %v835
    %v848 = vadd.f32 %v809, %v835
    %v849 = vadd.f32 %v810, %v835
    %v850 = vadd.f32 %v811, %v835
    %v851 = vadd.f32 %v812, %v835
    %v852 = vadd.f32 %v813, %v835
    %v853 = vadd.f32 %v814, %v835
    %v854 = vadd.f32 %v815, %v835
    %v855 = vadd.f32 %v816, %v835
    %v856 = vadd.f32 %v817, %v835
    %v857 = vadd.f32 %v818, %v835
    %v858 = vadd.f32 %v819, %v835
    %v859 = vadd.f32 %v820, %v835
    %v860 = vadd.f32 %v821, %v835
    %v861 = vadd.f32 %v822, %v835
    %v862 = vadd.f32 %v823, %v835
    %v863 = vadd.f32 %v824, %v835
    %v864 = vadd.f32 %v825, %v835
    %v865 = vadd.f32 %v826, %v835
    %v866 = vadd.f32 %v827, %v835
    %v867 = vadd.f32 %v828, %v835
    %v868 = vadd.f32 %v829, %v835
    %v869 = vmax.f32 %v837, 0.0
    %v870 = vmax.f32 %v838, 0.0
    %v871 = vmax.f32 %v839, 0.0
    %v872 = vmax.f32 %v840, 0.0
    %v873 = vmax.f32 %v841, 0.0
    %v874 = vmax.f32 %v842, 0.0
    %v875 = vmax.f32 %v843, 0.0
    %v876 = vmax.f32 %v844, 0.0
    %v877 = vmax.f32 %v845, 0.0
    %v878 = vmax.f32 %v846, 0.0
    %v879 = vmax.f32 %v847, 0.0
    %v880 = vmax.f32 %v848, 0.0
    %v881 = vmax.f32 %v849, 0.0
    %v882 = vmax.f32 %v850, 0.0
    %v883 = vmax.f32 %v851, 0.0
    %v884 = vmax.f32 %v852, 0.0
    %v885 = vmax.f32 %v853, 0.0
    %v886 = vmax.f32 %v854, 0.0
    %v887 = vmax.f32 %v855, 0.0
    %v888 = vmax.f32 %v856, 0.0
    %v889 = vmax.f32 %v857, 0.0
    %v890 = vmax.f32 %v858, 0.0
    %v891 = vmax.f32 %v859, 0.0
    %v892 = vmax.f32 %v860, 0.0
    %v893 = vmax.f32 %v861, 0.0
    %v894 = vmax.f32 %v862, 0.0
    %v895 = vmax.f32 %v863, 0.0
    %v896 = vmax.f32 %v864, 0.0
    %v897 = vmax.f32 %v865, 0.0
    %v898 = vmax.f32 %v866, 0.0
    %v899 = vmax.f32 %v867, 0.0
    %v900 = vmax.f32 %v868, 0.0
    %901 = vst.msk [vmem:[%s4] sm:$0xff] %vm762, %v869
    %902 = vst.msk [vmem:[%s4 + $0x8] sm:$0xff] %vm762, %v870
    %903 = vst.msk [vmem:[%s4 + $0x10] sm:$0xff] %vm762, %v871
    %904 = vst.msk [vmem:[%s4 + $0x18] sm:$0xff] %vm762, %v872
    %905 = vst.msk [vmem:[%s4 + $0x20] sm:$0xff] %vm762, %v873
    %906 = vst.msk [vmem:[%s4 + $0x28] sm:$0xff] %vm762, %v874
    %907 = vst.msk [vmem:[%s4 + $0x30] sm:$0xff] %vm762, %v875
    %908 = vst.msk [vmem:[%s4 + $0x38] sm:$0xff] %vm762, %v876
    %909 = vst.msk [vmem:[%s4 + $0x40] sm:$0xff] %vm762, %v877
    %910 = vst.msk [vmem:[%s4 + $0x48] sm:$0xff] %vm762, %v878
    %911 = vst.msk [vmem:[%s4 + $0x50] sm:$0xff] %vm762, %v879
    %912 = vst.msk [vmem:[%s4 + $0x58] sm:$0xff] %vm762, %v880
    %913 = vst.msk [vmem:[%s4 + $0x60] sm:$0xff] %vm762, %v881
    %914 = vst.msk [vmem:[%s4 + $0x68] sm:$0xff] %vm762, %v882
    %915 = vst.msk [vmem:[%s4 + $0x70] sm:$0xff] %vm762, %v883
    %916 = vst.msk [vmem:[%s4 + $0x78] sm:$0xff] %vm762, %v884
    %917 = vst.msk [vmem:[%s4 + $0x80] sm:$0xff] %vm762, %v885
    %918 = vst.msk [vmem:[%s4 + $0x88] sm:$0xff] %vm762, %v886
    %919 = vst.msk [vmem:[%s4 + $0x90] sm:$0xff] %vm762, %v887
    %920 = vst.msk [vmem:[%s4 + $0x98] sm:$0xff] %vm762, %v888
    %921 = vst.msk [vmem:[%s4 + $0xa0] sm:$0xff] %vm762, %v889
    %922 = vst.msk [vmem:[%s4 + $0xa8] sm:$0xff] %vm762, %v890
    %923 = vst.msk [vmem:[%s4 + $0xb0] sm:$0xff] %vm762, %v891
    %924 = vst.msk [vmem:[%s4 + $0xb8] sm:$0xff] %vm762, %v892
    %925 = vst.msk [vmem:[%s4 + $0xc0] sm:$0xff] %vm762, %v893
    %926 = vst.msk [vmem:[%s4 + $0xc8] sm:$0xff] %vm762, %v894
    %927 = vst.msk [vmem:[%s4 + $0xd0] sm:$0xff] %vm762, %v895
    %928 = vst.msk [vmem:[%s4 + $0xd8] sm:$0xff] %vm762, %v896
    %929 = vst.msk [vmem:[%s4 + $0xe0] sm:$0xff] %vm762, %v897
    %930 = vst.msk [vmem:[%s4 + $0xe8] sm:$0xff] %vm762, %v898
    %931 = vst.msk [vmem:[%s4 + $0xf0] sm:$0xff] %vm762, %v899
    %932 = vst.msk [vmem:[%s4 + $0xf8] sm:$0xff] %vm762, %v900
  $region25: #{comga_forward.11} parent=0 // pred_fallthru
    _
  // Predicated region
  $region26: #{comga_forward.11} parent=0 // pred_check
    _
  $region27: #{comga_forward.11} parent=0 // pred_check_branch
    %934 = sbr.rel (0) target = $region29
  $region28: #{comga_forward.11} parent=0 // pred_region
    _
  $region29: #{comga_forward.11} parent=0 // pred_fallthru
    _
  // Predicated region
  $region30: #{comga_forward.11} parent=0 // pred_check
    _
  $region31: #{comga_forward.11} parent=0 // pred_check_branch
    %936 = sbr.rel (0) target = $region33
  $region32: #{comga_forward.11} parent=0 // pred_region
    _
  $region33: #{comga_forward.11} parent=0 // pred_fallthru
    _

// kernel: comga_forward.13
$region0: #{comga_forward.13}
  #allocation0 [shape = 'u32[]', space=smem, size = 0x4, offset = 0x4, fixed_abs, tag = 'smem constant byte address 0x4 - core index']
  #allocation1 [shape = 'u32[144,128]{1,0:T(1,128)}', space=vmem, size = 0x12000, scoped, tag = 'internal scratch']
  #allocation2 [shape = 'f32[256,8]{1,0:T(8,128)}', space=vmem, size = 0x20000, scoped, tag = 'scratch operand']
  %s0 = inlined_call_operand.vmem [shape: bf16[256,256], index: 0, kind: input, shape index: {}]
  %s1 = inlined_call_operand.vmem [shape: f32[256,16], index: 1, kind: input, shape index: {}]
  %s2 = inlined_call_operand.vmem [shape: f32[256,16], index: 2, kind: input, shape index: {}]
  %s3 = inlined_call_operand.vmem [shape: bf16[16,8], index: 3, kind: input, shape index: {}]
  %s4 = inlined_call_operand.vmem [shape: f32[1,8], index: 4, kind: input, shape index: {}]
  %s5 = inlined_call_operand.vmem [shape: f32[256,8], index: 5, kind: output, shape index: {}]
  %s6 = sld [smem:[#allocation0]]
  $region38: #{comga_forward.13} parent=0
    _
  %s8 = ssub.s32 1, %s6
  %s9 = scalar_select 0, %s8, %s6
  // Predicated region
  $region2: #{comga_forward.13} parent=0 // pred_check
    _
  $region3: #{comga_forward.13} parent=0 // pred_check_branch
    %11 = sbr.rel (0) target = $region5
  $region4: #{comga_forward.13} parent=0 // pred_region
    _
  $region5: #{comga_forward.13} parent=0 // pred_fallthru
    _
  // Predicated region
  $region6: #{comga_forward.13} parent=0 // pred_check
    _
  $region7: #{comga_forward.13} parent=0 // pred_check_branch
    %13 = sbr.rel (0) target = $region9
  $region8: #{comga_forward.13} parent=0 // pred_region
    _
  $region9: #{comga_forward.13} parent=0 // pred_fallthru
    _
  // Predicated region
  $region10: #{comga_forward.13} parent=0 // pred_check
    _
  $region11: #{comga_forward.13} parent=0 // pred_check_branch
    %15 = sbr.rel (0) target = $region13
  $region12: #{comga_forward.13} parent=0 // pred_region
    _
  $region13: #{comga_forward.13} parent=0 // pred_fallthru
    _
  // Predicated region
  $region14: #{comga_forward.13} parent=0 // pred_check
    _
  $region15: #{comga_forward.13} parent=0 // pred_check_branch
    %17 = sbr.rel (0) target = $region17
  $region16: #{comga_forward.13} parent=0 // pred_region
    _
  $region17: #{comga_forward.13} parent=0 // pred_fallthru
    _
  // Predicated region
  $region18: #{comga_forward.13} parent=0 // pred_check
    _
  $region19: #{comga_forward.13} parent=0 // pred_check_branch
    %19 = sbr.rel (0) target = $region21
  $region20: #{comga_forward.13} parent=0 // pred_region
    _
  $region21: #{comga_forward.13} parent=0 // pred_fallthru
    _
  %p21 = scmp.eq.s32.totalorder 0, 0
  // Predicated region
  $region22: #{comga_forward.13} parent=0 // pred_check
    %p22 = pneg %p21
  $region23: #{comga_forward.13} parent=0 // pred_check_branch
    %24 = sbr.rel (%p22) target = $region25
  $region24: #{comga_forward.13} parent=0 // pred_region
    %vm25 = vcmask 64512
    %26 = vst.msk [vmem:[#allocation2] sm:$0xff] %vm25, 0.0
    %27 = vst.msk [vmem:[#allocation2 + $0x8] sm:$0xff] %vm25, 0.0
    %28 = vst.msk [vmem:[#allocation2 + $0x10] sm:$0xff] %vm25, 0.0
    %29 = vst.msk [vmem:[#allocation2 + $0x18] sm:$0xff] %vm25, 0.0
    %30 = vst.msk [vmem:[#allocation2 + $0x20] sm:$0xff] %vm25, 0.0
    %31 = vst.msk [vmem:[#allocation2 + $0x28] sm:$0xff] %vm25, 0.0
    %32 = vst.msk [vmem:[#allocation2 + $0x30] sm:$0xff] %vm25, 0.0
    %33 = vst.msk [vmem:[#allocation2 + $0x38] sm:$0xff] %vm25, 0.0
    %34 = vst.msk [vmem:[#allocation2 + $0x40] sm:$0xff] %vm25, 0.0
    %35 = vst.msk [vmem:[#allocation2 + $0x48] sm:$0xff] %vm25, 0.0
    %36 = vst.msk [vmem:[#allocation2 + $0x50] sm:$0xff] %vm25, 0.0
    %37 = vst.msk [vmem:[#allocation2 + $0x58] sm:$0xff] %vm25, 0.0
    %38 = vst.msk [vmem:[#allocation2 + $0x60] sm:$0xff] %vm25, 0.0
    %39 = vst.msk [vmem:[#allocation2 + $0x68] sm:$0xff] %vm25, 0.0
    %40 = vst.msk [vmem:[#allocation2 + $0x70] sm:$0xff] %vm25, 0.0
    %41 = vst.msk [vmem:[#allocation2 + $0x78] sm:$0xff] %vm25, 0.0
    %42 = vst.msk [vmem:[#allocation2 + $0x80] sm:$0xff] %vm25, 0.0
    %43 = vst.msk [vmem:[#allocation2 + $0x88] sm:$0xff] %vm25, 0.0
    %44 = vst.msk [vmem:[#allocation2 + $0x90] sm:$0xff] %vm25, 0.0
    %45 = vst.msk [vmem:[#allocation2 + $0x98] sm:$0xff] %vm25, 0.0
    %46 = vst.msk [vmem:[#allocation2 + $0xa0] sm:$0xff] %vm25, 0.0
    %47 = vst.msk [vmem:[#allocation2 + $0xa8] sm:$0xff] %vm25, 0.0
    %48 = vst.msk [vmem:[#allocation2 + $0xb0] sm:$0xff] %vm25, 0.0
    %49 = vst.msk [vmem:[#allocation2 + $0xb8] sm:$0xff] %vm25, 0.0
    %50 = vst.msk [vmem:[#allocation2 + $0xc0] sm:$0xff] %vm25, 0.0
    %51 = vst.msk [vmem:[#allocation2 + $0xc8] sm:$0xff] %vm25, 0.0
    %52 = vst.msk [vmem:[#allocation2 + $0xd0] sm:$0xff] %vm25, 0.0
    %53 = vst.msk [vmem:[#allocation2 + $0xd8] sm:$0xff] %vm25, 0.0
    %54 = vst.msk [vmem:[#allocation2 + $0xe0] sm:$0xff] %vm25, 0.0
    %55 = vst.msk [vmem:[#allocation2 + $0xe8] sm:$0xff] %vm25, 0.0
    %56 = vst.msk [vmem:[#allocation2 + $0xf0] sm:$0xff] %vm25, 0.0
    %57 = vst.msk [vmem:[#allocation2 + $0xf8] sm:$0xff] %vm25, 0.0
  $region25: #{comga_forward.13} parent=0 // pred_fallthru
    _
  %v58 = vld [vmem:[%s1] sm:$0xff]
  %v59 = vld [vmem:[%s1 + $0x8] sm:$0xff]
  %v60 = vld [vmem:[%s1 + $0x10] sm:$0xff]
  %v61 = vld [vmem:[%s1 + $0x18] sm:$0xff]
  %v62 = vld [vmem:[%s1 + $0x20] sm:$0xff]
  %v63 = vld [vmem:[%s1 + $0x28] sm:$0xff]
  %v64 = vld [vmem:[%s1 + $0x30] sm:$0xff]
  %v65 = vld [vmem:[%s1 + $0x38] sm:$0xff]
  %v66 = vld [vmem:[%s1 + $0x40] sm:$0xff]
  %v67 = vld [vmem:[%s1 + $0x48] sm:$0xff]
  %v68 = vld [vmem:[%s1 + $0x50] sm:$0xff]
  %v69 = vld [vmem:[%s1 + $0x58] sm:$0xff]
  %v70 = vld [vmem:[%s1 + $0x60] sm:$0xff]
  %v71 = vld [vmem:[%s1 + $0x68] sm:$0xff]
  %v72 = vld [vmem:[%s1 + $0x70] sm:$0xff]
  %v73 = vld [vmem:[%s1 + $0x78] sm:$0xff]
  %v74 = vld [vmem:[%s1 + $0x80] sm:$0xff]
  %v75 = vld [vmem:[%s1 + $0x88] sm:$0xff]
  %v76 = vld [vmem:[%s1 + $0x90] sm:$0xff]
  %v77 = vld [vmem:[%s1 + $0x98] sm:$0xff]
  %v78 = vld [vmem:[%s1 + $0xa0] sm:$0xff]
  %v79 = vld [vmem:[%s1 + $0xa8] sm:$0xff]
  %v80 = vld [vmem:[%s1 + $0xb0] sm:$0xff]
  %v81 = vld [vmem:[%s1 + $0xb8] sm:$0xff]
  %v82 = vld [vmem:[%s1 + $0xc0] sm:$0xff]
  %v83 = vld [vmem:[%s1 + $0xc8] sm:$0xff]
  %v84 = vld [vmem:[%s1 + $0xd0] sm:$0xff]
  %v85 = vld [vmem:[%s1 + $0xd8] sm:$0xff]
  %v86 = vld [vmem:[%s1 + $0xe0] sm:$0xff]
  %v87 = vld [vmem:[%s1 + $0xe8] sm:$0xff]
  %v88 = vld [vmem:[%s1 + $0xf0] sm:$0xff]
  %v89 = vld [vmem:[%s1 + $0xf8] sm:$0xff]
  %v90 = vld [vmem:[%s2] sm:$0xff]
  %v91 = vld [vmem:[%s2 + $0x8] sm:$0xff]
  %v92 = vld [vmem:[%s2 + $0x10] sm:$0xff]
  %v93 = vld [vmem:[%s2 + $0x18] sm:$0xff]
  %v94 = vld [vmem:[%s2 + $0x20] sm:$0xff]
  %v95 = vld [vmem:[%s2 + $0x28] sm:$0xff]
  %v96 = vld [vmem:[%s2 + $0x30] sm:$0xff]
  %v97 = vld [vmem:[%s2 + $0x38] sm:$0xff]
  %v98 = vld [vmem:[%s2 + $0x40] sm:$0xff]
  %v99 = vld [vmem:[%s2 + $0x48] sm:$0xff]
  %v100 = vld [vmem:[%s2 + $0x50] sm:$0xff]
  %v101 = vld [vmem:[%s2 + $0x58] sm:$0xff]
  %v102 = vld [vmem:[%s2 + $0x60] sm:$0xff]
  %v103 = vld [vmem:[%s2 + $0x68] sm:$0xff]
  %v104 = vld [vmem:[%s2 + $0x70] sm:$0xff]
  %v105 = vld [vmem:[%s2 + $0x78] sm:$0xff]
  %v106 = vld [vmem:[%s2 + $0x80] sm:$0xff]
  %v107 = vld [vmem:[%s2 + $0x88] sm:$0xff]
  %v108 = vld [vmem:[%s2 + $0x90] sm:$0xff]
  %v109 = vld [vmem:[%s2 + $0x98] sm:$0xff]
  %v110 = vld [vmem:[%s2 + $0xa0] sm:$0xff]
  %v111 = vld [vmem:[%s2 + $0xa8] sm:$0xff]
  %v112 = vld [vmem:[%s2 + $0xb0] sm:$0xff]
  %v113 = vld [vmem:[%s2 + $0xb8] sm:$0xff]
  %v114 = vld [vmem:[%s2 + $0xc0] sm:$0xff]
  %v115 = vld [vmem:[%s2 + $0xc8] sm:$0xff]
  %v116 = vld [vmem:[%s2 + $0xd0] sm:$0xff]
  %v117 = vld [vmem:[%s2 + $0xd8] sm:$0xff]
  %v118 = vld [vmem:[%s2 + $0xe0] sm:$0xff]
  %v119 = vld [vmem:[%s2 + $0xe8] sm:$0xff]
  %v120 = vld [vmem:[%s2 + $0xf0] sm:$0xff]
  %v121 = vld [vmem:[%s2 + $0xf8] sm:$0xff]
  %v122 = vadd.f32 %v58, %v90
  %v123 = vadd.f32 %v59, %v91
  %v124 = vadd.f32 %v60, %v92
  %v125 = vadd.f32 %v61, %v93
  %v126 = vadd.f32 %v62, %v94
  %v127 = vadd.f32 %v63, %v95
  %v128 = vadd.f32 %v64, %v96
  %v129 = vadd.f32 %v65, %v97
  %v130 = vadd.f32 %v66, %v98
  %v131 = vadd.f32 %v67, %v99
  %v132 = vadd.f32 %v68, %v100
  %v133 = vadd.f32 %v69, %v101
  %v134 = vadd.f32 %v70, %v102
  %v135 = vadd.f32 %v71, %v103
  %v136 = vadd.f32 %v72, %v104
  %v137 = vadd.f32 %v73, %v105
  %v138 = vadd.f32 %v74, %v106
  %v139 = vadd.f32 %v75, %v107
  %v140 = vadd.f32 %v76, %v108
  %v141 = vadd.f32 %v77, %v109
  %v142 = vadd.f32 %v78, %v110
  %v143 = vadd.f32 %v79, %v111
  %v144 = vadd.f32 %v80, %v112
  %v145 = vadd.f32 %v81, %v113
  %v146 = vadd.f32 %v82, %v114
  %v147 = vadd.f32 %v83, %v115
  %v148 = vadd.f32 %v84, %v116
  %v149 = vadd.f32 %v85, %v117
  %v150 = vadd.f32 %v86, %v118
  %v151 = vadd.f32 %v87, %v119
  %v152 = vadd.f32 %v88, %v120
  %v153 = vadd.f32 %v89, %v121
  %v154 = vpack.c.bf16 %v123, %v122
  %v155 = vpack.c.bf16 %v125, %v124
  %v156 = vpack.c.bf16 %v127, %v126
  %v157 = vpack.c.bf16 %v129, %v128
  %v158 = vpack.c.bf16 %v131, %v130
  %v159 = vpack.c.bf16 %v133, %v132
  %v160 = vpack.c.bf16 %v135, %v134
  %v161 = vpack.c.bf16 %v137, %v136
  %v162 = vpack.c.bf16 %v139, %v138
  %v163 = vpack.c.bf16 %v141, %v140
  %v164 = vpack.c.bf16 %v143, %v142
  %v165 = vpack.c.bf16 %v145, %v144
  %v166 = vpack.c.bf16 %v147, %v146
  %v167 = vpack.c.bf16 %v149, %v148
  %v168 = vpack.c.bf16 %v151, %v150
  %v169 = vpack.c.bf16 %v153, %v152
  %v170 = vld [vmem:[%s3] sm:$0xf]
  %v171 = vld [vmem:[%s3 + $0x4] sm:$0xf]
  %v174 = vunpack.c.l.b16 %v170
  %v175 = vunpack.c.l.b16 %v171
  %v176 = vpack.c.b16 %v175, %v174
  %vm178 = vcmask 130048
  %v180 = vsel %vm178, %v154, 0
  %v183 = vsel %vm178, %v155, 0
  %v186 = vsel %vm178, %v156, 0
  %v189 = vsel %vm178, %v157, 0
  %v192 = vsel %vm178, %v158, 0
  %v195 = vsel %vm178, %v159, 0
  %v198 = vsel %vm178, %v160, 0
  %v201 = vsel %vm178, %v161, 0
  %v204 = vsel %vm178, %v162, 0
  %v207 = vsel %vm178, %v163, 0
  %v210 = vsel %vm178, %v164, 0
  %v213 = vsel %vm178, %v165, 0
  %v216 = vsel %vm178, %v166, 0
  %v219 = vsel %vm178, %v167, 0
  %v222 = vsel %vm178, %v168, 0
  %v225 = vsel %vm178, %v169, 0
  %227 = vmatprep.subr.bf16.mxu0 0
  %228 = vmatpush1.bf16.msra.mxu0 0
  %229 = vmatprep.subr.bf16.mxu0 0
  %230 = vmatpush1.bf16.msra.mxu0 0
  %231 = vmatprep.subr.bf16.mxu0 0
  %232 = vmatpush1.bf16.msra.mxu0 0
  %233 = vmatprep.subr.bf16.mxu0 0
  %234 = vmatpush1.bf16.msra.mxu0 0
  %235 = vmatprep.subr.bf16.mxu0 0
  %236 = vmatpush1.bf16.msra.mxu0 0
  %237 = vmatprep.subr.bf16.mxu0 0
  %238 = vmatpush1.bf16.msra.mxu0 0
  %239 = vmatprep.subr.bf16.mxu0 0
  %240 = vmatpush1.bf16.msra.mxu0 0
  %241 = vmatprep.subr.bf16.mxu0 0
  %242 = vmatpush1.bf16.msra.mxu0 %v176
  %243 = vmatprep.subr.bf16.mxu0 0
  %244 = vmatpush2.bf16.msra.mxu0 0
  %245 = vmatprep.subr.bf16.mxu0 0
  %246 = vmatpush2.bf16.msra.mxu0 0
  %247 = vmatprep.subr.bf16.mxu0 0
  %248 = vmatpush2.bf16.msra.mxu0 0
  %249 = vmatprep.subr.bf16.mxu0 0
  %250 = vmatpush2.bf16.msra.mxu0 0
  %251 = vmatprep.subr.bf16.mxu0 0
  %252 = vmatpush2.bf16.msra.mxu0 0
  %253 = vmatprep.subr.bf16.mxu0 0
  %254 = vmatpush2.bf16.msra.mxu0 0
  %255 = vmatprep.subr.bf16.mxu0 0
  %256 = vmatpush2.bf16.msra.mxu0 0
  %257 = vmatprep.subr.bf16.mxu0 0
  %258 = vmatpush2.bf16.msra.mxu0 0
  %259 = vmatprep.mubr.bf16.mxu0 0
  %260 = vmatmul.mubr.bf16.gmra.mxu0 %v180
  %v261 = vpop.f32.mrf.mxu0
  %v262 = vadd.f32 0.0, %v261
  %v263 = vpop.f32.mrf.mxu0
  %v264 = vpop.f32.mrf.mxu0
  %v265 = vadd.f32 0.0, %v264
  %v266 = vpop.f32.mrf.mxu0
  %267 = vmatprep.mubr.bf16.mxu0 0
  %268 = vmatmul.mubr.bf16.gmra.mxu0 %v183
  %v269 = vpop.f32.mrf.mxu0
  %v270 = vadd.f32 0.0, %v269
  %v271 = vpop.f32.mrf.mxu0
  %v272 = vpop.f32.mrf.mxu0
  %v273 = vadd.f32 0.0, %v272
  %v274 = vpop.f32.mrf.mxu0
  %275 = vmatprep.mubr.bf16.mxu0 0
  %276 = vmatmul.mubr.bf16.gmra.mxu0 %v186
  %v277 = vpop.f32.mrf.mxu0
  %v278 = vadd.f32 0.0, %v277
  %v279 = vpop.f32.mrf.mxu0
  %v280 = vpop.f32.mrf.mxu0
  %v281 = vadd.f32 0.0, %v280
  %v282 = vpop.f32.mrf.mxu0
  %283 = vmatprep.mubr.bf16.mxu0 0
  %284 = vmatmul.mubr.bf16.gmra.mxu0 %v189
  %v285 = vpop.f32.mrf.mxu0
  %v286 = vadd.f32 0.0, %v285
  %v287 = vpop.f32.mrf.mxu0
  %v288 = vpop.f32.mrf.mxu0
  %v289 = vadd.f32 0.0, %v288
  %v290 = vpop.f32.mrf.mxu0
  %291 = vmatprep.mubr.bf16.mxu0 0
  %292 = vmatmul.mubr.bf16.gmra.mxu0 %v192
  %v293 = vpop.f32.mrf.mxu0
  %v294 = vadd.f32 0.0, %v293
  %v295 = vpop.f32.mrf.mxu0
  %v296 = vpop.f32.mrf.mxu0
  %v297 = vadd.f32 0.0, %v296
  %v298 = vpop.f32.mrf.mxu0
  %299 = vmatprep.mubr.bf16.mxu0 0
  %300 = vmatmul.mubr.bf16.gmra.mxu0 %v195
  %v301 = vpop.f32.mrf.mxu0
  %v302 = vadd.f32 0.0, %v301
  %v303 = vpop.f32.mrf.mxu0
  %v304 = vpop.f32.mrf.mxu0
  %v305 = vadd.f32 0.0, %v304
  %v306 = vpop.f32.mrf.mxu0
  %307 = vmatprep.mubr.bf16.mxu0 0
  %308 = vmatmul.mubr.bf16.gmra.mxu0 %v198
  %v309 = vpop.f32.mrf.mxu0
  %v310 = vadd.f32 0.0, %v309
  %v311 = vpop.f32.mrf.mxu0
  %v312 = vpop.f32.mrf.mxu0
  %v313 = vadd.f32 0.0, %v312
  %v314 = vpop.f32.mrf.mxu0
  %315 = vmatprep.mubr.bf16.mxu0 0
  %316 = vmatmul.mubr.bf16.gmra.mxu0 %v201
  %v317 = vpop.f32.mrf.mxu0
  %v318 = vadd.f32 0.0, %v317
  %v319 = vpop.f32.mrf.mxu0
  %v320 = vpop.f32.mrf.mxu0
  %v321 = vadd.f32 0.0, %v320
  %v322 = vpop.f32.mrf.mxu0
  %323 = vmatprep.mubr.bf16.mxu0 0
  %324 = vmatmul.mubr.bf16.gmra.mxu0 %v204
  %v325 = vpop.f32.mrf.mxu0
  %v326 = vadd.f32 0.0, %v325
  %v327 = vpop.f32.mrf.mxu0
  %v328 = vpop.f32.mrf.mxu0
  %v329 = vadd.f32 0.0, %v328
  %v330 = vpop.f32.mrf.mxu0
  %331 = vmatprep.mubr.bf16.mxu0 0
  %332 = vmatmul.mubr.bf16.gmra.mxu0 %v207
  %v333 = vpop.f32.mrf.mxu0
  %v334 = vadd.f32 0.0, %v333
  %v335 = vpop.f32.mrf.mxu0
  %v336 = vpop.f32.mrf.mxu0
  %v337 = vadd.f32 0.0, %v336
  %v338 = vpop.f32.mrf.mxu0
  %339 = vmatprep.mubr.bf16.mxu0 0
  %340 = vmatmul.mubr.bf16.gmra.mxu0 %v210
  %v341 = vpop.f32.mrf.mxu0
  %v342 = vadd.f32 0.0, %v341
  %v343 = vpop.f32.mrf.mxu0
  %v344 = vpop.f32.mrf.mxu0
  %v345 = vadd.f32 0.0, %v344
  %v346 = vpop.f32.mrf.mxu0
  %347 = vmatprep.mubr.bf16.mxu0 0
  %348 = vmatmul.mubr.bf16.gmra.mxu0 %v213
  %v349 = vpop.f32.mrf.mxu0
  %v350 = vadd.f32 0.0, %v349
  %v351 = vpop.f32.mrf.mxu0
  %v352 = vpop.f32.mrf.mxu0
  %v353 = vadd.f32 0.0, %v352
  %v354 = vpop.f32.mrf.mxu0
  %355 = vmatprep.mubr.bf16.mxu0 0
  %356 = vmatmul.mubr.bf16.gmra.mxu0 %v216
  %v357 = vpop.f32.mrf.mxu0
  %v358 = vadd.f32 0.0, %v357
  %v359 = vpop.f32.mrf.mxu0
  %v360 = vpop.f32.mrf.mxu0
  %v361 = vadd.f32 0.0, %v360
  %v362 = vpop.f32.mrf.mxu0
  %363 = vmatprep.mubr.bf16.mxu0 0
  %364 = vmatmul.mubr.bf16.gmra.mxu0 %v219
  %v365 = vpop.f32.mrf.mxu0
  %v366 = vadd.f32 0.0, %v365
  %v367 = vpop.f32.mrf.mxu0
  %v368 = vpop.f32.mrf.mxu0
  %v369 = vadd.f32 0.0, %v368
  %v370 = vpop.f32.mrf.mxu0
  %371 = vmatprep.mubr.bf16.mxu0 0
  %372 = vmatmul.mubr.bf16.gmra.mxu0 %v222
  %v373 = vpop.f32.mrf.mxu0
  %v374 = vadd.f32 0.0, %v373
  %v375 = vpop.f32.mrf.mxu0
  %v376 = vpop.f32.mrf.mxu0
  %v377 = vadd.f32 0.0, %v376
  %v378 = vpop.f32.mrf.mxu0
  %379 = vmatprep.mubr.bf16.mxu0 0
  %380 = vmatmul.mubr.bf16.gmra.mxu0 %v225
  %v381 = vpop.f32.mrf.mxu0
  %v382 = vadd.f32 0.0, %v381
  %v383 = vpop.f32.mrf.mxu0
  %v384 = vpop.f32.mrf.mxu0
  %v385 = vadd.f32 0.0, %v384
  %v386 = vpop.f32.mrf.mxu0
  %387 = vdwg.mxu0
  %v388 = vld [vmem:[#allocation2] sm:$0xff]
  %v389 = vld [vmem:[#allocation2 + $0x8] sm:$0xff]
  %v390 = vld [vmem:[#allocation2 + $0x10] sm:$0xff]
  %v391 = vld [vmem:[#allocation2 + $0x18] sm:$0xff]
  %v392 = vld [vmem:[#allocation2 + $0x20] sm:$0xff]
  %v393 = vld [vmem:[#allocation2 + $0x28] sm:$0xff]
  %v394 = vld [vmem:[#allocation2 + $0x30] sm:$0xff]
  %v395 = vld [vmem:[#allocation2 + $0x38] sm:$0xff]
  %v396 = vld [vmem:[#allocation2 + $0x40] sm:$0xff]
  %v397 = vld [vmem:[#allocation2 + $0x48] sm:$0xff]
  %v398 = vld [vmem:[#allocation2 + $0x50] sm:$0xff]
  %v399 = vld [vmem:[#allocation2 + $0x58] sm:$0xff]
  %v400 = vld [vmem:[#allocation2 + $0x60] sm:$0xff]
  %v401 = vld [vmem:[#allocation2 + $0x68] sm:$0xff]
  %v402 = vld [vmem:[#allocation2 + $0x70] sm:$0xff]
  %v403 = vld [vmem:[#allocation2 + $0x78] sm:$0xff]
  %v404 = vld [vmem:[#allocation2 + $0x80] sm:$0xff]
  %v405 = vld [vmem:[#allocation2 + $0x88] sm:$0xff]
  %v406 = vld [vmem:[#allocation2 + $0x90] sm:$0xff]
  %v407 = vld [vmem:[#allocation2 + $0x98] sm:$0xff]
  %v408 = vld [vmem:[#allocation2 + $0xa0] sm:$0xff]
  %v409 = vld [vmem:[#allocation2 + $0xa8] sm:$0xff]
  %v410 = vld [vmem:[#allocation2 + $0xb0] sm:$0xff]
  %v411 = vld [vmem:[#allocation2 + $0xb8] sm:$0xff]
  %v412 = vld [vmem:[#allocation2 + $0xc0] sm:$0xff]
  %v413 = vld [vmem:[#allocation2 + $0xc8] sm:$0xff]
  %v414 = vld [vmem:[#allocation2 + $0xd0] sm:$0xff]
  %v415 = vld [vmem:[#allocation2 + $0xd8] sm:$0xff]
  %v416 = vld [vmem:[#allocation2 + $0xe0] sm:$0xff]
  %v417 = vld [vmem:[#allocation2 + $0xe8] sm:$0xff]
  %v418 = vld [vmem:[#allocation2 + $0xf0] sm:$0xff]
  %v419 = vld [vmem:[#allocation2 + $0xf8] sm:$0xff]
  %v420 = vld [vmem:[%s0] sm:$0xff]
  %v421 = vld [vmem:[%s0 + $0x8] sm:$0xff]
  %v422 = vld [vmem:[%s0 + $0x10] sm:$0xff]
  %v423 = vld [vmem:[%s0 + $0x18] sm:$0xff]
  %v424 = vld [vmem:[%s0 + $0x20] sm:$0xff]
  %v425 = vld [vmem:[%s0 + $0x28] sm:$0xff]
  %v426 = vld [vmem:[%s0 + $0x30] sm:$0xff]
  %v427 = vld [vmem:[%s0 + $0x38] sm:$0xff]
  %v428 = vld [vmem:[%s0 + $0x40] sm:$0xff]
  %v429 = vld [vmem:[%s0 + $0x48] sm:$0xff]
  %v430 = vld [vmem:[%s0 + $0x50] sm:$0xff]
  %v431 = vld [vmem:[%s0 + $0x58] sm:$0xff]
  %v432 = vld [vmem:[%s0 + $0x60] sm:$0xff]
  %v433 = vld [vmem:[%s0 + $0x68] sm:$0xff]
  %v434 = vld [vmem:[%s0 + $0x70] sm:$0xff]
  %v435 = vld [vmem:[%s0 + $0x78] sm:$0xff]
  %v436 = vld [vmem:[%s0 + $0x80] sm:$0xff]
  %v437 = vld [vmem:[%s0 + $0x88] sm:$0xff]
  %v438 = vld [vmem:[%s0 + $0x90] sm:$0xff]
  %v439 = vld [vmem:[%s0 + $0x98] sm:$0xff]
  %v440 = vld [vmem:[%s0 + $0xa0] sm:$0xff]
  %v441 = vld [vmem:[%s0 + $0xa8] sm:$0xff]
  %v442 = vld [vmem:[%s0 + $0xb0] sm:$0xff]
  %v443 = vld [vmem:[%s0 + $0xb8] sm:$0xff]
  %v444 = vld [vmem:[%s0 + $0xc0] sm:$0xff]
  %v445 = vld [vmem:[%s0 + $0xc8] sm:$0xff]
  %v446 = vld [vmem:[%s0 + $0xd0] sm:$0xff]
  %v447 = vld [vmem:[%s0 + $0xd8] sm:$0xff]
  %v448 = vld [vmem:[%s0 + $0xe0] sm:$0xff]
  %v449 = vld [vmem:[%s0 + $0xe8] sm:$0xff]
  %v450 = vld [vmem:[%s0 + $0xf0] sm:$0xff]
  %v451 = vld [vmem:[%s0 + $0xf8] sm:$0xff]
  %v452 = vpack.c.bf16 %v265, %v262
  %v453 = vpack.c.bf16 %v273, %v270
  %v454 = vpack.c.bf16 %v281, %v278
  %v455 = vpack.c.bf16 %v289, %v286
  %v456 = vpack.c.bf16 %v297, %v294
  %v457 = vpack.c.bf16 %v305, %v302
  %v458 = vpack.c.bf16 %v313, %v310
  %v459 = vpack.c.bf16 %v321, %v318
  %v460 = vpack.c.bf16 %v329, %v326
  %v461 = vpack.c.bf16 %v337, %v334
  %v462 = vpack.c.bf16 %v345, %v342
  %v463 = vpack.c.bf16 %v353, %v350
  %v464 = vpack.c.bf16 %v361, %v358
  %v465 = vpack.c.bf16 %v369, %v366
  %v466 = vpack.c.bf16 %v377, %v374
  %v467 = vpack.c.bf16 %v385, %v382
  %v500 = vunpack.c.l.b16 %v420
  %v501 = vunpack.c.h.b16 %v420
  %v502 = vunpack.c.l.b16 %v421
  %v503 = vunpack.c.h.b16 %v421
  %v504 = vunpack.c.l.b16 %v422
  %v505 = vunpack.c.h.b16 %v422
  %v506 = vunpack.c.l.b16 %v423
  %v507 = vunpack.c.h.b16 %v423
  %v508 = vunpack.c.l.b16 %v424
  %v509 = vunpack.c.h.b16 %v424
  %v510 = vunpack.c.l.b16 %v425
  %v511 = vunpack.c.h.b16 %v425
  %v512 = vunpack.c.l.b16 %v426
  %v513 = vunpack.c.h.b16 %v426
  %v514 = vunpack.c.l.b16 %v427
  %v515 = vunpack.c.h.b16 %v427
  %v516 = vunpack.c.l.b16 %v428
  %v517 = vunpack.c.h.b16 %v428
  %v518 = vunpack.c.l.b16 %v429
  %v519 = vunpack.c.h.b16 %v429
  %v520 = vunpack.c.l.b16 %v430
  %v521 = vunpack.c.h.b16 %v430
  %v522 = vunpack.c.l.b16 %v431
  %v523 = vunpack.c.h.b16 %v431
  %v524 = vunpack.c.l.b16 %v432
  %v525 = vunpack.c.h.b16 %v432
  %v526 = vunpack.c.l.b16 %v433
  %v527 = vunpack.c.h.b16 %v433
  %v528 = vunpack.c.l.b16 %v434
  %v529 = vunpack.c.h.b16 %v434
  %v530 = vunpack.c.l.b16 %v435
  %v531 = vunpack.c.h.b16 %v435
  %v532 = vunpack.c.l.b16 %v436
  %v533 = vunpack.c.h.b16 %v436
  %v534 = vunpack.c.l.b16 %v437
  %v535 = vunpack.c.h.b16 %v437
  %v536 = vunpack.c.l.b16 %v438
  %v537 = vunpack.c.h.b16 %v438
  %v538 = vunpack.c.l.b16 %v439
  %v539 = vunpack.c.h.b16 %v439
  %v540 = vunpack.c.l.b16 %v440
  %v541 = vunpack.c.h.b16 %v440
  %v542 = vunpack.c.l.b16 %v441
  %v543 = vunpack.c.h.b16 %v441
  %v544 = vunpack.c.l.b16 %v442
  %v545 = vunpack.c.h.b16 %v442
  %v546 = vunpack.c.l.b16 %v443
  %v547 = vunpack.c.h.b16 %v443
  %v548 = vunpack.c.l.b16 %v444
  %v549 = vunpack.c.h.b16 %v444
  %v550 = vunpack.c.l.b16 %v445
  %v551 = vunpack.c.h.b16 %v445
  %v552 = vunpack.c.l.b16 %v446
  %v553 = vunpack.c.h.b16 %v446
  %v554 = vunpack.c.l.b16 %v447
  %v555 = vunpack.c.h.b16 %v447
  %v556 = vunpack.c.l.b16 %v448
  %v557 = vunpack.c.h.b16 %v448
  %v558 = vunpack.c.l.b16 %v449
  %v559 = vunpack.c.h.b16 %v449
  %v560 = vunpack.c.l.b16 %v450
  %v561 = vunpack.c.h.b16 %v450
  %v562 = vunpack.c.l.b16 %v451
  %v563 = vunpack.c.h.b16 %v451
  %v564 = vpack.c.b16 %v502, %v500
  %v565 = vpack.c.b16 %v503, %v501
  %v566 = vpack.c.b16 %v506, %v504
  %v567 = vpack.c.b16 %v507, %v505
  %v568 = vpack.c.b16 %v510, %v508
  %v569 = vpack.c.b16 %v511, %v509
  %v570 = vpack.c.b16 %v514, %v512
  %v571 = vpack.c.b16 %v515, %v513
  %v572 = vpack.c.b16 %v518, %v516
  %v573 = vpack.c.b16 %v519, %v517
  %v574 = vpack.c.b16 %v522, %v520
  %v575 = vpack.c.b16 %v523, %v521
  %v576 = vpack.c.b16 %v526, %v524
  %v577 = vpack.c.b16 %v527, %v525
  %v578 = vpack.c.b16 %v530, %v528
  %v579 = vpack.c.b16 %v531, %v529
  %v580 = vpack.c.b16 %v534, %v532
  %v581 = vpack.c.b16 %v535, %v533
  %v582 = vpack.c.b16 %v538, %v536
  %v583 = vpack.c.b16 %v539, %v537
  %v584 = vpack.c.b16 %v542, %v540
  %v585 = vpack.c.b16 %v543, %v541
  %v586 = vpack.c.b16 %v546, %v544
  %v587 = vpack.c.b16 %v547, %v545
  %v588 = vpack.c.b16 %v550, %v548
  %v589 = vpack.c.b16 %v551, %v549
  %v590 = vpack.c.b16 %v554, %v552
  %v591 = vpack.c.b16 %v555, %v553
  %v592 = vpack.c.b16 %v558, %v556
  %v593 = vpack.c.b16 %v559, %v557
  %v594 = vpack.c.b16 %v562, %v560
  %v595 = vpack.c.b16 %v563, %v561
  %628 = vmatprep.subr.bf16.mxu0 0
  %629 = vmatpush1.bf16.msra.mxu0 %v459
  %630 = vmatprep.subr.bf16.mxu0 0
  %631 = vmatpush1.bf16.msra.mxu0 %v458
  %632 = vmatprep.subr.bf16.mxu0 0
  %633 = vmatpush1.bf16.msra.mxu0 %v457
  %634 = vmatprep.subr.bf16.mxu0 0
  %635 = vmatpush1.bf16.msra.mxu0 %v456
  %636 = vmatprep.subr.bf16.mxu0 0
  %637 = vmatpush1.bf16.msra.mxu0 %v455
  %638 = vmatprep.subr.bf16.mxu0 0
  %639 = vmatpush1.bf16.msra.mxu0 %v454
  %640 = vmatprep.subr.bf16.mxu0 0
  %641 = vmatpush1.bf16.msra.mxu0 %v453
  %642 = vmatprep.subr.bf16.mxu0 0
  %643 = vmatpush1.bf16.msra.mxu0 %v452
  %644 = vmatprep.subr.bf16.mxu0 0
  %645 = vmatpush2.bf16.msra.mxu0 %v467
  %646 = vmatprep.subr.bf16.mxu0 0
  %647 = vmatpush2.bf16.msra.mxu0 %v466
  %648 = vmatprep.subr.bf16.mxu0 0
  %649 = vmatpush2.bf16.msra.mxu0 %v465
  %650 = vmatprep.subr.bf16.mxu0 0
  %651 = vmatpush2.bf16.msra.mxu0 %v464
  %652 = vmatprep.subr.bf16.mxu0 0
  %653 = vmatpush2.bf16.msra.mxu0 %v463
  %654 = vmatprep.subr.bf16.mxu0 0
  %655 = vmatpush2.bf16.msra.mxu0 %v462
  %656 = vmatprep.subr.bf16.mxu0 0
  %657 = vmatpush2.bf16.msra.mxu0 %v461
  %658 = vmatprep.subr.bf16.mxu0 0
  %659 = vmatpush2.bf16.msra.mxu0 %v460
  %660 = vmatprep.mubr.bf16.mxu0 %v565
  %661 = vmatmul.mubr.bf16.gmra.mxu0 %v564
  %v662 = vpop.f32.mrf.mxu0
  %v663 = vadd.f32 0.0, %v662
  %v664 = vpop.f32.mrf.mxu0
  %v665 = vpop.f32.mrf.mxu0
  %v666 = vadd.f32 0.0, %v665
  %v667 = vpop.f32.mrf.mxu0
  %668 = vmatprep.mubr.bf16.mxu0 %v567
  %669 = vmatmul.mubr.bf16.gmra.mxu0 %v566
  %v670 = vpop.f32.mrf.mxu0
  %v671 = vadd.f32 0.0, %v670
  %v672 = vpop.f32.mrf.mxu0
  %v673 = vpop.f32.mrf.mxu0
  %v674 = vadd.f32 0.0, %v673
  %v675 = vpop.f32.mrf.mxu0
  %676 = vmatprep.mubr.bf16.mxu0 %v569
  %677 = vmatmul.mubr.bf16.gmra.mxu0 %v568
  %v678 = vpop.f32.mrf.mxu0
  %v679 = vadd.f32 0.0, %v678
  %v680 = vpop.f32.mrf.mxu0
  %v681 = vpop.f32.mrf.mxu0
  %v682 = vadd.f32 0.0, %v681
  %v683 = vpop.f32.mrf.mxu0
  %684 = vmatprep.mubr.bf16.mxu0 %v571
  %685 = vmatmul.mubr.bf16.gmra.mxu0 %v570
  %v686 = vpop.f32.mrf.mxu0
  %v687 = vadd.f32 0.0, %v686
  %v688 = vpop.f32.mrf.mxu0
  %v689 = vpop.f32.mrf.mxu0
  %v690 = vadd.f32 0.0, %v689
  %v691 = vpop.f32.mrf.mxu0
  %692 = vmatprep.mubr.bf16.mxu0 %v573
  %693 = vmatmul.mubr.bf16.gmra.mxu0 %v572
  %v694 = vpop.f32.mrf.mxu0
  %v695 = vadd.f32 0.0, %v694
  %v696 = vpop.f32.mrf.mxu0
  %v697 = vpop.f32.mrf.mxu0
  %v698 = vadd.f32 0.0, %v697
  %v699 = vpop.f32.mrf.mxu0
  %700 = vmatprep.mubr.bf16.mxu0 %v575
  %701 = vmatmul.mubr.bf16.gmra.mxu0 %v574
  %v702 = vpop.f32.mrf.mxu0
  %v703 = vadd.f32 0.0, %v702
  %v704 = vpop.f32.mrf.mxu0
  %v705 = vpop.f32.mrf.mxu0
  %v706 = vadd.f32 0.0, %v705
  %v707 = vpop.f32.mrf.mxu0
  %708 = vmatprep.mubr.bf16.mxu0 %v577
  %709 = vmatmul.mubr.bf16.gmra.mxu0 %v576
  %v710 = vpop.f32.mrf.mxu0
  %v711 = vadd.f32 0.0, %v710
  %v712 = vpop.f32.mrf.mxu0
  %v713 = vpop.f32.mrf.mxu0
  %v714 = vadd.f32 0.0, %v713
  %v715 = vpop.f32.mrf.mxu0
  %716 = vmatprep.mubr.bf16.mxu0 %v579
  %717 = vmatmul.mubr.bf16.gmra.mxu0 %v578
  %v718 = vpop.f32.mrf.mxu0
  %v719 = vadd.f32 0.0, %v718
  %v720 = vpop.f32.mrf.mxu0
  %v721 = vpop.f32.mrf.mxu0
  %v722 = vadd.f32 0.0, %v721
  %v723 = vpop.f32.mrf.mxu0
  %724 = vmatprep.mubr.bf16.mxu0 %v581
  %725 = vmatmul.mubr.bf16.gmra.mxu0 %v580
  %v726 = vpop.f32.mrf.mxu0
  %v727 = vadd.f32 0.0, %v726
  %v728 = vpop.f32.mrf.mxu0
  %v729 = vpop.f32.mrf.mxu0
  %v730 = vadd.f32 0.0, %v729
  %v731 = vpop.f32.mrf.mxu0
  %732 = vmatprep.mubr.bf16.mxu0 %v583
  %733 = vmatmul.mubr.bf16.gmra.mxu0 %v582
  %v734 = vpop.f32.mrf.mxu0
  %v735 = vadd.f32 0.0, %v734
  %v736 = vpop.f32.mrf.mxu0
  %v737 = vpop.f32.mrf.mxu0
  %v738 = vadd.f32 0.0, %v737
  %v739 = vpop.f32.mrf.mxu0
  %740 = vmatprep.mubr.bf16.mxu0 %v585
  %741 = vmatmul.mubr.bf16.gmra.mxu0 %v584
  %v742 = vpop.f32.mrf.mxu0
  %v743 = vadd.f32 0.0, %v742
  %v744 = vpop.f32.mrf.mxu0
  %v745 = vpop.f32.mrf.mxu0
  %v746 = vadd.f32 0.0, %v745
  %v747 = vpop.f32.mrf.mxu0
  %748 = vmatprep.mubr.bf16.mxu0 %v587
  %749 = vmatmul.mubr.bf16.gmra.mxu0 %v586
  %v750 = vpop.f32.mrf.mxu0
  %v751 = vadd.f32 0.0, %v750
  %v752 = vpop.f32.mrf.mxu0
  %v753 = vpop.f32.mrf.mxu0
  %v754 = vadd.f32 0.0, %v753
  %v755 = vpop.f32.mrf.mxu0
  %756 = vmatprep.mubr.bf16.mxu0 %v589
  %757 = vmatmul.mubr.bf16.gmra.mxu0 %v588
  %v758 = vpop.f32.mrf.mxu0
  %v759 = vadd.f32 0.0, %v758
  %v760 = vpop.f32.mrf.mxu0
  %v761 = vpop.f32.mrf.mxu0
  %v762 = vadd.f32 0.0, %v761
  %v763 = vpop.f32.mrf.mxu0
  %764 = vmatprep.mubr.bf16.mxu0 %v591
  %765 = vmatmul.mubr.bf16.gmra.mxu0 %v590
  %v766 = vpop.f32.mrf.mxu0
  %v767 = vadd.f32 0.0, %v766
  %v768 = vpop.f32.mrf.mxu0
  %v769 = vpop.f32.mrf.mxu0
  %v770 = vadd.f32 0.0, %v769
  %v771 = vpop.f32.mrf.mxu0
  %772 = vmatprep.mubr.bf16.mxu0 %v593
  %773 = vmatmul.mubr.bf16.gmra.mxu0 %v592
  %v774 = vpop.f32.mrf.mxu0
  %v775 = vadd.f32 0.0, %v774
  %v776 = vpop.f32.mrf.mxu0
  %v777 = vpop.f32.mrf.mxu0
  %v778 = vadd.f32 0.0, %v777
  %v779 = vpop.f32.mrf.mxu0
  %780 = vmatprep.mubr.bf16.mxu0 %v595
  %781 = vmatmul.mubr.bf16.gmra.mxu0 %v594
  %v782 = vpop.f32.mrf.mxu0
  %v783 = vadd.f32 0.0, %v782
  %v784 = vpop.f32.mrf.mxu0
  %v785 = vpop.f32.mrf.mxu0
  %v786 = vadd.f32 0.0, %v785
  %v787 = vpop.f32.mrf.mxu0
  %788 = vdwg.mxu0
  %v789 = vadd.f32 %v388, %v663
  %v790 = vadd.f32 %v389, %v666
  %v791 = vadd.f32 %v390, %v671
  %v792 = vadd.f32 %v391, %v674
  %v793 = vadd.f32 %v392, %v679
  %v794 = vadd.f32 %v393, %v682
  %v795 = vadd.f32 %v394, %v687
  %v796 = vadd.f32 %v395, %v690
  %v797 = vadd.f32 %v396, %v695
  %v798 = vadd.f32 %v397, %v698
  %v799 = vadd.f32 %v398, %v703
  %v800 = vadd.f32 %v399, %v706
  %v801 = vadd.f32 %v400, %v711
  %v802 = vadd.f32 %v401, %v714
  %v803 = vadd.f32 %v402, %v719
  %v804 = vadd.f32 %v403, %v722
  %v805 = vadd.f32 %v404, %v727
  %v806 = vadd.f32 %v405, %v730
  %v807 = vadd.f32 %v406, %v735
  %v808 = vadd.f32 %v407, %v738
  %v809 = vadd.f32 %v408, %v743
  %v810 = vadd.f32 %v409, %v746
  %v811 = vadd.f32 %v410, %v751
  %v812 = vadd.f32 %v411, %v754
  %v813 = vadd.f32 %v412, %v759
  %v814 = vadd.f32 %v413, %v762
  %v815 = vadd.f32 %v414, %v767
  %v816 = vadd.f32 %v415, %v770
  %v817 = vadd.f32 %v416, %v775
  %v818 = vadd.f32 %v417, %v778
  %v819 = vadd.f32 %v418, %v783
  %v820 = vadd.f32 %v419, %v786
  %vm821 = vcmask 64512
  %822 = vst.msk [vmem:[#allocation2] sm:$0xff] %vm821, %v789
  %823 = vst.msk [vmem:[#allocation2 + $0x8] sm:$0xff] %vm821, %v790
  %824 = vst.msk [vmem:[#allocation2 + $0x10] sm:$0xff] %vm821, %v791
  %825 = vst.msk [vmem:[#allocation2 + $0x18] sm:$0xff] %vm821, %v792
  %826 = vst.msk [vmem:[#allocation2 + $0x20] sm:$0xff] %vm821, %v793
  %827 = vst.msk [vmem:[#allocation2 + $0x28] sm:$0xff] %vm821, %v794
  %828 = vst.msk [vmem:[#allocation2 + $0x30] sm:$0xff] %vm821, %v795
  %829 = vst.msk [vmem:[#allocation2 + $0x38] sm:$0xff] %vm821, %v796
  %830 = vst.msk [vmem:[#allocation2 + $0x40] sm:$0xff] %vm821, %v797
  %831 = vst.msk [vmem:[#allocation2 + $0x48] sm:$0xff] %vm821, %v798
  %832 = vst.msk [vmem:[#allocation2 + $0x50] sm:$0xff] %vm821, %v799
  %833 = vst.msk [vmem:[#allocation2 + $0x58] sm:$0xff] %vm821, %v800
  %834 = vst.msk [vmem:[#allocation2 + $0x60] sm:$0xff] %vm821, %v801
  %835 = vst.msk [vmem:[#allocation2 + $0x68] sm:$0xff] %vm821, %v802
  %836 = vst.msk [vmem:[#allocation2 + $0x70] sm:$0xff] %vm821, %v803
  %837 = vst.msk [vmem:[#allocation2 + $0x78] sm:$0xff] %vm821, %v804
  %838 = vst.msk [vmem:[#allocation2 + $0x80] sm:$0xff] %vm821, %v805
  %839 = vst.msk [vmem:[#allocation2 + $0x88] sm:$0xff] %vm821, %v806
  %840 = vst.msk [vmem:[#allocation2 + $0x90] sm:$0xff] %vm821, %v807
  %841 = vst.msk [vmem:[#allocation2 + $0x98] sm:$0xff] %vm821, %v808
  %842 = vst.msk [vmem:[#allocation2 + $0xa0] sm:$0xff] %vm821, %v809
  %843 = vst.msk [vmem:[#allocation2 + $0xa8] sm:$0xff] %vm821, %v810
  %844 = vst.msk [vmem:[#allocation2 + $0xb0] sm:$0xff] %vm821, %v811
  %845 = vst.msk [vmem:[#allocation2 + $0xb8] sm:$0xff] %vm821, %v812
  %846 = vst.msk [vmem:[#allocation2 + $0xc0] sm:$0xff] %vm821, %v813
  %847 = vst.msk [vmem:[#allocation2 + $0xc8] sm:$0xff] %vm821, %v814
  %848 = vst.msk [vmem:[#allocation2 + $0xd0] sm:$0xff] %vm821, %v815
  %849 = vst.msk [vmem:[#allocation2 + $0xd8] sm:$0xff] %vm821, %v816
  %850 = vst.msk [vmem:[#allocation2 + $0xe0] sm:$0xff] %vm821, %v817
  %851 = vst.msk [vmem:[#allocation2 + $0xe8] sm:$0xff] %vm821, %v818
  %852 = vst.msk [vmem:[#allocation2 + $0xf0] sm:$0xff] %vm821, %v819
  %853 = vst.msk [vmem:[#allocation2 + $0xf8] sm:$0xff] %vm821, %v820
  // Predicated region
  $region26: #{comga_forward.13} parent=0 // pred_check
    %p854 = pneg %p21
  $region27: #{comga_forward.13} parent=0 // pred_check_branch
    %856 = sbr.rel (%p854) target = $region29
  $region28: #{comga_forward.13} parent=0 // pred_region
    %v857 = vld [vmem:[#allocation2] sm:$0xff]
    %v858 = vld [vmem:[#allocation2 + $0x8] sm:$0xff]
    %v859 = vld [vmem:[#allocation2 + $0x10] sm:$0xff]
    %v860 = vld [vmem:[#allocation2 + $0x18] sm:$0xff]
    %v861 = vld [vmem:[#allocation2 + $0x20] sm:$0xff]
    %v862 = vld [vmem:[#allocation2 + $0x28] sm:$0xff]
    %v863 = vld [vmem:[#allocation2 + $0x30] sm:$0xff]
    %v864 = vld [vmem:[#allocation2 + $0x38] sm:$0xff]
    %v865 = vld [vmem:[#allocation2 + $0x40] sm:$0xff]
    %v866 = vld [vmem:[#allocation2 + $0x48] sm:$0xff]
    %v867 = vld [vmem:[#allocation2 + $0x50] sm:$0xff]
    %v868 = vld [vmem:[#allocation2 + $0x58] sm:$0xff]
    %v869 = vld [vmem:[#allocation2 + $0x60] sm:$0xff]
    %v870 = vld [vmem:[#allocation2 + $0x68] sm:$0xff]
    %v871 = vld [vmem:[#allocation2 + $0x70] sm:$0xff]
    %v872 = vld [vmem:[#allocation2 + $0x78] sm:$0xff]
    %v873 = vld [vmem:[#allocation2 + $0x80] sm:$0xff]
    %v874 = vld [vmem:[#allocation2 + $0x88] sm:$0xff]
    %v875 = vld [vmem:[#allocation2 + $0x90] sm:$0xff]
    %v876 = vld [vmem:[#allocation2 + $0x98] sm:$0xff]
    %v877 = vld [vmem:[#allocation2 + $0xa0] sm:$0xff]
    %v878 = vld [vmem:[#allocation2 + $0xa8] sm:$0xff]
    %v879 = vld [vmem:[#allocation2 + $0xb0] sm:$0xff]
    %v880 = vld [vmem:[#allocation2 + $0xb8] sm:$0xff]
    %v881 = vld [vmem:[#allocation2 + $0xc0] sm:$0xff]
    %v882 = vld [vmem:[#allocation2 + $0xc8] sm:$0xff]
    %v883 = vld [vmem:[#allocation2 + $0xd0] sm:$0xff]
    %v884 = vld [vmem:[#allocation2 + $0xd8] sm:$0xff]
    %v885 = vld [vmem:[#allocation2 + $0xe0] sm:$0xff]
    %v886 = vld [vmem:[#allocation2 + $0xe8] sm:$0xff]
    %v887 = vld [vmem:[#allocation2 + $0xf0] sm:$0xff]
    %v888 = vld [vmem:[#allocation2 + $0xf8] sm:$0xff]
    %v889 = vld [vmem:[%s4] sm:$0x1]
    %v891 = vlaneseq
    %v892 = vshrl.u32 %v891, 7
    %v893 = vsub.s32 0, %v892
    %v894 = vrot.slane %v889, %v893
    %v896 = vadd.f32 %v857, %v894
    %v897 = vadd.f32 %v858, %v894
    %v898 = vadd.f32 %v859, %v894
    %v899 = vadd.f32 %v860, %v894
    %v900 = vadd.f32 %v861, %v894
    %v901 = vadd.f32 %v862, %v894
    %v902 = vadd.f32 %v863, %v894
    %v903 = vadd.f32 %v864, %v894
    %v904 = vadd.f32 %v865, %v894
    %v905 = vadd.f32 %v866, %v894
    %v906 = vadd.f32 %v867, %v894
    %v907 = vadd.f32 %v868, %v894
    %v908 = vadd.f32 %v869, %v894
    %v909 = vadd.f32 %v870, %v894
    %v910 = vadd.f32 %v871, %v894
    %v911 = vadd.f32 %v872, %v894
    %v912 = vadd.f32 %v873, %v894
    %v913 = vadd.f32 %v874, %v894
    %v914 = vadd.f32 %v875, %v894
    %v915 = vadd.f32 %v876, %v894
    %v916 = vadd.f32 %v877, %v894
    %v917 = vadd.f32 %v878, %v894
    %v918 = vadd.f32 %v879, %v894
    %v919 = vadd.f32 %v880, %v894
    %v920 = vadd.f32 %v881, %v894
    %v921 = vadd.f32 %v882, %v894
    %v922 = vadd.f32 %v883, %v894
    %v923 = vadd.f32 %v884, %v894
    %v924 = vadd.f32 %v885, %v894
    %v925 = vadd.f32 %v886, %v894
    %v926 = vadd.f32 %v887, %v894
    %v927 = vadd.f32 %v888, %v894
    %v928 = vmax.f32 %v896, 0.0
    %v929 = vmax.f32 %v897, 0.0
    %v930 = vmax.f32 %v898, 0.0
    %v931 = vmax.f32 %v899, 0.0
    %v932 = vmax.f32 %v900, 0.0
    %v933 = vmax.f32 %v901, 0.0
    %v934 = vmax.f32 %v902, 0.0
    %v935 = vmax.f32 %v903, 0.0
    %v936 = vmax.f32 %v904, 0.0
    %v937 = vmax.f32 %v905, 0.0
    %v938 = vmax.f32 %v906, 0.0
    %v939 = vmax.f32 %v907, 0.0
    %v940 = vmax.f32 %v908, 0.0
    %v941 = vmax.f32 %v909, 0.0
    %v942 = vmax.f32 %v910, 0.0
    %v943 = vmax.f32 %v911, 0.0
    %v944 = vmax.f32 %v912, 0.0
    %v945 = vmax.f32 %v913, 0.0
    %v946 = vmax.f32 %v914, 0.0
    %v947 = vmax.f32 %v915, 0.0
    %v948 = vmax.f32 %v916, 0.0
    %v949 = vmax.f32 %v917, 0.0
    %v950 = vmax.f32 %v918, 0.0
    %v951 = vmax.f32 %v919, 0.0
    %v952 = vmax.f32 %v920, 0.0
    %v953 = vmax.f32 %v921, 0.0
    %v954 = vmax.f32 %v922, 0.0
    %v955 = vmax.f32 %v923, 0.0
    %v956 = vmax.f32 %v924, 0.0
    %v957 = vmax.f32 %v925, 0.0
    %v958 = vmax.f32 %v926, 0.0
    %v959 = vmax.f32 %v927, 0.0
    %960 = vst.msk [vmem:[%s5] sm:$0xff] %vm821, %v928
    %961 = vst.msk [vmem:[%s5 + $0x8] sm:$0xff] %vm821, %v929
    %962 = vst.msk [vmem:[%s5 + $0x10] sm:$0xff] %vm821, %v930
    %963 = vst.msk [vmem:[%s5 + $0x18] sm:$0xff] %vm821, %v931
    %964 = vst.msk [vmem:[%s5 + $0x20] sm:$0xff] %vm821, %v932
    %965 = vst.msk [vmem:[%s5 + $0x28] sm:$0xff] %vm821, %v933
    %966 = vst.msk [vmem:[%s5 + $0x30] sm:$0xff] %vm821, %v934
    %967 = vst.msk [vmem:[%s5 + $0x38] sm:$0xff] %vm821, %v935
    %968 = vst.msk [vmem:[%s5 + $0x40] sm:$0xff] %vm821, %v936
    %969 = vst.msk [vmem:[%s5 + $0x48] sm:$0xff] %vm821, %v937
    %970 = vst.msk [vmem:[%s5 + $0x50] sm:$0xff] %vm821, %v938
    %971 = vst.msk [vmem:[%s5 + $0x58] sm:$0xff] %vm821, %v939
    %972 = vst.msk [vmem:[%s5 + $0x60] sm:$0xff] %vm821, %v940
    %973 = vst.msk [vmem:[%s5 + $0x68] sm:$0xff] %vm821, %v941
    %974 = vst.msk [vmem:[%s5 + $0x70] sm:$0xff] %vm821, %v942
    %975 = vst.msk [vmem:[%s5 + $0x78] sm:$0xff] %vm821, %v943
    %976 = vst.msk [vmem:[%s5 + $0x80] sm:$0xff] %vm821, %v944
    %977 = vst.msk [vmem:[%s5 + $0x88] sm:$0xff] %vm821, %v945
    %978 = vst.msk [vmem:[%s5 + $0x90] sm:$0xff] %vm821, %v946
    %979 = vst.msk [vmem:[%s5 + $0x98] sm:$0xff] %vm821, %v947
    %980 = vst.msk [vmem:[%s5 + $0xa0] sm:$0xff] %vm821, %v948
    %981 = vst.msk [vmem:[%s5 + $0xa8] sm:$0xff] %vm821, %v949
    %982 = vst.msk [vmem:[%s5 + $0xb0] sm:$0xff] %vm821, %v950
    %983 = vst.msk [vmem:[%s5 + $0xb8] sm:$0xff] %vm821, %v951
    %984 = vst.msk [vmem:[%s5 + $0xc0] sm:$0xff] %vm821, %v952
    %985 = vst.msk [vmem:[%s5 + $0xc8] sm:$0xff] %vm821, %v953
    %986 = vst.msk [vmem:[%s5 + $0xd0] sm:$0xff] %vm821, %v954
    %987 = vst.msk [vmem:[%s5 + $0xd8] sm:$0xff] %vm821, %v955
    %988 = vst.msk [vmem:[%s5 + $0xe0] sm:$0xff] %vm821, %v956
    %989 = vst.msk [vmem:[%s5 + $0xe8] sm:$0xff] %vm821, %v957
    %990 = vst.msk [vmem:[%s5 + $0xf0] sm:$0xff] %vm821, %v958
    %991 = vst.msk [vmem:[%s5 + $0xf8] sm:$0xff] %vm821, %v959
  $region29: #{comga_forward.13} parent=0 // pred_fallthru
    _
  // Predicated region
  $region30: #{comga_forward.13} parent=0 // pred_check
    _
  $region31: #{comga_forward.13} parent=0 // pred_check_branch
    %993 = sbr.rel (0) target = $region33
  $region32: #{comga_forward.13} parent=0 // pred_region
    _
  $region33: #{comga_forward.13} parent=0 // pred_fallthru
    _
  // Predicated region
  $region34: #{comga_forward.13} parent=0 // pred_check
    _
  $region35: #{comga_forward.13} parent=0 // pred_check_branch
    %995 = sbr.rel (0) target = $region37
  $region36: #{comga_forward.13} parent=0 // pred_region
    _
  $region37: #{comga_forward.13} parent=0 // pred_fallthru
    _

// kernel: comga_forward.12
$region0: #{comga_forward.12}
  #allocation0 [shape = 'u32[]', space=smem, size = 0x4, offset = 0x4, fixed_abs, tag = 'smem constant byte address 0x4 - core index']
  #allocation1 [shape = 'u32[144,128]{1,0:T(1,128)}', space=vmem, size = 0x12000, scoped, tag = 'internal scratch']
  #allocation2 [shape = 'f32[256,16]{1,0:T(8,128)}', space=vmem, size = 0x20000, scoped, tag = 'scratch operand']
  %s0 = inlined_call_operand.vmem [shape: bf16[256,256], index: 0, kind: input, shape index: {}]
  %s1 = inlined_call_operand.vmem [shape: f32[256,32], index: 1, kind: input, shape index: {}]
  %s2 = inlined_call_operand.vmem [shape: f32[256,32], index: 2, kind: input, shape index: {}]
  %s3 = inlined_call_operand.vmem [shape: bf16[32,16], index: 3, kind: input, shape index: {}]
  %s4 = inlined_call_operand.vmem [shape: f32[1,16], index: 4, kind: input, shape index: {}]
  %s5 = inlined_call_operand.vmem [shape: f32[256,16], index: 5, kind: output, shape index: {}]
  %s6 = sld [smem:[#allocation0]]
  $region38: #{comga_forward.12} parent=0
    _
  %s8 = ssub.s32 1, %s6
  %s9 = scalar_select 0, %s8, %s6
  // Predicated region
  $region2: #{comga_forward.12} parent=0 // pred_check
    _
  $region3: #{comga_forward.12} parent=0 // pred_check_branch
    %11 = sbr.rel (0) target = $region5
  $region4: #{comga_forward.12} parent=0 // pred_region
    _
  $region5: #{comga_forward.12} parent=0 // pred_fallthru
    _
  // Predicated region
  $region6: #{comga_forward.12} parent=0 // pred_check
    _
  $region7: #{comga_forward.12} parent=0 // pred_check_branch
    %13 = sbr.rel (0) target = $region9
  $region8: #{comga_forward.12} parent=0 // pred_region
    _
  $region9: #{comga_forward.12} parent=0 // pred_fallthru
    _
  // Predicated region
  $region10: #{comga_forward.12} parent=0 // pred_check
    _
  $region11: #{comga_forward.12} parent=0 // pred_check_branch
    %15 = sbr.rel (0) target = $region13
  $region12: #{comga_forward.12} parent=0 // pred_region
    _
  $region13: #{comga_forward.12} parent=0 // pred_fallthru
    _
  // Predicated region
  $region14: #{comga_forward.12} parent=0 // pred_check
    _
  $region15: #{comga_forward.12} parent=0 // pred_check_branch
    %17 = sbr.rel (0) target = $region17
  $region16: #{comga_forward.12} parent=0 // pred_region
    _
  $region17: #{comga_forward.12} parent=0 // pred_fallthru
    _
  // Predicated region
  $region18: #{comga_forward.12} parent=0 // pred_check
    _
  $region19: #{comga_forward.12} parent=0 // pred_check_branch
    %19 = sbr.rel (0) target = $region21
  $region20: #{comga_forward.12} parent=0 // pred_region
    _
  $region21: #{comga_forward.12} parent=0 // pred_fallthru
    _
  %p21 = scmp.eq.s32.totalorder 0, 0
  // Predicated region
  $region22: #{comga_forward.12} parent=0 // pred_check
    %p22 = pneg %p21
  $region23: #{comga_forward.12} parent=0 // pred_check_branch
    %24 = sbr.rel (%p22) target = $region25
  $region24: #{comga_forward.12} parent=0 // pred_region
    %vm25 = vcmask 130048
    %26 = vst.msk [vmem:[#allocation2] sm:$0xff] %vm25, 0.0
    %27 = vst.msk [vmem:[#allocation2 + $0x8] sm:$0xff] %vm25, 0.0
    %28 = vst.msk [vmem:[#allocation2 + $0x10] sm:$0xff] %vm25, 0.0
    %29 = vst.msk [vmem:[#allocation2 + $0x18] sm:$0xff] %vm25, 0.0
    %30 = vst.msk [vmem:[#allocation2 + $0x20] sm:$0xff] %vm25, 0.0
    %31 = vst.msk [vmem:[#allocation2 + $0x28] sm:$0xff] %vm25, 0.0
    %32 = vst.msk [vmem:[#allocation2 + $0x30] sm:$0xff] %vm25, 0.0
    %33 = vst.msk [vmem:[#allocation2 + $0x38] sm:$0xff] %vm25, 0.0
    %34 = vst.msk [vmem:[#allocation2 + $0x40] sm:$0xff] %vm25, 0.0
    %35 = vst.msk [vmem:[#allocation2 + $0x48] sm:$0xff] %vm25, 0.0
    %36 = vst.msk [vmem:[#allocation2 + $0x50] sm:$0xff] %vm25, 0.0
    %37 = vst.msk [vmem:[#allocation2 + $0x58] sm:$0xff] %vm25, 0.0
    %38 = vst.msk [vmem:[#allocation2 + $0x60] sm:$0xff] %vm25, 0.0
    %39 = vst.msk [vmem:[#allocation2 + $0x68] sm:$0xff] %vm25, 0.0
    %40 = vst.msk [vmem:[#allocation2 + $0x70] sm:$0xff] %vm25, 0.0
    %41 = vst.msk [vmem:[#allocation2 + $0x78] sm:$0xff] %vm25, 0.0
    %42 = vst.msk [vmem:[#allocation2 + $0x80] sm:$0xff] %vm25, 0.0
    %43 = vst.msk [vmem:[#allocation2 + $0x88] sm:$0xff] %vm25, 0.0
    %44 = vst.msk [vmem:[#allocation2 + $0x90] sm:$0xff] %vm25, 0.0
    %45 = vst.msk [vmem:[#allocation2 + $0x98] sm:$0xff] %vm25, 0.0
    %46 = vst.msk [vmem:[#allocation2 + $0xa0] sm:$0xff] %vm25, 0.0
    %47 = vst.msk [vmem:[#allocation2 + $0xa8] sm:$0xff] %vm25, 0.0
    %48 = vst.msk [vmem:[#allocation2 + $0xb0] sm:$0xff] %vm25, 0.0
    %49 = vst.msk [vmem:[#allocation2 + $0xb8] sm:$0xff] %vm25, 0.0
    %50 = vst.msk [vmem:[#allocation2 + $0xc0] sm:$0xff] %vm25, 0.0
    %51 = vst.msk [vmem:[#allocation2 + $0xc8] sm:$0xff] %vm25, 0.0
    %52 = vst.msk [vmem:[#allocation2 + $0xd0] sm:$0xff] %vm25, 0.0
    %53 = vst.msk [vmem:[#allocation2 + $0xd8] sm:$0xff] %vm25, 0.0
    %54 = vst.msk [vmem:[#allocation2 + $0xe0] sm:$0xff] %vm25, 0.0
    %55 = vst.msk [vmem:[#allocation2 + $0xe8] sm:$0xff] %vm25, 0.0
    %56 = vst.msk [vmem:[#allocation2 + $0xf0] sm:$0xff] %vm25, 0.0
    %57 = vst.msk [vmem:[#allocation2 + $0xf8] sm:$0xff] %vm25, 0.0
  $region25: #{comga_forward.12} parent=0 // pred_fallthru
    _
  %v58 = vld [vmem:[%s1] sm:$0xff]
  %v59 = vld [vmem:[%s1 + $0x8] sm:$0xff]
  %v60 = vld [vmem:[%s1 + $0x10] sm:$0xff]
  %v61 = vld [vmem:[%s1 + $0x18] sm:$0xff]
  %v62 = vld [vmem:[%s1 + $0x20] sm:$0xff]
  %v63 = vld [vmem:[%s1 + $0x28] sm:$0xff]
  %v64 = vld [vmem:[%s1 + $0x30] sm:$0xff]
  %v65 = vld [vmem:[%s1 + $0x38] sm:$0xff]
  %v66 = vld [vmem:[%s1 + $0x40] sm:$0xff]
  %v67 = vld [vmem:[%s1 + $0x48] sm:$0xff]
  %v68 = vld [vmem:[%s1 + $0x50] sm:$0xff]
  %v69 = vld [vmem:[%s1 + $0x58] sm:$0xff]
  %v70 = vld [vmem:[%s1 + $0x60] sm:$0xff]
  %v71 = vld [vmem:[%s1 + $0x68] sm:$0xff]
  %v72 = vld [vmem:[%s1 + $0x70] sm:$0xff]
  %v73 = vld [vmem:[%s1 + $0x78] sm:$0xff]
  %v74 = vld [vmem:[%s1 + $0x80] sm:$0xff]
  %v75 = vld [vmem:[%s1 + $0x88] sm:$0xff]
  %v76 = vld [vmem:[%s1 + $0x90] sm:$0xff]
  %v77 = vld [vmem:[%s1 + $0x98] sm:$0xff]
  %v78 = vld [vmem:[%s1 + $0xa0] sm:$0xff]
  %v79 = vld [vmem:[%s1 + $0xa8] sm:$0xff]
  %v80 = vld [vmem:[%s1 + $0xb0] sm:$0xff]
  %v81 = vld [vmem:[%s1 + $0xb8] sm:$0xff]
  %v82 = vld [vmem:[%s1 + $0xc0] sm:$0xff]
  %v83 = vld [vmem:[%s1 + $0xc8] sm:$0xff]
  %v84 = vld [vmem:[%s1 + $0xd0] sm:$0xff]
  %v85 = vld [vmem:[%s1 + $0xd8] sm:$0xff]
  %v86 = vld [vmem:[%s1 + $0xe0] sm:$0xff]
  %v87 = vld [vmem:[%s1 + $0xe8] sm:$0xff]
  %v88 = vld [vmem:[%s1 + $0xf0] sm:$0xff]
  %v89 = vld [vmem:[%s1 + $0xf8] sm:$0xff]
  %v90 = vld [vmem:[%s2] sm:$0xff]
  %v91 = vld [vmem:[%s2 + $0x8] sm:$0xff]
  %v92 = vld [vmem:[%s2 + $0x10] sm:$0xff]
  %v93 = vld [vmem:[%s2 + $0x18] sm:$0xff]
  %v94 = vld [vmem:[%s2 + $0x20] sm:$0xff]
  %v95 = vld [vmem:[%s2 + $0x28] sm:$0xff]
  %v96 = vld [vmem:[%s2 + $0x30] sm:$0xff]
  %v97 = vld [vmem:[%s2 + $0x38] sm:$0xff]
  %v98 = vld [vmem:[%s2 + $0x40] sm:$0xff]
  %v99 = vld [vmem:[%s2 + $0x48] sm:$0xff]
  %v100 = vld [vmem:[%s2 + $0x50] sm:$0xff]
  %v101 = vld [vmem:[%s2 + $0x58] sm:$0xff]
  %v102 = vld [vmem:[%s2 + $0x60] sm:$0xff]
  %v103 = vld [vmem:[%s2 + $0x68] sm:$0xff]
  %v104 = vld [vmem:[%s2 + $0x70] sm:$0xff]
  %v105 = vld [vmem:[%s2 + $0x78] sm:$0xff]
  %v106 = vld [vmem:[%s2 + $0x80] sm:$0xff]
  %v107 = vld [vmem:[%s2 + $0x88] sm:$0xff]
  %v108 = vld [vmem:[%s2 + $0x90] sm:$0xff]
  %v109 = vld [vmem:[%s2 + $0x98] sm:$0xff]
  %v110 = vld [vmem:[%s2 + $0xa0] sm:$0xff]
  %v111 = vld [vmem:[%s2 + $0xa8] sm:$0xff]
  %v112 = vld [vmem:[%s2 + $0xb0] sm:$0xff]
  %v113 = vld [vmem:[%s2 + $0xb8] sm:$0xff]
  %v114 = vld [vmem:[%s2 + $0xc0] sm:$0xff]
  %v115 = vld [vmem:[%s2 + $0xc8] sm:$0xff]
  %v116 = vld [vmem:[%s2 + $0xd0] sm:$0xff]
  %v117 = vld [vmem:[%s2 + $0xd8] sm:$0xff]
  %v118 = vld [vmem:[%s2 + $0xe0] sm:$0xff]
  %v119 = vld [vmem:[%s2 + $0xe8] sm:$0xff]
  %v120 = vld [vmem:[%s2 + $0xf0] sm:$0xff]
  %v121 = vld [vmem:[%s2 + $0xf8] sm:$0xff]
  %v122 = vadd.f32 %v58, %v90
  %v123 = vadd.f32 %v59, %v91
  %v124 = vadd.f32 %v60, %v92
  %v125 = vadd.f32 %v61, %v93
  %v126 = vadd.f32 %v62, %v94
  %v127 = vadd.f32 %v63, %v95
  %v128 = vadd.f32 %v64, %v96
  %v129 = vadd.f32 %v65, %v97
  %v130 = vadd.f32 %v66, %v98
  %v131 = vadd.f32 %v67, %v99
  %v132 = vadd.f32 %v68, %v100
  %v133 = vadd.f32 %v69, %v101
  %v134 = vadd.f32 %v70, %v102
  %v135 = vadd.f32 %v71, %v103
  %v136 = vadd.f32 %v72, %v104
  %v137 = vadd.f32 %v73, %v105
  %v138 = vadd.f32 %v74, %v106
  %v139 = vadd.f32 %v75, %v107
  %v140 = vadd.f32 %v76, %v108
  %v141 = vadd.f32 %v77, %v109
  %v142 = vadd.f32 %v78, %v110
  %v143 = vadd.f32 %v79, %v111
  %v144 = vadd.f32 %v80, %v112
  %v145 = vadd.f32 %v81, %v113
  %v146 = vadd.f32 %v82, %v114
  %v147 = vadd.f32 %v83, %v115
  %v148 = vadd.f32 %v84, %v116
  %v149 = vadd.f32 %v85, %v117
  %v150 = vadd.f32 %v86, %v118
  %v151 = vadd.f32 %v87, %v119
  %v152 = vadd.f32 %v88, %v120
  %v153 = vadd.f32 %v89, %v121
  %v154 = vpack.c.bf16 %v123, %v122
  %v155 = vpack.c.bf16 %v125, %v124
  %v156 = vpack.c.bf16 %v127, %v126
  %v157 = vpack.c.bf16 %v129, %v128
  %v158 = vpack.c.bf16 %v131, %v130
  %v159 = vpack.c.bf16 %v133, %v132
  %v160 = vpack.c.bf16 %v135, %v134
  %v161 = vpack.c.bf16 %v137, %v136
  %v162 = vpack.c.bf16 %v139, %v138
  %v163 = vpack.c.bf16 %v141, %v140
  %v164 = vpack.c.bf16 %v143, %v142
  %v165 = vpack.c.bf16 %v145, %v144
  %v166 = vpack.c.bf16 %v147, %v146
  %v167 = vpack.c.bf16 %v149, %v148
  %v168 = vpack.c.bf16 %v151, %v150
  %v169 = vpack.c.bf16 %v153, %v152
  %v170 = vld [vmem:[%s3] sm:$0xf]
  %v171 = vld [vmem:[%s3 + $0x4] sm:$0xf]
  %v172 = vld [vmem:[%s3 + $0x8] sm:$0xf]
  %v173 = vld [vmem:[%s3 + $0xc] sm:$0xf]
  %v178 = vunpack.c.l.b16 %v170
  %v179 = vunpack.c.l.b16 %v171
  %v180 = vunpack.c.l.b16 %v172
  %v181 = vunpack.c.l.b16 %v173
  %v182 = vpack.c.b16 %v179, %v178
  %v183 = vpack.c.b16 %v181, %v180
  %vm186 = vcmask 261120
  %v188 = vsel %vm186, %v154, 0
  %v191 = vsel %vm186, %v155, 0
  %v194 = vsel %vm186, %v156, 0
  %v197 = vsel %vm186, %v157, 0
  %v200 = vsel %vm186, %v158, 0
  %v203 = vsel %vm186, %v159, 0
  %v206 = vsel %vm186, %v160, 0
  %v209 = vsel %vm186, %v161, 0
  %v212 = vsel %vm186, %v162, 0
  %v215 = vsel %vm186, %v163, 0
  %v218 = vsel %vm186, %v164, 0
  %v221 = vsel %vm186, %v165, 0
  %v224 = vsel %vm186, %v166, 0
  %v227 = vsel %vm186, %v167, 0
  %v230 = vsel %vm186, %v168, 0
  %v233 = vsel %vm186, %v169, 0
  %235 = vmatprep.subr.bf16.mxu0 0
  %236 = vmatpush1.bf16.msra.mxu0 0
  %237 = vmatprep.subr.bf16.mxu0 0
  %238 = vmatpush1.bf16.msra.mxu0 0
  %239 = vmatprep.subr.bf16.mxu0 0
  %240 = vmatpush1.bf16.msra.mxu0 0
  %241 = vmatprep.subr.bf16.mxu0 0
  %242 = vmatpush1.bf16.msra.mxu0 0
  %243 = vmatprep.subr.bf16.mxu0 0
  %244 = vmatpush1.bf16.msra.mxu0 0
  %245 = vmatprep.subr.bf16.mxu0 0
  %246 = vmatpush1.bf16.msra.mxu0 0
  %247 = vmatprep.subr.bf16.mxu0 0
  %248 = vmatpush1.bf16.msra.mxu0 %v183
  %249 = vmatprep.subr.bf16.mxu0 0
  %250 = vmatpush1.bf16.msra.mxu0 %v182
  %251 = vmatprep.subr.bf16.mxu0 0
  %252 = vmatpush2.bf16.msra.mxu0 0
  %253 = vmatprep.subr.bf16.mxu0 0
  %254 = vmatpush2.bf16.msra.mxu0 0
  %255 = vmatprep.subr.bf16.mxu0 0
  %256 = vmatpush2.bf16.msra.mxu0 0
  %257 = vmatprep.subr.bf16.mxu0 0
  %258 = vmatpush2.bf16.msra.mxu0 0
  %259 = vmatprep.subr.bf16.mxu0 0
  %260 = vmatpush2.bf16.msra.mxu0 0
  %261 = vmatprep.subr.bf16.mxu0 0
  %262 = vmatpush2.bf16.msra.mxu0 0
  %263 = vmatprep.subr.bf16.mxu0 0
  %264 = vmatpush2.bf16.msra.mxu0 0
  %265 = vmatprep.subr.bf16.mxu0 0
  %266 = vmatpush2.bf16.msra.mxu0 0
  %267 = vmatprep.mubr.bf16.mxu0 0
  %268 = vmatmul.mubr.bf16.gmra.mxu0 %v188
  %v269 = vpop.f32.mrf.mxu0
  %v270 = vadd.f32 0.0, %v269
  %v271 = vpop.f32.mrf.mxu0
  %v272 = vpop.f32.mrf.mxu0
  %v273 = vadd.f32 0.0, %v272
  %v274 = vpop.f32.mrf.mxu0
  %275 = vmatprep.mubr.bf16.mxu0 0
  %276 = vmatmul.mubr.bf16.gmra.mxu0 %v191
  %v277 = vpop.f32.mrf.mxu0
  %v278 = vadd.f32 0.0, %v277
  %v279 = vpop.f32.mrf.mxu0
  %v280 = vpop.f32.mrf.mxu0
  %v281 = vadd.f32 0.0, %v280
  %v282 = vpop.f32.mrf.mxu0
  %283 = vmatprep.mubr.bf16.mxu0 0
  %284 = vmatmul.mubr.bf16.gmra.mxu0 %v194
  %v285 = vpop.f32.mrf.mxu0
  %v286 = vadd.f32 0.0, %v285
  %v287 = vpop.f32.mrf.mxu0
  %v288 = vpop.f32.mrf.mxu0
  %v289 = vadd.f32 0.0, %v288
  %v290 = vpop.f32.mrf.mxu0
  %291 = vmatprep.mubr.bf16.mxu0 0
  %292 = vmatmul.mubr.bf16.gmra.mxu0 %v197
  %v293 = vpop.f32.mrf.mxu0
  %v294 = vadd.f32 0.0, %v293
  %v295 = vpop.f32.mrf.mxu0
  %v296 = vpop.f32.mrf.mxu0
  %v297 = vadd.f32 0.0, %v296
  %v298 = vpop.f32.mrf.mxu0
  %299 = vmatprep.mubr.bf16.mxu0 0
  %300 = vmatmul.mubr.bf16.gmra.mxu0 %v200
  %v301 = vpop.f32.mrf.mxu0
  %v302 = vadd.f32 0.0, %v301
  %v303 = vpop.f32.mrf.mxu0
  %v304 = vpop.f32.mrf.mxu0
  %v305 = vadd.f32 0.0, %v304
  %v306 = vpop.f32.mrf.mxu0
  %307 = vmatprep.mubr.bf16.mxu0 0
  %308 = vmatmul.mubr.bf16.gmra.mxu0 %v203
  %v309 = vpop.f32.mrf.mxu0
  %v310 = vadd.f32 0.0, %v309
  %v311 = vpop.f32.mrf.mxu0
  %v312 = vpop.f32.mrf.mxu0
  %v313 = vadd.f32 0.0, %v312
  %v314 = vpop.f32.mrf.mxu0
  %315 = vmatprep.mubr.bf16.mxu0 0
  %316 = vmatmul.mubr.bf16.gmra.mxu0 %v206
  %v317 = vpop.f32.mrf.mxu0
  %v318 = vadd.f32 0.0, %v317
  %v319 = vpop.f32.mrf.mxu0
  %v320 = vpop.f32.mrf.mxu0
  %v321 = vadd.f32 0.0, %v320
  %v322 = vpop.f32.mrf.mxu0
  %323 = vmatprep.mubr.bf16.mxu0 0
  %324 = vmatmul.mubr.bf16.gmra.mxu0 %v209
  %v325 = vpop.f32.mrf.mxu0
  %v326 = vadd.f32 0.0, %v325
  %v327 = vpop.f32.mrf.mxu0
  %v328 = vpop.f32.mrf.mxu0
  %v329 = vadd.f32 0.0, %v328
  %v330 = vpop.f32.mrf.mxu0
  %331 = vmatprep.mubr.bf16.mxu0 0
  %332 = vmatmul.mubr.bf16.gmra.mxu0 %v212
  %v333 = vpop.f32.mrf.mxu0
  %v334 = vadd.f32 0.0, %v333
  %v335 = vpop.f32.mrf.mxu0
  %v336 = vpop.f32.mrf.mxu0
  %v337 = vadd.f32 0.0, %v336
  %v338 = vpop.f32.mrf.mxu0
  %339 = vmatprep.mubr.bf16.mxu0 0
  %340 = vmatmul.mubr.bf16.gmra.mxu0 %v215
  %v341 = vpop.f32.mrf.mxu0
  %v342 = vadd.f32 0.0, %v341
  %v343 = vpop.f32.mrf.mxu0
  %v344 = vpop.f32.mrf.mxu0
  %v345 = vadd.f32 0.0, %v344
  %v346 = vpop.f32.mrf.mxu0
  %347 = vmatprep.mubr.bf16.mxu0 0
  %348 = vmatmul.mubr.bf16.gmra.mxu0 %v218
  %v349 = vpop.f32.mrf.mxu0
  %v350 = vadd.f32 0.0, %v349
  %v351 = vpop.f32.mrf.mxu0
  %v352 = vpop.f32.mrf.mxu0
  %v353 = vadd.f32 0.0, %v352
  %v354 = vpop.f32.mrf.mxu0
  %355 = vmatprep.mubr.bf16.mxu0 0
  %356 = vmatmul.mubr.bf16.gmra.mxu0 %v221
  %v357 = vpop.f32.mrf.mxu0
  %v358 = vadd.f32 0.0, %v357
  %v359 = vpop.f32.mrf.mxu0
  %v360 = vpop.f32.mrf.mxu0
  %v361 = vadd.f32 0.0, %v360
  %v362 = vpop.f32.mrf.mxu0
  %363 = vmatprep.mubr.bf16.mxu0 0
  %364 = vmatmul.mubr.bf16.gmra.mxu0 %v224
  %v365 = vpop.f32.mrf.mxu0
  %v366 = vadd.f32 0.0, %v365
  %v367 = vpop.f32.mrf.mxu0
  %v368 = vpop.f32.mrf.mxu0
  %v369 = vadd.f32 0.0, %v368
  %v370 = vpop.f32.mrf.mxu0
  %371 = vmatprep.mubr.bf16.mxu0 0
  %372 = vmatmul.mubr.bf16.gmra.mxu0 %v227
  %v373 = vpop.f32.mrf.mxu0
  %v374 = vadd.f32 0.0, %v373
  %v375 = vpop.f32.mrf.mxu0
  %v376 = vpop.f32.mrf.mxu0
  %v377 = vadd.f32 0.0, %v376
  %v378 = vpop.f32.mrf.mxu0
  %379 = vmatprep.mubr.bf16.mxu0 0
  %380 = vmatmul.mubr.bf16.gmra.mxu0 %v230
  %v381 = vpop.f32.mrf.mxu0
  %v382 = vadd.f32 0.0, %v381
  %v383 = vpop.f32.mrf.mxu0
  %v384 = vpop.f32.mrf.mxu0
  %v385 = vadd.f32 0.0, %v384
  %v386 = vpop.f32.mrf.mxu0
  %387 = vmatprep.mubr.bf16.mxu0 0
  %388 = vmatmul.mubr.bf16.gmra.mxu0 %v233
  %v389 = vpop.f32.mrf.mxu0
  %v390 = vadd.f32 0.0, %v389
  %v391 = vpop.f32.mrf.mxu0
  %v392 = vpop.f32.mrf.mxu0
  %v393 = vadd.f32 0.0, %v392
  %v394 = vpop.f32.mrf.mxu0
  %395 = vdwg.mxu0
  %v396 = vld [vmem:[#allocation2] sm:$0xff]
  %v397 = vld [vmem:[#allocation2 + $0x8] sm:$0xff]
  %v398 = vld [vmem:[#allocation2 + $0x10] sm:$0xff]
  %v399 = vld [vmem:[#allocation2 + $0x18] sm:$0xff]
  %v400 = vld [vmem:[#allocation2 + $0x20] sm:$0xff]
  %v401 = vld [vmem:[#allocation2 + $0x28] sm:$0xff]
  %v402 = vld [vmem:[#allocation2 + $0x30] sm:$0xff]
  %v403 = vld [vmem:[#allocation2 + $0x38] sm:$0xff]
  %v404 = vld [vmem:[#allocation2 + $0x40] sm:$0xff]
  %v405 = vld [vmem:[#allocation2 + $0x48] sm:$0xff]
  %v406 = vld [vmem:[#allocation2 + $0x50] sm:$0xff]
  %v407 = vld [vmem:[#allocation2 + $0x58] sm:$0xff]
  %v408 = vld [vmem:[#allocation2 + $0x60] sm:$0xff]
  %v409 = vld [vmem:[#allocation2 + $0x68] sm:$0xff]
  %v410 = vld [vmem:[#allocation2 + $0x70] sm:$0xff]
  %v411 = vld [vmem:[#allocation2 + $0x78] sm:$0xff]
  %v412 = vld [vmem:[#allocation2 + $0x80] sm:$0xff]
  %v413 = vld [vmem:[#allocation2 + $0x88] sm:$0xff]
  %v414 = vld [vmem:[#allocation2 + $0x90] sm:$0xff]
  %v415 = vld [vmem:[#allocation2 + $0x98] sm:$0xff]
  %v416 = vld [vmem:[#allocation2 + $0xa0] sm:$0xff]
  %v417 = vld [vmem:[#allocation2 + $0xa8] sm:$0xff]
  %v418 = vld [vmem:[#allocation2 + $0xb0] sm:$0xff]
  %v419 = vld [vmem:[#allocation2 + $0xb8] sm:$0xff]
  %v420 = vld [vmem:[#allocation2 + $0xc0] sm:$0xff]
  %v421 = vld [vmem:[#allocation2 + $0xc8] sm:$0xff]
  %v422 = vld [vmem:[#allocation2 + $0xd0] sm:$0xff]
  %v423 = vld [vmem:[#allocation2 + $0xd8] sm:$0xff]
  %v424 = vld [vmem:[#allocation2 + $0xe0] sm:$0xff]
  %v425 = vld [vmem:[#allocation2 + $0xe8] sm:$0xff]
  %v426 = vld [vmem:[#allocation2 + $0xf0] sm:$0xff]
  %v427 = vld [vmem:[#allocation2 + $0xf8] sm:$0xff]
  %v428 = vld [vmem:[%s0] sm:$0xff]
  %v429 = vld [vmem:[%s0 + $0x8] sm:$0xff]
  %v430 = vld [vmem:[%s0 + $0x10] sm:$0xff]
  %v431 = vld [vmem:[%s0 + $0x18] sm:$0xff]
  %v432 = vld [vmem:[%s0 + $0x20] sm:$0xff]
  %v433 = vld [vmem:[%s0 + $0x28] sm:$0xff]
  %v434 = vld [vmem:[%s0 + $0x30] sm:$0xff]
  %v435 = vld [vmem:[%s0 + $0x38] sm:$0xff]
  %v436 = vld [vmem:[%s0 + $0x40] sm:$0xff]
  %v437 = vld [vmem:[%s0 + $0x48] sm:$0xff]
  %v438 = vld [vmem:[%s0 + $0x50] sm:$0xff]
  %v439 = vld [vmem:[%s0 + $0x58] sm:$0xff]
  %v440 = vld [vmem:[%s0 + $0x60] sm:$0xff]
  %v441 = vld [vmem:[%s0 + $0x68] sm:$0xff]
  %v442 = vld [vmem:[%s0 + $0x70] sm:$0xff]
  %v443 = vld [vmem:[%s0 + $0x78] sm:$0xff]
  %v444 = vld [vmem:[%s0 + $0x80] sm:$0xff]
  %v445 = vld [vmem:[%s0 + $0x88] sm:$0xff]
  %v446 = vld [vmem:[%s0 + $0x90] sm:$0xff]
  %v447 = vld [vmem:[%s0 + $0x98] sm:$0xff]
  %v448 = vld [vmem:[%s0 + $0xa0] sm:$0xff]
  %v449 = vld [vmem:[%s0 + $0xa8] sm:$0xff]
  %v450 = vld [vmem:[%s0 + $0xb0] sm:$0xff]
  %v451 = vld [vmem:[%s0 + $0xb8] sm:$0xff]
  %v452 = vld [vmem:[%s0 + $0xc0] sm:$0xff]
  %v453 = vld [vmem:[%s0 + $0xc8] sm:$0xff]
  %v454 = vld [vmem:[%s0 + $0xd0] sm:$0xff]
  %v455 = vld [vmem:[%s0 + $0xd8] sm:$0xff]
  %v456 = vld [vmem:[%s0 + $0xe0] sm:$0xff]
  %v457 = vld [vmem:[%s0 + $0xe8] sm:$0xff]
  %v458 = vld [vmem:[%s0 + $0xf0] sm:$0xff]
  %v459 = vld [vmem:[%s0 + $0xf8] sm:$0xff]
  %v460 = vpack.c.bf16 %v273, %v270
  %v461 = vpack.c.bf16 %v281, %v278
  %v462 = vpack.c.bf16 %v289, %v286
  %v463 = vpack.c.bf16 %v297, %v294
  %v464 = vpack.c.bf16 %v305, %v302
  %v465 = vpack.c.bf16 %v313, %v310
  %v466 = vpack.c.bf16 %v321, %v318
  %v467 = vpack.c.bf16 %v329, %v326
  %v468 = vpack.c.bf16 %v337, %v334
  %v469 = vpack.c.bf16 %v345, %v342
  %v470 = vpack.c.bf16 %v353, %v350
  %v471 = vpack.c.bf16 %v361, %v358
  %v472 = vpack.c.bf16 %v369, %v366
  %v473 = vpack.c.bf16 %v377, %v374
  %v474 = vpack.c.bf16 %v385, %v382
  %v475 = vpack.c.bf16 %v393, %v390
  %v508 = vunpack.c.l.b16 %v428
  %v509 = vunpack.c.h.b16 %v428
  %v510 = vunpack.c.l.b16 %v429
  %v511 = vunpack.c.h.b16 %v429
  %v512 = vunpack.c.l.b16 %v430
  %v513 = vunpack.c.h.b16 %v430
  %v514 = vunpack.c.l.b16 %v431
  %v515 = vunpack.c.h.b16 %v431
  %v516 = vunpack.c.l.b16 %v432
  %v517 = vunpack.c.h.b16 %v432
  %v518 = vunpack.c.l.b16 %v433
  %v519 = vunpack.c.h.b16 %v433
  %v520 = vunpack.c.l.b16 %v434
  %v521 = vunpack.c.h.b16 %v434
  %v522 = vunpack.c.l.b16 %v435
  %v523 = vunpack.c.h.b16 %v435
  %v524 = vunpack.c.l.b16 %v436
  %v525 = vunpack.c.h.b16 %v436
  %v526 = vunpack.c.l.b16 %v437
  %v527 = vunpack.c.h.b16 %v437
  %v528 = vunpack.c.l.b16 %v438
  %v529 = vunpack.c.h.b16 %v438
  %v530 = vunpack.c.l.b16 %v439
  %v531 = vunpack.c.h.b16 %v439
  %v532 = vunpack.c.l.b16 %v440
  %v533 = vunpack.c.h.b16 %v440
  %v534 = vunpack.c.l.b16 %v441
  %v535 = vunpack.c.h.b16 %v441
  %v536 = vunpack.c.l.b16 %v442
  %v537 = vunpack.c.h.b16 %v442
  %v538 = vunpack.c.l.b16 %v443
  %v539 = vunpack.c.h.b16 %v443
  %v540 = vunpack.c.l.b16 %v444
  %v541 = vunpack.c.h.b16 %v444
  %v542 = vunpack.c.l.b16 %v445
  %v543 = vunpack.c.h.b16 %v445
  %v544 = vunpack.c.l.b16 %v446
  %v545 = vunpack.c.h.b16 %v446
  %v546 = vunpack.c.l.b16 %v447
  %v547 = vunpack.c.h.b16 %v447
  %v548 = vunpack.c.l.b16 %v448
  %v549 = vunpack.c.h.b16 %v448
  %v550 = vunpack.c.l.b16 %v449
  %v551 = vunpack.c.h.b16 %v449
  %v552 = vunpack.c.l.b16 %v450
  %v553 = vunpack.c.h.b16 %v450
  %v554 = vunpack.c.l.b16 %v451
  %v555 = vunpack.c.h.b16 %v451
  %v556 = vunpack.c.l.b16 %v452
  %v557 = vunpack.c.h.b16 %v452
  %v558 = vunpack.c.l.b16 %v453
  %v559 = vunpack.c.h.b16 %v453
  %v560 = vunpack.c.l.b16 %v454
  %v561 = vunpack.c.h.b16 %v454
  %v562 = vunpack.c.l.b16 %v455
  %v563 = vunpack.c.h.b16 %v455
  %v564 = vunpack.c.l.b16 %v456
  %v565 = vunpack.c.h.b16 %v456
  %v566 = vunpack.c.l.b16 %v457
  %v567 = vunpack.c.h.b16 %v457
  %v568 = vunpack.c.l.b16 %v458
  %v569 = vunpack.c.h.b16 %v458
  %v570 = vunpack.c.l.b16 %v459
  %v571 = vunpack.c.h.b16 %v459
  %v572 = vpack.c.b16 %v510, %v508
  %v573 = vpack.c.b16 %v511, %v509
  %v574 = vpack.c.b16 %v514, %v512
  %v575 = vpack.c.b16 %v515, %v513
  %v576 = vpack.c.b16 %v518, %v516
  %v577 = vpack.c.b16 %v519, %v517
  %v578 = vpack.c.b16 %v522, %v520
  %v579 = vpack.c.b16 %v523, %v521
  %v580 = vpack.c.b16 %v526, %v524
  %v581 = vpack.c.b16 %v527, %v525
  %v582 = vpack.c.b16 %v530, %v528
  %v583 = vpack.c.b16 %v531, %v529
  %v584 = vpack.c.b16 %v534, %v532
  %v585 = vpack.c.b16 %v535, %v533
  %v586 = vpack.c.b16 %v538, %v536
  %v587 = vpack.c.b16 %v539, %v537
  %v588 = vpack.c.b16 %v542, %v540
  %v589 = vpack.c.b16 %v543, %v541
  %v590 = vpack.c.b16 %v546, %v544
  %v591 = vpack.c.b16 %v547, %v545
  %v592 = vpack.c.b16 %v550, %v548
  %v593 = vpack.c.b16 %v551, %v549
  %v594 = vpack.c.b16 %v554, %v552
  %v595 = vpack.c.b16 %v555, %v553
  %v596 = vpack.c.b16 %v558, %v556
  %v597 = vpack.c.b16 %v559, %v557
  %v598 = vpack.c.b16 %v562, %v560
  %v599 = vpack.c.b16 %v563, %v561
  %v600 = vpack.c.b16 %v566, %v564
  %v601 = vpack.c.b16 %v567, %v565
  %v602 = vpack.c.b16 %v570, %v568
  %v603 = vpack.c.b16 %v571, %v569
  %636 = vmatprep.subr.bf16.mxu0 0
  %637 = vmatpush1.bf16.msra.mxu0 %v467
  %638 = vmatprep.subr.bf16.mxu0 0
  %639 = vmatpush1.bf16.msra.mxu0 %v466
  %640 = vmatprep.subr.bf16.mxu0 0
  %641 = vmatpush1.bf16.msra.mxu0 %v465
  %642 = vmatprep.subr.bf16.mxu0 0
  %643 = vmatpush1.bf16.msra.mxu0 %v464
  %644 = vmatprep.subr.bf16.mxu0 0
  %645 = vmatpush1.bf16.msra.mxu0 %v463
  %646 = vmatprep.subr.bf16.mxu0 0
  %647 = vmatpush1.bf16.msra.mxu0 %v462
  %648 = vmatprep.subr.bf16.mxu0 0
  %649 = vmatpush1.bf16.msra.mxu0 %v461
  %650 = vmatprep.subr.bf16.mxu0 0
  %651 = vmatpush1.bf16.msra.mxu0 %v460
  %652 = vmatprep.subr.bf16.mxu0 0
  %653 = vmatpush2.bf16.msra.mxu0 %v475
  %654 = vmatprep.subr.bf16.mxu0 0
  %655 = vmatpush2.bf16.msra.mxu0 %v474
  %656 = vmatprep.subr.bf16.mxu0 0
  %657 = vmatpush2.bf16.msra.mxu0 %v473
  %658 = vmatprep.subr.bf16.mxu0 0
  %659 = vmatpush2.bf16.msra.mxu0 %v472
  %660 = vmatprep.subr.bf16.mxu0 0
  %661 = vmatpush2.bf16.msra.mxu0 %v471
  %662 = vmatprep.subr.bf16.mxu0 0
  %663 = vmatpush2.bf16.msra.mxu0 %v470
  %664 = vmatprep.subr.bf16.mxu0 0
  %665 = vmatpush2.bf16.msra.mxu0 %v469
  %666 = vmatprep.subr.bf16.mxu0 0
  %667 = vmatpush2.bf16.msra.mxu0 %v468
  %668 = vmatprep.mubr.bf16.mxu0 %v573
  %669 = vmatmul.mubr.bf16.gmra.mxu0 %v572
  %v670 = vpop.f32.mrf.mxu0
  %v671 = vadd.f32 0.0, %v670
  %v672 = vpop.f32.mrf.mxu0
  %v673 = vpop.f32.mrf.mxu0
  %v674 = vadd.f32 0.0, %v673
  %v675 = vpop.f32.mrf.mxu0
  %676 = vmatprep.mubr.bf16.mxu0 %v575
  %677 = vmatmul.mubr.bf16.gmra.mxu0 %v574
  %v678 = vpop.f32.mrf.mxu0
  %v679 = vadd.f32 0.0, %v678
  %v680 = vpop.f32.mrf.mxu0
  %v681 = vpop.f32.mrf.mxu0
  %v682 = vadd.f32 0.0, %v681
  %v683 = vpop.f32.mrf.mxu0
  %684 = vmatprep.mubr.bf16.mxu0 %v577
  %685 = vmatmul.mubr.bf16.gmra.mxu0 %v576
  %v686 = vpop.f32.mrf.mxu0
  %v687 = vadd.f32 0.0, %v686
  %v688 = vpop.f32.mrf.mxu0
  %v689 = vpop.f32.mrf.mxu0
  %v690 = vadd.f32 0.0, %v689
  %v691 = vpop.f32.mrf.mxu0
  %692 = vmatprep.mubr.bf16.mxu0 %v579
  %693 = vmatmul.mubr.bf16.gmra.mxu0 %v578
  %v694 = vpop.f32.mrf.mxu0
  %v695 = vadd.f32 0.0, %v694
  %v696 = vpop.f32.mrf.mxu0
  %v697 = vpop.f32.mrf.mxu0
  %v698 = vadd.f32 0.0, %v697
  %v699 = vpop.f32.mrf.mxu0
  %700 = vmatprep.mubr.bf16.mxu0 %v581
  %701 = vmatmul.mubr.bf16.gmra.mxu0 %v580
  %v702 = vpop.f32.mrf.mxu0
  %v703 = vadd.f32 0.0, %v702
  %v704 = vpop.f32.mrf.mxu0
  %v705 = vpop.f32.mrf.mxu0
  %v706 = vadd.f32 0.0, %v705
  %v707 = vpop.f32.mrf.mxu0
  %708 = vmatprep.mubr.bf16.mxu0 %v583
  %709 = vmatmul.mubr.bf16.gmra.mxu0 %v582
  %v710 = vpop.f32.mrf.mxu0
  %v711 = vadd.f32 0.0, %v710
  %v712 = vpop.f32.mrf.mxu0
  %v713 = vpop.f32.mrf.mxu0
  %v714 = vadd.f32 0.0, %v713
  %v715 = vpop.f32.mrf.mxu0
  %716 = vmatprep.mubr.bf16.mxu0 %v585
  %717 = vmatmul.mubr.bf16.gmra.mxu0 %v584
  %v718 = vpop.f32.mrf.mxu0
  %v719 = vadd.f32 0.0, %v718
  %v720 = vpop.f32.mrf.mxu0
  %v721 = vpop.f32.mrf.mxu0
  %v722 = vadd.f32 0.0, %v721
  %v723 = vpop.f32.mrf.mxu0
  %724 = vmatprep.mubr.bf16.mxu0 %v587
  %725 = vmatmul.mubr.bf16.gmra.mxu0 %v586
  %v726 = vpop.f32.mrf.mxu0
  %v727 = vadd.f32 0.0, %v726
  %v728 = vpop.f32.mrf.mxu0
  %v729 = vpop.f32.mrf.mxu0
  %v730 = vadd.f32 0.0, %v729
  %v731 = vpop.f32.mrf.mxu0
  %732 = vmatprep.mubr.bf16.mxu0 %v589
  %733 = vmatmul.mubr.bf16.gmra.mxu0 %v588
  %v734 = vpop.f32.mrf.mxu0
  %v735 = vadd.f32 0.0, %v734
  %v736 = vpop.f32.mrf.mxu0
  %v737 = vpop.f32.mrf.mxu0
  %v738 = vadd.f32 0.0, %v737
  %v739 = vpop.f32.mrf.mxu0
  %740 = vmatprep.mubr.bf16.mxu0 %v591
  %741 = vmatmul.mubr.bf16.gmra.mxu0 %v590
  %v742 = vpop.f32.mrf.mxu0
  %v743 = vadd.f32 0.0, %v742
  %v744 = vpop.f32.mrf.mxu0
  %v745 = vpop.f32.mrf.mxu0
  %v746 = vadd.f32 0.0, %v745
  %v747 = vpop.f32.mrf.mxu0
  %748 = vmatprep.mubr.bf16.mxu0 %v593
  %749 = vmatmul.mubr.bf16.gmra.mxu0 %v592
  %v750 = vpop.f32.mrf.mxu0
  %v751 = vadd.f32 0.0, %v750
  %v752 = vpop.f32.mrf.mxu0
  %v753 = vpop.f32.mrf.mxu0
  %v754 = vadd.f32 0.0, %v753
  %v755 = vpop.f32.mrf.mxu0
  %756 = vmatprep.mubr.bf16.mxu0 %v595
  %757 = vmatmul.mubr.bf16.gmra.mxu0 %v594
  %v758 = vpop.f32.mrf.mxu0
  %v759 = vadd.f32 0.0, %v758
  %v760 = vpop.f32.mrf.mxu0
  %v761 = vpop.f32.mrf.mxu0
  %v762 = vadd.f32 0.0, %v761
  %v763 = vpop.f32.mrf.mxu0
  %764 = vmatprep.mubr.bf16.mxu0 %v597
  %765 = vmatmul.mubr.bf16.gmra.mxu0 %v596
  %v766 = vpop.f32.mrf.mxu0
  %v767 = vadd.f32 0.0, %v766
  %v768 = vpop.f32.mrf.mxu0
  %v769 = vpop.f32.mrf.mxu0
  %v770 = vadd.f32 0.0, %v769
  %v771 = vpop.f32.mrf.mxu0
  %772 = vmatprep.mubr.bf16.mxu0 %v599
  %773 = vmatmul.mubr.bf16.gmra.mxu0 %v598
  %v774 = vpop.f32.mrf.mxu0
  %v775 = vadd.f32 0.0, %v774
  %v776 = vpop.f32.mrf.mxu0
  %v777 = vpop.f32.mrf.mxu0
  %v778 = vadd.f32 0.0, %v777
  %v779 = vpop.f32.mrf.mxu0
  %780 = vmatprep.mubr.bf16.mxu0 %v601
  %781 = vmatmul.mubr.bf16.gmra.mxu0 %v600
  %v782 = vpop.f32.mrf.mxu0
  %v783 = vadd.f32 0.0, %v782
  %v784 = vpop.f32.mrf.mxu0
  %v785 = vpop.f32.mrf.mxu0
  %v786 = vadd.f32 0.0, %v785
  %v787 = vpop.f32.mrf.mxu0
  %788 = vmatprep.mubr.bf16.mxu0 %v603
  %789 = vmatmul.mubr.bf16.gmra.mxu0 %v602
  %v790 = vpop.f32.mrf.mxu0
  %v791 = vadd.f32 0.0, %v790
  %v792 = vpop.f32.mrf.mxu0
  %v793 = vpop.f32.mrf.mxu0
  %v794 = vadd.f32 0.0, %v793
  %v795 = vpop.f32.mrf.mxu0
  %796 = vdwg.mxu0
  %v797 = vadd.f32 %v396, %v671
  %v798 = vadd.f32 %v397, %v674
  %v799 = vadd.f32 %v398, %v679
  %v800 = vadd.f32 %v399, %v682
  %v801 = vadd.f32 %v400, %v687
  %v802 = vadd.f32 %v401, %v690
  %v803 = vadd.f32 %v402, %v695
  %v804 = vadd.f32 %v403, %v698
  %v805 = vadd.f32 %v404, %v703
  %v806 = vadd.f32 %v405, %v706
  %v807 = vadd.f32 %v406, %v711
  %v808 = vadd.f32 %v407, %v714
  %v809 = vadd.f32 %v408, %v719
  %v810 = vadd.f32 %v409, %v722
  %v811 = vadd.f32 %v410, %v727
  %v812 = vadd.f32 %v411, %v730
  %v813 = vadd.f32 %v412, %v735
  %v814 = vadd.f32 %v413, %v738
  %v815 = vadd.f32 %v414, %v743
  %v816 = vadd.f32 %v415, %v746
  %v817 = vadd.f32 %v416, %v751
  %v818 = vadd.f32 %v417, %v754
  %v819 = vadd.f32 %v418, %v759
  %v820 = vadd.f32 %v419, %v762
  %v821 = vadd.f32 %v420, %v767
  %v822 = vadd.f32 %v421, %v770
  %v823 = vadd.f32 %v422, %v775
  %v824 = vadd.f32 %v423, %v778
  %v825 = vadd.f32 %v424, %v783
  %v826 = vadd.f32 %v425, %v786
  %v827 = vadd.f32 %v426, %v791
  %v828 = vadd.f32 %v427, %v794
  %vm829 = vcmask 130048
  %830 = vst.msk [vmem:[#allocation2] sm:$0xff] %vm829, %v797
  %831 = vst.msk [vmem:[#allocation2 + $0x8] sm:$0xff] %vm829, %v798
  %832 = vst.msk [vmem:[#allocation2 + $0x10] sm:$0xff] %vm829, %v799
  %833 = vst.msk [vmem:[#allocation2 + $0x18] sm:$0xff] %vm829, %v800
  %834 = vst.msk [vmem:[#allocation2 + $0x20] sm:$0xff] %vm829, %v801
  %835 = vst.msk [vmem:[#allocation2 + $0x28] sm:$0xff] %vm829, %v802
  %836 = vst.msk [vmem:[#allocation2 + $0x30] sm:$0xff] %vm829, %v803
  %837 = vst.msk [vmem:[#allocation2 + $0x38] sm:$0xff] %vm829, %v804
  %838 = vst.msk [vmem:[#allocation2 + $0x40] sm:$0xff] %vm829, %v805
  %839 = vst.msk [vmem:[#allocation2 + $0x48] sm:$0xff] %vm829, %v806
  %840 = vst.msk [vmem:[#allocation2 + $0x50] sm:$0xff] %vm829, %v807
  %841 = vst.msk [vmem:[#allocation2 + $0x58] sm:$0xff] %vm829, %v808
  %842 = vst.msk [vmem:[#allocation2 + $0x60] sm:$0xff] %vm829, %v809
  %843 = vst.msk [vmem:[#allocation2 + $0x68] sm:$0xff] %vm829, %v810
  %844 = vst.msk [vmem:[#allocation2 + $0x70] sm:$0xff] %vm829, %v811
  %845 = vst.msk [vmem:[#allocation2 + $0x78] sm:$0xff] %vm829, %v812
  %846 = vst.msk [vmem:[#allocation2 + $0x80] sm:$0xff] %vm829, %v813
  %847 = vst.msk [vmem:[#allocation2 + $0x88] sm:$0xff] %vm829, %v814
  %848 = vst.msk [vmem:[#allocation2 + $0x90] sm:$0xff] %vm829, %v815
  %849 = vst.msk [vmem:[#allocation2 + $0x98] sm:$0xff] %vm829, %v816
  %850 = vst.msk [vmem:[#allocation2 + $0xa0] sm:$0xff] %vm829, %v817
  %851 = vst.msk [vmem:[#allocation2 + $0xa8] sm:$0xff] %vm829, %v818
  %852 = vst.msk [vmem:[#allocation2 + $0xb0] sm:$0xff] %vm829, %v819
  %853 = vst.msk [vmem:[#allocation2 + $0xb8] sm:$0xff] %vm829, %v820
  %854 = vst.msk [vmem:[#allocation2 + $0xc0] sm:$0xff] %vm829, %v821
  %855 = vst.msk [vmem:[#allocation2 + $0xc8] sm:$0xff] %vm829, %v822
  %856 = vst.msk [vmem:[#allocation2 + $0xd0] sm:$0xff] %vm829, %v823
  %857 = vst.msk [vmem:[#allocation2 + $0xd8] sm:$0xff] %vm829, %v824
  %858 = vst.msk [vmem:[#allocation2 + $0xe0] sm:$0xff] %vm829, %v825
  %859 = vst.msk [vmem:[#allocation2 + $0xe8] sm:$0xff] %vm829, %v826
  %860 = vst.msk [vmem:[#allocation2 + $0xf0] sm:$0xff] %vm829, %v827
  %861 = vst.msk [vmem:[#allocation2 + $0xf8] sm:$0xff] %vm829, %v828
  // Predicated region
  $region26: #{comga_forward.12} parent=0 // pred_check
    %p862 = pneg %p21
  $region27: #{comga_forward.12} parent=0 // pred_check_branch
    %864 = sbr.rel (%p862) target = $region29
  $region28: #{comga_forward.12} parent=0 // pred_region
    %v865 = vld [vmem:[#allocation2] sm:$0xff]
    %v866 = vld [vmem:[#allocation2 + $0x8] sm:$0xff]
    %v867 = vld [vmem:[#allocation2 + $0x10] sm:$0xff]
    %v868 = vld [vmem:[#allocation2 + $0x18] sm:$0xff]
    %v869 = vld [vmem:[#allocation2 + $0x20] sm:$0xff]
    %v870 = vld [vmem:[#allocation2 + $0x28] sm:$0xff]
    %v871 = vld [vmem:[#allocation2 + $0x30] sm:$0xff]
    %v872 = vld [vmem:[#allocation2 + $0x38] sm:$0xff]
    %v873 = vld [vmem:[#allocation2 + $0x40] sm:$0xff]
    %v874 = vld [vmem:[#allocation2 + $0x48] sm:$0xff]
    %v875 = vld [vmem:[#allocation2 + $0x50] sm:$0xff]
    %v876 = vld [vmem:[#allocation2 + $0x58] sm:$0xff]
    %v877 = vld [vmem:[#allocation2 + $0x60] sm:$0xff]
    %v878 = vld [vmem:[#allocation2 + $0x68] sm:$0xff]
    %v879 = vld [vmem:[#allocation2 + $0x70] sm:$0xff]
    %v880 = vld [vmem:[#allocation2 + $0x78] sm:$0xff]
    %v881 = vld [vmem:[#allocation2 + $0x80] sm:$0xff]
    %v882 = vld [vmem:[#allocation2 + $0x88] sm:$0xff]
    %v883 = vld [vmem:[#allocation2 + $0x90] sm:$0xff]
    %v884 = vld [vmem:[#allocation2 + $0x98] sm:$0xff]
    %v885 = vld [vmem:[#allocation2 + $0xa0] sm:$0xff]
    %v886 = vld [vmem:[#allocation2 + $0xa8] sm:$0xff]
    %v887 = vld [vmem:[#allocation2 + $0xb0] sm:$0xff]
    %v888 = vld [vmem:[#allocation2 + $0xb8] sm:$0xff]
    %v889 = vld [vmem:[#allocation2 + $0xc0] sm:$0xff]
    %v890 = vld [vmem:[#allocation2 + $0xc8] sm:$0xff]
    %v891 = vld [vmem:[#allocation2 + $0xd0] sm:$0xff]
    %v892 = vld [vmem:[#allocation2 + $0xd8] sm:$0xff]
    %v893 = vld [vmem:[#allocation2 + $0xe0] sm:$0xff]
    %v894 = vld [vmem:[#allocation2 + $0xe8] sm:$0xff]
    %v895 = vld [vmem:[#allocation2 + $0xf0] sm:$0xff]
    %v896 = vld [vmem:[#allocation2 + $0xf8] sm:$0xff]
    %v897 = vld [vmem:[%s4] sm:$0x1]
    %v899 = vlaneseq
    %v900 = vshrl.u32 %v899, 7
    %v901 = vsub.s32 0, %v900
    %v902 = vrot.slane %v897, %v901
    %v904 = vadd.f32 %v865, %v902
    %v905 = vadd.f32 %v866, %v902
    %v906 = vadd.f32 %v867, %v902
    %v907 = vadd.f32 %v868, %v902
    %v908 = vadd.f32 %v869, %v902
    %v909 = vadd.f32 %v870, %v902
    %v910 = vadd.f32 %v871, %v902
    %v911 = vadd.f32 %v872, %v902
    %v912 = vadd.f32 %v873, %v902
    %v913 = vadd.f32 %v874, %v902
    %v914 = vadd.f32 %v875, %v902
    %v915 = vadd.f32 %v876, %v902
    %v916 = vadd.f32 %v877, %v902
    %v917 = vadd.f32 %v878, %v902
    %v918 = vadd.f32 %v879, %v902
    %v919 = vadd.f32 %v880, %v902
    %v920 = vadd.f32 %v881, %v902
    %v921 = vadd.f32 %v882, %v902
    %v922 = vadd.f32 %v883, %v902
    %v923 = vadd.f32 %v884, %v902
    %v924 = vadd.f32 %v885, %v902
    %v925 = vadd.f32 %v886, %v902
    %v926 = vadd.f32 %v887, %v902
    %v927 = vadd.f32 %v888, %v902
    %v928 = vadd.f32 %v889, %v902
    %v929 = vadd.f32 %v890, %v902
    %v930 = vadd.f32 %v891, %v902
    %v931 = vadd.f32 %v892, %v902
    %v932 = vadd.f32 %v893, %v902
    %v933 = vadd.f32 %v894, %v902
    %v934 = vadd.f32 %v895, %v902
    %v935 = vadd.f32 %v896, %v902
    %v936 = vmax.f32 %v904, 0.0
    %v937 = vmax.f32 %v905, 0.0
    %v938 = vmax.f32 %v906, 0.0
    %v939 = vmax.f32 %v907, 0.0
    %v940 = vmax.f32 %v908, 0.0
    %v941 = vmax.f32 %v909, 0.0
    %v942 = vmax.f32 %v910, 0.0
    %v943 = vmax.f32 %v911, 0.0
    %v944 = vmax.f32 %v912, 0.0
    %v945 = vmax.f32 %v913, 0.0
    %v946 = vmax.f32 %v914, 0.0
    %v947 = vmax.f32 %v915, 0.0
    %v948 = vmax.f32 %v916, 0.0
    %v949 = vmax.f32 %v917, 0.0
    %v950 = vmax.f32 %v918, 0.0
    %v951 = vmax.f32 %v919, 0.0
    %v952 = vmax.f32 %v920, 0.0
    %v953 = vmax.f32 %v921, 0.0
    %v954 = vmax.f32 %v922, 0.0
    %v955 = vmax.f32 %v923, 0.0
    %v956 = vmax.f32 %v924, 0.0
    %v957 = vmax.f32 %v925, 0.0
    %v958 = vmax.f32 %v926, 0.0
    %v959 = vmax.f32 %v927, 0.0
    %v960 = vmax.f32 %v928, 0.0
    %v961 = vmax.f32 %v929, 0.0
    %v962 = vmax.f32 %v930, 0.0
    %v963 = vmax.f32 %v931, 0.0
    %v964 = vmax.f32 %v932, 0.0
    %v965 = vmax.f32 %v933, 0.0
    %v966 = vmax.f32 %v934, 0.0
    %v967 = vmax.f32 %v935, 0.0
    %968 = vst.msk [vmem:[%s5] sm:$0xff] %vm829, %v936
    %969 = vst.msk [vmem:[%s5 + $0x8] sm:$0xff] %vm829, %v937
    %970 = vst.msk [vmem:[%s5 + $0x10] sm:$0xff] %vm829, %v938
    %971 = vst.msk [vmem:[%s5 + $0x18] sm:$0xff] %vm829, %v939
    %972 = vst.msk [vmem:[%s5 + $0x20] sm:$0xff] %vm829, %v940
    %973 = vst.msk [vmem:[%s5 + $0x28] sm:$0xff] %vm829, %v941
    %974 = vst.msk [vmem:[%s5 + $0x30] sm:$0xff] %vm829, %v942
    %975 = vst.msk [vmem:[%s5 + $0x38] sm:$0xff] %vm829, %v943
    %976 = vst.msk [vmem:[%s5 + $0x40] sm:$0xff] %vm829, %v944
    %977 = vst.msk [vmem:[%s5 + $0x48] sm:$0xff] %vm829, %v945
    %978 = vst.msk [vmem:[%s5 + $0x50] sm:$0xff] %vm829, %v946
    %979 = vst.msk [vmem:[%s5 + $0x58] sm:$0xff] %vm829, %v947
    %980 = vst.msk [vmem:[%s5 + $0x60] sm:$0xff] %vm829, %v948
    %981 = vst.msk [vmem:[%s5 + $0x68] sm:$0xff] %vm829, %v949
    %982 = vst.msk [vmem:[%s5 + $0x70] sm:$0xff] %vm829, %v950
    %983 = vst.msk [vmem:[%s5 + $0x78] sm:$0xff] %vm829, %v951
    %984 = vst.msk [vmem:[%s5 + $0x80] sm:$0xff] %vm829, %v952
    %985 = vst.msk [vmem:[%s5 + $0x88] sm:$0xff] %vm829, %v953
    %986 = vst.msk [vmem:[%s5 + $0x90] sm:$0xff] %vm829, %v954
    %987 = vst.msk [vmem:[%s5 + $0x98] sm:$0xff] %vm829, %v955
    %988 = vst.msk [vmem:[%s5 + $0xa0] sm:$0xff] %vm829, %v956
    %989 = vst.msk [vmem:[%s5 + $0xa8] sm:$0xff] %vm829, %v957
    %990 = vst.msk [vmem:[%s5 + $0xb0] sm:$0xff] %vm829, %v958
    %991 = vst.msk [vmem:[%s5 + $0xb8] sm:$0xff] %vm829, %v959
    %992 = vst.msk [vmem:[%s5 + $0xc0] sm:$0xff] %vm829, %v960
    %993 = vst.msk [vmem:[%s5 + $0xc8] sm:$0xff] %vm829, %v961
    %994 = vst.msk [vmem:[%s5 + $0xd0] sm:$0xff] %vm829, %v962
    %995 = vst.msk [vmem:[%s5 + $0xd8] sm:$0xff] %vm829, %v963
    %996 = vst.msk [vmem:[%s5 + $0xe0] sm:$0xff] %vm829, %v964
    %997 = vst.msk [vmem:[%s5 + $0xe8] sm:$0xff] %vm829, %v965
    %998 = vst.msk [vmem:[%s5 + $0xf0] sm:$0xff] %vm829, %v966
    %999 = vst.msk [vmem:[%s5 + $0xf8] sm:$0xff] %vm829, %v967
  $region29: #{comga_forward.12} parent=0 // pred_fallthru
    _
  // Predicated region
  $region30: #{comga_forward.12} parent=0 // pred_check
    _
  $region31: #{comga_forward.12} parent=0 // pred_check_branch
    %1001 = sbr.rel (0) target = $region33
  $region32: #{comga_forward.12} parent=0 // pred_region
    _
  $region33: #{comga_forward.12} parent=0 // pred_fallthru
    _
  // Predicated region
  $region34: #{comga_forward.12} parent=0 // pred_check
    _
  $region35: #{comga_forward.12} parent=0 // pred_check_branch
    %1003 = sbr.rel (0) target = $region37
  $region36: #{comga_forward.12} parent=0 // pred_region
    _
  $region37: #{comga_forward.12} parent=0 // pred_fallthru
    _

// kernel: comga_forward.10
$region0: #{comga_forward.10}
  #allocation0 [shape = 'u32[]', space=smem, size = 0x4, offset = 0x4, fixed_abs, tag = 'smem constant byte address 0x4 - core index']
  #allocation1 [shape = 'u32[144,128]{1,0:T(1,128)}', space=vmem, size = 0x12000, scoped, tag = 'internal scratch']
  %s0 = inlined_call_operand.vmem [shape: bf16[256,256], index: 0, kind: input, shape index: {}]
  %s1 = inlined_call_operand.vmem [shape: bf16[256,32], index: 1, kind: input, shape index: {}]
  %s2 = inlined_call_operand.vmem [shape: f32[1,32], index: 2, kind: input, shape index: {}]
  %s3 = inlined_call_operand.vmem [shape: bf16[32,16], index: 3, kind: input, shape index: {}]
  %s4 = inlined_call_operand.vmem [shape: f32[1,16], index: 4, kind: input, shape index: {}]
  %s5 = inlined_call_operand.vmem [shape: bf16[16,8], index: 5, kind: input, shape index: {}]
  %s6 = inlined_call_operand.vmem [shape: f32[1,8], index: 6, kind: input, shape index: {}]
  %s7 = inlined_call_operand.vmem [shape: bf16[8,16], index: 7, kind: input, shape index: {}]
  %s8 = inlined_call_operand.vmem [shape: f32[1,16], index: 8, kind: input, shape index: {}]
  %s9 = inlined_call_operand.vmem [shape: bf16[16,32], index: 9, kind: input, shape index: {}]
  %s10 = inlined_call_operand.vmem [shape: f32[1,32], index: 10, kind: input, shape index: {}]
  %s11 = inlined_call_operand.vmem [shape: bf16[32,256], index: 11, kind: input, shape index: {}]
  %s12 = inlined_call_operand.vmem [shape: f32[1,256], index: 12, kind: input, shape index: {}]
  %s13 = inlined_call_operand.vmem [shape: f32[256,32], index: 13, kind: output, shape index: {0}]
  %s14 = inlined_call_operand.vmem [shape: f32[256,16], index: 14, kind: output, shape index: {1}]
  %s15 = inlined_call_operand.vmem [shape: f32[256,8], index: 15, kind: output, shape index: {2}]
  %s16 = inlined_call_operand.vmem [shape: f32[256,256], index: 16, kind: output, shape index: {3}]
  %17 = xla_tuple %s13, %s14, %s15, %s16
  %s18 = sld [smem:[#allocation0]]
  $region86: #{comga_forward.10} parent=0
    _
  %s20 = ssub.s32 1, %s18
  %s21 = scalar_select 0, %s20, %s18
  // Predicated region
  $region2: #{comga_forward.10} parent=0 // pred_check
    _
  $region3: #{comga_forward.10} parent=0 // pred_check_branch
    %23 = sbr.rel (0) target = $region5
  $region4: #{comga_forward.10} parent=0 // pred_region
    _
  $region5: #{comga_forward.10} parent=0 // pred_fallthru
    _
  // Predicated region
  $region6: #{comga_forward.10} parent=0 // pred_check
    _
  $region7: #{comga_forward.10} parent=0 // pred_check_branch
    %25 = sbr.rel (0) target = $region9
  $region8: #{comga_forward.10} parent=0 // pred_region
    _
  $region9: #{comga_forward.10} parent=0 // pred_fallthru
    _
  // Predicated region
  $region10: #{comga_forward.10} parent=0 // pred_check
    _
  $region11: #{comga_forward.10} parent=0 // pred_check_branch
    %27 = sbr.rel (0) target = $region13
  $region12: #{comga_forward.10} parent=0 // pred_region
    _
  $region13: #{comga_forward.10} parent=0 // pred_fallthru
    _
  // Predicated region
  $region14: #{comga_forward.10} parent=0 // pred_check
    _
  $region15: #{comga_forward.10} parent=0 // pred_check_branch
    %29 = sbr.rel (0) target = $region17
  $region16: #{comga_forward.10} parent=0 // pred_region
    _
  $region17: #{comga_forward.10} parent=0 // pred_fallthru
    _
  // Predicated region
  $region18: #{comga_forward.10} parent=0 // pred_check
    _
  $region19: #{comga_forward.10} parent=0 // pred_check_branch
    %31 = sbr.rel (0) target = $region21
  $region20: #{comga_forward.10} parent=0 // pred_region
    _
  $region21: #{comga_forward.10} parent=0 // pred_fallthru
    _
  // Predicated region
  $region22: #{comga_forward.10} parent=0 // pred_check
    _
  $region23: #{comga_forward.10} parent=0 // pred_check_branch
    %33 = sbr.rel (0) target = $region25
  $region24: #{comga_forward.10} parent=0 // pred_region
    _
  $region25: #{comga_forward.10} parent=0 // pred_fallthru
    _
  // Predicated region
  $region26: #{comga_forward.10} parent=0 // pred_check
    _
  $region27: #{comga_forward.10} parent=0 // pred_check_branch
    %35 = sbr.rel (0) target = $region29
  $region28: #{comga_forward.10} parent=0 // pred_region
    _
  $region29: #{comga_forward.10} parent=0 // pred_fallthru
    _
  // Predicated region
  $region30: #{comga_forward.10} parent=0 // pred_check
    _
  $region31: #{comga_forward.10} parent=0 // pred_check_branch
    %37 = sbr.rel (0) target = $region33
  $region32: #{comga_forward.10} parent=0 // pred_region
    _
  $region33: #{comga_forward.10} parent=0 // pred_fallthru
    _
  // Predicated region
  $region34: #{comga_forward.10} parent=0 // pred_check
    _
  $region35: #{comga_forward.10} parent=0 // pred_check_branch
    %39 = sbr.rel (0) target = $region37
  $region36: #{comga_forward.10} parent=0 // pred_region
    _
  $region37: #{comga_forward.10} parent=0 // pred_fallthru
    _
  // Predicated region
  $region38: #{comga_forward.10} parent=0 // pred_check
    _
  $region39: #{comga_forward.10} parent=0 // pred_check_branch
    %41 = sbr.rel (0) target = $region41
  $region40: #{comga_forward.10} parent=0 // pred_region
    _
  $region41: #{comga_forward.10} parent=0 // pred_fallthru
    _
  // Predicated region
  $region42: #{comga_forward.10} parent=0 // pred_check
    _
  $region43: #{comga_forward.10} parent=0 // pred_check_branch
    %43 = sbr.rel (0) target = $region45
  $region44: #{comga_forward.10} parent=0 // pred_region
    _
  $region45: #{comga_forward.10} parent=0 // pred_fallthru
    _
  // Predicated region
  $region46: #{comga_forward.10} parent=0 // pred_check
    _
  $region47: #{comga_forward.10} parent=0 // pred_check_branch
    %45 = sbr.rel (0) target = $region49
  $region48: #{comga_forward.10} parent=0 // pred_region
    _
  $region49: #{comga_forward.10} parent=0 // pred_fallthru
    _
  // Predicated region
  $region50: #{comga_forward.10} parent=0 // pred_check
    _
  $region51: #{comga_forward.10} parent=0 // pred_check_branch
    %47 = sbr.rel (0) target = $region53
  $region52: #{comga_forward.10} parent=0 // pred_region
    _
  $region53: #{comga_forward.10} parent=0 // pred_fallthru
    _
  %v49 = vld [vmem:[%s0] sm:$0xff]
  %v50 = vld [vmem:[%s0 + $0x8] sm:$0xff]
  %v51 = vld [vmem:[%s0 + $0x10] sm:$0xff]
  %v52 = vld [vmem:[%s0 + $0x18] sm:$0xff]
  %v53 = vld [vmem:[%s0 + $0x20] sm:$0xff]
  %v54 = vld [vmem:[%s0 + $0x28] sm:$0xff]
  %v55 = vld [vmem:[%s0 + $0x30] sm:$0xff]
  %v56 = vld [vmem:[%s0 + $0x38] sm:$0xff]
  %v57 = vld [vmem:[%s0 + $0x40] sm:$0xff]
  %v58 = vld [vmem:[%s0 + $0x48] sm:$0xff]
  %v59 = vld [vmem:[%s0 + $0x50] sm:$0xff]
  %v60 = vld [vmem:[%s0 + $0x58] sm:$0xff]
  %v61 = vld [vmem:[%s0 + $0x60] sm:$0xff]
  %v62 = vld [vmem:[%s0 + $0x68] sm:$0xff]
  %v63 = vld [vmem:[%s0 + $0x70] sm:$0xff]
  %v64 = vld [vmem:[%s0 + $0x78] sm:$0xff]
  %v65 = vld [vmem:[%s0 + $0x80] sm:$0xff]
  %v66 = vld [vmem:[%s0 + $0x88] sm:$0xff]
  %v67 = vld [vmem:[%s0 + $0x90] sm:$0xff]
  %v68 = vld [vmem:[%s0 + $0x98] sm:$0xff]
  %v69 = vld [vmem:[%s0 + $0xa0] sm:$0xff]
  %v70 = vld [vmem:[%s0 + $0xa8] sm:$0xff]
  %v71 = vld [vmem:[%s0 + $0xb0] sm:$0xff]
  %v72 = vld [vmem:[%s0 + $0xb8] sm:$0xff]
  %v73 = vld [vmem:[%s0 + $0xc0] sm:$0xff]
  %v74 = vld [vmem:[%s0 + $0xc8] sm:$0xff]
  %v75 = vld [vmem:[%s0 + $0xd0] sm:$0xff]
  %v76 = vld [vmem:[%s0 + $0xd8] sm:$0xff]
  %v77 = vld [vmem:[%s0 + $0xe0] sm:$0xff]
  %v78 = vld [vmem:[%s0 + $0xe8] sm:$0xff]
  %v79 = vld [vmem:[%s0 + $0xf0] sm:$0xff]
  %v80 = vld [vmem:[%s0 + $0xf8] sm:$0xff]
  %v81 = vld [vmem:[%s1] sm:$0xf]
  %v82 = vld [vmem:[%s1 + $0x4] sm:$0xf]
  %v83 = vld [vmem:[%s1 + $0x8] sm:$0xf]
  %v84 = vld [vmem:[%s1 + $0xc] sm:$0xf]
  %v85 = vld [vmem:[%s1 + $0x10] sm:$0xf]
  %v86 = vld [vmem:[%s1 + $0x14] sm:$0xf]
  %v87 = vld [vmem:[%s1 + $0x18] sm:$0xf]
  %v88 = vld [vmem:[%s1 + $0x1c] sm:$0xf]
  %v89 = vld [vmem:[%s1 + $0x20] sm:$0xf]
  %v90 = vld [vmem:[%s1 + $0x24] sm:$0xf]
  %v91 = vld [vmem:[%s1 + $0x28] sm:$0xf]
  %v92 = vld [vmem:[%s1 + $0x2c] sm:$0xf]
  %v93 = vld [vmem:[%s1 + $0x30] sm:$0xf]
  %v94 = vld [vmem:[%s1 + $0x34] sm:$0xf]
  %v95 = vld [vmem:[%s1 + $0x38] sm:$0xf]
  %v96 = vld [vmem:[%s1 + $0x3c] sm:$0xf]
  %v97 = vld [vmem:[%s1 + $0x40] sm:$0xf]
  %v98 = vld [vmem:[%s1 + $0x44] sm:$0xf]
  %v99 = vld [vmem:[%s1 + $0x48] sm:$0xf]
  %v100 = vld [vmem:[%s1 + $0x4c] sm:$0xf]
  %v101 = vld [vmem:[%s1 + $0x50] sm:$0xf]
  %v102 = vld [vmem:[%s1 + $0x54] sm:$0xf]
  %v103 = vld [vmem:[%s1 + $0x58] sm:$0xf]
  %v104 = vld [vmem:[%s1 + $0x5c] sm:$0xf]
  %v105 = vld [vmem:[%s1 + $0x60] sm:$0xf]
  %v106 = vld [vmem:[%s1 + $0x64] sm:$0xf]
  %v107 = vld [vmem:[%s1 + $0x68] sm:$0xf]
  %v108 = vld [vmem:[%s1 + $0x6c] sm:$0xf]
  %v109 = vld [vmem:[%s1 + $0x70] sm:$0xf]
  %v110 = vld [vmem:[%s1 + $0x74] sm:$0xf]
  %v111 = vld [vmem:[%s1 + $0x78] sm:$0xf]
  %v112 = vld [vmem:[%s1 + $0x7c] sm:$0xf]
  %v113 = vld [vmem:[%s2] sm:$0x1]
  %v115 = vlaneseq
  %v116 = vshrl.u32 %v115, 7
  %v117 = vsub.s32 0, %v116
  %v118 = vrot.slane %v113, %v117
  %v152 = vunpack.c.l.b16 %v49
  %v153 = vunpack.c.h.b16 %v49
  %v154 = vunpack.c.l.b16 %v50
  %v155 = vunpack.c.h.b16 %v50
  %v156 = vunpack.c.l.b16 %v51
  %v157 = vunpack.c.h.b16 %v51
  %v158 = vunpack.c.l.b16 %v52
  %v159 = vunpack.c.h.b16 %v52
  %v160 = vunpack.c.l.b16 %v53
  %v161 = vunpack.c.h.b16 %v53
  %v162 = vunpack.c.l.b16 %v54
  %v163 = vunpack.c.h.b16 %v54
  %v164 = vunpack.c.l.b16 %v55
  %v165 = vunpack.c.h.b16 %v55
  %v166 = vunpack.c.l.b16 %v56
  %v167 = vunpack.c.h.b16 %v56
  %v168 = vunpack.c.l.b16 %v57
  %v169 = vunpack.c.h.b16 %v57
  %v170 = vunpack.c.l.b16 %v58
  %v171 = vunpack.c.h.b16 %v58
  %v172 = vunpack.c.l.b16 %v59
  %v173 = vunpack.c.h.b16 %v59
  %v174 = vunpack.c.l.b16 %v60
  %v175 = vunpack.c.h.b16 %v60
  %v176 = vunpack.c.l.b16 %v61
  %v177 = vunpack.c.h.b16 %v61
  %v178 = vunpack.c.l.b16 %v62
  %v179 = vunpack.c.h.b16 %v62
  %v180 = vunpack.c.l.b16 %v63
  %v181 = vunpack.c.h.b16 %v63
  %v182 = vunpack.c.l.b16 %v64
  %v183 = vunpack.c.h.b16 %v64
  %v184 = vunpack.c.l.b16 %v65
  %v185 = vunpack.c.h.b16 %v65
  %v186 = vunpack.c.l.b16 %v66
  %v187 = vunpack.c.h.b16 %v66
  %v188 = vunpack.c.l.b16 %v67
  %v189 = vunpack.c.h.b16 %v67
  %v190 = vunpack.c.l.b16 %v68
  %v191 = vunpack.c.h.b16 %v68
  %v192 = vunpack.c.l.b16 %v69
  %v193 = vunpack.c.h.b16 %v69
  %v194 = vunpack.c.l.b16 %v70
  %v195 = vunpack.c.h.b16 %v70
  %v196 = vunpack.c.l.b16 %v71
  %v197 = vunpack.c.h.b16 %v71
  %v198 = vunpack.c.l.b16 %v72
  %v199 = vunpack.c.h.b16 %v72
  %v200 = vunpack.c.l.b16 %v73
  %v201 = vunpack.c.h.b16 %v73
  %v202 = vunpack.c.l.b16 %v74
  %v203 = vunpack.c.h.b16 %v74
  %v204 = vunpack.c.l.b16 %v75
  %v205 = vunpack.c.h.b16 %v75
  %v206 = vunpack.c.l.b16 %v76
  %v207 = vunpack.c.h.b16 %v76
  %v208 = vunpack.c.l.b16 %v77
  %v209 = vunpack.c.h.b16 %v77
  %v210 = vunpack.c.l.b16 %v78
  %v211 = vunpack.c.h.b16 %v78
  %v212 = vunpack.c.l.b16 %v79
  %v213 = vunpack.c.h.b16 %v79
  %v214 = vunpack.c.l.b16 %v80
  %v215 = vunpack.c.h.b16 %v80
  %v216 = vpack.c.b16 %v154, %v152
  %v217 = vpack.c.b16 %v155, %v153
  %v218 = vpack.c.b16 %v158, %v156
  %v219 = vpack.c.b16 %v159, %v157
  %v220 = vpack.c.b16 %v162, %v160
  %v221 = vpack.c.b16 %v163, %v161
  %v222 = vpack.c.b16 %v166, %v164
  %v223 = vpack.c.b16 %v167, %v165
  %v224 = vpack.c.b16 %v170, %v168
  %v225 = vpack.c.b16 %v171, %v169
  %v226 = vpack.c.b16 %v174, %v172
  %v227 = vpack.c.b16 %v175, %v173
  %v228 = vpack.c.b16 %v178, %v176
  %v229 = vpack.c.b16 %v179, %v177
  %v230 = vpack.c.b16 %v182, %v180
  %v231 = vpack.c.b16 %v183, %v181
  %v232 = vpack.c.b16 %v186, %v184
  %v233 = vpack.c.b16 %v187, %v185
  %v234 = vpack.c.b16 %v190, %v188
  %v235 = vpack.c.b16 %v191, %v189
  %v236 = vpack.c.b16 %v194, %v192
  %v237 = vpack.c.b16 %v195, %v193
  %v238 = vpack.c.b16 %v198, %v196
  %v239 = vpack.c.b16 %v199, %v197
  %v240 = vpack.c.b16 %v202, %v200
  %v241 = vpack.c.b16 %v203, %v201
  %v242 = vpack.c.b16 %v206, %v204
  %v243 = vpack.c.b16 %v207, %v205
  %v244 = vpack.c.b16 %v210, %v208
  %v245 = vpack.c.b16 %v211, %v209
  %v246 = vpack.c.b16 %v214, %v212
  %v247 = vpack.c.b16 %v215, %v213
  %v312 = vunpack.c.l.b16 %v81
  %v313 = vunpack.c.l.b16 %v82
  %v314 = vunpack.c.l.b16 %v83
  %v315 = vunpack.c.l.b16 %v84
  %v316 = vunpack.c.l.b16 %v85
  %v317 = vunpack.c.l.b16 %v86
  %v318 = vunpack.c.l.b16 %v87
  %v319 = vunpack.c.l.b16 %v88
  %v320 = vunpack.c.l.b16 %v89
  %v321 = vunpack.c.l.b16 %v90
  %v322 = vunpack.c.l.b16 %v91
  %v323 = vunpack.c.l.b16 %v92
  %v324 = vunpack.c.l.b16 %v93
  %v325 = vunpack.c.l.b16 %v94
  %v326 = vunpack.c.l.b16 %v95
  %v327 = vunpack.c.l.b16 %v96
  %v328 = vunpack.c.l.b16 %v97
  %v329 = vunpack.c.l.b16 %v98
  %v330 = vunpack.c.l.b16 %v99
  %v331 = vunpack.c.l.b16 %v100
  %v332 = vunpack.c.l.b16 %v101
  %v333 = vunpack.c.l.b16 %v102
  %v334 = vunpack.c.l.b16 %v103
  %v335 = vunpack.c.l.b16 %v104
  %v336 = vunpack.c.l.b16 %v105
  %v337 = vunpack.c.l.b16 %v106
  %v338 = vunpack.c.l.b16 %v107
  %v339 = vunpack.c.l.b16 %v108
  %v340 = vunpack.c.l.b16 %v109
  %v341 = vunpack.c.l.b16 %v110
  %v342 = vunpack.c.l.b16 %v111
  %v343 = vunpack.c.l.b16 %v112
  %v344 = vpack.c.b16 %v313, %v312
  %v345 = vpack.c.b16 %v315, %v314
  %v346 = vpack.c.b16 %v317, %v316
  %v347 = vpack.c.b16 %v319, %v318
  %v348 = vpack.c.b16 %v321, %v320
  %v349 = vpack.c.b16 %v323, %v322
  %v350 = vpack.c.b16 %v325, %v324
  %v351 = vpack.c.b16 %v327, %v326
  %v352 = vpack.c.b16 %v329, %v328
  %v353 = vpack.c.b16 %v331, %v330
  %v354 = vpack.c.b16 %v333, %v332
  %v355 = vpack.c.b16 %v335, %v334
  %v356 = vpack.c.b16 %v337, %v336
  %v357 = vpack.c.b16 %v339, %v338
  %v358 = vpack.c.b16 %v341, %v340
  %v359 = vpack.c.b16 %v343, %v342
  %376 = vmatprep.subr.bf16.mxu0 0
  %377 = vmatpush1.bf16.msra.mxu0 %v351
  %378 = vmatprep.subr.bf16.mxu0 0
  %379 = vmatpush1.bf16.msra.mxu0 %v350
  %380 = vmatprep.subr.bf16.mxu0 0
  %381 = vmatpush1.bf16.msra.mxu0 %v349
  %382 = vmatprep.subr.bf16.mxu0 0
  %383 = vmatpush1.bf16.msra.mxu0 %v348
  %384 = vmatprep.subr.bf16.mxu0 0
  %385 = vmatpush1.bf16.msra.mxu0 %v347
  %386 = vmatprep.subr.bf16.mxu0 0
  %387 = vmatpush1.bf16.msra.mxu0 %v346
  %388 = vmatprep.subr.bf16.mxu0 0
  %389 = vmatpush1.bf16.msra.mxu0 %v345
  %390 = vmatprep.subr.bf16.mxu0 0
  %391 = vmatpush1.bf16.msra.mxu0 %v344
  %392 = vmatprep.subr.bf16.mxu0 0
  %393 = vmatpush2.bf16.msra.mxu0 %v359
  %394 = vmatprep.subr.bf16.mxu0 0
  %395 = vmatpush2.bf16.msra.mxu0 %v358
  %396 = vmatprep.subr.bf16.mxu0 0
  %397 = vmatpush2.bf16.msra.mxu0 %v357
  %398 = vmatprep.subr.bf16.mxu0 0
  %399 = vmatpush2.bf16.msra.mxu0 %v356
  %400 = vmatprep.subr.bf16.mxu0 0
  %401 = vmatpush2.bf16.msra.mxu0 %v355
  %402 = vmatprep.subr.bf16.mxu0 0
  %403 = vmatpush2.bf16.msra.mxu0 %v354
  %404 = vmatprep.subr.bf16.mxu0 0
  %405 = vmatpush2.bf16.msra.mxu0 %v353
  %406 = vmatprep.subr.bf16.mxu0 0
  %407 = vmatpush2.bf16.msra.mxu0 %v352
  %408 = vmatprep.mubr.bf16.mxu0 %v217
  %409 = vmatmul.mubr.bf16.gmra.mxu0 %v216
  %v410 = vpop.f32.mrf.mxu0
  %v411 = vadd.f32 %v118, %v410
  %v412 = vpop.f32.mrf.mxu0
  %v413 = vpop.f32.mrf.mxu0
  %v414 = vadd.f32 %v118, %v413
  %v415 = vpop.f32.mrf.mxu0
  %416 = vmatprep.mubr.bf16.mxu0 %v219
  %417 = vmatmul.mubr.bf16.gmra.mxu0 %v218
  %v418 = vpop.f32.mrf.mxu0
  %v419 = vadd.f32 %v118, %v418
  %v420 = vpop.f32.mrf.mxu0
  %v421 = vpop.f32.mrf.mxu0
  %v422 = vadd.f32 %v118, %v421
  %v423 = vpop.f32.mrf.mxu0
  %424 = vmatprep.mubr.bf16.mxu0 %v221
  %425 = vmatmul.mubr.bf16.gmra.mxu0 %v220
  %v426 = vpop.f32.mrf.mxu0
  %v427 = vadd.f32 %v118, %v426
  %v428 = vpop.f32.mrf.mxu0
  %v429 = vpop.f32.mrf.mxu0
  %v430 = vadd.f32 %v118, %v429
  %v431 = vpop.f32.mrf.mxu0
  %432 = vmatprep.mubr.bf16.mxu0 %v223
  %433 = vmatmul.mubr.bf16.gmra.mxu0 %v222
  %v434 = vpop.f32.mrf.mxu0
  %v435 = vadd.f32 %v118, %v434
  %v436 = vpop.f32.mrf.mxu0
  %v437 = vpop.f32.mrf.mxu0
  %v438 = vadd.f32 %v118, %v437
  %v439 = vpop.f32.mrf.mxu0
  %440 = vmatprep.mubr.bf16.mxu0 %v225
  %441 = vmatmul.mubr.bf16.gmra.mxu0 %v224
  %v442 = vpop.f32.mrf.mxu0
  %v443 = vadd.f32 %v118, %v442
  %v444 = vpop.f32.mrf.mxu0
  %v445 = vpop.f32.mrf.mxu0
  %v446 = vadd.f32 %v118, %v445
  %v447 = vpop.f32.mrf.mxu0
  %448 = vmatprep.mubr.bf16.mxu0 %v227
  %449 = vmatmul.mubr.bf16.gmra.mxu0 %v226
  %v450 = vpop.f32.mrf.mxu0
  %v451 = vadd.f32 %v118, %v450
  %v452 = vpop.f32.mrf.mxu0
  %v453 = vpop.f32.mrf.mxu0
  %v454 = vadd.f32 %v118, %v453
  %v455 = vpop.f32.mrf.mxu0
  %456 = vmatprep.mubr.bf16.mxu0 %v229
  %457 = vmatmul.mubr.bf16.gmra.mxu0 %v228
  %v458 = vpop.f32.mrf.mxu0
  %v459 = vadd.f32 %v118, %v458
  %v460 = vpop.f32.mrf.mxu0
  %v461 = vpop.f32.mrf.mxu0
  %v462 = vadd.f32 %v118, %v461
  %v463 = vpop.f32.mrf.mxu0
  %464 = vmatprep.mubr.bf16.mxu0 %v231
  %465 = vmatmul.mubr.bf16.gmra.mxu0 %v230
  %v466 = vpop.f32.mrf.mxu0
  %v467 = vadd.f32 %v118, %v466
  %v468 = vpop.f32.mrf.mxu0
  %v469 = vpop.f32.mrf.mxu0
  %v470 = vadd.f32 %v118, %v469
  %v471 = vpop.f32.mrf.mxu0
  %472 = vmatprep.mubr.bf16.mxu0 %v233
  %473 = vmatmul.mubr.bf16.gmra.mxu0 %v232
  %v474 = vpop.f32.mrf.mxu0
  %v475 = vadd.f32 %v118, %v474
  %v476 = vpop.f32.mrf.mxu0
  %v477 = vpop.f32.mrf.mxu0
  %v478 = vadd.f32 %v118, %v477
  %v479 = vpop.f32.mrf.mxu0
  %480 = vmatprep.mubr.bf16.mxu0 %v235
  %481 = vmatmul.mubr.bf16.gmra.mxu0 %v234
  %v482 = vpop.f32.mrf.mxu0
  %v483 = vadd.f32 %v118, %v482
  %v484 = vpop.f32.mrf.mxu0
  %v485 = vpop.f32.mrf.mxu0
  %v486 = vadd.f32 %v118, %v485
  %v487 = vpop.f32.mrf.mxu0
  %488 = vmatprep.mubr.bf16.mxu0 %v237
  %489 = vmatmul.mubr.bf16.gmra.mxu0 %v236
  %v490 = vpop.f32.mrf.mxu0
  %v491 = vadd.f32 %v118, %v490
  %v492 = vpop.f32.mrf.mxu0
  %v493 = vpop.f32.mrf.mxu0
  %v494 = vadd.f32 %v118, %v493
  %v495 = vpop.f32.mrf.mxu0
  %496 = vmatprep.mubr.bf16.mxu0 %v239
  %497 = vmatmul.mubr.bf16.gmra.mxu0 %v238
  %v498 = vpop.f32.mrf.mxu0
  %v499 = vadd.f32 %v118, %v498
  %v500 = vpop.f32.mrf.mxu0
  %v501 = vpop.f32.mrf.mxu0
  %v502 = vadd.f32 %v118, %v501
  %v503 = vpop.f32.mrf.mxu0
  %504 = vmatprep.mubr.bf16.mxu0 %v241
  %505 = vmatmul.mubr.bf16.gmra.mxu0 %v240
  %v506 = vpop.f32.mrf.mxu0
  %v507 = vadd.f32 %v118, %v506
  %v508 = vpop.f32.mrf.mxu0
  %v509 = vpop.f32.mrf.mxu0
  %v510 = vadd.f32 %v118, %v509
  %v511 = vpop.f32.mrf.mxu0
  %512 = vmatprep.mubr.bf16.mxu0 %v243
  %513 = vmatmul.mubr.bf16.gmra.mxu0 %v242
  %v514 = vpop.f32.mrf.mxu0
  %v515 = vadd.f32 %v118, %v514
  %v516 = vpop.f32.mrf.mxu0
  %v517 = vpop.f32.mrf.mxu0
  %v518 = vadd.f32 %v118, %v517
  %v519 = vpop.f32.mrf.mxu0
  %520 = vmatprep.mubr.bf16.mxu0 %v245
  %521 = vmatmul.mubr.bf16.gmra.mxu0 %v244
  %v522 = vpop.f32.mrf.mxu0
  %v523 = vadd.f32 %v118, %v522
  %v524 = vpop.f32.mrf.mxu0
  %v525 = vpop.f32.mrf.mxu0
  %v526 = vadd.f32 %v118, %v525
  %v527 = vpop.f32.mrf.mxu0
  %528 = vmatprep.mubr.bf16.mxu0 %v247
  %529 = vmatmul.mubr.bf16.gmra.mxu0 %v246
  %v530 = vpop.f32.mrf.mxu0
  %v531 = vadd.f32 %v118, %v530
  %v532 = vpop.f32.mrf.mxu0
  %v533 = vpop.f32.mrf.mxu0
  %v534 = vadd.f32 %v118, %v533
  %v535 = vpop.f32.mrf.mxu0
  %536 = vdwg.mxu0
  %v537 = vmax.f32 %v411, 0.0
  %v538 = vmax.f32 %v414, 0.0
  %v539 = vmax.f32 %v419, 0.0
  %v540 = vmax.f32 %v422, 0.0
  %v541 = vmax.f32 %v427, 0.0
  %v542 = vmax.f32 %v430, 0.0
  %v543 = vmax.f32 %v435, 0.0
  %v544 = vmax.f32 %v438, 0.0
  %v545 = vmax.f32 %v443, 0.0
  %v546 = vmax.f32 %v446, 0.0
  %v547 = vmax.f32 %v451, 0.0
  %v548 = vmax.f32 %v454, 0.0
  %v549 = vmax.f32 %v459, 0.0
  %v550 = vmax.f32 %v462, 0.0
  %v551 = vmax.f32 %v467, 0.0
  %v552 = vmax.f32 %v470, 0.0
  %v553 = vmax.f32 %v475, 0.0
  %v554 = vmax.f32 %v478, 0.0
  %v555 = vmax.f32 %v483, 0.0
  %v556 = vmax.f32 %v486, 0.0
  %v557 = vmax.f32 %v491, 0.0
  %v558 = vmax.f32 %v494, 0.0
  %v559 = vmax.f32 %v499, 0.0
  %v560 = vmax.f32 %v502, 0.0
  %v561 = vmax.f32 %v507, 0.0
  %v562 = vmax.f32 %v510, 0.0
  %v563 = vmax.f32 %v515, 0.0
  %v564 = vmax.f32 %v518, 0.0
  %v565 = vmax.f32 %v523, 0.0
  %v566 = vmax.f32 %v526, 0.0
  %v567 = vmax.f32 %v531, 0.0
  %v568 = vmax.f32 %v534, 0.0
  %v569 = vpack.c.bf16 %v538, %v537
  %v570 = vpack.c.bf16 %v540, %v539
  %v571 = vpack.c.bf16 %v542, %v541
  %v572 = vpack.c.bf16 %v544, %v543
  %v573 = vpack.c.bf16 %v546, %v545
  %v574 = vpack.c.bf16 %v548, %v547
  %v575 = vpack.c.bf16 %v550, %v549
  %v576 = vpack.c.bf16 %v552, %v551
  %v577 = vpack.c.bf16 %v554, %v553
  %v578 = vpack.c.bf16 %v556, %v555
  %v579 = vpack.c.bf16 %v558, %v557
  %v580 = vpack.c.bf16 %v560, %v559
  %v581 = vpack.c.bf16 %v562, %v561
  %v582 = vpack.c.bf16 %v564, %v563
  %v583 = vpack.c.bf16 %v566, %v565
  %v584 = vpack.c.bf16 %v568, %v567
  %v585 = vld [vmem:[%s3] sm:$0xf]
  %v586 = vld [vmem:[%s3 + $0x4] sm:$0xf]
  %v587 = vld [vmem:[%s3 + $0x8] sm:$0xf]
  %v588 = vld [vmem:[%s3 + $0xc] sm:$0xf]
  %v589 = vld [vmem:[%s4] sm:$0x1]
  %v591 = vlaneseq
  %v592 = vshrl.u32 %v591, 7
  %v593 = vsub.s32 0, %v592
  %v594 = vrot.slane %v589, %v593
  %v600 = vunpack.c.l.b16 %v585
  %v601 = vunpack.c.l.b16 %v586
  %v602 = vunpack.c.l.b16 %v587
  %v603 = vunpack.c.l.b16 %v588
  %v604 = vpack.c.b16 %v601, %v600
  %v605 = vpack.c.b16 %v603, %v602
  %vm608 = vcmask 261120
  %v610 = vsel %vm608, %v569, 0
  %v613 = vsel %vm608, %v570, 0
  %v616 = vsel %vm608, %v571, 0
  %v619 = vsel %vm608, %v572, 0
  %v622 = vsel %vm608, %v573, 0
  %v625 = vsel %vm608, %v574, 0
  %v628 = vsel %vm608, %v575, 0
  %v631 = vsel %vm608, %v576, 0
  %v634 = vsel %vm608, %v577, 0
  %v637 = vsel %vm608, %v578, 0
  %v640 = vsel %vm608, %v579, 0
  %v643 = vsel %vm608, %v580, 0
  %v646 = vsel %vm608, %v581, 0
  %v649 = vsel %vm608, %v582, 0
  %v652 = vsel %vm608, %v583, 0
  %v655 = vsel %vm608, %v584, 0
  %657 = vmatprep.subr.bf16.mxu0 0
  %658 = vmatpush1.bf16.msra.mxu0 0
  %659 = vmatprep.subr.bf16.mxu0 0
  %660 = vmatpush1.bf16.msra.mxu0 0
  %661 = vmatprep.subr.bf16.mxu0 0
  %662 = vmatpush1.bf16.msra.mxu0 0
  %663 = vmatprep.subr.bf16.mxu0 0
  %664 = vmatpush1.bf16.msra.mxu0 0
  %665 = vmatprep.subr.bf16.mxu0 0
  %666 = vmatpush1.bf16.msra.mxu0 0
  %667 = vmatprep.subr.bf16.mxu0 0
  %668 = vmatpush1.bf16.msra.mxu0 0
  %669 = vmatprep.subr.bf16.mxu0 0
  %670 = vmatpush1.bf16.msra.mxu0 %v605
  %671 = vmatprep.subr.bf16.mxu0 0
  %672 = vmatpush1.bf16.msra.mxu0 %v604
  %673 = vmatprep.subr.bf16.mxu0 0
  %674 = vmatpush2.bf16.msra.mxu0 0
  %675 = vmatprep.subr.bf16.mxu0 0
  %676 = vmatpush2.bf16.msra.mxu0 0
  %677 = vmatprep.subr.bf16.mxu0 0
  %678 = vmatpush2.bf16.msra.mxu0 0
  %679 = vmatprep.subr.bf16.mxu0 0
  %680 = vmatpush2.bf16.msra.mxu0 0
  %681 = vmatprep.subr.bf16.mxu0 0
  %682 = vmatpush2.bf16.msra.mxu0 0
  %683 = vmatprep.subr.bf16.mxu0 0
  %684 = vmatpush2.bf16.msra.mxu0 0
  %685 = vmatprep.subr.bf16.mxu0 0
  %686 = vmatpush2.bf16.msra.mxu0 0
  %687 = vmatprep.subr.bf16.mxu0 0
  %688 = vmatpush2.bf16.msra.mxu0 0
  %689 = vmatprep.mubr.bf16.mxu0 0
  %690 = vmatmul.mubr.bf16.gmra.mxu0 %v610
  %v691 = vpop.f32.mrf.mxu0
  %v692 = vadd.f32 %v594, %v691
  %v693 = vpop.f32.mrf.mxu0
  %v694 = vpop.f32.mrf.mxu0
  %v695 = vadd.f32 %v594, %v694
  %v696 = vpop.f32.mrf.mxu0
  %697 = vmatprep.mubr.bf16.mxu0 0
  %698 = vmatmul.mubr.bf16.gmra.mxu0 %v613
  %v699 = vpop.f32.mrf.mxu0
  %v700 = vadd.f32 %v594, %v699
  %v701 = vpop.f32.mrf.mxu0
  %v702 = vpop.f32.mrf.mxu0
  %v703 = vadd.f32 %v594, %v702
  %v704 = vpop.f32.mrf.mxu0
  %705 = vmatprep.mubr.bf16.mxu0 0
  %706 = vmatmul.mubr.bf16.gmra.mxu0 %v616
  %v707 = vpop.f32.mrf.mxu0
  %v708 = vadd.f32 %v594, %v707
  %v709 = vpop.f32.mrf.mxu0
  %v710 = vpop.f32.mrf.mxu0
  %v711 = vadd.f32 %v594, %v710
  %v712 = vpop.f32.mrf.mxu0
  %713 = vmatprep.mubr.bf16.mxu0 0
  %714 = vmatmul.mubr.bf16.gmra.mxu0 %v619
  %v715 = vpop.f32.mrf.mxu0
  %v716 = vadd.f32 %v594, %v715
  %v717 = vpop.f32.mrf.mxu0
  %v718 = vpop.f32.mrf.mxu0
  %v719 = vadd.f32 %v594, %v718
  %v720 = vpop.f32.mrf.mxu0
  %721 = vmatprep.mubr.bf16.mxu0 0
  %722 = vmatmul.mubr.bf16.gmra.mxu0 %v622
  %v723 = vpop.f32.mrf.mxu0
  %v724 = vadd.f32 %v594, %v723
  %v725 = vpop.f32.mrf.mxu0
  %v726 = vpop.f32.mrf.mxu0
  %v727 = vadd.f32 %v594, %v726
  %v728 = vpop.f32.mrf.mxu0
  %729 = vmatprep.mubr.bf16.mxu0 0
  %730 = vmatmul.mubr.bf16.gmra.mxu0 %v625
  %v731 = vpop.f32.mrf.mxu0
  %v732 = vadd.f32 %v594, %v731
  %v733 = vpop.f32.mrf.mxu0
  %v734 = vpop.f32.mrf.mxu0
  %v735 = vadd.f32 %v594, %v734
  %v736 = vpop.f32.mrf.mxu0
  %737 = vmatprep.mubr.bf16.mxu0 0
  %738 = vmatmul.mubr.bf16.gmra.mxu0 %v628
  %v739 = vpop.f32.mrf.mxu0
  %v740 = vadd.f32 %v594, %v739
  %v741 = vpop.f32.mrf.mxu0
  %v742 = vpop.f32.mrf.mxu0
  %v743 = vadd.f32 %v594, %v742
  %v744 = vpop.f32.mrf.mxu0
  %745 = vmatprep.mubr.bf16.mxu0 0
  %746 = vmatmul.mubr.bf16.gmra.mxu0 %v631
  %v747 = vpop.f32.mrf.mxu0
  %v748 = vadd.f32 %v594, %v747
  %v749 = vpop.f32.mrf.mxu0
  %v750 = vpop.f32.mrf.mxu0
  %v751 = vadd.f32 %v594, %v750
  %v752 = vpop.f32.mrf.mxu0
  %753 = vmatprep.mubr.bf16.mxu0 0
  %754 = vmatmul.mubr.bf16.gmra.mxu0 %v634
  %v755 = vpop.f32.mrf.mxu0
  %v756 = vadd.f32 %v594, %v755
  %v757 = vpop.f32.mrf.mxu0
  %v758 = vpop.f32.mrf.mxu0
  %v759 = vadd.f32 %v594, %v758
  %v760 = vpop.f32.mrf.mxu0
  %761 = vmatprep.mubr.bf16.mxu0 0
  %762 = vmatmul.mubr.bf16.gmra.mxu0 %v637
  %v763 = vpop.f32.mrf.mxu0
  %v764 = vadd.f32 %v594, %v763
  %v765 = vpop.f32.mrf.mxu0
  %v766 = vpop.f32.mrf.mxu0
  %v767 = vadd.f32 %v594, %v766
  %v768 = vpop.f32.mrf.mxu0
  %769 = vmatprep.mubr.bf16.mxu0 0
  %770 = vmatmul.mubr.bf16.gmra.mxu0 %v640
  %v771 = vpop.f32.mrf.mxu0
  %v772 = vadd.f32 %v594, %v771
  %v773 = vpop.f32.mrf.mxu0
  %v774 = vpop.f32.mrf.mxu0
  %v775 = vadd.f32 %v594, %v774
  %v776 = vpop.f32.mrf.mxu0
  %777 = vmatprep.mubr.bf16.mxu0 0
  %778 = vmatmul.mubr.bf16.gmra.mxu0 %v643
  %v779 = vpop.f32.mrf.mxu0
  %v780 = vadd.f32 %v594, %v779
  %v781 = vpop.f32.mrf.mxu0
  %v782 = vpop.f32.mrf.mxu0
  %v783 = vadd.f32 %v594, %v782
  %v784 = vpop.f32.mrf.mxu0
  %785 = vmatprep.mubr.bf16.mxu0 0
  %786 = vmatmul.mubr.bf16.gmra.mxu0 %v646
  %v787 = vpop.f32.mrf.mxu0
  %v788 = vadd.f32 %v594, %v787
  %v789 = vpop.f32.mrf.mxu0
  %v790 = vpop.f32.mrf.mxu0
  %v791 = vadd.f32 %v594, %v790
  %v792 = vpop.f32.mrf.mxu0
  %793 = vmatprep.mubr.bf16.mxu0 0
  %794 = vmatmul.mubr.bf16.gmra.mxu0 %v649
  %v795 = vpop.f32.mrf.mxu0
  %v796 = vadd.f32 %v594, %v795
  %v797 = vpop.f32.mrf.mxu0
  %v798 = vpop.f32.mrf.mxu0
  %v799 = vadd.f32 %v594, %v798
  %v800 = vpop.f32.mrf.mxu0
  %801 = vmatprep.mubr.bf16.mxu0 0
  %802 = vmatmul.mubr.bf16.gmra.mxu0 %v652
  %v803 = vpop.f32.mrf.mxu0
  %v804 = vadd.f32 %v594, %v803
  %v805 = vpop.f32.mrf.mxu0
  %v806 = vpop.f32.mrf.mxu0
  %v807 = vadd.f32 %v594, %v806
  %v808 = vpop.f32.mrf.mxu0
  %809 = vmatprep.mubr.bf16.mxu0 0
  %810 = vmatmul.mubr.bf16.gmra.mxu0 %v655
  %v811 = vpop.f32.mrf.mxu0
  %v812 = vadd.f32 %v594, %v811
  %v813 = vpop.f32.mrf.mxu0
  %v814 = vpop.f32.mrf.mxu0
  %v815 = vadd.f32 %v594, %v814
  %v816 = vpop.f32.mrf.mxu0
  %817 = vdwg.mxu0
  %v818 = vmax.f32 %v692, 0.0
  %v819 = vmax.f32 %v695, 0.0
  %v820 = vmax.f32 %v700, 0.0
  %v821 = vmax.f32 %v703, 0.0
  %v822 = vmax.f32 %v708, 0.0
  %v823 = vmax.f32 %v711, 0.0
  %v824 = vmax.f32 %v716, 0.0
  %v825 = vmax.f32 %v719, 0.0
  %v826 = vmax.f32 %v724, 0.0
  %v827 = vmax.f32 %v727, 0.0
  %v828 = vmax.f32 %v732, 0.0
  %v829 = vmax.f32 %v735, 0.0
  %v830 = vmax.f32 %v740, 0.0
  %v831 = vmax.f32 %v743, 0.0
  %v832 = vmax.f32 %v748, 0.0
  %v833 = vmax.f32 %v751, 0.0
  %v834 = vmax.f32 %v756, 0.0
  %v835 = vmax.f32 %v759, 0.0
  %v836 = vmax.f32 %v764, 0.0
  %v837 = vmax.f32 %v767, 0.0
  %v838 = vmax.f32 %v772, 0.0
  %v839 = vmax.f32 %v775, 0.0
  %v840 = vmax.f32 %v780, 0.0
  %v841 = vmax.f32 %v783, 0.0
  %v842 = vmax.f32 %v788, 0.0
  %v843 = vmax.f32 %v791, 0.0
  %v844 = vmax.f32 %v796, 0.0
  %v845 = vmax.f32 %v799, 0.0
  %v846 = vmax.f32 %v804, 0.0
  %v847 = vmax.f32 %v807, 0.0
  %v848 = vmax.f32 %v812, 0.0
  %v849 = vmax.f32 %v815, 0.0
  %v850 = vpack.c.bf16 %v819, %v818
  %v851 = vpack.c.bf16 %v821, %v820
  %v852 = vpack.c.bf16 %v823, %v822
  %v853 = vpack.c.bf16 %v825, %v824
  %v854 = vpack.c.bf16 %v827, %v826
  %v855 = vpack.c.bf16 %v829, %v828
  %v856 = vpack.c.bf16 %v831, %v830
  %v857 = vpack.c.bf16 %v833, %v832
  %v858 = vpack.c.bf16 %v835, %v834
  %v859 = vpack.c.bf16 %v837, %v836
  %v860 = vpack.c.bf16 %v839, %v838
  %v861 = vpack.c.bf16 %v841, %v840
  %v862 = vpack.c.bf16 %v843, %v842
  %v863 = vpack.c.bf16 %v845, %v844
  %v864 = vpack.c.bf16 %v847, %v846
  %v865 = vpack.c.bf16 %v849, %v848
  %v866 = vld [vmem:[%s5] sm:$0xf]
  %v867 = vld [vmem:[%s5 + $0x4] sm:$0xf]
  %v868 = vld [vmem:[%s6] sm:$0x1]
  %v870 = vlaneseq
  %v871 = vshrl.u32 %v870, 7
  %v872 = vsub.s32 0, %v871
  %v873 = vrot.slane %v868, %v872
  %v877 = vunpack.c.l.b16 %v866
  %v878 = vunpack.c.l.b16 %v867
  %v879 = vpack.c.b16 %v878, %v877
  %vm881 = vcmask 130048
  %v883 = vsel %vm881, %v850, 0
  %v886 = vsel %vm881, %v851, 0
  %v889 = vsel %vm881, %v852, 0
  %v892 = vsel %vm881, %v853, 0
  %v895 = vsel %vm881, %v854, 0
  %v898 = vsel %vm881, %v855, 0
  %v901 = vsel %vm881, %v856, 0
  %v904 = vsel %vm881, %v857, 0
  %v907 = vsel %vm881, %v858, 0
  %v910 = vsel %vm881, %v859, 0
  %v913 = vsel %vm881, %v860, 0
  %v916 = vsel %vm881, %v861, 0
  %v919 = vsel %vm881, %v862, 0
  %v922 = vsel %vm881, %v863, 0
  %v925 = vsel %vm881, %v864, 0
  %v928 = vsel %vm881, %v865, 0
  %930 = vmatprep.subr.bf16.mxu0 0
  %931 = vmatpush1.bf16.msra.mxu0 0
  %932 = vmatprep.subr.bf16.mxu0 0
  %933 = vmatpush1.bf16.msra.mxu0 0
  %934 = vmatprep.subr.bf16.mxu0 0
  %935 = vmatpush1.bf16.msra.mxu0 0
  %936 = vmatprep.subr.bf16.mxu0 0
  %937 = vmatpush1.bf16.msra.mxu0 0
  %938 = vmatprep.subr.bf16.mxu0 0
  %939 = vmatpush1.bf16.msra.mxu0 0
  %940 = vmatprep.subr.bf16.mxu0 0
  %941 = vmatpush1.bf16.msra.mxu0 0
  %942 = vmatprep.subr.bf16.mxu0 0
  %943 = vmatpush1.bf16.msra.mxu0 0
  %944 = vmatprep.subr.bf16.mxu0 0
  %945 = vmatpush1.bf16.msra.mxu0 %v879
  %946 = vmatprep.subr.bf16.mxu0 0
  %947 = vmatpush2.bf16.msra.mxu0 0
  %948 = vmatprep.subr.bf16.mxu0 0
  %949 = vmatpush2.bf16.msra.mxu0 0
  %950 = vmatprep.subr.bf16.mxu0 0
  %951 = vmatpush2.bf16.msra.mxu0 0
  %952 = vmatprep.subr.bf16.mxu0 0
  %953 = vmatpush2.bf16.msra.mxu0 0
  %954 = vmatprep.subr.bf16.mxu0 0
  %955 = vmatpush2.bf16.msra.mxu0 0
  %956 = vmatprep.subr.bf16.mxu0 0
  %957 = vmatpush2.bf16.msra.mxu0 0
  %958 = vmatprep.subr.bf16.mxu0 0
  %959 = vmatpush2.bf16.msra.mxu0 0
  %960 = vmatprep.subr.bf16.mxu0 0
  %961 = vmatpush2.bf16.msra.mxu0 0
  %962 = vmatprep.mubr.bf16.mxu0 0
  %963 = vmatmul.mubr.bf16.gmra.mxu0 %v883
  %v964 = vpop.f32.mrf.mxu0
  %v965 = vadd.f32 %v873, %v964
  %v966 = vpop.f32.mrf.mxu0
  %v967 = vpop.f32.mrf.mxu0
  %v968 = vadd.f32 %v873, %v967
  %v969 = vpop.f32.mrf.mxu0
  %970 = vmatprep.mubr.bf16.mxu0 0
  %971 = vmatmul.mubr.bf16.gmra.mxu0 %v886
  %v972 = vpop.f32.mrf.mxu0
  %v973 = vadd.f32 %v873, %v972
  %v974 = vpop.f32.mrf.mxu0
  %v975 = vpop.f32.mrf.mxu0
  %v976 = vadd.f32 %v873, %v975
  %v977 = vpop.f32.mrf.mxu0
  %978 = vmatprep.mubr.bf16.mxu0 0
  %979 = vmatmul.mubr.bf16.gmra.mxu0 %v889
  %v980 = vpop.f32.mrf.mxu0
  %v981 = vadd.f32 %v873, %v980
  %v982 = vpop.f32.mrf.mxu0
  %v983 = vpop.f32.mrf.mxu0
  %v984 = vadd.f32 %v873, %v983
  %v985 = vpop.f32.mrf.mxu0
  %986 = vmatprep.mubr.bf16.mxu0 0
  %987 = vmatmul.mubr.bf16.gmra.mxu0 %v892
  %v988 = vpop.f32.mrf.mxu0
  %v989 = vadd.f32 %v873, %v988
  %v990 = vpop.f32.mrf.mxu0
  %v991 = vpop.f32.mrf.mxu0
  %v992 = vadd.f32 %v873, %v991
  %v993 = vpop.f32.mrf.mxu0
  %994 = vmatprep.mubr.bf16.mxu0 0
  %995 = vmatmul.mubr.bf16.gmra.mxu0 %v895
  %v996 = vpop.f32.mrf.mxu0
  %v997 = vadd.f32 %v873, %v996
  %v998 = vpop.f32.mrf.mxu0
  %v999 = vpop.f32.mrf.mxu0
  %v1000 = vadd.f32 %v873, %v999
  %v1001 = vpop.f32.mrf.mxu0
  %1002 = vmatprep.mubr.bf16.mxu0 0
  %1003 = vmatmul.mubr.bf16.gmra.mxu0 %v898
  %v1004 = vpop.f32.mrf.mxu0
  %v1005 = vadd.f32 %v873, %v1004
  %v1006 = vpop.f32.mrf.mxu0
  %v1007 = vpop.f32.mrf.mxu0
  %v1008 = vadd.f32 %v873, %v1007
  %v1009 = vpop.f32.mrf.mxu0
  %1010 = vmatprep.mubr.bf16.mxu0 0
  %1011 = vmatmul.mubr.bf16.gmra.mxu0 %v901
  %v1012 = vpop.f32.mrf.mxu0
  %v1013 = vadd.f32 %v873, %v1012
  %v1014 = vpop.f32.mrf.mxu0
  %v1015 = vpop.f32.mrf.mxu0
  %v1016 = vadd.f32 %v873, %v1015
  %v1017 = vpop.f32.mrf.mxu0
  %1018 = vmatprep.mubr.bf16.mxu0 0
  %1019 = vmatmul.mubr.bf16.gmra.mxu0 %v904
  %v1020 = vpop.f32.mrf.mxu0
  %v1021 = vadd.f32 %v873, %v1020
  %v1022 = vpop.f32.mrf.mxu0
  %v1023 = vpop.f32.mrf.mxu0
  %v1024 = vadd.f32 %v873, %v1023
  %v1025 = vpop.f32.mrf.mxu0
  %1026 = vmatprep.mubr.bf16.mxu0 0
  %1027 = vmatmul.mubr.bf16.gmra.mxu0 %v907
  %v1028 = vpop.f32.mrf.mxu0
  %v1029 = vadd.f32 %v873, %v1028
  %v1030 = vpop.f32.mrf.mxu0
  %v1031 = vpop.f32.mrf.mxu0
  %v1032 = vadd.f32 %v873, %v1031
  %v1033 = vpop.f32.mrf.mxu0
  %1034 = vmatprep.mubr.bf16.mxu0 0
  %1035 = vmatmul.mubr.bf16.gmra.mxu0 %v910
  %v1036 = vpop.f32.mrf.mxu0
  %v1037 = vadd.f32 %v873, %v1036
  %v1038 = vpop.f32.mrf.mxu0
  %v1039 = vpop.f32.mrf.mxu0
  %v1040 = vadd.f32 %v873, %v1039
  %v1041 = vpop.f32.mrf.mxu0
  %1042 = vmatprep.mubr.bf16.mxu0 0
  %1043 = vmatmul.mubr.bf16.gmra.mxu0 %v913
  %v1044 = vpop.f32.mrf.mxu0
  %v1045 = vadd.f32 %v873, %v1044
  %v1046 = vpop.f32.mrf.mxu0
  %v1047 = vpop.f32.mrf.mxu0
  %v1048 = vadd.f32 %v873, %v1047
  %v1049 = vpop.f32.mrf.mxu0
  %1050 = vmatprep.mubr.bf16.mxu0 0
  %1051 = vmatmul.mubr.bf16.gmra.mxu0 %v916
  %v1052 = vpop.f32.mrf.mxu0
  %v1053 = vadd.f32 %v873, %v1052
  %v1054 = vpop.f32.mrf.mxu0
  %v1055 = vpop.f32.mrf.mxu0
  %v1056 = vadd.f32 %v873, %v1055
  %v1057 = vpop.f32.mrf.mxu0
  %1058 = vmatprep.mubr.bf16.mxu0 0
  %1059 = vmatmul.mubr.bf16.gmra.mxu0 %v919
  %v1060 = vpop.f32.mrf.mxu0
  %v1061 = vadd.f32 %v873, %v1060
  %v1062 = vpop.f32.mrf.mxu0
  %v1063 = vpop.f32.mrf.mxu0
  %v1064 = vadd.f32 %v873, %v1063
  %v1065 = vpop.f32.mrf.mxu0
  %1066 = vmatprep.mubr.bf16.mxu0 0
  %1067 = vmatmul.mubr.bf16.gmra.mxu0 %v922
  %v1068 = vpop.f32.mrf.mxu0
  %v1069 = vadd.f32 %v873, %v1068
  %v1070 = vpop.f32.mrf.mxu0
  %v1071 = vpop.f32.mrf.mxu0
  %v1072 = vadd.f32 %v873, %v1071
  %v1073 = vpop.f32.mrf.mxu0
  %1074 = vmatprep.mubr.bf16.mxu0 0
  %1075 = vmatmul.mubr.bf16.gmra.mxu0 %v925
  %v1076 = vpop.f32.mrf.mxu0
  %v1077 = vadd.f32 %v873, %v1076
  %v1078 = vpop.f32.mrf.mxu0
  %v1079 = vpop.f32.mrf.mxu0
  %v1080 = vadd.f32 %v873, %v1079
  %v1081 = vpop.f32.mrf.mxu0
  %1082 = vmatprep.mubr.bf16.mxu0 0
  %1083 = vmatmul.mubr.bf16.gmra.mxu0 %v928
  %v1084 = vpop.f32.mrf.mxu0
  %v1085 = vadd.f32 %v873, %v1084
  %v1086 = vpop.f32.mrf.mxu0
  %v1087 = vpop.f32.mrf.mxu0
  %v1088 = vadd.f32 %v873, %v1087
  %v1089 = vpop.f32.mrf.mxu0
  %1090 = vdwg.mxu0
  %v1091 = vmax.f32 %v965, 0.0
  %v1092 = vmax.f32 %v968, 0.0
  %v1093 = vmax.f32 %v973, 0.0
  %v1094 = vmax.f32 %v976, 0.0
  %v1095 = vmax.f32 %v981, 0.0
  %v1096 = vmax.f32 %v984, 0.0
  %v1097 = vmax.f32 %v989, 0.0
  %v1098 = vmax.f32 %v992, 0.0
  %v1099 = vmax.f32 %v997, 0.0
  %v1100 = vmax.f32 %v1000, 0.0
  %v1101 = vmax.f32 %v1005, 0.0
  %v1102 = vmax.f32 %v1008, 0.0
  %v1103 = vmax.f32 %v1013, 0.0
  %v1104 = vmax.f32 %v1016, 0.0
  %v1105 = vmax.f32 %v1021, 0.0
  %v1106 = vmax.f32 %v1024, 0.0
  %v1107 = vmax.f32 %v1029, 0.0
  %v1108 = vmax.f32 %v1032, 0.0
  %v1109 = vmax.f32 %v1037, 0.0
  %v1110 = vmax.f32 %v1040, 0.0
  %v1111 = vmax.f32 %v1045, 0.0
  %v1112 = vmax.f32 %v1048, 0.0
  %v1113 = vmax.f32 %v1053, 0.0
  %v1114 = vmax.f32 %v1056, 0.0
  %v1115 = vmax.f32 %v1061, 0.0
  %v1116 = vmax.f32 %v1064, 0.0
  %v1117 = vmax.f32 %v1069, 0.0
  %v1118 = vmax.f32 %v1072, 0.0
  %v1119 = vmax.f32 %v1077, 0.0
  %v1120 = vmax.f32 %v1080, 0.0
  %v1121 = vmax.f32 %v1085, 0.0
  %v1122 = vmax.f32 %v1088, 0.0
  %v1123 = vpack.c.bf16 %v1092, %v1091
  %v1124 = vpack.c.bf16 %v1094, %v1093
  %v1125 = vpack.c.bf16 %v1096, %v1095
  %v1126 = vpack.c.bf16 %v1098, %v1097
  %v1127 = vpack.c.bf16 %v1100, %v1099
  %v1128 = vpack.c.bf16 %v1102, %v1101
  %v1129 = vpack.c.bf16 %v1104, %v1103
  %v1130 = vpack.c.bf16 %v1106, %v1105
  %v1131 = vpack.c.bf16 %v1108, %v1107
  %v1132 = vpack.c.bf16 %v1110, %v1109
  %v1133 = vpack.c.bf16 %v1112, %v1111
  %v1134 = vpack.c.bf16 %v1114, %v1113
  %v1135 = vpack.c.bf16 %v1116, %v1115
  %v1136 = vpack.c.bf16 %v1118, %v1117
  %v1137 = vpack.c.bf16 %v1120, %v1119
  %v1138 = vpack.c.bf16 %v1122, %v1121
  %v1139 = vld [vmem:[%s7] sm:$0xf]
  %v1140 = vld [vmem:[%s8] sm:$0x1]
  %v1142 = vlaneseq
  %v1143 = vshrl.u32 %v1142, 7
  %v1144 = vsub.s32 0, %v1143
  %v1145 = vrot.slane %v1140, %v1144
  %vm1147 = vcmask 64512
  %v1149 = vsel %vm1147, %v1123, 0
  %v1152 = vsel %vm1147, %v1124, 0
  %v1155 = vsel %vm1147, %v1125, 0
  %v1158 = vsel %vm1147, %v1126, 0
  %v1161 = vsel %vm1147, %v1127, 0
  %v1164 = vsel %vm1147, %v1128, 0
  %v1167 = vsel %vm1147, %v1129, 0
  %v1170 = vsel %vm1147, %v1130, 0
  %v1173 = vsel %vm1147, %v1131, 0
  %v1176 = vsel %vm1147, %v1132, 0
  %v1179 = vsel %vm1147, %v1133, 0
  %v1182 = vsel %vm1147, %v1134, 0
  %v1185 = vsel %vm1147, %v1135, 0
  %v1188 = vsel %vm1147, %v1136, 0
  %v1191 = vsel %vm1147, %v1137, 0
  %v1194 = vsel %vm1147, %v1138, 0
  %vm1196 = vcmask 1043456
  %v1198 = vsel %vm1196, %v1139, 0
  %1200 = vmatprep.subr.bf16.mxu0 0
  %1201 = vmatpush1.bf16.msra.mxu0 0
  %1202 = vmatprep.subr.bf16.mxu0 0
  %1203 = vmatpush1.bf16.msra.mxu0 0
  %1204 = vmatprep.subr.bf16.mxu0 0
  %1205 = vmatpush1.bf16.msra.mxu0 0
  %1206 = vmatprep.subr.bf16.mxu0 0
  %1207 = vmatpush1.bf16.msra.mxu0 0
  %1208 = vmatprep.subr.bf16.mxu0 0
  %1209 = vmatpush1.bf16.msra.mxu0 0
  %1210 = vmatprep.subr.bf16.mxu0 0
  %1211 = vmatpush1.bf16.msra.mxu0 0
  %1212 = vmatprep.subr.bf16.mxu0 0
  %1213 = vmatpush1.bf16.msra.mxu0 0
  %1214 = vmatprep.subr.bf16.mxu0 0
  %1215 = vmatpush1.bf16.msra.mxu0 %v1198
  %1216 = vmatprep.subr.bf16.mxu0 0
  %1217 = vmatpush2.bf16.msra.mxu0 0
  %1218 = vmatprep.subr.bf16.mxu0 0
  %1219 = vmatpush2.bf16.msra.mxu0 0
  %1220 = vmatprep.subr.bf16.mxu0 0
  %1221 = vmatpush2.bf16.msra.mxu0 0
  %1222 = vmatprep.subr.bf16.mxu0 0
  %1223 = vmatpush2.bf16.msra.mxu0 0
  %1224 = vmatprep.subr.bf16.mxu0 0
  %1225 = vmatpush2.bf16.msra.mxu0 0
  %1226 = vmatprep.subr.bf16.mxu0 0
  %1227 = vmatpush2.bf16.msra.mxu0 0
  %1228 = vmatprep.subr.bf16.mxu0 0
  %1229 = vmatpush2.bf16.msra.mxu0 0
  %1230 = vmatprep.subr.bf16.mxu0 0
  %1231 = vmatpush2.bf16.msra.mxu0 0
  %1232 = vmatprep.mubr.bf16.mxu0 0
  %1233 = vmatmul.mubr.bf16.gmra.mxu0 %v1149
  %v1234 = vpop.f32.mrf.mxu0
  %v1235 = vadd.f32 %v1145, %v1234
  %v1236 = vpop.f32.mrf.mxu0
  %v1237 = vpop.f32.mrf.mxu0
  %v1238 = vadd.f32 %v1145, %v1237
  %v1239 = vpop.f32.mrf.mxu0
  %1240 = vmatprep.mubr.bf16.mxu0 0
  %1241 = vmatmul.mubr.bf16.gmra.mxu0 %v1152
  %v1242 = vpop.f32.mrf.mxu0
  %v1243 = vadd.f32 %v1145, %v1242
  %v1244 = vpop.f32.mrf.mxu0
  %v1245 = vpop.f32.mrf.mxu0
  %v1246 = vadd.f32 %v1145, %v1245
  %v1247 = vpop.f32.mrf.mxu0
  %1248 = vmatprep.mubr.bf16.mxu0 0
  %1249 = vmatmul.mubr.bf16.gmra.mxu0 %v1155
  %v1250 = vpop.f32.mrf.mxu0
  %v1251 = vadd.f32 %v1145, %v1250
  %v1252 = vpop.f32.mrf.mxu0
  %v1253 = vpop.f32.mrf.mxu0
  %v1254 = vadd.f32 %v1145, %v1253
  %v1255 = vpop.f32.mrf.mxu0
  %1256 = vmatprep.mubr.bf16.mxu0 0
  %1257 = vmatmul.mubr.bf16.gmra.mxu0 %v1158
  %v1258 = vpop.f32.mrf.mxu0
  %v1259 = vadd.f32 %v1145, %v1258
  %v1260 = vpop.f32.mrf.mxu0
  %v1261 = vpop.f32.mrf.mxu0
  %v1262 = vadd.f32 %v1145, %v1261
  %v1263 = vpop.f32.mrf.mxu0
  %1264 = vmatprep.mubr.bf16.mxu0 0
  %1265 = vmatmul.mubr.bf16.gmra.mxu0 %v1161
  %v1266 = vpop.f32.mrf.mxu0
  %v1267 = vadd.f32 %v1145, %v1266
  %v1268 = vpop.f32.mrf.mxu0
  %v1269 = vpop.f32.mrf.mxu0
  %v1270 = vadd.f32 %v1145, %v1269
  %v1271 = vpop.f32.mrf.mxu0
  %1272 = vmatprep.mubr.bf16.mxu0 0
  %1273 = vmatmul.mubr.bf16.gmra.mxu0 %v1164
  %v1274 = vpop.f32.mrf.mxu0
  %v1275 = vadd.f32 %v1145, %v1274
  %v1276 = vpop.f32.mrf.mxu0
  %v1277 = vpop.f32.mrf.mxu0
  %v1278 = vadd.f32 %v1145, %v1277
  %v1279 = vpop.f32.mrf.mxu0
  %1280 = vmatprep.mubr.bf16.mxu0 0
  %1281 = vmatmul.mubr.bf16.gmra.mxu0 %v1167
  %v1282 = vpop.f32.mrf.mxu0
  %v1283 = vadd.f32 %v1145, %v1282
  %v1284 = vpop.f32.mrf.mxu0
  %v1285 = vpop.f32.mrf.mxu0
  %v1286 = vadd.f32 %v1145, %v1285
  %v1287 = vpop.f32.mrf.mxu0
  %1288 = vmatprep.mubr.bf16.mxu0 0
  %1289 = vmatmul.mubr.bf16.gmra.mxu0 %v1170
  %v1290 = vpop.f32.mrf.mxu0
  %v1291 = vadd.f32 %v1145, %v1290
  %v1292 = vpop.f32.mrf.mxu0
  %v1293 = vpop.f32.mrf.mxu0
  %v1294 = vadd.f32 %v1145, %v1293
  %v1295 = vpop.f32.mrf.mxu0
  %1296 = vmatprep.mubr.bf16.mxu0 0
  %1297 = vmatmul.mubr.bf16.gmra.mxu0 %v1173
  %v1298 = vpop.f32.mrf.mxu0
  %v1299 = vadd.f32 %v1145, %v1298
  %v1300 = vpop.f32.mrf.mxu0
  %v1301 = vpop.f32.mrf.mxu0
  %v1302 = vadd.f32 %v1145, %v1301
  %v1303 = vpop.f32.mrf.mxu0
  %1304 = vmatprep.mubr.bf16.mxu0 0
  %1305 = vmatmul.mubr.bf16.gmra.mxu0 %v1176
  %v1306 = vpop.f32.mrf.mxu0
  %v1307 = vadd.f32 %v1145, %v1306
  %v1308 = vpop.f32.mrf.mxu0
  %v1309 = vpop.f32.mrf.mxu0
  %v1310 = vadd.f32 %v1145, %v1309
  %v1311 = vpop.f32.mrf.mxu0
  %1312 = vmatprep.mubr.bf16.mxu0 0
  %1313 = vmatmul.mubr.bf16.gmra.mxu0 %v1179
  %v1314 = vpop.f32.mrf.mxu0
  %v1315 = vadd.f32 %v1145, %v1314
  %v1316 = vpop.f32.mrf.mxu0
  %v1317 = vpop.f32.mrf.mxu0
  %v1318 = vadd.f32 %v1145, %v1317
  %v1319 = vpop.f32.mrf.mxu0
  %1320 = vmatprep.mubr.bf16.mxu0 0
  %1321 = vmatmul.mubr.bf16.gmra.mxu0 %v1182
  %v1322 = vpop.f32.mrf.mxu0
  %v1323 = vadd.f32 %v1145, %v1322
  %v1324 = vpop.f32.mrf.mxu0
  %v1325 = vpop.f32.mrf.mxu0
  %v1326 = vadd.f32 %v1145, %v1325
  %v1327 = vpop.f32.mrf.mxu0
  %1328 = vmatprep.mubr.bf16.mxu0 0
  %1329 = vmatmul.mubr.bf16.gmra.mxu0 %v1185
  %v1330 = vpop.f32.mrf.mxu0
  %v1331 = vadd.f32 %v1145, %v1330
  %v1332 = vpop.f32.mrf.mxu0
  %v1333 = vpop.f32.mrf.mxu0
  %v1334 = vadd.f32 %v1145, %v1333
  %v1335 = vpop.f32.mrf.mxu0
  %1336 = vmatprep.mubr.bf16.mxu0 0
  %1337 = vmatmul.mubr.bf16.gmra.mxu0 %v1188
  %v1338 = vpop.f32.mrf.mxu0
  %v1339 = vadd.f32 %v1145, %v1338
  %v1340 = vpop.f32.mrf.mxu0
  %v1341 = vpop.f32.mrf.mxu0
  %v1342 = vadd.f32 %v1145, %v1341
  %v1343 = vpop.f32.mrf.mxu0
  %1344 = vmatprep.mubr.bf16.mxu0 0
  %1345 = vmatmul.mubr.bf16.gmra.mxu0 %v1191
  %v1346 = vpop.f32.mrf.mxu0
  %v1347 = vadd.f32 %v1145, %v1346
  %v1348 = vpop.f32.mrf.mxu0
  %v1349 = vpop.f32.mrf.mxu0
  %v1350 = vadd.f32 %v1145, %v1349
  %v1351 = vpop.f32.mrf.mxu0
  %1352 = vmatprep.mubr.bf16.mxu0 0
  %1353 = vmatmul.mubr.bf16.gmra.mxu0 %v1194
  %v1354 = vpop.f32.mrf.mxu0
  %v1355 = vadd.f32 %v1145, %v1354
  %v1356 = vpop.f32.mrf.mxu0
  %v1357 = vpop.f32.mrf.mxu0
  %v1358 = vadd.f32 %v1145, %v1357
  %v1359 = vpop.f32.mrf.mxu0
  %1360 = vdwg.mxu0
  %v1361 = vmax.f32 %v1235, 0.0
  %v1362 = vmax.f32 %v1238, 0.0
  %v1363 = vmax.f32 %v1243, 0.0
  %v1364 = vmax.f32 %v1246, 0.0
  %v1365 = vmax.f32 %v1251, 0.0
  %v1366 = vmax.f32 %v1254, 0.0
  %v1367 = vmax.f32 %v1259, 0.0
  %v1368 = vmax.f32 %v1262, 0.0
  %v1369 = vmax.f32 %v1267, 0.0
  %v1370 = vmax.f32 %v1270, 0.0
  %v1371 = vmax.f32 %v1275, 0.0
  %v1372 = vmax.f32 %v1278, 0.0
  %v1373 = vmax.f32 %v1283, 0.0
  %v1374 = vmax.f32 %v1286, 0.0
  %v1375 = vmax.f32 %v1291, 0.0
  %v1376 = vmax.f32 %v1294, 0.0
  %v1377 = vmax.f32 %v1299, 0.0
  %v1378 = vmax.f32 %v1302, 0.0
  %v1379 = vmax.f32 %v1307, 0.0
  %v1380 = vmax.f32 %v1310, 0.0
  %v1381 = vmax.f32 %v1315, 0.0
  %v1382 = vmax.f32 %v1318, 0.0
  %v1383 = vmax.f32 %v1323, 0.0
  %v1384 = vmax.f32 %v1326, 0.0
  %v1385 = vmax.f32 %v1331, 0.0
  %v1386 = vmax.f32 %v1334, 0.0
  %v1387 = vmax.f32 %v1339, 0.0
  %v1388 = vmax.f32 %v1342, 0.0
  %v1389 = vmax.f32 %v1347, 0.0
  %v1390 = vmax.f32 %v1350, 0.0
  %v1391 = vmax.f32 %v1355, 0.0
  %v1392 = vmax.f32 %v1358, 0.0
  %v1393 = vpack.c.bf16 %v1362, %v1361
  %v1394 = vpack.c.bf16 %v1364, %v1363
  %v1395 = vpack.c.bf16 %v1366, %v1365
  %v1396 = vpack.c.bf16 %v1368, %v1367
  %v1397 = vpack.c.bf16 %v1370, %v1369
  %v1398 = vpack.c.bf16 %v1372, %v1371
  %v1399 = vpack.c.bf16 %v1374, %v1373
  %v1400 = vpack.c.bf16 %v1376, %v1375
  %v1401 = vpack.c.bf16 %v1378, %v1377
  %v1402 = vpack.c.bf16 %v1380, %v1379
  %v1403 = vpack.c.bf16 %v1382, %v1381
  %v1404 = vpack.c.bf16 %v1384, %v1383
  %v1405 = vpack.c.bf16 %v1386, %v1385
  %v1406 = vpack.c.bf16 %v1388, %v1387
  %v1407 = vpack.c.bf16 %v1390, %v1389
  %v1408 = vpack.c.bf16 %v1392, %v1391
  %v1409 = vld [vmem:[%s9] sm:$0xf]
  %v1410 = vld [vmem:[%s9 + $0x4] sm:$0xf]
  %v1411 = vld [vmem:[%s10] sm:$0x1]
  %v1413 = vlaneseq
  %v1414 = vshrl.u32 %v1413, 7
  %v1415 = vsub.s32 0, %v1414
  %v1416 = vrot.slane %v1411, %v1415
  %v1420 = vunpack.c.l.b16 %v1409
  %v1421 = vunpack.c.l.b16 %v1410
  %v1422 = vpack.c.b16 %v1421, %v1420
  %v1425 = vsel %vm881, %v1393, 0
  %v1428 = vsel %vm881, %v1394, 0
  %v1431 = vsel %vm881, %v1395, 0
  %v1434 = vsel %vm881, %v1396, 0
  %v1437 = vsel %vm881, %v1397, 0
  %v1440 = vsel %vm881, %v1398, 0
  %v1443 = vsel %vm881, %v1399, 0
  %v1446 = vsel %vm881, %v1400, 0
  %v1449 = vsel %vm881, %v1401, 0
  %v1452 = vsel %vm881, %v1402, 0
  %v1455 = vsel %vm881, %v1403, 0
  %v1458 = vsel %vm881, %v1404, 0
  %v1461 = vsel %vm881, %v1405, 0
  %v1464 = vsel %vm881, %v1406, 0
  %v1467 = vsel %vm881, %v1407, 0
  %v1470 = vsel %vm881, %v1408, 0
  %1472 = vmatprep.subr.bf16.mxu0 0
  %1473 = vmatpush1.bf16.msra.mxu0 0
  %1474 = vmatprep.subr.bf16.mxu0 0
  %1475 = vmatpush1.bf16.msra.mxu0 0
  %1476 = vmatprep.subr.bf16.mxu0 0
  %1477 = vmatpush1.bf16.msra.mxu0 0
  %1478 = vmatprep.subr.bf16.mxu0 0
  %1479 = vmatpush1.bf16.msra.mxu0 0
  %1480 = vmatprep.subr.bf16.mxu0 0
  %1481 = vmatpush1.bf16.msra.mxu0 0
  %1482 = vmatprep.subr.bf16.mxu0 0
  %1483 = vmatpush1.bf16.msra.mxu0 0
  %1484 = vmatprep.subr.bf16.mxu0 0
  %1485 = vmatpush1.bf16.msra.mxu0 0
  %1486 = vmatprep.subr.bf16.mxu0 0
  %1487 = vmatpush1.bf16.msra.mxu0 %v1422
  %1488 = vmatprep.subr.bf16.mxu0 0
  %1489 = vmatpush2.bf16.msra.mxu0 0
  %1490 = vmatprep.subr.bf16.mxu0 0
  %1491 = vmatpush2.bf16.msra.mxu0 0
  %1492 = vmatprep.subr.bf16.mxu0 0
  %1493 = vmatpush2.bf16.msra.mxu0 0
  %1494 = vmatprep.subr.bf16.mxu0 0
  %1495 = vmatpush2.bf16.msra.mxu0 0
  %1496 = vmatprep.subr.bf16.mxu0 0
  %1497 = vmatpush2.bf16.msra.mxu0 0
  %1498 = vmatprep.subr.bf16.mxu0 0
  %1499 = vmatpush2.bf16.msra.mxu0 0
  %1500 = vmatprep.subr.bf16.mxu0 0
  %1501 = vmatpush2.bf16.msra.mxu0 0
  %1502 = vmatprep.subr.bf16.mxu0 0
  %1503 = vmatpush2.bf16.msra.mxu0 0
  %1504 = vmatprep.mubr.bf16.mxu0 0
  %1505 = vmatmul.mubr.bf16.gmra.mxu0 %v1425
  %v1506 = vpop.f32.mrf.mxu0
  %v1507 = vadd.f32 %v1416, %v1506
  %v1508 = vpop.f32.mrf.mxu0
  %v1509 = vpop.f32.mrf.mxu0
  %v1510 = vadd.f32 %v1416, %v1509
  %v1511 = vpop.f32.mrf.mxu0
  %1512 = vmatprep.mubr.bf16.mxu0 0
  %1513 = vmatmul.mubr.bf16.gmra.mxu0 %v1428
  %v1514 = vpop.f32.mrf.mxu0
  %v1515 = vadd.f32 %v1416, %v1514
  %v1516 = vpop.f32.mrf.mxu0
  %v1517 = vpop.f32.mrf.mxu0
  %v1518 = vadd.f32 %v1416, %v1517
  %v1519 = vpop.f32.mrf.mxu0
  %1520 = vmatprep.mubr.bf16.mxu0 0
  %1521 = vmatmul.mubr.bf16.gmra.mxu0 %v1431
  %v1522 = vpop.f32.mrf.mxu0
  %v1523 = vadd.f32 %v1416, %v1522
  %v1524 = vpop.f32.mrf.mxu0
  %v1525 = vpop.f32.mrf.mxu0
  %v1526 = vadd.f32 %v1416, %v1525
  %v1527 = vpop.f32.mrf.mxu0
  %1528 = vmatprep.mubr.bf16.mxu0 0
  %1529 = vmatmul.mubr.bf16.gmra.mxu0 %v1434
  %v1530 = vpop.f32.mrf.mxu0
  %v1531 = vadd.f32 %v1416, %v1530
  %v1532 = vpop.f32.mrf.mxu0
  %v1533 = vpop.f32.mrf.mxu0
  %v1534 = vadd.f32 %v1416, %v1533
  %v1535 = vpop.f32.mrf.mxu0
  %1536 = vmatprep.mubr.bf16.mxu0 0
  %1537 = vmatmul.mubr.bf16.gmra.mxu0 %v1437
  %v1538 = vpop.f32.mrf.mxu0
  %v1539 = vadd.f32 %v1416, %v1538
  %v1540 = vpop.f32.mrf.mxu0
  %v1541 = vpop.f32.mrf.mxu0
  %v1542 = vadd.f32 %v1416, %v1541
  %v1543 = vpop.f32.mrf.mxu0
  %1544 = vmatprep.mubr.bf16.mxu0 0
  %1545 = vmatmul.mubr.bf16.gmra.mxu0 %v1440
  %v1546 = vpop.f32.mrf.mxu0
  %v1547 = vadd.f32 %v1416, %v1546
  %v1548 = vpop.f32.mrf.mxu0
  %v1549 = vpop.f32.mrf.mxu0
  %v1550 = vadd.f32 %v1416, %v1549
  %v1551 = vpop.f32.mrf.mxu0
  %1552 = vmatprep.mubr.bf16.mxu0 0
  %1553 = vmatmul.mubr.bf16.gmra.mxu0 %v1443
  %v1554 = vpop.f32.mrf.mxu0
  %v1555 = vadd.f32 %v1416, %v1554
  %v1556 = vpop.f32.mrf.mxu0
  %v1557 = vpop.f32.mrf.mxu0
  %v1558 = vadd.f32 %v1416, %v1557
  %v1559 = vpop.f32.mrf.mxu0
  %1560 = vmatprep.mubr.bf16.mxu0 0
  %1561 = vmatmul.mubr.bf16.gmra.mxu0 %v1446
  %v1562 = vpop.f32.mrf.mxu0
  %v1563 = vadd.f32 %v1416, %v1562
  %v1564 = vpop.f32.mrf.mxu0
  %v1565 = vpop.f32.mrf.mxu0
  %v1566 = vadd.f32 %v1416, %v1565
  %v1567 = vpop.f32.mrf.mxu0
  %1568 = vmatprep.mubr.bf16.mxu0 0
  %1569 = vmatmul.mubr.bf16.gmra.mxu0 %v1449
  %v1570 = vpop.f32.mrf.mxu0
  %v1571 = vadd.f32 %v1416, %v1570
  %v1572 = vpop.f32.mrf.mxu0
  %v1573 = vpop.f32.mrf.mxu0
  %v1574 = vadd.f32 %v1416, %v1573
  %v1575 = vpop.f32.mrf.mxu0
  %1576 = vmatprep.mubr.bf16.mxu0 0
  %1577 = vmatmul.mubr.bf16.gmra.mxu0 %v1452
  %v1578 = vpop.f32.mrf.mxu0
  %v1579 = vadd.f32 %v1416, %v1578
  %v1580 = vpop.f32.mrf.mxu0
  %v1581 = vpop.f32.mrf.mxu0
  %v1582 = vadd.f32 %v1416, %v1581
  %v1583 = vpop.f32.mrf.mxu0
  %1584 = vmatprep.mubr.bf16.mxu0 0
  %1585 = vmatmul.mubr.bf16.gmra.mxu0 %v1455
  %v1586 = vpop.f32.mrf.mxu0
  %v1587 = vadd.f32 %v1416, %v1586
  %v1588 = vpop.f32.mrf.mxu0
  %v1589 = vpop.f32.mrf.mxu0
  %v1590 = vadd.f32 %v1416, %v1589
  %v1591 = vpop.f32.mrf.mxu0
  %1592 = vmatprep.mubr.bf16.mxu0 0
  %1593 = vmatmul.mubr.bf16.gmra.mxu0 %v1458
  %v1594 = vpop.f32.mrf.mxu0
  %v1595 = vadd.f32 %v1416, %v1594
  %v1596 = vpop.f32.mrf.mxu0
  %v1597 = vpop.f32.mrf.mxu0
  %v1598 = vadd.f32 %v1416, %v1597
  %v1599 = vpop.f32.mrf.mxu0
  %1600 = vmatprep.mubr.bf16.mxu0 0
  %1601 = vmatmul.mubr.bf16.gmra.mxu0 %v1461
  %v1602 = vpop.f32.mrf.mxu0
  %v1603 = vadd.f32 %v1416, %v1602
  %v1604 = vpop.f32.mrf.mxu0
  %v1605 = vpop.f32.mrf.mxu0
  %v1606 = vadd.f32 %v1416, %v1605
  %v1607 = vpop.f32.mrf.mxu0
  %1608 = vmatprep.mubr.bf16.mxu0 0
  %1609 = vmatmul.mubr.bf16.gmra.mxu0 %v1464
  %v1610 = vpop.f32.mrf.mxu0
  %v1611 = vadd.f32 %v1416, %v1610
  %v1612 = vpop.f32.mrf.mxu0
  %v1613 = vpop.f32.mrf.mxu0
  %v1614 = vadd.f32 %v1416, %v1613
  %v1615 = vpop.f32.mrf.mxu0
  %1616 = vmatprep.mubr.bf16.mxu0 0
  %1617 = vmatmul.mubr.bf16.gmra.mxu0 %v1467
  %v1618 = vpop.f32.mrf.mxu0
  %v1619 = vadd.f32 %v1416, %v1618
  %v1620 = vpop.f32.mrf.mxu0
  %v1621 = vpop.f32.mrf.mxu0
  %v1622 = vadd.f32 %v1416, %v1621
  %v1623 = vpop.f32.mrf.mxu0
  %1624 = vmatprep.mubr.bf16.mxu0 0
  %1625 = vmatmul.mubr.bf16.gmra.mxu0 %v1470
  %v1626 = vpop.f32.mrf.mxu0
  %v1627 = vadd.f32 %v1416, %v1626
  %v1628 = vpop.f32.mrf.mxu0
  %v1629 = vpop.f32.mrf.mxu0
  %v1630 = vadd.f32 %v1416, %v1629
  %v1631 = vpop.f32.mrf.mxu0
  %1632 = vdwg.mxu0
  %v1633 = vmax.f32 %v1507, 0.0
  %v1634 = vmax.f32 %v1510, 0.0
  %v1635 = vmax.f32 %v1515, 0.0
  %v1636 = vmax.f32 %v1518, 0.0
  %v1637 = vmax.f32 %v1523, 0.0
  %v1638 = vmax.f32 %v1526, 0.0
  %v1639 = vmax.f32 %v1531, 0.0
  %v1640 = vmax.f32 %v1534, 0.0
  %v1641 = vmax.f32 %v1539, 0.0
  %v1642 = vmax.f32 %v1542, 0.0
  %v1643 = vmax.f32 %v1547, 0.0
  %v1644 = vmax.f32 %v1550, 0.0
  %v1645 = vmax.f32 %v1555, 0.0
  %v1646 = vmax.f32 %v1558, 0.0
  %v1647 = vmax.f32 %v1563, 0.0
  %v1648 = vmax.f32 %v1566, 0.0
  %v1649 = vmax.f32 %v1571, 0.0
  %v1650 = vmax.f32 %v1574, 0.0
  %v1651 = vmax.f32 %v1579, 0.0
  %v1652 = vmax.f32 %v1582, 0.0
  %v1653 = vmax.f32 %v1587, 0.0
  %v1654 = vmax.f32 %v1590, 0.0
  %v1655 = vmax.f32 %v1595, 0.0
  %v1656 = vmax.f32 %v1598, 0.0
  %v1657 = vmax.f32 %v1603, 0.0
  %v1658 = vmax.f32 %v1606, 0.0
  %v1659 = vmax.f32 %v1611, 0.0
  %v1660 = vmax.f32 %v1614, 0.0
  %v1661 = vmax.f32 %v1619, 0.0
  %v1662 = vmax.f32 %v1622, 0.0
  %v1663 = vmax.f32 %v1627, 0.0
  %v1664 = vmax.f32 %v1630, 0.0
  %v1665 = vpack.c.bf16 %v1634, %v1633
  %v1666 = vpack.c.bf16 %v1636, %v1635
  %v1667 = vpack.c.bf16 %v1638, %v1637
  %v1668 = vpack.c.bf16 %v1640, %v1639
  %v1669 = vpack.c.bf16 %v1642, %v1641
  %v1670 = vpack.c.bf16 %v1644, %v1643
  %v1671 = vpack.c.bf16 %v1646, %v1645
  %v1672 = vpack.c.bf16 %v1648, %v1647
  %v1673 = vpack.c.bf16 %v1650, %v1649
  %v1674 = vpack.c.bf16 %v1652, %v1651
  %v1675 = vpack.c.bf16 %v1654, %v1653
  %v1676 = vpack.c.bf16 %v1656, %v1655
  %v1677 = vpack.c.bf16 %v1658, %v1657
  %v1678 = vpack.c.bf16 %v1660, %v1659
  %v1679 = vpack.c.bf16 %v1662, %v1661
  %v1680 = vpack.c.bf16 %v1664, %v1663
  %v1681 = vld [vmem:[%s11] sm:$0xff]
  %v1682 = vld [vmem:[%s11 + $0x8] sm:$0xff]
  %v1683 = vld [vmem:[%s11 + $0x10] sm:$0xff]
  %v1684 = vld [vmem:[%s11 + $0x18] sm:$0xff]
  %v1685 = vld [vmem:[%s12] sm:$0x3]
  %v1687 = vlaneseq
  %v1688 = vshrl.u32 %v1687, 7
  %v1689 = vsub.s32 0, %v1688
  %v1690 = vrot.slane %v1685, %v1689
  %v1691 = vlaneseq
  %v1692 = vshrl.u32 %v1691, 7
  %v1693 = vsub.s32 1, %v1692
  %v1694 = vrot.slane %v1685, %v1693
  %v1701 = vunpack.c.l.b16 %v1681
  %v1702 = vunpack.c.h.b16 %v1681
  %v1703 = vunpack.c.l.b16 %v1682
  %v1704 = vunpack.c.h.b16 %v1682
  %v1705 = vunpack.c.l.b16 %v1683
  %v1706 = vunpack.c.h.b16 %v1683
  %v1707 = vunpack.c.l.b16 %v1684
  %v1708 = vunpack.c.h.b16 %v1684
  %v1709 = vpack.c.b16 %v1703, %v1701
  %v1710 = vpack.c.b16 %v1704, %v1702
  %v1711 = vpack.c.b16 %v1707, %v1705
  %v1712 = vpack.c.b16 %v1708, %v1706
  %v1718 = vsel %vm608, %v1665, 0
  %v1721 = vsel %vm608, %v1666, 0
  %v1724 = vsel %vm608, %v1667, 0
  %v1727 = vsel %vm608, %v1668, 0
  %v1730 = vsel %vm608, %v1669, 0
  %v1733 = vsel %vm608, %v1670, 0
  %v1736 = vsel %vm608, %v1671, 0
  %v1739 = vsel %vm608, %v1672, 0
  %v1742 = vsel %vm608, %v1673, 0
  %v1745 = vsel %vm608, %v1674, 0
  %v1748 = vsel %vm608, %v1675, 0
  %v1751 = vsel %vm608, %v1676, 0
  %v1754 = vsel %vm608, %v1677, 0
  %v1757 = vsel %vm608, %v1678, 0
  %v1760 = vsel %vm608, %v1679, 0
  %v1763 = vsel %vm608, %v1680, 0
  %1765 = vmatprep.subr.bf16.mxu0 0
  %1766 = vmatpush1.bf16.msra.mxu0 0
  %1767 = vmatprep.subr.bf16.mxu0 0
  %1768 = vmatpush1.bf16.msra.mxu0 0
  %1769 = vmatprep.subr.bf16.mxu0 0
  %1770 = vmatpush1.bf16.msra.mxu0 0
  %1771 = vmatprep.subr.bf16.mxu0 0
  %1772 = vmatpush1.bf16.msra.mxu0 0
  %1773 = vmatprep.subr.bf16.mxu0 0
  %1774 = vmatpush1.bf16.msra.mxu0 0
  %1775 = vmatprep.subr.bf16.mxu0 0
  %1776 = vmatpush1.bf16.msra.mxu0 0
  %1777 = vmatprep.subr.bf16.mxu0 %v1712
  %1778 = vmatpush1.bf16.msra.mxu0 %v1711
  %1779 = vmatprep.subr.bf16.mxu0 %v1710
  %1780 = vmatpush1.bf16.msra.mxu0 %v1709
  %1781 = vmatprep.subr.bf16.mxu0 0
  %1782 = vmatpush2.bf16.msra.mxu0 0
  %1783 = vmatprep.subr.bf16.mxu0 0
  %1784 = vmatpush2.bf16.msra.mxu0 0
  %1785 = vmatprep.subr.bf16.mxu0 0
  %1786 = vmatpush2.bf16.msra.mxu0 0
  %1787 = vmatprep.subr.bf16.mxu0 0
  %1788 = vmatpush2.bf16.msra.mxu0 0
  %1789 = vmatprep.subr.bf16.mxu0 0
  %1790 = vmatpush2.bf16.msra.mxu0 0
  %1791 = vmatprep.subr.bf16.mxu0 0
  %1792 = vmatpush2.bf16.msra.mxu0 0
  %1793 = vmatprep.subr.bf16.mxu0 0
  %1794 = vmatpush2.bf16.msra.mxu0 0
  %1795 = vmatprep.subr.bf16.mxu0 0
  %1796 = vmatpush2.bf16.msra.mxu0 0
  %1797 = vmatprep.mubr.bf16.mxu0 0
  %1798 = vmatmul.mubr.bf16.gmra.mxu0 %v1718
  %v1799 = vpop.f32.mrf.mxu0
  %v1800 = vadd.f32 %v1690, %v1799
  %v1801 = vpop.f32.mrf.mxu0
  %v1802 = vadd.f32 %v1694, %v1801
  %v1803 = vpop.f32.mrf.mxu0
  %v1804 = vadd.f32 %v1690, %v1803
  %v1805 = vpop.f32.mrf.mxu0
  %v1806 = vadd.f32 %v1694, %v1805
  %1807 = vmatprep.mubr.bf16.mxu0 0
  %1808 = vmatmul.mubr.bf16.gmra.mxu0 %v1721
  %v1809 = vpop.f32.mrf.mxu0
  %v1810 = vadd.f32 %v1690, %v1809
  %v1811 = vpop.f32.mrf.mxu0
  %v1812 = vadd.f32 %v1694, %v1811
  %v1813 = vpop.f32.mrf.mxu0
  %v1814 = vadd.f32 %v1690, %v1813
  %v1815 = vpop.f32.mrf.mxu0
  %v1816 = vadd.f32 %v1694, %v1815
  %1817 = vmatprep.mubr.bf16.mxu0 0
  %1818 = vmatmul.mubr.bf16.gmra.mxu0 %v1724
  %v1819 = vpop.f32.mrf.mxu0
  %v1820 = vadd.f32 %v1690, %v1819
  %v1821 = vpop.f32.mrf.mxu0
  %v1822 = vadd.f32 %v1694, %v1821
  %v1823 = vpop.f32.mrf.mxu0
  %v1824 = vadd.f32 %v1690, %v1823
  %v1825 = vpop.f32.mrf.mxu0
  %v1826 = vadd.f32 %v1694, %v1825
  %1827 = vmatprep.mubr.bf16.mxu0 0
  %1828 = vmatmul.mubr.bf16.gmra.mxu0 %v1727
  %v1829 = vpop.f32.mrf.mxu0
  %v1830 = vadd.f32 %v1690, %v1829
  %v1831 = vpop.f32.mrf.mxu0
  %v1832 = vadd.f32 %v1694, %v1831
  %v1833 = vpop.f32.mrf.mxu0
  %v1834 = vadd.f32 %v1690, %v1833
  %v1835 = vpop.f32.mrf.mxu0
  %v1836 = vadd.f32 %v1694, %v1835
  %1837 = vmatprep.mubr.bf16.mxu0 0
  %1838 = vmatmul.mubr.bf16.gmra.mxu0 %v1730
  %v1839 = vpop.f32.mrf.mxu0
  %v1840 = vadd.f32 %v1690, %v1839
  %v1841 = vpop.f32.mrf.mxu0
  %v1842 = vadd.f32 %v1694, %v1841
  %v1843 = vpop.f32.mrf.mxu0
  %v1844 = vadd.f32 %v1690, %v1843
  %v1845 = vpop.f32.mrf.mxu0
  %v1846 = vadd.f32 %v1694, %v1845
  %1847 = vmatprep.mubr.bf16.mxu0 0
  %1848 = vmatmul.mubr.bf16.gmra.mxu0 %v1733
  %v1849 = vpop.f32.mrf.mxu0
  %v1850 = vadd.f32 %v1690, %v1849
  %v1851 = vpop.f32.mrf.mxu0
  %v1852 = vadd.f32 %v1694, %v1851
  %v1853 = vpop.f32.mrf.mxu0
  %v1854 = vadd.f32 %v1690, %v1853
  %v1855 = vpop.f32.mrf.mxu0
  %v1856 = vadd.f32 %v1694, %v1855
  %1857 = vmatprep.mubr.bf16.mxu0 0
  %1858 = vmatmul.mubr.bf16.gmra.mxu0 %v1736
  %v1859 = vpop.f32.mrf.mxu0
  %v1860 = vadd.f32 %v1690, %v1859
  %v1861 = vpop.f32.mrf.mxu0
  %v1862 = vadd.f32 %v1694, %v1861
  %v1863 = vpop.f32.mrf.mxu0
  %v1864 = vadd.f32 %v1690, %v1863
  %v1865 = vpop.f32.mrf.mxu0
  %v1866 = vadd.f32 %v1694, %v1865
  %1867 = vmatprep.mubr.bf16.mxu0 0
  %1868 = vmatmul.mubr.bf16.gmra.mxu0 %v1739
  %v1869 = vpop.f32.mrf.mxu0
  %v1870 = vadd.f32 %v1690, %v1869
  %v1871 = vpop.f32.mrf.mxu0
  %v1872 = vadd.f32 %v1694, %v1871
  %v1873 = vpop.f32.mrf.mxu0
  %v1874 = vadd.f32 %v1690, %v1873
  %v1875 = vpop.f32.mrf.mxu0
  %v1876 = vadd.f32 %v1694, %v1875
  %1877 = vmatprep.mubr.bf16.mxu0 0
  %1878 = vmatmul.mubr.bf16.gmra.mxu0 %v1742
  %v1879 = vpop.f32.mrf.mxu0
  %v1880 = vadd.f32 %v1690, %v1879
  %v1881 = vpop.f32.mrf.mxu0
  %v1882 = vadd.f32 %v1694, %v1881
  %v1883 = vpop.f32.mrf.mxu0
  %v1884 = vadd.f32 %v1690, %v1883
  %v1885 = vpop.f32.mrf.mxu0
  %v1886 = vadd.f32 %v1694, %v1885
  %1887 = vmatprep.mubr.bf16.mxu0 0
  %1888 = vmatmul.mubr.bf16.gmra.mxu0 %v1745
  %v1889 = vpop.f32.mrf.mxu0
  %v1890 = vadd.f32 %v1690, %v1889
  %v1891 = vpop.f32.mrf.mxu0
  %v1892 = vadd.f32 %v1694, %v1891
  %v1893 = vpop.f32.mrf.mxu0
  %v1894 = vadd.f32 %v1690, %v1893
  %v1895 = vpop.f32.mrf.mxu0
  %v1896 = vadd.f32 %v1694, %v1895
  %1897 = vmatprep.mubr.bf16.mxu0 0
  %1898 = vmatmul.mubr.bf16.gmra.mxu0 %v1748
  %v1899 = vpop.f32.mrf.mxu0
  %v1900 = vadd.f32 %v1690, %v1899
  %v1901 = vpop.f32.mrf.mxu0
  %v1902 = vadd.f32 %v1694, %v1901
  %v1903 = vpop.f32.mrf.mxu0
  %v1904 = vadd.f32 %v1690, %v1903
  %v1905 = vpop.f32.mrf.mxu0
  %v1906 = vadd.f32 %v1694, %v1905
  %1907 = vmatprep.mubr.bf16.mxu0 0
  %1908 = vmatmul.mubr.bf16.gmra.mxu0 %v1751
  %v1909 = vpop.f32.mrf.mxu0
  %v1910 = vadd.f32 %v1690, %v1909
  %v1911 = vpop.f32.mrf.mxu0
  %v1912 = vadd.f32 %v1694, %v1911
  %v1913 = vpop.f32.mrf.mxu0
  %v1914 = vadd.f32 %v1690, %v1913
  %v1915 = vpop.f32.mrf.mxu0
  %v1916 = vadd.f32 %v1694, %v1915
  %1917 = vmatprep.mubr.bf16.mxu0 0
  %1918 = vmatmul.mubr.bf16.gmra.mxu0 %v1754
  %v1919 = vpop.f32.mrf.mxu0
  %v1920 = vadd.f32 %v1690, %v1919
  %v1921 = vpop.f32.mrf.mxu0
  %v1922 = vadd.f32 %v1694, %v1921
  %v1923 = vpop.f32.mrf.mxu0
  %v1924 = vadd.f32 %v1690, %v1923
  %v1925 = vpop.f32.mrf.mxu0
  %v1926 = vadd.f32 %v1694, %v1925
  %1927 = vmatprep.mubr.bf16.mxu0 0
  %1928 = vmatmul.mubr.bf16.gmra.mxu0 %v1757
  %v1929 = vpop.f32.mrf.mxu0
  %v1930 = vadd.f32 %v1690, %v1929
  %v1931 = vpop.f32.mrf.mxu0
  %v1932 = vadd.f32 %v1694, %v1931
  %v1933 = vpop.f32.mrf.mxu0
  %v1934 = vadd.f32 %v1690, %v1933
  %v1935 = vpop.f32.mrf.mxu0
  %v1936 = vadd.f32 %v1694, %v1935
  %1937 = vmatprep.mubr.bf16.mxu0 0
  %1938 = vmatmul.mubr.bf16.gmra.mxu0 %v1760
  %v1939 = vpop.f32.mrf.mxu0
  %v1940 = vadd.f32 %v1690, %v1939
  %v1941 = vpop.f32.mrf.mxu0
  %v1942 = vadd.f32 %v1694, %v1941
  %v1943 = vpop.f32.mrf.mxu0
  %v1944 = vadd.f32 %v1690, %v1943
  %v1945 = vpop.f32.mrf.mxu0
  %v1946 = vadd.f32 %v1694, %v1945
  %1947 = vmatprep.mubr.bf16.mxu0 0
  %1948 = vmatmul.mubr.bf16.gmra.mxu0 %v1763
  %v1949 = vpop.f32.mrf.mxu0
  %v1950 = vadd.f32 %v1690, %v1949
  %v1951 = vpop.f32.mrf.mxu0
  %v1952 = vadd.f32 %v1694, %v1951
  %v1953 = vpop.f32.mrf.mxu0
  %v1954 = vadd.f32 %v1690, %v1953
  %v1955 = vpop.f32.mrf.mxu0
  %v1956 = vadd.f32 %v1694, %v1955
  %1957 = vdwg.mxu0
  %v1958 = vxor.u32 %v1800, 2147483648
  %v1959 = vxor.u32 %v1802, 2147483648
  %v1960 = vxor.u32 %v1804, 2147483648
  %v1961 = vxor.u32 %v1806, 2147483648
  %v1962 = vxor.u32 %v1810, 2147483648
  %v1963 = vxor.u32 %v1812, 2147483648
  %v1964 = vxor.u32 %v1814, 2147483648
  %v1965 = vxor.u32 %v1816, 2147483648
  %v1966 = vxor.u32 %v1820, 2147483648
  %v1967 = vxor.u32 %v1822, 2147483648
  %v1968 = vxor.u32 %v1824, 2147483648
  %v1969 = vxor.u32 %v1826, 2147483648
  %v1970 = vxor.u32 %v1830, 2147483648
  %v1971 = vxor.u32 %v1832, 2147483648
  %v1972 = vxor.u32 %v1834, 2147483648
  %v1973 = vxor.u32 %v1836, 2147483648
  %v1974 = vxor.u32 %v1840, 2147483648
  %v1975 = vxor.u32 %v1842, 2147483648
  %v1976 = vxor.u32 %v1844, 2147483648
  %v1977 = vxor.u32 %v1846, 2147483648
  %v1978 = vxor.u32 %v1850, 2147483648
  %v1979 = vxor.u32 %v1852, 2147483648
  %v1980 = vxor.u32 %v1854, 2147483648
  %v1981 = vxor.u32 %v1856, 2147483648
  %v1982 = vxor.u32 %v1860, 2147483648
  %v1983 = vxor.u32 %v1862, 2147483648
  %v1984 = vxor.u32 %v1864, 2147483648
  %v1985 = vxor.u32 %v1866, 2147483648
  %v1986 = vxor.u32 %v1870, 2147483648
  %v1987 = vxor.u32 %v1872, 2147483648
  %v1988 = vxor.u32 %v1874, 2147483648
  %v1989 = vxor.u32 %v1876, 2147483648
  %v1990 = vxor.u32 %v1880, 2147483648
  %v1991 = vxor.u32 %v1882, 2147483648
  %v1992 = vxor.u32 %v1884, 2147483648
  %v1993 = vxor.u32 %v1886, 2147483648
  %v1994 = vxor.u32 %v1890, 2147483648
  %v1995 = vxor.u32 %v1892, 2147483648
  %v1996 = vxor.u32 %v1894, 2147483648
  %v1997 = vxor.u32 %v1896, 2147483648
  %v1998 = vxor.u32 %v1900, 2147483648
  %v1999 = vxor.u32 %v1902, 2147483648
  %v2000 = vxor.u32 %v1904, 2147483648
  %v2001 = vxor.u32 %v1906, 2147483648
  %v2002 = vxor.u32 %v1910, 2147483648
  %v2003 = vxor.u32 %v1912, 2147483648
  %v2004 = vxor.u32 %v1914, 2147483648
  %v2005 = vxor.u32 %v1916, 2147483648
  %v2006 = vxor.u32 %v1920, 2147483648
  %v2007 = vxor.u32 %v1922, 2147483648
  %v2008 = vxor.u32 %v1924, 2147483648
  %v2009 = vxor.u32 %v1926, 2147483648
  %v2010 = vxor.u32 %v1930, 2147483648
  %v2011 = vxor.u32 %v1932, 2147483648
  %v2012 = vxor.u32 %v1934, 2147483648
  %v2013 = vxor.u32 %v1936, 2147483648
  %v2014 = vxor.u32 %v1940, 2147483648
  %v2015 = vxor.u32 %v1942, 2147483648
  %v2016 = vxor.u32 %v1944, 2147483648
  %v2017 = vxor.u32 %v1946, 2147483648
  %v2018 = vxor.u32 %v1950, 2147483648
  %v2019 = vxor.u32 %v1952, 2147483648
  %v2020 = vxor.u32 %v1954, 2147483648
  %v2021 = vxor.u32 %v1956, 2147483648
  %v2022 = vmul.f32 %v1958, 1.442695
  %v2023 = vpow.pop %v2022
  %v2024 = vmul.f32 %v1959, 1.442695
  %v2025 = vpow.pop %v2024
  %v2026 = vmul.f32 %v1960, 1.442695
  %v2027 = vpow.pop %v2026
  %v2028 = vmul.f32 %v1961, 1.442695
  %v2029 = vpow.pop %v2028
  %v2030 = vmul.f32 %v1962, 1.442695
  %v2031 = vpow.pop %v2030
  %v2032 = vmul.f32 %v1963, 1.442695
  %v2033 = vpow.pop %v2032
  %v2034 = vmul.f32 %v1964, 1.442695
  %v2035 = vpow.pop %v2034
  %v2036 = vmul.f32 %v1965, 1.442695
  %v2037 = vpow.pop %v2036
  %v2038 = vmul.f32 %v1966, 1.442695
  %v2039 = vpow.pop %v2038
  %v2040 = vmul.f32 %v1967, 1.442695
  %v2041 = vpow.pop %v2040
  %v2042 = vmul.f32 %v1968, 1.442695
  %v2043 = vpow.pop %v2042
  %v2044 = vmul.f32 %v1969, 1.442695
  %v2045 = vpow.pop %v2044
  %v2046 = vmul.f32 %v1970, 1.442695
  %v2047 = vpow.pop %v2046
  %v2048 = vmul.f32 %v1971, 1.442695
  %v2049 = vpow.pop %v2048
  %v2050 = vmul.f32 %v1972, 1.442695
  %v2051 = vpow.pop %v2050
  %v2052 = vmul.f32 %v1973, 1.442695
  %v2053 = vpow.pop %v2052
  %v2054 = vmul.f32 %v1974, 1.442695
  %v2055 = vpow.pop %v2054
  %v2056 = vmul.f32 %v1975, 1.442695
  %v2057 = vpow.pop %v2056
  %v2058 = vmul.f32 %v1976, 1.442695
  %v2059 = vpow.pop %v2058
  %v2060 = vmul.f32 %v1977, 1.442695
  %v2061 = vpow.pop %v2060
  %v2062 = vmul.f32 %v1978, 1.442695
  %v2063 = vpow.pop %v2062
  %v2064 = vmul.f32 %v1979, 1.442695
  %v2065 = vpow.pop %v2064
  %v2066 = vmul.f32 %v1980, 1.442695
  %v2067 = vpow.pop %v2066
  %v2068 = vmul.f32 %v1981, 1.442695
  %v2069 = vpow.pop %v2068
  %v2070 = vmul.f32 %v1982, 1.442695
  %v2071 = vpow.pop %v2070
  %v2072 = vmul.f32 %v1983, 1.442695
  %v2073 = vpow.pop %v2072
  %v2074 = vmul.f32 %v1984, 1.442695
  %v2075 = vpow.pop %v2074
  %v2076 = vmul.f32 %v1985, 1.442695
  %v2077 = vpow.pop %v2076
  %v2078 = vmul.f32 %v1986, 1.442695
  %v2079 = vpow.pop %v2078
  %v2080 = vmul.f32 %v1987, 1.442695
  %v2081 = vpow.pop %v2080
  %v2082 = vmul.f32 %v1988, 1.442695
  %v2083 = vpow.pop %v2082
  %v2084 = vmul.f32 %v1989, 1.442695
  %v2085 = vpow.pop %v2084
  %v2086 = vmul.f32 %v1990, 1.442695
  %v2087 = vpow.pop %v2086
  %v2088 = vmul.f32 %v1991, 1.442695
  %v2089 = vpow.pop %v2088
  %v2090 = vmul.f32 %v1992, 1.442695
  %v2091 = vpow.pop %v2090
  %v2092 = vmul.f32 %v1993, 1.442695
  %v2093 = vpow.pop %v2092
  %v2094 = vmul.f32 %v1994, 1.442695
  %v2095 = vpow.pop %v2094
  %v2096 = vmul.f32 %v1995, 1.442695
  %v2097 = vpow.pop %v2096
  %v2098 = vmul.f32 %v1996, 1.442695
  %v2099 = vpow.pop %v2098
  %v2100 = vmul.f32 %v1997, 1.442695
  %v2101 = vpow.pop %v2100
  %v2102 = vmul.f32 %v1998, 1.442695
  %v2103 = vpow.pop %v2102
  %v2104 = vmul.f32 %v1999, 1.442695
  %v2105 = vpow.pop %v2104
  %v2106 = vmul.f32 %v2000, 1.442695
  %v2107 = vpow.pop %v2106
  %v2108 = vmul.f32 %v2001, 1.442695
  %v2109 = vpow.pop %v2108
  %v2110 = vmul.f32 %v2002, 1.442695
  %v2111 = vpow.pop %v2110
  %v2112 = vmul.f32 %v2003, 1.442695
  %v2113 = vpow.pop %v2112
  %v2114 = vmul.f32 %v2004, 1.442695
  %v2115 = vpow.pop %v2114
  %v2116 = vmul.f32 %v2005, 1.442695
  %v2117 = vpow.pop %v2116
  %v2118 = vmul.f32 %v2006, 1.442695
  %v2119 = vpow.pop %v2118
  %v2120 = vmul.f32 %v2007, 1.442695
  %v2121 = vpow.pop %v2120
  %v2122 = vmul.f32 %v2008, 1.442695
  %v2123 = vpow.pop %v2122
  %v2124 = vmul.f32 %v2009, 1.442695
  %v2125 = vpow.pop %v2124
  %v2126 = vmul.f32 %v2010, 1.442695
  %v2127 = vpow.pop %v2126
  %v2128 = vmul.f32 %v2011, 1.442695
  %v2129 = vpow.pop %v2128
  %v2130 = vmul.f32 %v2012, 1.442695
  %v2131 = vpow.pop %v2130
  %v2132 = vmul.f32 %v2013, 1.442695
  %v2133 = vpow.pop %v2132
  %v2134 = vmul.f32 %v2014, 1.442695
  %v2135 = vpow.pop %v2134
  %v2136 = vmul.f32 %v2015, 1.442695
  %v2137 = vpow.pop %v2136
  %v2138 = vmul.f32 %v2016, 1.442695
  %v2139 = vpow.pop %v2138
  %v2140 = vmul.f32 %v2017, 1.442695
  %v2141 = vpow.pop %v2140
  %v2142 = vmul.f32 %v2018, 1.442695
  %v2143 = vpow.pop %v2142
  %v2144 = vmul.f32 %v2019, 1.442695
  %v2145 = vpow.pop %v2144
  %v2146 = vmul.f32 %v2020, 1.442695
  %v2147 = vpow.pop %v2146
  %v2148 = vmul.f32 %v2021, 1.442695
  %v2149 = vpow.pop %v2148
  %v2150 = vadd.f32 %v2023, 1.0
  %v2151 = vadd.f32 %v2025, 1.0
  %v2152 = vadd.f32 %v2027, 1.0
  %v2153 = vadd.f32 %v2029, 1.0
  %v2154 = vadd.f32 %v2031, 1.0
  %v2155 = vadd.f32 %v2033, 1.0
  %v2156 = vadd.f32 %v2035, 1.0
  %v2157 = vadd.f32 %v2037, 1.0
  %v2158 = vadd.f32 %v2039, 1.0
  %v2159 = vadd.f32 %v2041, 1.0
  %v2160 = vadd.f32 %v2043, 1.0
  %v2161 = vadd.f32 %v2045, 1.0
  %v2162 = vadd.f32 %v2047, 1.0
  %v2163 = vadd.f32 %v2049, 1.0
  %v2164 = vadd.f32 %v2051, 1.0
  %v2165 = vadd.f32 %v2053, 1.0
  %v2166 = vadd.f32 %v2055, 1.0
  %v2167 = vadd.f32 %v2057, 1.0
  %v2168 = vadd.f32 %v2059, 1.0
  %v2169 = vadd.f32 %v2061, 1.0
  %v2170 = vadd.f32 %v2063, 1.0
  %v2171 = vadd.f32 %v2065, 1.0
  %v2172 = vadd.f32 %v2067, 1.0
  %v2173 = vadd.f32 %v2069, 1.0
  %v2174 = vadd.f32 %v2071, 1.0
  %v2175 = vadd.f32 %v2073, 1.0
  %v2176 = vadd.f32 %v2075, 1.0
  %v2177 = vadd.f32 %v2077, 1.0
  %v2178 = vadd.f32 %v2079, 1.0
  %v2179 = vadd.f32 %v2081, 1.0
  %v2180 = vadd.f32 %v2083, 1.0
  %v2181 = vadd.f32 %v2085, 1.0
  %v2182 = vadd.f32 %v2087, 1.0
  %v2183 = vadd.f32 %v2089, 1.0
  %v2184 = vadd.f32 %v2091, 1.0
  %v2185 = vadd.f32 %v2093, 1.0
  %v2186 = vadd.f32 %v2095, 1.0
  %v2187 = vadd.f32 %v2097, 1.0
  %v2188 = vadd.f32 %v2099, 1.0
  %v2189 = vadd.f32 %v2101, 1.0
  %v2190 = vadd.f32 %v2103, 1.0
  %v2191 = vadd.f32 %v2105, 1.0
  %v2192 = vadd.f32 %v2107, 1.0
  %v2193 = vadd.f32 %v2109, 1.0
  %v2194 = vadd.f32 %v2111, 1.0
  %v2195 = vadd.f32 %v2113, 1.0
  %v2196 = vadd.f32 %v2115, 1.0
  %v2197 = vadd.f32 %v2117, 1.0
  %v2198 = vadd.f32 %v2119, 1.0
  %v2199 = vadd.f32 %v2121, 1.0
  %v2200 = vadd.f32 %v2123, 1.0
  %v2201 = vadd.f32 %v2125, 1.0
  %v2202 = vadd.f32 %v2127, 1.0
  %v2203 = vadd.f32 %v2129, 1.0
  %v2204 = vadd.f32 %v2131, 1.0
  %v2205 = vadd.f32 %v2133, 1.0
  %v2206 = vadd.f32 %v2135, 1.0
  %v2207 = vadd.f32 %v2137, 1.0
  %v2208 = vadd.f32 %v2139, 1.0
  %v2209 = vadd.f32 %v2141, 1.0
  %v2210 = vadd.f32 %v2143, 1.0
  %v2211 = vadd.f32 %v2145, 1.0
  %v2212 = vadd.f32 %v2147, 1.0
  %v2213 = vadd.f32 %v2149, 1.0
  %v2214 = vrcp.pop %v2150
  %v2215 = vmul.f32 1.0, %v2214
  %v2216 = vrcp.pop %v2151
  %v2217 = vmul.f32 1.0, %v2216
  %v2218 = vrcp.pop %v2152
  %v2219 = vmul.f32 1.0, %v2218
  %v2220 = vrcp.pop %v2153
  %v2221 = vmul.f32 1.0, %v2220
  %v2222 = vrcp.pop %v2154
  %v2223 = vmul.f32 1.0, %v2222
  %v2224 = vrcp.pop %v2155
  %v2225 = vmul.f32 1.0, %v2224
  %v2226 = vrcp.pop %v2156
  %v2227 = vmul.f32 1.0, %v2226
  %v2228 = vrcp.pop %v2157
  %v2229 = vmul.f32 1.0, %v2228
  %v2230 = vrcp.pop %v2158
  %v2231 = vmul.f32 1.0, %v2230
  %v2232 = vrcp.pop %v2159
  %v2233 = vmul.f32 1.0, %v2232
  %v2234 = vrcp.pop %v2160
  %v2235 = vmul.f32 1.0, %v2234
  %v2236 = vrcp.pop %v2161
  %v2237 = vmul.f32 1.0, %v2236
  %v2238 = vrcp.pop %v2162
  %v2239 = vmul.f32 1.0, %v2238
  %v2240 = vrcp.pop %v2163
  %v2241 = vmul.f32 1.0, %v2240
  %v2242 = vrcp.pop %v2164
  %v2243 = vmul.f32 1.0, %v2242
  %v2244 = vrcp.pop %v2165
  %v2245 = vmul.f32 1.0, %v2244
  %v2246 = vrcp.pop %v2166
  %v2247 = vmul.f32 1.0, %v2246
  %v2248 = vrcp.pop %v2167
  %v2249 = vmul.f32 1.0, %v2248
  %v2250 = vrcp.pop %v2168
  %v2251 = vmul.f32 1.0, %v2250
  %v2252 = vrcp.pop %v2169
  %v2253 = vmul.f32 1.0, %v2252
  %v2254 = vrcp.pop %v2170
  %v2255 = vmul.f32 1.0, %v2254
  %v2256 = vrcp.pop %v2171
  %v2257 = vmul.f32 1.0, %v2256
  %v2258 = vrcp.pop %v2172
  %v2259 = vmul.f32 1.0, %v2258
  %v2260 = vrcp.pop %v2173
  %v2261 = vmul.f32 1.0, %v2260
  %v2262 = vrcp.pop %v2174
  %v2263 = vmul.f32 1.0, %v2262
  %v2264 = vrcp.pop %v2175
  %v2265 = vmul.f32 1.0, %v2264
  %v2266 = vrcp.pop %v2176
  %v2267 = vmul.f32 1.0, %v2266
  %v2268 = vrcp.pop %v2177
  %v2269 = vmul.f32 1.0, %v2268
  %v2270 = vrcp.pop %v2178
  %v2271 = vmul.f32 1.0, %v2270
  %v2272 = vrcp.pop %v2179
  %v2273 = vmul.f32 1.0, %v2272
  %v2274 = vrcp.pop %v2180
  %v2275 = vmul.f32 1.0, %v2274
  %v2276 = vrcp.pop %v2181
  %v2277 = vmul.f32 1.0, %v2276
  %v2278 = vrcp.pop %v2182
  %v2279 = vmul.f32 1.0, %v2278
  %v2280 = vrcp.pop %v2183
  %v2281 = vmul.f32 1.0, %v2280
  %v2282 = vrcp.pop %v2184
  %v2283 = vmul.f32 1.0, %v2282
  %v2284 = vrcp.pop %v2185
  %v2285 = vmul.f32 1.0, %v2284
  %v2286 = vrcp.pop %v2186
  %v2287 = vmul.f32 1.0, %v2286
  %v2288 = vrcp.pop %v2187
  %v2289 = vmul.f32 1.0, %v2288
  %v2290 = vrcp.pop %v2188
  %v2291 = vmul.f32 1.0, %v2290
  %v2292 = vrcp.pop %v2189
  %v2293 = vmul.f32 1.0, %v2292
  %v2294 = vrcp.pop %v2190
  %v2295 = vmul.f32 1.0, %v2294
  %v2296 = vrcp.pop %v2191
  %v2297 = vmul.f32 1.0, %v2296
  %v2298 = vrcp.pop %v2192
  %v2299 = vmul.f32 1.0, %v2298
  %v2300 = vrcp.pop %v2193
  %v2301 = vmul.f32 1.0, %v2300
  %v2302 = vrcp.pop %v2194
  %v2303 = vmul.f32 1.0, %v2302
  %v2304 = vrcp.pop %v2195
  %v2305 = vmul.f32 1.0, %v2304
  %v2306 = vrcp.pop %v2196
  %v2307 = vmul.f32 1.0, %v2306
  %v2308 = vrcp.pop %v2197
  %v2309 = vmul.f32 1.0, %v2308
  %v2310 = vrcp.pop %v2198
  %v2311 = vmul.f32 1.0, %v2310
  %v2312 = vrcp.pop %v2199
  %v2313 = vmul.f32 1.0, %v2312
  %v2314 = vrcp.pop %v2200
  %v2315 = vmul.f32 1.0, %v2314
  %v2316 = vrcp.pop %v2201
  %v2317 = vmul.f32 1.0, %v2316
  %v2318 = vrcp.pop %v2202
  %v2319 = vmul.f32 1.0, %v2318
  %v2320 = vrcp.pop %v2203
  %v2321 = vmul.f32 1.0, %v2320
  %v2322 = vrcp.pop %v2204
  %v2323 = vmul.f32 1.0, %v2322
  %v2324 = vrcp.pop %v2205
  %v2325 = vmul.f32 1.0, %v2324
  %v2326 = vrcp.pop %v2206
  %v2327 = vmul.f32 1.0, %v2326
  %v2328 = vrcp.pop %v2207
  %v2329 = vmul.f32 1.0, %v2328
  %v2330 = vrcp.pop %v2208
  %v2331 = vmul.f32 1.0, %v2330
  %v2332 = vrcp.pop %v2209
  %v2333 = vmul.f32 1.0, %v2332
  %v2334 = vrcp.pop %v2210
  %v2335 = vmul.f32 1.0, %v2334
  %v2336 = vrcp.pop %v2211
  %v2337 = vmul.f32 1.0, %v2336
  %v2338 = vrcp.pop %v2212
  %v2339 = vmul.f32 1.0, %v2338
  %v2340 = vrcp.pop %v2213
  %v2341 = vmul.f32 1.0, %v2340
  %2342 = vst.msk [vmem:[%s13] sm:$0xff] %vm608, %v537
  %2343 = vst.msk [vmem:[%s13 + $0x8] sm:$0xff] %vm608, %v538
  %2344 = vst.msk [vmem:[%s13 + $0x10] sm:$0xff] %vm608, %v539
  %2345 = vst.msk [vmem:[%s13 + $0x18] sm:$0xff] %vm608, %v540
  %2346 = vst.msk [vmem:[%s13 + $0x20] sm:$0xff] %vm608, %v541
  %2347 = vst.msk [vmem:[%s13 + $0x28] sm:$0xff] %vm608, %v542
  %2348 = vst.msk [vmem:[%s13 + $0x30] sm:$0xff] %vm608, %v543
  %2349 = vst.msk [vmem:[%s13 + $0x38] sm:$0xff] %vm608, %v544
  %2350 = vst.msk [vmem:[%s13 + $0x40] sm:$0xff] %vm608, %v545
  %2351 = vst.msk [vmem:[%s13 + $0x48] sm:$0xff] %vm608, %v546
  %2352 = vst.msk [vmem:[%s13 + $0x50] sm:$0xff] %vm608, %v547
  %2353 = vst.msk [vmem:[%s13 + $0x58] sm:$0xff] %vm608, %v548
  %2354 = vst.msk [vmem:[%s13 + $0x60] sm:$0xff] %vm608, %v549
  %2355 = vst.msk [vmem:[%s13 + $0x68] sm:$0xff] %vm608, %v550
  %2356 = vst.msk [vmem:[%s13 + $0x70] sm:$0xff] %vm608, %v551
  %2357 = vst.msk [vmem:[%s13 + $0x78] sm:$0xff] %vm608, %v552
  %2358 = vst.msk [vmem:[%s13 + $0x80] sm:$0xff] %vm608, %v553
  %2359 = vst.msk [vmem:[%s13 + $0x88] sm:$0xff] %vm608, %v554
  %2360 = vst.msk [vmem:[%s13 + $0x90] sm:$0xff] %vm608, %v555
  %2361 = vst.msk [vmem:[%s13 + $0x98] sm:$0xff] %vm608, %v556
  %2362 = vst.msk [vmem:[%s13 + $0xa0] sm:$0xff] %vm608, %v557
  %2363 = vst.msk [vmem:[%s13 + $0xa8] sm:$0xff] %vm608, %v558
  %2364 = vst.msk [vmem:[%s13 + $0xb0] sm:$0xff] %vm608, %v559
  %2365 = vst.msk [vmem:[%s13 + $0xb8] sm:$0xff] %vm608, %v560
  %2366 = vst.msk [vmem:[%s13 + $0xc0] sm:$0xff] %vm608, %v561
  %2367 = vst.msk [vmem:[%s13 + $0xc8] sm:$0xff] %vm608, %v562
  %2368 = vst.msk [vmem:[%s13 + $0xd0] sm:$0xff] %vm608, %v563
  %2369 = vst.msk [vmem:[%s13 + $0xd8] sm:$0xff] %vm608, %v564
  %2370 = vst.msk [vmem:[%s13 + $0xe0] sm:$0xff] %vm608, %v565
  %2371 = vst.msk [vmem:[%s13 + $0xe8] sm:$0xff] %vm608, %v566
  %2372 = vst.msk [vmem:[%s13 + $0xf0] sm:$0xff] %vm608, %v567
  %2373 = vst.msk [vmem:[%s13 + $0xf8] sm:$0xff] %vm608, %v568
  %2374 = vst.msk [vmem:[%s14] sm:$0xff] %vm881, %v818
  %2375 = vst.msk [vmem:[%s14 + $0x8] sm:$0xff] %vm881, %v819
  %2376 = vst.msk [vmem:[%s14 + $0x10] sm:$0xff] %vm881, %v820
  %2377 = vst.msk [vmem:[%s14 + $0x18] sm:$0xff] %vm881, %v821
  %2378 = vst.msk [vmem:[%s14 + $0x20] sm:$0xff] %vm881, %v822
  %2379 = vst.msk [vmem:[%s14 + $0x28] sm:$0xff] %vm881, %v823
  %2380 = vst.msk [vmem:[%s14 + $0x30] sm:$0xff] %vm881, %v824
  %2381 = vst.msk [vmem:[%s14 + $0x38] sm:$0xff] %vm881, %v825
  %2382 = vst.msk [vmem:[%s14 + $0x40] sm:$0xff] %vm881, %v826
  %2383 = vst.msk [vmem:[%s14 + $0x48] sm:$0xff] %vm881, %v827
  %2384 = vst.msk [vmem:[%s14 + $0x50] sm:$0xff] %vm881, %v828
  %2385 = vst.msk [vmem:[%s14 + $0x58] sm:$0xff] %vm881, %v829
  %2386 = vst.msk [vmem:[%s14 + $0x60] sm:$0xff] %vm881, %v830
  %2387 = vst.msk [vmem:[%s14 + $0x68] sm:$0xff] %vm881, %v831
  %2388 = vst.msk [vmem:[%s14 + $0x70] sm:$0xff] %vm881, %v832
  %2389 = vst.msk [vmem:[%s14 + $0x78] sm:$0xff] %vm881, %v833
  %2390 = vst.msk [vmem:[%s14 + $0x80] sm:$0xff] %vm881, %v834
  %2391 = vst.msk [vmem:[%s14 + $0x88] sm:$0xff] %vm881, %v835
  %2392 = vst.msk [vmem:[%s14 + $0x90] sm:$0xff] %vm881, %v836
  %2393 = vst.msk [vmem:[%s14 + $0x98] sm:$0xff] %vm881, %v837
  %2394 = vst.msk [vmem:[%s14 + $0xa0] sm:$0xff] %vm881, %v838
  %2395 = vst.msk [vmem:[%s14 + $0xa8] sm:$0xff] %vm881, %v839
  %2396 = vst.msk [vmem:[%s14 + $0xb0] sm:$0xff] %vm881, %v840
  %2397 = vst.msk [vmem:[%s14 + $0xb8] sm:$0xff] %vm881, %v841
  %2398 = vst.msk [vmem:[%s14 + $0xc0] sm:$0xff] %vm881, %v842
  %2399 = vst.msk [vmem:[%s14 + $0xc8] sm:$0xff] %vm881, %v843
  %2400 = vst.msk [vmem:[%s14 + $0xd0] sm:$0xff] %vm881, %v844
  %2401 = vst.msk [vmem:[%s14 + $0xd8] sm:$0xff] %vm881, %v845
  %2402 = vst.msk [vmem:[%s14 + $0xe0] sm:$0xff] %vm881, %v846
  %2403 = vst.msk [vmem:[%s14 + $0xe8] sm:$0xff] %vm881, %v847
  %2404 = vst.msk [vmem:[%s14 + $0xf0] sm:$0xff] %vm881, %v848
  %2405 = vst.msk [vmem:[%s14 + $0xf8] sm:$0xff] %vm881, %v849
  %2406 = vst.msk [vmem:[%s15] sm:$0xff] %vm1147, %v1091
  %2407 = vst.msk [vmem:[%s15 + $0x8] sm:$0xff] %vm1147, %v1092
  %2408 = vst.msk [vmem:[%s15 + $0x10] sm:$0xff] %vm1147, %v1093
  %2409 = vst.msk [vmem:[%s15 + $0x18] sm:$0xff] %vm1147, %v1094
  %2410 = vst.msk [vmem:[%s15 + $0x20] sm:$0xff] %vm1147, %v1095
  %2411 = vst.msk [vmem:[%s15 + $0x28] sm:$0xff] %vm1147, %v1096
  %2412 = vst.msk [vmem:[%s15 + $0x30] sm:$0xff] %vm1147, %v1097
  %2413 = vst.msk [vmem:[%s15 + $0x38] sm:$0xff] %vm1147, %v1098
  %2414 = vst.msk [vmem:[%s15 + $0x40] sm:$0xff] %vm1147, %v1099
  %2415 = vst.msk [vmem:[%s15 + $0x48] sm:$0xff] %vm1147, %v1100
  %2416 = vst.msk [vmem:[%s15 + $0x50] sm:$0xff] %vm1147, %v1101
  %2417 = vst.msk [vmem:[%s15 + $0x58] sm:$0xff] %vm1147, %v1102
  %2418 = vst.msk [vmem:[%s15 + $0x60] sm:$0xff] %vm1147, %v1103
  %2419 = vst.msk [vmem:[%s15 + $0x68] sm:$0xff] %vm1147, %v1104
  %2420 = vst.msk [vmem:[%s15 + $0x70] sm:$0xff] %vm1147, %v1105
  %2421 = vst.msk [vmem:[%s15 + $0x78] sm:$0xff] %vm1147, %v1106
  %2422 = vst.msk [vmem:[%s15 + $0x80] sm:$0xff] %vm1147, %v1107
  %2423 = vst.msk [vmem:[%s15 + $0x88] sm:$0xff] %vm1147, %v1108
  %2424 = vst.msk [vmem:[%s15 + $0x90] sm:$0xff] %vm1147, %v1109
  %2425 = vst.msk [vmem:[%s15 + $0x98] sm:$0xff] %vm1147, %v1110
  %2426 = vst.msk [vmem:[%s15 + $0xa0] sm:$0xff] %vm1147, %v1111
  %2427 = vst.msk [vmem:[%s15 + $0xa8] sm:$0xff] %vm1147, %v1112
  %2428 = vst.msk [vmem:[%s15 + $0xb0] sm:$0xff] %vm1147, %v1113
  %2429 = vst.msk [vmem:[%s15 + $0xb8] sm:$0xff] %vm1147, %v1114
  %2430 = vst.msk [vmem:[%s15 + $0xc0] sm:$0xff] %vm1147, %v1115
  %2431 = vst.msk [vmem:[%s15 + $0xc8] sm:$0xff] %vm1147, %v1116
  %2432 = vst.msk [vmem:[%s15 + $0xd0] sm:$0xff] %vm1147, %v1117
  %2433 = vst.msk [vmem:[%s15 + $0xd8] sm:$0xff] %vm1147, %v1118
  %2434 = vst.msk [vmem:[%s15 + $0xe0] sm:$0xff] %vm1147, %v1119
  %2435 = vst.msk [vmem:[%s15 + $0xe8] sm:$0xff] %vm1147, %v1120
  %2436 = vst.msk [vmem:[%s15 + $0xf0] sm:$0xff] %vm1147, %v1121
  %2437 = vst.msk [vmem:[%s15 + $0xf8] sm:$0xff] %vm1147, %v1122
  %2438 = vst [vmem:[%s16] sm:$0xff] %v2215
  %2439 = vst [vmem:[%s16 + $0x8] sm:$0xff] %v2217
  %2440 = vst [vmem:[%s16 + $0x10] sm:$0xff] %v2219
  %2441 = vst [vmem:[%s16 + $0x18] sm:$0xff] %v2221
  %2442 = vst [vmem:[%s16 + $0x20] sm:$0xff] %v2223
  %2443 = vst [vmem:[%s16 + $0x28] sm:$0xff] %v2225
  %2444 = vst [vmem:[%s16 + $0x30] sm:$0xff] %v2227
  %2445 = vst [vmem:[%s16 + $0x38] sm:$0xff] %v2229
  %2446 = vst [vmem:[%s16 + $0x40] sm:$0xff] %v2231
  %2447 = vst [vmem:[%s16 + $0x48] sm:$0xff] %v2233
  %2448 = vst [vmem:[%s16 + $0x50] sm:$0xff] %v2235
  %2449 = vst [vmem:[%s16 + $0x58] sm:$0xff] %v2237
  %2450 = vst [vmem:[%s16 + $0x60] sm:$0xff] %v2239
  %2451 = vst [vmem:[%s16 + $0x68] sm:$0xff] %v2241
  %2452 = vst [vmem:[%s16 + $0x70] sm:$0xff] %v2243
  %2453 = vst [vmem:[%s16 + $0x78] sm:$0xff] %v2245
  %2454 = vst [vmem:[%s16 + $0x80] sm:$0xff] %v2247
  %2455 = vst [vmem:[%s16 + $0x88] sm:$0xff] %v2249
  %2456 = vst [vmem:[%s16 + $0x90] sm:$0xff] %v2251
  %2457 = vst [vmem:[%s16 + $0x98] sm:$0xff] %v2253
  %2458 = vst [vmem:[%s16 + $0xa0] sm:$0xff] %v2255
  %2459 = vst [vmem:[%s16 + $0xa8] sm:$0xff] %v2257
  %2460 = vst [vmem:[%s16 + $0xb0] sm:$0xff] %v2259
  %2461 = vst [vmem:[%s16 + $0xb8] sm:$0xff] %v2261
  %2462 = vst [vmem:[%s16 + $0xc0] sm:$0xff] %v2263
  %2463 = vst [vmem:[%s16 + $0xc8] sm:$0xff] %v2265
  %2464 = vst [vmem:[%s16 + $0xd0] sm:$0xff] %v2267
  %2465 = vst [vmem:[%s16 + $0xd8] sm:$0xff] %v2269
  %2466 = vst [vmem:[%s16 + $0xe0] sm:$0xff] %v2271
  %2467 = vst [vmem:[%s16 + $0xe8] sm:$0xff] %v2273
  %2468 = vst [vmem:[%s16 + $0xf0] sm:$0xff] %v2275
  %2469 = vst [vmem:[%s16 + $0xf8] sm:$0xff] %v2277
  %2470 = vst [vmem:[%s16 + $0x100] sm:$0xff] %v2279
  %2471 = vst [vmem:[%s16 + $0x108] sm:$0xff] %v2281
  %2472 = vst [vmem:[%s16 + $0x110] sm:$0xff] %v2283
  %2473 = vst [vmem:[%s16 + $0x118] sm:$0xff] %v2285
  %2474 = vst [vmem:[%s16 + $0x120] sm:$0xff] %v2287
  %2475 = vst [vmem:[%s16 + $0x128] sm:$0xff] %v2289
  %2476 = vst [vmem:[%s16 + $0x130] sm:$0xff] %v2291
  %2477 = vst [vmem:[%s16 + $0x138] sm:$0xff] %v2293
  %2478 = vst [vmem:[%s16 + $0x140] sm:$0xff] %v2295
  %2479 = vst [vmem:[%s16 + $0x148] sm:$0xff] %v2297
  %2480 = vst [vmem:[%s16 + $0x150] sm:$0xff] %v2299
  %2481 = vst [vmem:[%s16 + $0x158] sm:$0xff] %v2301
  %2482 = vst [vmem:[%s16 + $0x160] sm:$0xff] %v2303
  %2483 = vst [vmem:[%s16 + $0x168] sm:$0xff] %v2305
  %2484 = vst [vmem:[%s16 + $0x170] sm:$0xff] %v2307
  %2485 = vst [vmem:[%s16 + $0x178] sm:$0xff] %v2309
  %2486 = vst [vmem:[%s16 + $0x180] sm:$0xff] %v2311
  %2487 = vst [vmem:[%s16 + $0x188] sm:$0xff] %v2313
  %2488 = vst [vmem:[%s16 + $0x190] sm:$0xff] %v2315
  %2489 = vst [vmem:[%s16 + $0x198] sm:$0xff] %v2317
  %2490 = vst [vmem:[%s16 + $0x1a0] sm:$0xff] %v2319
  %2491 = vst [vmem:[%s16 + $0x1a8] sm:$0xff] %v2321
  %2492 = vst [vmem:[%s16 + $0x1b0] sm:$0xff] %v2323
  %2493 = vst [vmem:[%s16 + $0x1b8] sm:$0xff] %v2325
  %2494 = vst [vmem:[%s16 + $0x1c0] sm:$0xff] %v2327
  %2495 = vst [vmem:[%s16 + $0x1c8] sm:$0xff] %v2329
  %2496 = vst [vmem:[%s16 + $0x1d0] sm:$0xff] %v2331
  %2497 = vst [vmem:[%s16 + $0x1d8] sm:$0xff] %v2333
  %2498 = vst [vmem:[%s16 + $0x1e0] sm:$0xff] %v2335
  %2499 = vst [vmem:[%s16 + $0x1e8] sm:$0xff] %v2337
  %2500 = vst [vmem:[%s16 + $0x1f0] sm:$0xff] %v2339
  %2501 = vst [vmem:[%s16 + $0x1f8] sm:$0xff] %v2341
  // Predicated region
  $region54: #{comga_forward.10} parent=0 // pred_check
    _
  $region55: #{comga_forward.10} parent=0 // pred_check_branch
    %2503 = sbr.rel (0) target = $region57
  $region56: #{comga_forward.10} parent=0 // pred_region
    _
  $region57: #{comga_forward.10} parent=0 // pred_fallthru
    _
  // Predicated region
  $region58: #{comga_forward.10} parent=0 // pred_check
    _
  $region59: #{comga_forward.10} parent=0 // pred_check_branch
    %2505 = sbr.rel (0) target = $region61
  $region60: #{comga_forward.10} parent=0 // pred_region
    _
  $region61: #{comga_forward.10} parent=0 // pred_fallthru
    _
  // Predicated region
  $region62: #{comga_forward.10} parent=0 // pred_check
    _
  $region63: #{comga_forward.10} parent=0 // pred_check_branch
    %2507 = sbr.rel (0) target = $region65
  $region64: #{comga_forward.10} parent=0 // pred_region
    _
  $region65: #{comga_forward.10} parent=0 // pred_fallthru
    _
  // Predicated region
  $region66: #{comga_forward.10} parent=0 // pred_check
    _
  $region67: #{comga_forward.10} parent=0 // pred_check_branch
    %2509 = sbr.rel (0) target = $region69
  $region68: #{comga_forward.10} parent=0 // pred_region
    _
  $region69: #{comga_forward.10} parent=0 // pred_fallthru
    _
  // Predicated region
  $region70: #{comga_forward.10} parent=0 // pred_check
    _
  $region71: #{comga_forward.10} parent=0 // pred_check_branch
    %2511 = sbr.rel (0) target = $region73
  $region72: #{comga_forward.10} parent=0 // pred_region
    _
  $region73: #{comga_forward.10} parent=0 // pred_fallthru
    _
  // Predicated region
  $region74: #{comga_forward.10} parent=0 // pred_check
    _
  $region75: #{comga_forward.10} parent=0 // pred_check_branch
    %2513 = sbr.rel (0) target = $region77
  $region76: #{comga_forward.10} parent=0 // pred_region
    _
  $region77: #{comga_forward.10} parent=0 // pred_fallthru
    _
  // Predicated region
  $region78: #{comga_forward.10} parent=0 // pred_check
    _
  $region79: #{comga_forward.10} parent=0 // pred_check_branch
    %2515 = sbr.rel (0) target = $region81
  $region80: #{comga_forward.10} parent=0 // pred_region
    _
  $region81: #{comga_forward.10} parent=0 // pred_fallthru
    _
  // Predicated region
  $region82: #{comga_forward.10} parent=0 // pred_check
    _
  $region83: #{comga_forward.10} parent=0 // pred_check_branch
    %2517 = sbr.rel (0) target = $region85
  $region84: #{comga_forward.10} parent=0 // pred_region
    _
  $region85: #{comga_forward.10} parent=0 // pred_fallthru
    _

// kernel: comga_forward.15
$region0: #{comga_forward.15}
  #allocation0 [shape = 'u32[]', space=smem, size = 0x4, offset = 0x4, fixed_abs, tag = 'smem constant byte address 0x4 - core index']
  #allocation1 [shape = 'u32[144,128]{1,0:T(1,128)}', space=vmem, size = 0x12000, scoped, tag = 'internal scratch']
  #allocation2 [shape = 'f32[256,8]{1,0:T(8,128)}', space=vmem, size = 0x20000, scoped, tag = 'scratch operand']
  %s0 = inlined_call_operand.vmem [shape: bf16[256,256], index: 0, kind: input, shape index: {}]
  %s1 = inlined_call_operand.vmem [shape: f32[256,8], index: 1, kind: input, shape index: {}]
  %s2 = inlined_call_operand.vmem [shape: bf16[8,8], index: 2, kind: input, shape index: {}]
  %s3 = inlined_call_operand.vmem [shape: f32[1,8], index: 3, kind: input, shape index: {}]
  %s4 = inlined_call_operand.vmem [shape: f32[256,8], index: 4, kind: output, shape index: {}]
  %s5 = sld [smem:[#allocation0]]
  $region34: #{comga_forward.15} parent=0
    _
  %s7 = ssub.s32 1, %s5
  %s8 = scalar_select 0, %s7, %s5
  // Predicated region
  $region2: #{comga_forward.15} parent=0 // pred_check
    _
  $region3: #{comga_forward.15} parent=0 // pred_check_branch
    %10 = sbr.rel (0) target = $region5
  $region4: #{comga_forward.15} parent=0 // pred_region
    _
  $region5: #{comga_forward.15} parent=0 // pred_fallthru
    _
  // Predicated region
  $region6: #{comga_forward.15} parent=0 // pred_check
    _
  $region7: #{comga_forward.15} parent=0 // pred_check_branch
    %12 = sbr.rel (0) target = $region9
  $region8: #{comga_forward.15} parent=0 // pred_region
    _
  $region9: #{comga_forward.15} parent=0 // pred_fallthru
    _
  // Predicated region
  $region10: #{comga_forward.15} parent=0 // pred_check
    _
  $region11: #{comga_forward.15} parent=0 // pred_check_branch
    %14 = sbr.rel (0) target = $region13
  $region12: #{comga_forward.15} parent=0 // pred_region
    _
  $region13: #{comga_forward.15} parent=0 // pred_fallthru
    _
  // Predicated region
  $region14: #{comga_forward.15} parent=0 // pred_check
    _
  $region15: #{comga_forward.15} parent=0 // pred_check_branch
    %16 = sbr.rel (0) target = $region17
  $region16: #{comga_forward.15} parent=0 // pred_region
    _
  $region17: #{comga_forward.15} parent=0 // pred_fallthru
    _
  %p18 = scmp.eq.s32.totalorder 0, 0
  // Predicated region
  $region18: #{comga_forward.15} parent=0 // pred_check
    %p19 = pneg %p18
  $region19: #{comga_forward.15} parent=0 // pred_check_branch
    %21 = sbr.rel (%p19) target = $region21
  $region20: #{comga_forward.15} parent=0 // pred_region
    %vm22 = vcmask 64512
    %23 = vst.msk [vmem:[#allocation2] sm:$0xff] %vm22, 0.0
    %24 = vst.msk [vmem:[#allocation2 + $0x8] sm:$0xff] %vm22, 0.0
    %25 = vst.msk [vmem:[#allocation2 + $0x10] sm:$0xff] %vm22, 0.0
    %26 = vst.msk [vmem:[#allocation2 + $0x18] sm:$0xff] %vm22, 0.0
    %27 = vst.msk [vmem:[#allocation2 + $0x20] sm:$0xff] %vm22, 0.0
    %28 = vst.msk [vmem:[#allocation2 + $0x28] sm:$0xff] %vm22, 0.0
    %29 = vst.msk [vmem:[#allocation2 + $0x30] sm:$0xff] %vm22, 0.0
    %30 = vst.msk [vmem:[#allocation2 + $0x38] sm:$0xff] %vm22, 0.0
    %31 = vst.msk [vmem:[#allocation2 + $0x40] sm:$0xff] %vm22, 0.0
    %32 = vst.msk [vmem:[#allocation2 + $0x48] sm:$0xff] %vm22, 0.0
    %33 = vst.msk [vmem:[#allocation2 + $0x50] sm:$0xff] %vm22, 0.0
    %34 = vst.msk [vmem:[#allocation2 + $0x58] sm:$0xff] %vm22, 0.0
    %35 = vst.msk [vmem:[#allocation2 + $0x60] sm:$0xff] %vm22, 0.0
    %36 = vst.msk [vmem:[#allocation2 + $0x68] sm:$0xff] %vm22, 0.0
    %37 = vst.msk [vmem:[#allocation2 + $0x70] sm:$0xff] %vm22, 0.0
    %38 = vst.msk [vmem:[#allocation2 + $0x78] sm:$0xff] %vm22, 0.0
    %39 = vst.msk [vmem:[#allocation2 + $0x80] sm:$0xff] %vm22, 0.0
    %40 = vst.msk [vmem:[#allocation2 + $0x88] sm:$0xff] %vm22, 0.0
    %41 = vst.msk [vmem:[#allocation2 + $0x90] sm:$0xff] %vm22, 0.0
    %42 = vst.msk [vmem:[#allocation2 + $0x98] sm:$0xff] %vm22, 0.0
    %43 = vst.msk [vmem:[#allocation2 + $0xa0] sm:$0xff] %vm22, 0.0
    %44 = vst.msk [vmem:[#allocation2 + $0xa8] sm:$0xff] %vm22, 0.0
    %45 = vst.msk [vmem:[#allocation2 + $0xb0] sm:$0xff] %vm22, 0.0
    %46 = vst.msk [vmem:[#allocation2 + $0xb8] sm:$0xff] %vm22, 0.0
    %47 = vst.msk [vmem:[#allocation2 + $0xc0] sm:$0xff] %vm22, 0.0
    %48 = vst.msk [vmem:[#allocation2 + $0xc8] sm:$0xff] %vm22, 0.0
    %49 = vst.msk [vmem:[#allocation2 + $0xd0] sm:$0xff] %vm22, 0.0
    %50 = vst.msk [vmem:[#allocation2 + $0xd8] sm:$0xff] %vm22, 0.0
    %51 = vst.msk [vmem:[#allocation2 + $0xe0] sm:$0xff] %vm22, 0.0
    %52 = vst.msk [vmem:[#allocation2 + $0xe8] sm:$0xff] %vm22, 0.0
    %53 = vst.msk [vmem:[#allocation2 + $0xf0] sm:$0xff] %vm22, 0.0
    %54 = vst.msk [vmem:[#allocation2 + $0xf8] sm:$0xff] %vm22, 0.0
  $region21: #{comga_forward.15} parent=0 // pred_fallthru
    _
  %v55 = vld [vmem:[%s1] sm:$0xff]
  %v56 = vld [vmem:[%s1 + $0x8] sm:$0xff]
  %v57 = vld [vmem:[%s1 + $0x10] sm:$0xff]
  %v58 = vld [vmem:[%s1 + $0x18] sm:$0xff]
  %v59 = vld [vmem:[%s1 + $0x20] sm:$0xff]
  %v60 = vld [vmem:[%s1 + $0x28] sm:$0xff]
  %v61 = vld [vmem:[%s1 + $0x30] sm:$0xff]
  %v62 = vld [vmem:[%s1 + $0x38] sm:$0xff]
  %v63 = vld [vmem:[%s1 + $0x40] sm:$0xff]
  %v64 = vld [vmem:[%s1 + $0x48] sm:$0xff]
  %v65 = vld [vmem:[%s1 + $0x50] sm:$0xff]
  %v66 = vld [vmem:[%s1 + $0x58] sm:$0xff]
  %v67 = vld [vmem:[%s1 + $0x60] sm:$0xff]
  %v68 = vld [vmem:[%s1 + $0x68] sm:$0xff]
  %v69 = vld [vmem:[%s1 + $0x70] sm:$0xff]
  %v70 = vld [vmem:[%s1 + $0x78] sm:$0xff]
  %v71 = vld [vmem:[%s1 + $0x80] sm:$0xff]
  %v72 = vld [vmem:[%s1 + $0x88] sm:$0xff]
  %v73 = vld [vmem:[%s1 + $0x90] sm:$0xff]
  %v74 = vld [vmem:[%s1 + $0x98] sm:$0xff]
  %v75 = vld [vmem:[%s1 + $0xa0] sm:$0xff]
  %v76 = vld [vmem:[%s1 + $0xa8] sm:$0xff]
  %v77 = vld [vmem:[%s1 + $0xb0] sm:$0xff]
  %v78 = vld [vmem:[%s1 + $0xb8] sm:$0xff]
  %v79 = vld [vmem:[%s1 + $0xc0] sm:$0xff]
  %v80 = vld [vmem:[%s1 + $0xc8] sm:$0xff]
  %v81 = vld [vmem:[%s1 + $0xd0] sm:$0xff]
  %v82 = vld [vmem:[%s1 + $0xd8] sm:$0xff]
  %v83 = vld [vmem:[%s1 + $0xe0] sm:$0xff]
  %v84 = vld [vmem:[%s1 + $0xe8] sm:$0xff]
  %v85 = vld [vmem:[%s1 + $0xf0] sm:$0xff]
  %v86 = vld [vmem:[%s1 + $0xf8] sm:$0xff]
  %v87 = vpack.c.bf16 %v56, %v55
  %v88 = vpack.c.bf16 %v58, %v57
  %v89 = vpack.c.bf16 %v60, %v59
  %v90 = vpack.c.bf16 %v62, %v61
  %v91 = vpack.c.bf16 %v64, %v63
  %v92 = vpack.c.bf16 %v66, %v65
  %v93 = vpack.c.bf16 %v68, %v67
  %v94 = vpack.c.bf16 %v70, %v69
  %v95 = vpack.c.bf16 %v72, %v71
  %v96 = vpack.c.bf16 %v74, %v73
  %v97 = vpack.c.bf16 %v76, %v75
  %v98 = vpack.c.bf16 %v78, %v77
  %v99 = vpack.c.bf16 %v80, %v79
  %v100 = vpack.c.bf16 %v82, %v81
  %v101 = vpack.c.bf16 %v84, %v83
  %v102 = vpack.c.bf16 %v86, %v85
  %v103 = vld [vmem:[%s2] sm:$0xf]
  %vm104 = vcmask 64512
  %v106 = vsel %vm104, %v87, 0
  %v109 = vsel %vm104, %v88, 0
  %v112 = vsel %vm104, %v89, 0
  %v115 = vsel %vm104, %v90, 0
  %v118 = vsel %vm104, %v91, 0
  %v121 = vsel %vm104, %v92, 0
  %v124 = vsel %vm104, %v93, 0
  %v127 = vsel %vm104, %v94, 0
  %v130 = vsel %vm104, %v95, 0
  %v133 = vsel %vm104, %v96, 0
  %v136 = vsel %vm104, %v97, 0
  %v139 = vsel %vm104, %v98, 0
  %v142 = vsel %vm104, %v99, 0
  %v145 = vsel %vm104, %v100, 0
  %v148 = vsel %vm104, %v101, 0
  %v151 = vsel %vm104, %v102, 0
  %vm153 = vcmask 1043456
  %v155 = vsel %vm153, %v103, 0
  %157 = vmatprep.subr.bf16.mxu0 0
  %158 = vmatpush1.bf16.msra.mxu0 0
  %159 = vmatprep.subr.bf16.mxu0 0
  %160 = vmatpush1.bf16.msra.mxu0 0
  %161 = vmatprep.subr.bf16.mxu0 0
  %162 = vmatpush1.bf16.msra.mxu0 0
  %163 = vmatprep.subr.bf16.mxu0 0
  %164 = vmatpush1.bf16.msra.mxu0 0
  %165 = vmatprep.subr.bf16.mxu0 0
  %166 = vmatpush1.bf16.msra.mxu0 0
  %167 = vmatprep.subr.bf16.mxu0 0
  %168 = vmatpush1.bf16.msra.mxu0 0
  %169 = vmatprep.subr.bf16.mxu0 0
  %170 = vmatpush1.bf16.msra.mxu0 0
  %171 = vmatprep.subr.bf16.mxu0 0
  %172 = vmatpush1.bf16.msra.mxu0 %v155
  %173 = vmatprep.subr.bf16.mxu0 0
  %174 = vmatpush2.bf16.msra.mxu0 0
  %175 = vmatprep.subr.bf16.mxu0 0
  %176 = vmatpush2.bf16.msra.mxu0 0
  %177 = vmatprep.subr.bf16.mxu0 0
  %178 = vmatpush2.bf16.msra.mxu0 0
  %179 = vmatprep.subr.bf16.mxu0 0
  %180 = vmatpush2.bf16.msra.mxu0 0
  %181 = vmatprep.subr.bf16.mxu0 0
  %182 = vmatpush2.bf16.msra.mxu0 0
  %183 = vmatprep.subr.bf16.mxu0 0
  %184 = vmatpush2.bf16.msra.mxu0 0
  %185 = vmatprep.subr.bf16.mxu0 0
  %186 = vmatpush2.bf16.msra.mxu0 0
  %187 = vmatprep.subr.bf16.mxu0 0
  %188 = vmatpush2.bf16.msra.mxu0 0
  %189 = vmatprep.mubr.bf16.mxu0 0
  %190 = vmatmul.mubr.bf16.gmra.mxu0 %v106
  %v191 = vpop.f32.mrf.mxu0
  %v192 = vadd.f32 0.0, %v191
  %v193 = vpop.f32.mrf.mxu0
  %v194 = vpop.f32.mrf.mxu0
  %v195 = vadd.f32 0.0, %v194
  %v196 = vpop.f32.mrf.mxu0
  %197 = vmatprep.mubr.bf16.mxu0 0
  %198 = vmatmul.mubr.bf16.gmra.mxu0 %v109
  %v199 = vpop.f32.mrf.mxu0
  %v200 = vadd.f32 0.0, %v199
  %v201 = vpop.f32.mrf.mxu0
  %v202 = vpop.f32.mrf.mxu0
  %v203 = vadd.f32 0.0, %v202
  %v204 = vpop.f32.mrf.mxu0
  %205 = vmatprep.mubr.bf16.mxu0 0
  %206 = vmatmul.mubr.bf16.gmra.mxu0 %v112
  %v207 = vpop.f32.mrf.mxu0
  %v208 = vadd.f32 0.0, %v207
  %v209 = vpop.f32.mrf.mxu0
  %v210 = vpop.f32.mrf.mxu0
  %v211 = vadd.f32 0.0, %v210
  %v212 = vpop.f32.mrf.mxu0
  %213 = vmatprep.mubr.bf16.mxu0 0
  %214 = vmatmul.mubr.bf16.gmra.mxu0 %v115
  %v215 = vpop.f32.mrf.mxu0
  %v216 = vadd.f32 0.0, %v215
  %v217 = vpop.f32.mrf.mxu0
  %v218 = vpop.f32.mrf.mxu0
  %v219 = vadd.f32 0.0, %v218
  %v220 = vpop.f32.mrf.mxu0
  %221 = vmatprep.mubr.bf16.mxu0 0
  %222 = vmatmul.mubr.bf16.gmra.mxu0 %v118
  %v223 = vpop.f32.mrf.mxu0
  %v224 = vadd.f32 0.0, %v223
  %v225 = vpop.f32.mrf.mxu0
  %v226 = vpop.f32.mrf.mxu0
  %v227 = vadd.f32 0.0, %v226
  %v228 = vpop.f32.mrf.mxu0
  %229 = vmatprep.mubr.bf16.mxu0 0
  %230 = vmatmul.mubr.bf16.gmra.mxu0 %v121
  %v231 = vpop.f32.mrf.mxu0
  %v232 = vadd.f32 0.0, %v231
  %v233 = vpop.f32.mrf.mxu0
  %v234 = vpop.f32.mrf.mxu0
  %v235 = vadd.f32 0.0, %v234
  %v236 = vpop.f32.mrf.mxu0
  %237 = vmatprep.mubr.bf16.mxu0 0
  %238 = vmatmul.mubr.bf16.gmra.mxu0 %v124
  %v239 = vpop.f32.mrf.mxu0
  %v240 = vadd.f32 0.0, %v239
  %v241 = vpop.f32.mrf.mxu0
  %v242 = vpop.f32.mrf.mxu0
  %v243 = vadd.f32 0.0, %v242
  %v244 = vpop.f32.mrf.mxu0
  %245 = vmatprep.mubr.bf16.mxu0 0
  %246 = vmatmul.mubr.bf16.gmra.mxu0 %v127
  %v247 = vpop.f32.mrf.mxu0
  %v248 = vadd.f32 0.0, %v247
  %v249 = vpop.f32.mrf.mxu0
  %v250 = vpop.f32.mrf.mxu0
  %v251 = vadd.f32 0.0, %v250
  %v252 = vpop.f32.mrf.mxu0
  %253 = vmatprep.mubr.bf16.mxu0 0
  %254 = vmatmul.mubr.bf16.gmra.mxu0 %v130
  %v255 = vpop.f32.mrf.mxu0
  %v256 = vadd.f32 0.0, %v255
  %v257 = vpop.f32.mrf.mxu0
  %v258 = vpop.f32.mrf.mxu0
  %v259 = vadd.f32 0.0, %v258
  %v260 = vpop.f32.mrf.mxu0
  %261 = vmatprep.mubr.bf16.mxu0 0
  %262 = vmatmul.mubr.bf16.gmra.mxu0 %v133
  %v263 = vpop.f32.mrf.mxu0
  %v264 = vadd.f32 0.0, %v263
  %v265 = vpop.f32.mrf.mxu0
  %v266 = vpop.f32.mrf.mxu0
  %v267 = vadd.f32 0.0, %v266
  %v268 = vpop.f32.mrf.mxu0
  %269 = vmatprep.mubr.bf16.mxu0 0
  %270 = vmatmul.mubr.bf16.gmra.mxu0 %v136
  %v271 = vpop.f32.mrf.mxu0
  %v272 = vadd.f32 0.0, %v271
  %v273 = vpop.f32.mrf.mxu0
  %v274 = vpop.f32.mrf.mxu0
  %v275 = vadd.f32 0.0, %v274
  %v276 = vpop.f32.mrf.mxu0
  %277 = vmatprep.mubr.bf16.mxu0 0
  %278 = vmatmul.mubr.bf16.gmra.mxu0 %v139
  %v279 = vpop.f32.mrf.mxu0
  %v280 = vadd.f32 0.0, %v279
  %v281 = vpop.f32.mrf.mxu0
  %v282 = vpop.f32.mrf.mxu0
  %v283 = vadd.f32 0.0, %v282
  %v284 = vpop.f32.mrf.mxu0
  %285 = vmatprep.mubr.bf16.mxu0 0
  %286 = vmatmul.mubr.bf16.gmra.mxu0 %v142
  %v287 = vpop.f32.mrf.mxu0
  %v288 = vadd.f32 0.0, %v287
  %v289 = vpop.f32.mrf.mxu0
  %v290 = vpop.f32.mrf.mxu0
  %v291 = vadd.f32 0.0, %v290
  %v292 = vpop.f32.mrf.mxu0
  %293 = vmatprep.mubr.bf16.mxu0 0
  %294 = vmatmul.mubr.bf16.gmra.mxu0 %v145
  %v295 = vpop.f32.mrf.mxu0
  %v296 = vadd.f32 0.0, %v295
  %v297 = vpop.f32.mrf.mxu0
  %v298 = vpop.f32.mrf.mxu0
  %v299 = vadd.f32 0.0, %v298
  %v300 = vpop.f32.mrf.mxu0
  %301 = vmatprep.mubr.bf16.mxu0 0
  %302 = vmatmul.mubr.bf16.gmra.mxu0 %v148
  %v303 = vpop.f32.mrf.mxu0
  %v304 = vadd.f32 0.0, %v303
  %v305 = vpop.f32.mrf.mxu0
  %v306 = vpop.f32.mrf.mxu0
  %v307 = vadd.f32 0.0, %v306
  %v308 = vpop.f32.mrf.mxu0
  %309 = vmatprep.mubr.bf16.mxu0 0
  %310 = vmatmul.mubr.bf16.gmra.mxu0 %v151
  %v311 = vpop.f32.mrf.mxu0
  %v312 = vadd.f32 0.0, %v311
  %v313 = vpop.f32.mrf.mxu0
  %v314 = vpop.f32.mrf.mxu0
  %v315 = vadd.f32 0.0, %v314
  %v316 = vpop.f32.mrf.mxu0
  %317 = vdwg.mxu0
  %v318 = vld [vmem:[#allocation2] sm:$0xff]
  %v319 = vld [vmem:[#allocation2 + $0x8] sm:$0xff]
  %v320 = vld [vmem:[#allocation2 + $0x10] sm:$0xff]
  %v321 = vld [vmem:[#allocation2 + $0x18] sm:$0xff]
  %v322 = vld [vmem:[#allocation2 + $0x20] sm:$0xff]
  %v323 = vld [vmem:[#allocation2 + $0x28] sm:$0xff]
  %v324 = vld [vmem:[#allocation2 + $0x30] sm:$0xff]
  %v325 = vld [vmem:[#allocation2 + $0x38] sm:$0xff]
  %v326 = vld [vmem:[#allocation2 + $0x40] sm:$0xff]
  %v327 = vld [vmem:[#allocation2 + $0x48] sm:$0xff]
  %v328 = vld [vmem:[#allocation2 + $0x50] sm:$0xff]
  %v329 = vld [vmem:[#allocation2 + $0x58] sm:$0xff]
  %v330 = vld [vmem:[#allocation2 + $0x60] sm:$0xff]
  %v331 = vld [vmem:[#allocation2 + $0x68] sm:$0xff]
  %v332 = vld [vmem:[#allocation2 + $0x70] sm:$0xff]
  %v333 = vld [vmem:[#allocation2 + $0x78] sm:$0xff]
  %v334 = vld [vmem:[#allocation2 + $0x80] sm:$0xff]
  %v335 = vld [vmem:[#allocation2 + $0x88] sm:$0xff]
  %v336 = vld [vmem:[#allocation2 + $0x90] sm:$0xff]
  %v337 = vld [vmem:[#allocation2 + $0x98] sm:$0xff]
  %v338 = vld [vmem:[#allocation2 + $0xa0] sm:$0xff]
  %v339 = vld [vmem:[#allocation2 + $0xa8] sm:$0xff]
  %v340 = vld [vmem:[#allocation2 + $0xb0] sm:$0xff]
  %v341 = vld [vmem:[#allocation2 + $0xb8] sm:$0xff]
  %v342 = vld [vmem:[#allocation2 + $0xc0] sm:$0xff]
  %v343 = vld [vmem:[#allocation2 + $0xc8] sm:$0xff]
  %v344 = vld [vmem:[#allocation2 + $0xd0] sm:$0xff]
  %v345 = vld [vmem:[#allocation2 + $0xd8] sm:$0xff]
  %v346 = vld [vmem:[#allocation2 + $0xe0] sm:$0xff]
  %v347 = vld [vmem:[#allocation2 + $0xe8] sm:$0xff]
  %v348 = vld [vmem:[#allocation2 + $0xf0] sm:$0xff]
  %v349 = vld [vmem:[#allocation2 + $0xf8] sm:$0xff]
  %v350 = vld [vmem:[%s0] sm:$0xff]
  %v351 = vld [vmem:[%s0 + $0x8] sm:$0xff]
  %v352 = vld [vmem:[%s0 + $0x10] sm:$0xff]
  %v353 = vld [vmem:[%s0 + $0x18] sm:$0xff]
  %v354 = vld [vmem:[%s0 + $0x20] sm:$0xff]
  %v355 = vld [vmem:[%s0 + $0x28] sm:$0xff]
  %v356 = vld [vmem:[%s0 + $0x30] sm:$0xff]
  %v357 = vld [vmem:[%s0 + $0x38] sm:$0xff]
  %v358 = vld [vmem:[%s0 + $0x40] sm:$0xff]
  %v359 = vld [vmem:[%s0 + $0x48] sm:$0xff]
  %v360 = vld [vmem:[%s0 + $0x50] sm:$0xff]
  %v361 = vld [vmem:[%s0 + $0x58] sm:$0xff]
  %v362 = vld [vmem:[%s0 + $0x60] sm:$0xff]
  %v363 = vld [vmem:[%s0 + $0x68] sm:$0xff]
  %v364 = vld [vmem:[%s0 + $0x70] sm:$0xff]
  %v365 = vld [vmem:[%s0 + $0x78] sm:$0xff]
  %v366 = vld [vmem:[%s0 + $0x80] sm:$0xff]
  %v367 = vld [vmem:[%s0 + $0x88] sm:$0xff]
  %v368 = vld [vmem:[%s0 + $0x90] sm:$0xff]
  %v369 = vld [vmem:[%s0 + $0x98] sm:$0xff]
  %v370 = vld [vmem:[%s0 + $0xa0] sm:$0xff]
  %v371 = vld [vmem:[%s0 + $0xa8] sm:$0xff]
  %v372 = vld [vmem:[%s0 + $0xb0] sm:$0xff]
  %v373 = vld [vmem:[%s0 + $0xb8] sm:$0xff]
  %v374 = vld [vmem:[%s0 + $0xc0] sm:$0xff]
  %v375 = vld [vmem:[%s0 + $0xc8] sm:$0xff]
  %v376 = vld [vmem:[%s0 + $0xd0] sm:$0xff]
  %v377 = vld [vmem:[%s0 + $0xd8] sm:$0xff]
  %v378 = vld [vmem:[%s0 + $0xe0] sm:$0xff]
  %v379 = vld [vmem:[%s0 + $0xe8] sm:$0xff]
  %v380 = vld [vmem:[%s0 + $0xf0] sm:$0xff]
  %v381 = vld [vmem:[%s0 + $0xf8] sm:$0xff]
  %v382 = vpack.c.bf16 %v195, %v192
  %v383 = vpack.c.bf16 %v203, %v200
  %v384 = vpack.c.bf16 %v211, %v208
  %v385 = vpack.c.bf16 %v219, %v216
  %v386 = vpack.c.bf16 %v227, %v224
  %v387 = vpack.c.bf16 %v235, %v232
  %v388 = vpack.c.bf16 %v243, %v240
  %v389 = vpack.c.bf16 %v251, %v248
  %v390 = vpack.c.bf16 %v259, %v256
  %v391 = vpack.c.bf16 %v267, %v264
  %v392 = vpack.c.bf16 %v275, %v272
  %v393 = vpack.c.bf16 %v283, %v280
  %v394 = vpack.c.bf16 %v291, %v288
  %v395 = vpack.c.bf16 %v299, %v296
  %v396 = vpack.c.bf16 %v307, %v304
  %v397 = vpack.c.bf16 %v315, %v312
  %v430 = vunpack.c.l.b16 %v350
  %v431 = vunpack.c.h.b16 %v350
  %v432 = vunpack.c.l.b16 %v351
  %v433 = vunpack.c.h.b16 %v351
  %v434 = vunpack.c.l.b16 %v352
  %v435 = vunpack.c.h.b16 %v352
  %v436 = vunpack.c.l.b16 %v353
  %v437 = vunpack.c.h.b16 %v353
  %v438 = vunpack.c.l.b16 %v354
  %v439 = vunpack.c.h.b16 %v354
  %v440 = vunpack.c.l.b16 %v355
  %v441 = vunpack.c.h.b16 %v355
  %v442 = vunpack.c.l.b16 %v356
  %v443 = vunpack.c.h.b16 %v356
  %v444 = vunpack.c.l.b16 %v357
  %v445 = vunpack.c.h.b16 %v357
  %v446 = vunpack.c.l.b16 %v358
  %v447 = vunpack.c.h.b16 %v358
  %v448 = vunpack.c.l.b16 %v359
  %v449 = vunpack.c.h.b16 %v359
  %v450 = vunpack.c.l.b16 %v360
  %v451 = vunpack.c.h.b16 %v360
  %v452 = vunpack.c.l.b16 %v361
  %v453 = vunpack.c.h.b16 %v361
  %v454 = vunpack.c.l.b16 %v362
  %v455 = vunpack.c.h.b16 %v362
  %v456 = vunpack.c.l.b16 %v363
  %v457 = vunpack.c.h.b16 %v363
  %v458 = vunpack.c.l.b16 %v364
  %v459 = vunpack.c.h.b16 %v364
  %v460 = vunpack.c.l.b16 %v365
  %v461 = vunpack.c.h.b16 %v365
  %v462 = vunpack.c.l.b16 %v366
  %v463 = vunpack.c.h.b16 %v366
  %v464 = vunpack.c.l.b16 %v367
  %v465 = vunpack.c.h.b16 %v367
  %v466 = vunpack.c.l.b16 %v368
  %v467 = vunpack.c.h.b16 %v368
  %v468 = vunpack.c.l.b16 %v369
  %v469 = vunpack.c.h.b16 %v369
  %v470 = vunpack.c.l.b16 %v370
  %v471 = vunpack.c.h.b16 %v370
  %v472 = vunpack.c.l.b16 %v371
  %v473 = vunpack.c.h.b16 %v371
  %v474 = vunpack.c.l.b16 %v372
  %v475 = vunpack.c.h.b16 %v372
  %v476 = vunpack.c.l.b16 %v373
  %v477 = vunpack.c.h.b16 %v373
  %v478 = vunpack.c.l.b16 %v374
  %v479 = vunpack.c.h.b16 %v374
  %v480 = vunpack.c.l.b16 %v375
  %v481 = vunpack.c.h.b16 %v375
  %v482 = vunpack.c.l.b16 %v376
  %v483 = vunpack.c.h.b16 %v376
  %v484 = vunpack.c.l.b16 %v377
  %v485 = vunpack.c.h.b16 %v377
  %v486 = vunpack.c.l.b16 %v378
  %v487 = vunpack.c.h.b16 %v378
  %v488 = vunpack.c.l.b16 %v379
  %v489 = vunpack.c.h.b16 %v379
  %v490 = vunpack.c.l.b16 %v380
  %v491 = vunpack.c.h.b16 %v380
  %v492 = vunpack.c.l.b16 %v381
  %v493 = vunpack.c.h.b16 %v381
  %v494 = vpack.c.b16 %v432, %v430
  %v495 = vpack.c.b16 %v433, %v431
  %v496 = vpack.c.b16 %v436, %v434
  %v497 = vpack.c.b16 %v437, %v435
  %v498 = vpack.c.b16 %v440, %v438
  %v499 = vpack.c.b16 %v441, %v439
  %v500 = vpack.c.b16 %v444, %v442
  %v501 = vpack.c.b16 %v445, %v443
  %v502 = vpack.c.b16 %v448, %v446
  %v503 = vpack.c.b16 %v449, %v447
  %v504 = vpack.c.b16 %v452, %v450
  %v505 = vpack.c.b16 %v453, %v451
  %v506 = vpack.c.b16 %v456, %v454
  %v507 = vpack.c.b16 %v457, %v455
  %v508 = vpack.c.b16 %v460, %v458
  %v509 = vpack.c.b16 %v461, %v459
  %v510 = vpack.c.b16 %v464, %v462
  %v511 = vpack.c.b16 %v465, %v463
  %v512 = vpack.c.b16 %v468, %v466
  %v513 = vpack.c.b16 %v469, %v467
  %v514 = vpack.c.b16 %v472, %v470
  %v515 = vpack.c.b16 %v473, %v471
  %v516 = vpack.c.b16 %v476, %v474
  %v517 = vpack.c.b16 %v477, %v475
  %v518 = vpack.c.b16 %v480, %v478
  %v519 = vpack.c.b16 %v481, %v479
  %v520 = vpack.c.b16 %v484, %v482
  %v521 = vpack.c.b16 %v485, %v483
  %v522 = vpack.c.b16 %v488, %v486
  %v523 = vpack.c.b16 %v489, %v487
  %v524 = vpack.c.b16 %v492, %v490
  %v525 = vpack.c.b16 %v493, %v491
  %558 = vmatprep.subr.bf16.mxu0 0
  %559 = vmatpush1.bf16.msra.mxu0 %v389
  %560 = vmatprep.subr.bf16.mxu0 0
  %561 = vmatpush1.bf16.msra.mxu0 %v388
  %562 = vmatprep.subr.bf16.mxu0 0
  %563 = vmatpush1.bf16.msra.mxu0 %v387
  %564 = vmatprep.subr.bf16.mxu0 0
  %565 = vmatpush1.bf16.msra.mxu0 %v386
  %566 = vmatprep.subr.bf16.mxu0 0
  %567 = vmatpush1.bf16.msra.mxu0 %v385
  %568 = vmatprep.subr.bf16.mxu0 0
  %569 = vmatpush1.bf16.msra.mxu0 %v384
  %570 = vmatprep.subr.bf16.mxu0 0
  %571 = vmatpush1.bf16.msra.mxu0 %v383
  %572 = vmatprep.subr.bf16.mxu0 0
  %573 = vmatpush1.bf16.msra.mxu0 %v382
  %574 = vmatprep.subr.bf16.mxu0 0
  %575 = vmatpush2.bf16.msra.mxu0 %v397
  %576 = vmatprep.subr.bf16.mxu0 0
  %577 = vmatpush2.bf16.msra.mxu0 %v396
  %578 = vmatprep.subr.bf16.mxu0 0
  %579 = vmatpush2.bf16.msra.mxu0 %v395
  %580 = vmatprep.subr.bf16.mxu0 0
  %581 = vmatpush2.bf16.msra.mxu0 %v394
  %582 = vmatprep.subr.bf16.mxu0 0
  %583 = vmatpush2.bf16.msra.mxu0 %v393
  %584 = vmatprep.subr.bf16.mxu0 0
  %585 = vmatpush2.bf16.msra.mxu0 %v392
  %586 = vmatprep.subr.bf16.mxu0 0
  %587 = vmatpush2.bf16.msra.mxu0 %v391
  %588 = vmatprep.subr.bf16.mxu0 0
  %589 = vmatpush2.bf16.msra.mxu0 %v390
  %590 = vmatprep.mubr.bf16.mxu0 %v495
  %591 = vmatmul.mubr.bf16.gmra.mxu0 %v494
  %v592 = vpop.f32.mrf.mxu0
  %v593 = vadd.f32 0.0, %v592
  %v594 = vpop.f32.mrf.mxu0
  %v595 = vpop.f32.mrf.mxu0
  %v596 = vadd.f32 0.0, %v595
  %v597 = vpop.f32.mrf.mxu0
  %598 = vmatprep.mubr.bf16.mxu0 %v497
  %599 = vmatmul.mubr.bf16.gmra.mxu0 %v496
  %v600 = vpop.f32.mrf.mxu0
  %v601 = vadd.f32 0.0, %v600
  %v602 = vpop.f32.mrf.mxu0
  %v603 = vpop.f32.mrf.mxu0
  %v604 = vadd.f32 0.0, %v603
  %v605 = vpop.f32.mrf.mxu0
  %606 = vmatprep.mubr.bf16.mxu0 %v499
  %607 = vmatmul.mubr.bf16.gmra.mxu0 %v498
  %v608 = vpop.f32.mrf.mxu0
  %v609 = vadd.f32 0.0, %v608
  %v610 = vpop.f32.mrf.mxu0
  %v611 = vpop.f32.mrf.mxu0
  %v612 = vadd.f32 0.0, %v611
  %v613 = vpop.f32.mrf.mxu0
  %614 = vmatprep.mubr.bf16.mxu0 %v501
  %615 = vmatmul.mubr.bf16.gmra.mxu0 %v500
  %v616 = vpop.f32.mrf.mxu0
  %v617 = vadd.f32 0.0, %v616
  %v618 = vpop.f32.mrf.mxu0
  %v619 = vpop.f32.mrf.mxu0
  %v620 = vadd.f32 0.0, %v619
  %v621 = vpop.f32.mrf.mxu0
  %622 = vmatprep.mubr.bf16.mxu0 %v503
  %623 = vmatmul.mubr.bf16.gmra.mxu0 %v502
  %v624 = vpop.f32.mrf.mxu0
  %v625 = vadd.f32 0.0, %v624
  %v626 = vpop.f32.mrf.mxu0
  %v627 = vpop.f32.mrf.mxu0
  %v628 = vadd.f32 0.0, %v627
  %v629 = vpop.f32.mrf.mxu0
  %630 = vmatprep.mubr.bf16.mxu0 %v505
  %631 = vmatmul.mubr.bf16.gmra.mxu0 %v504
  %v632 = vpop.f32.mrf.mxu0
  %v633 = vadd.f32 0.0, %v632
  %v634 = vpop.f32.mrf.mxu0
  %v635 = vpop.f32.mrf.mxu0
  %v636 = vadd.f32 0.0, %v635
  %v637 = vpop.f32.mrf.mxu0
  %638 = vmatprep.mubr.bf16.mxu0 %v507
  %639 = vmatmul.mubr.bf16.gmra.mxu0 %v506
  %v640 = vpop.f32.mrf.mxu0
  %v641 = vadd.f32 0.0, %v640
  %v642 = vpop.f32.mrf.mxu0
  %v643 = vpop.f32.mrf.mxu0
  %v644 = vadd.f32 0.0, %v643
  %v645 = vpop.f32.mrf.mxu0
  %646 = vmatprep.mubr.bf16.mxu0 %v509
  %647 = vmatmul.mubr.bf16.gmra.mxu0 %v508
  %v648 = vpop.f32.mrf.mxu0
  %v649 = vadd.f32 0.0, %v648
  %v650 = vpop.f32.mrf.mxu0
  %v651 = vpop.f32.mrf.mxu0
  %v652 = vadd.f32 0.0, %v651
  %v653 = vpop.f32.mrf.mxu0
  %654 = vmatprep.mubr.bf16.mxu0 %v511
  %655 = vmatmul.mubr.bf16.gmra.mxu0 %v510
  %v656 = vpop.f32.mrf.mxu0
  %v657 = vadd.f32 0.0, %v656
  %v658 = vpop.f32.mrf.mxu0
  %v659 = vpop.f32.mrf.mxu0
  %v660 = vadd.f32 0.0, %v659
  %v661 = vpop.f32.mrf.mxu0
  %662 = vmatprep.mubr.bf16.mxu0 %v513
  %663 = vmatmul.mubr.bf16.gmra.mxu0 %v512
  %v664 = vpop.f32.mrf.mxu0
  %v665 = vadd.f32 0.0, %v664
  %v666 = vpop.f32.mrf.mxu0
  %v667 = vpop.f32.mrf.mxu0
  %v668 = vadd.f32 0.0, %v667
  %v669 = vpop.f32.mrf.mxu0
  %670 = vmatprep.mubr.bf16.mxu0 %v515
  %671 = vmatmul.mubr.bf16.gmra.mxu0 %v514
  %v672 = vpop.f32.mrf.mxu0
  %v673 = vadd.f32 0.0, %v672
  %v674 = vpop.f32.mrf.mxu0
  %v675 = vpop.f32.mrf.mxu0
  %v676 = vadd.f32 0.0, %v675
  %v677 = vpop.f32.mrf.mxu0
  %678 = vmatprep.mubr.bf16.mxu0 %v517
  %679 = vmatmul.mubr.bf16.gmra.mxu0 %v516
  %v680 = vpop.f32.mrf.mxu0
  %v681 = vadd.f32 0.0, %v680
  %v682 = vpop.f32.mrf.mxu0
  %v683 = vpop.f32.mrf.mxu0
  %v684 = vadd.f32 0.0, %v683
  %v685 = vpop.f32.mrf.mxu0
  %686 = vmatprep.mubr.bf16.mxu0 %v519
  %687 = vmatmul.mubr.bf16.gmra.mxu0 %v518
  %v688 = vpop.f32.mrf.mxu0
  %v689 = vadd.f32 0.0, %v688
  %v690 = vpop.f32.mrf.mxu0
  %v691 = vpop.f32.mrf.mxu0
  %v692 = vadd.f32 0.0, %v691
  %v693 = vpop.f32.mrf.mxu0
  %694 = vmatprep.mubr.bf16.mxu0 %v521
  %695 = vmatmul.mubr.bf16.gmra.mxu0 %v520
  %v696 = vpop.f32.mrf.mxu0
  %v697 = vadd.f32 0.0, %v696
  %v698 = vpop.f32.mrf.mxu0
  %v699 = vpop.f32.mrf.mxu0
  %v700 = vadd.f32 0.0, %v699
  %v701 = vpop.f32.mrf.mxu0
  %702 = vmatprep.mubr.bf16.mxu0 %v523
  %703 = vmatmul.mubr.bf16.gmra.mxu0 %v522
  %v704 = vpop.f32.mrf.mxu0
  %v705 = vadd.f32 0.0, %v704
  %v706 = vpop.f32.mrf.mxu0
  %v707 = vpop.f32.mrf.mxu0
  %v708 = vadd.f32 0.0, %v707
  %v709 = vpop.f32.mrf.mxu0
  %710 = vmatprep.mubr.bf16.mxu0 %v525
  %711 = vmatmul.mubr.bf16.gmra.mxu0 %v524
  %v712 = vpop.f32.mrf.mxu0
  %v713 = vadd.f32 0.0, %v712
  %v714 = vpop.f32.mrf.mxu0
  %v715 = vpop.f32.mrf.mxu0
  %v716 = vadd.f32 0.0, %v715
  %v717 = vpop.f32.mrf.mxu0
  %718 = vdwg.mxu0
  %v719 = vadd.f32 %v318, %v593
  %v720 = vadd.f32 %v319, %v596
  %v721 = vadd.f32 %v320, %v601
  %v722 = vadd.f32 %v321, %v604
  %v723 = vadd.f32 %v322, %v609
  %v724 = vadd.f32 %v323, %v612
  %v725 = vadd.f32 %v324, %v617
  %v726 = vadd.f32 %v325, %v620
  %v727 = vadd.f32 %v326, %v625
  %v728 = vadd.f32 %v327, %v628
  %v729 = vadd.f32 %v328, %v633
  %v730 = vadd.f32 %v329, %v636
  %v731 = vadd.f32 %v330, %v641
  %v732 = vadd.f32 %v331, %v644
  %v733 = vadd.f32 %v332, %v649
  %v734 = vadd.f32 %v333, %v652
  %v735 = vadd.f32 %v334, %v657
  %v736 = vadd.f32 %v335, %v660
  %v737 = vadd.f32 %v336, %v665
  %v738 = vadd.f32 %v337, %v668
  %v739 = vadd.f32 %v338, %v673
  %v740 = vadd.f32 %v339, %v676
  %v741 = vadd.f32 %v340, %v681
  %v742 = vadd.f32 %v341, %v684
  %v743 = vadd.f32 %v342, %v689
  %v744 = vadd.f32 %v343, %v692
  %v745 = vadd.f32 %v344, %v697
  %v746 = vadd.f32 %v345, %v700
  %v747 = vadd.f32 %v346, %v705
  %v748 = vadd.f32 %v347, %v708
  %v749 = vadd.f32 %v348, %v713
  %v750 = vadd.f32 %v349, %v716
  %751 = vst.msk [vmem:[#allocation2] sm:$0xff] %vm104, %v719
  %752 = vst.msk [vmem:[#allocation2 + $0x8] sm:$0xff] %vm104, %v720
  %753 = vst.msk [vmem:[#allocation2 + $0x10] sm:$0xff] %vm104, %v721
  %754 = vst.msk [vmem:[#allocation2 + $0x18] sm:$0xff] %vm104, %v722
  %755 = vst.msk [vmem:[#allocation2 + $0x20] sm:$0xff] %vm104, %v723
  %756 = vst.msk [vmem:[#allocation2 + $0x28] sm:$0xff] %vm104, %v724
  %757 = vst.msk [vmem:[#allocation2 + $0x30] sm:$0xff] %vm104, %v725
  %758 = vst.msk [vmem:[#allocation2 + $0x38] sm:$0xff] %vm104, %v726
  %759 = vst.msk [vmem:[#allocation2 + $0x40] sm:$0xff] %vm104, %v727
  %760 = vst.msk [vmem:[#allocation2 + $0x48] sm:$0xff] %vm104, %v728
  %761 = vst.msk [vmem:[#allocation2 + $0x50] sm:$0xff] %vm104, %v729
  %762 = vst.msk [vmem:[#allocation2 + $0x58] sm:$0xff] %vm104, %v730
  %763 = vst.msk [vmem:[#allocation2 + $0x60] sm:$0xff] %vm104, %v731
  %764 = vst.msk [vmem:[#allocation2 + $0x68] sm:$0xff] %vm104, %v732
  %765 = vst.msk [vmem:[#allocation2 + $0x70] sm:$0xff] %vm104, %v733
  %766 = vst.msk [vmem:[#allocation2 + $0x78] sm:$0xff] %vm104, %v734
  %767 = vst.msk [vmem:[#allocation2 + $0x80] sm:$0xff] %vm104, %v735
  %768 = vst.msk [vmem:[#allocation2 + $0x88] sm:$0xff] %vm104, %v736
  %769 = vst.msk [vmem:[#allocation2 + $0x90] sm:$0xff] %vm104, %v737
  %770 = vst.msk [vmem:[#allocation2 + $0x98] sm:$0xff] %vm104, %v738
  %771 = vst.msk [vmem:[#allocation2 + $0xa0] sm:$0xff] %vm104, %v739
  %772 = vst.msk [vmem:[#allocation2 + $0xa8] sm:$0xff] %vm104, %v740
  %773 = vst.msk [vmem:[#allocation2 + $0xb0] sm:$0xff] %vm104, %v741
  %774 = vst.msk [vmem:[#allocation2 + $0xb8] sm:$0xff] %vm104, %v742
  %775 = vst.msk [vmem:[#allocation2 + $0xc0] sm:$0xff] %vm104, %v743
  %776 = vst.msk [vmem:[#allocation2 + $0xc8] sm:$0xff] %vm104, %v744
  %777 = vst.msk [vmem:[#allocation2 + $0xd0] sm:$0xff] %vm104, %v745
  %778 = vst.msk [vmem:[#allocation2 + $0xd8] sm:$0xff] %vm104, %v746
  %779 = vst.msk [vmem:[#allocation2 + $0xe0] sm:$0xff] %vm104, %v747
  %780 = vst.msk [vmem:[#allocation2 + $0xe8] sm:$0xff] %vm104, %v748
  %781 = vst.msk [vmem:[#allocation2 + $0xf0] sm:$0xff] %vm104, %v749
  %782 = vst.msk [vmem:[#allocation2 + $0xf8] sm:$0xff] %vm104, %v750
  // Predicated region
  $region22: #{comga_forward.15} parent=0 // pred_check
    %p783 = pneg %p18
  $region23: #{comga_forward.15} parent=0 // pred_check_branch
    %785 = sbr.rel (%p783) target = $region25
  $region24: #{comga_forward.15} parent=0 // pred_region
    %v786 = vld [vmem:[#allocation2] sm:$0xff]
    %v787 = vld [vmem:[#allocation2 + $0x8] sm:$0xff]
    %v788 = vld [vmem:[#allocation2 + $0x10] sm:$0xff]
    %v789 = vld [vmem:[#allocation2 + $0x18] sm:$0xff]
    %v790 = vld [vmem:[#allocation2 + $0x20] sm:$0xff]
    %v791 = vld [vmem:[#allocation2 + $0x28] sm:$0xff]
    %v792 = vld [vmem:[#allocation2 + $0x30] sm:$0xff]
    %v793 = vld [vmem:[#allocation2 + $0x38] sm:$0xff]
    %v794 = vld [vmem:[#allocation2 + $0x40] sm:$0xff]
    %v795 = vld [vmem:[#allocation2 + $0x48] sm:$0xff]
    %v796 = vld [vmem:[#allocation2 + $0x50] sm:$0xff]
    %v797 = vld [vmem:[#allocation2 + $0x58] sm:$0xff]
    %v798 = vld [vmem:[#allocation2 + $0x60] sm:$0xff]
    %v799 = vld [vmem:[#allocation2 + $0x68] sm:$0xff]
    %v800 = vld [vmem:[#allocation2 + $0x70] sm:$0xff]
    %v801 = vld [vmem:[#allocation2 + $0x78] sm:$0xff]
    %v802 = vld [vmem:[#allocation2 + $0x80] sm:$0xff]
    %v803 = vld [vmem:[#allocation2 + $0x88] sm:$0xff]
    %v804 = vld [vmem:[#allocation2 + $0x90] sm:$0xff]
    %v805 = vld [vmem:[#allocation2 + $0x98] sm:$0xff]
    %v806 = vld [vmem:[#allocation2 + $0xa0] sm:$0xff]
    %v807 = vld [vmem:[#allocation2 + $0xa8] sm:$0xff]
    %v808 = vld [vmem:[#allocation2 + $0xb0] sm:$0xff]
    %v809 = vld [vmem:[#allocation2 + $0xb8] sm:$0xff]
    %v810 = vld [vmem:[#allocation2 + $0xc0] sm:$0xff]
    %v811 = vld [vmem:[#allocation2 + $0xc8] sm:$0xff]
    %v812 = vld [vmem:[#allocation2 + $0xd0] sm:$0xff]
    %v813 = vld [vmem:[#allocation2 + $0xd8] sm:$0xff]
    %v814 = vld [vmem:[#allocation2 + $0xe0] sm:$0xff]
    %v815 = vld [vmem:[#allocation2 + $0xe8] sm:$0xff]
    %v816 = vld [vmem:[#allocation2 + $0xf0] sm:$0xff]
    %v817 = vld [vmem:[#allocation2 + $0xf8] sm:$0xff]
    %v818 = vld [vmem:[%s3] sm:$0x1]
    %v820 = vlaneseq
    %v821 = vshrl.u32 %v820, 7
    %v822 = vsub.s32 0, %v821
    %v823 = vrot.slane %v818, %v822
    %v825 = vadd.f32 %v786, %v823
    %v826 = vadd.f32 %v787, %v823
    %v827 = vadd.f32 %v788, %v823
    %v828 = vadd.f32 %v789, %v823
    %v829 = vadd.f32 %v790, %v823
    %v830 = vadd.f32 %v791, %v823
    %v831 = vadd.f32 %v792, %v823
    %v832 = vadd.f32 %v793, %v823
    %v833 = vadd.f32 %v794, %v823
    %v834 = vadd.f32 %v795, %v823
    %v835 = vadd.f32 %v796, %v823
    %v836 = vadd.f32 %v797, %v823
    %v837 = vadd.f32 %v798, %v823
    %v838 = vadd.f32 %v799, %v823
    %v839 = vadd.f32 %v800, %v823
    %v840 = vadd.f32 %v801, %v823
    %v841 = vadd.f32 %v802, %v823
    %v842 = vadd.f32 %v803, %v823
    %v843 = vadd.f32 %v804, %v823
    %v844 = vadd.f32 %v805, %v823
    %v845 = vadd.f32 %v806, %v823
    %v846 = vadd.f32 %v807, %v823
    %v847 = vadd.f32 %v808, %v823
    %v848 = vadd.f32 %v809, %v823
    %v849 = vadd.f32 %v810, %v823
    %v850 = vadd.f32 %v811, %v823
    %v851 = vadd.f32 %v812, %v823
    %v852 = vadd.f32 %v813, %v823
    %v853 = vadd.f32 %v814, %v823
    %v854 = vadd.f32 %v815, %v823
    %v855 = vadd.f32 %v816, %v823
    %v856 = vadd.f32 %v817, %v823
    %v857 = vmax.f32 %v825, 0.0
    %v858 = vmax.f32 %v826, 0.0
    %v859 = vmax.f32 %v827, 0.0
    %v860 = vmax.f32 %v828, 0.0
    %v861 = vmax.f32 %v829, 0.0
    %v862 = vmax.f32 %v830, 0.0
    %v863 = vmax.f32 %v831, 0.0
    %v864 = vmax.f32 %v832, 0.0
    %v865 = vmax.f32 %v833, 0.0
    %v866 = vmax.f32 %v834, 0.0
    %v867 = vmax.f32 %v835, 0.0
    %v868 = vmax.f32 %v836, 0.0
    %v869 = vmax.f32 %v837, 0.0
    %v870 = vmax.f32 %v838, 0.0
    %v871 = vmax.f32 %v839, 0.0
    %v872 = vmax.f32 %v840, 0.0
    %v873 = vmax.f32 %v841, 0.0
    %v874 = vmax.f32 %v842, 0.0
    %v875 = vmax.f32 %v843, 0.0
    %v876 = vmax.f32 %v844, 0.0
    %v877 = vmax.f32 %v845, 0.0
    %v878 = vmax.f32 %v846, 0.0
    %v879 = vmax.f32 %v847, 0.0
    %v880 = vmax.f32 %v848, 0.0
    %v881 = vmax.f32 %v849, 0.0
    %v882 = vmax.f32 %v850, 0.0
    %v883 = vmax.f32 %v851, 0.0
    %v884 = vmax.f32 %v852, 0.0
    %v885 = vmax.f32 %v853, 0.0
    %v886 = vmax.f32 %v854, 0.0
    %v887 = vmax.f32 %v855, 0.0
    %v888 = vmax.f32 %v856, 0.0
    %889 = vst.msk [vmem:[%s4] sm:$0xff] %vm104, %v857
    %890 = vst.msk [vmem:[%s4 + $0x8] sm:$0xff] %vm104, %v858
    %891 = vst.msk [vmem:[%s4 + $0x10] sm:$0xff] %vm104, %v859
    %892 = vst.msk [vmem:[%s4 + $0x18] sm:$0xff] %vm104, %v860
    %893 = vst.msk [vmem:[%s4 + $0x20] sm:$0xff] %vm104, %v861
    %894 = vst.msk [vmem:[%s4 + $0x28] sm:$0xff] %vm104, %v862
    %895 = vst.msk [vmem:[%s4 + $0x30] sm:$0xff] %vm104, %v863
    %896 = vst.msk [vmem:[%s4 + $0x38] sm:$0xff] %vm104, %v864
    %897 = vst.msk [vmem:[%s4 + $0x40] sm:$0xff] %vm104, %v865
    %898 = vst.msk [vmem:[%s4 + $0x48] sm:$0xff] %vm104, %v866
    %899 = vst.msk [vmem:[%s4 + $0x50] sm:$0xff] %vm104, %v867
    %900 = vst.msk [vmem:[%s4 + $0x58] sm:$0xff] %vm104, %v868
    %901 = vst.msk [vmem:[%s4 + $0x60] sm:$0xff] %vm104, %v869
    %902 = vst.msk [vmem:[%s4 + $0x68] sm:$0xff] %vm104, %v870
    %903 = vst.msk [vmem:[%s4 + $0x70] sm:$0xff] %vm104, %v871
    %904 = vst.msk [vmem:[%s4 + $0x78] sm:$0xff] %vm104, %v872
    %905 = vst.msk [vmem:[%s4 + $0x80] sm:$0xff] %vm104, %v873
    %906 = vst.msk [vmem:[%s4 + $0x88] sm:$0xff] %vm104, %v874
    %907 = vst.msk [vmem:[%s4 + $0x90] sm:$0xff] %vm104, %v875
    %908 = vst.msk [vmem:[%s4 + $0x98] sm:$0xff] %vm104, %v876
    %909 = vst.msk [vmem:[%s4 + $0xa0] sm:$0xff] %vm104, %v877
    %910 = vst.msk [vmem:[%s4 + $0xa8] sm:$0xff] %vm104, %v878
    %911 = vst.msk [vmem:[%s4 + $0xb0] sm:$0xff] %vm104, %v879
    %912 = vst.msk [vmem:[%s4 + $0xb8] sm:$0xff] %vm104, %v880
    %913 = vst.msk [vmem:[%s4 + $0xc0] sm:$0xff] %vm104, %v881
    %914 = vst.msk [vmem:[%s4 + $0xc8] sm:$0xff] %vm104, %v882
    %915 = vst.msk [vmem:[%s4 + $0xd0] sm:$0xff] %vm104, %v883
    %916 = vst.msk [vmem:[%s4 + $0xd8] sm:$0xff] %vm104, %v884
    %917 = vst.msk [vmem:[%s4 + $0xe0] sm:$0xff] %vm104, %v885
    %918 = vst.msk [vmem:[%s4 + $0xe8] sm:$0xff] %vm104, %v886
    %919 = vst.msk [vmem:[%s4 + $0xf0] sm:$0xff] %vm104, %v887
    %920 = vst.msk [vmem:[%s4 + $0xf8] sm:$0xff] %vm104, %v888
  $region25: #{comga_forward.15} parent=0 // pred_fallthru
    _
  // Predicated region
  $region26: #{comga_forward.15} parent=0 // pred_check
    _
  $region27: #{comga_forward.15} parent=0 // pred_check_branch
    %922 = sbr.rel (0) target = $region29
  $region28: #{comga_forward.15} parent=0 // pred_region
    _
  $region29: #{comga_forward.15} parent=0 // pred_fallthru
    _
  // Predicated region
  $region30: #{comga_forward.15} parent=0 // pred_check
    _
  $region31: #{comga_forward.15} parent=0 // pred_check_branch
    %924 = sbr.rel (0) target = $region33
  $region32: #{comga_forward.15} parent=0 // pred_region
    _
  $region33: #{comga_forward.15} parent=0 // pred_fallthru
    _

// kernel: comga_forward.14
$region0: #{comga_forward.14}
  #allocation0 [shape = 'u32[]', space=smem, size = 0x4, offset = 0x4, fixed_abs, tag = 'smem constant byte address 0x4 - core index']
  #allocation1 [shape = 'u32[144,128]{1,0:T(1,128)}', space=vmem, size = 0x12000, scoped, tag = 'internal scratch']
  #allocation2 [shape = 'f32[256,8]{1,0:T(8,128)}', space=vmem, size = 0x20000, scoped, tag = 'scratch operand']
  %s0 = inlined_call_operand.vmem [shape: bf16[256,256], index: 0, kind: input, shape index: {}]
  %s1 = inlined_call_operand.vmem [shape: f32[256,8], index: 1, kind: input, shape index: {}]
  %s2 = inlined_call_operand.vmem [shape: f32[256,8], index: 2, kind: input, shape index: {}]
  %s3 = inlined_call_operand.vmem [shape: bf16[8,8], index: 3, kind: input, shape index: {}]
  %s4 = inlined_call_operand.vmem [shape: f32[1,8], index: 4, kind: input, shape index: {}]
  %s5 = inlined_call_operand.vmem [shape: f32[256,8], index: 5, kind: output, shape index: {}]
  %s6 = sld [smem:[#allocation0]]
  $region38: #{comga_forward.14} parent=0
    _
  %s8 = ssub.s32 1, %s6
  %s9 = scalar_select 0, %s8, %s6
  // Predicated region
  $region2: #{comga_forward.14} parent=0 // pred_check
    _
  $region3: #{comga_forward.14} parent=0 // pred_check_branch
    %11 = sbr.rel (0) target = $region5
  $region4: #{comga_forward.14} parent=0 // pred_region
    _
  $region5: #{comga_forward.14} parent=0 // pred_fallthru
    _
  // Predicated region
  $region6: #{comga_forward.14} parent=0 // pred_check
    _
  $region7: #{comga_forward.14} parent=0 // pred_check_branch
    %13 = sbr.rel (0) target = $region9
  $region8: #{comga_forward.14} parent=0 // pred_region
    _
  $region9: #{comga_forward.14} parent=0 // pred_fallthru
    _
  // Predicated region
  $region10: #{comga_forward.14} parent=0 // pred_check
    _
  $region11: #{comga_forward.14} parent=0 // pred_check_branch
    %15 = sbr.rel (0) target = $region13
  $region12: #{comga_forward.14} parent=0 // pred_region
    _
  $region13: #{comga_forward.14} parent=0 // pred_fallthru
    _
  // Predicated region
  $region14: #{comga_forward.14} parent=0 // pred_check
    _
  $region15: #{comga_forward.14} parent=0 // pred_check_branch
    %17 = sbr.rel (0) target = $region17
  $region16: #{comga_forward.14} parent=0 // pred_region
    _
  $region17: #{comga_forward.14} parent=0 // pred_fallthru
    _
  // Predicated region
  $region18: #{comga_forward.14} parent=0 // pred_check
    _
  $region19: #{comga_forward.14} parent=0 // pred_check_branch
    %19 = sbr.rel (0) target = $region21
  $region20: #{comga_forward.14} parent=0 // pred_region
    _
  $region21: #{comga_forward.14} parent=0 // pred_fallthru
    _
  %p21 = scmp.eq.s32.totalorder 0, 0
  // Predicated region
  $region22: #{comga_forward.14} parent=0 // pred_check
    %p22 = pneg %p21
  $region23: #{comga_forward.14} parent=0 // pred_check_branch
    %24 = sbr.rel (%p22) target = $region25
  $region24: #{comga_forward.14} parent=0 // pred_region
    %vm25 = vcmask 64512
    %26 = vst.msk [vmem:[#allocation2] sm:$0xff] %vm25, 0.0
    %27 = vst.msk [vmem:[#allocation2 + $0x8] sm:$0xff] %vm25, 0.0
    %28 = vst.msk [vmem:[#allocation2 + $0x10] sm:$0xff] %vm25, 0.0
    %29 = vst.msk [vmem:[#allocation2 + $0x18] sm:$0xff] %vm25, 0.0
    %30 = vst.msk [vmem:[#allocation2 + $0x20] sm:$0xff] %vm25, 0.0
    %31 = vst.msk [vmem:[#allocation2 + $0x28] sm:$0xff] %vm25, 0.0
    %32 = vst.msk [vmem:[#allocation2 + $0x30] sm:$0xff] %vm25, 0.0
    %33 = vst.msk [vmem:[#allocation2 + $0x38] sm:$0xff] %vm25, 0.0
    %34 = vst.msk [vmem:[#allocation2 + $0x40] sm:$0xff] %vm25, 0.0
    %35 = vst.msk [vmem:[#allocation2 + $0x48] sm:$0xff] %vm25, 0.0
    %36 = vst.msk [vmem:[#allocation2 + $0x50] sm:$0xff] %vm25, 0.0
    %37 = vst.msk [vmem:[#allocation2 + $0x58] sm:$0xff] %vm25, 0.0
    %38 = vst.msk [vmem:[#allocation2 + $0x60] sm:$0xff] %vm25, 0.0
    %39 = vst.msk [vmem:[#allocation2 + $0x68] sm:$0xff] %vm25, 0.0
    %40 = vst.msk [vmem:[#allocation2 + $0x70] sm:$0xff] %vm25, 0.0
    %41 = vst.msk [vmem:[#allocation2 + $0x78] sm:$0xff] %vm25, 0.0
    %42 = vst.msk [vmem:[#allocation2 + $0x80] sm:$0xff] %vm25, 0.0
    %43 = vst.msk [vmem:[#allocation2 + $0x88] sm:$0xff] %vm25, 0.0
    %44 = vst.msk [vmem:[#allocation2 + $0x90] sm:$0xff] %vm25, 0.0
    %45 = vst.msk [vmem:[#allocation2 + $0x98] sm:$0xff] %vm25, 0.0
    %46 = vst.msk [vmem:[#allocation2 + $0xa0] sm:$0xff] %vm25, 0.0
    %47 = vst.msk [vmem:[#allocation2 + $0xa8] sm:$0xff] %vm25, 0.0
    %48 = vst.msk [vmem:[#allocation2 + $0xb0] sm:$0xff] %vm25, 0.0
    %49 = vst.msk [vmem:[#allocation2 + $0xb8] sm:$0xff] %vm25, 0.0
    %50 = vst.msk [vmem:[#allocation2 + $0xc0] sm:$0xff] %vm25, 0.0
    %51 = vst.msk [vmem:[#allocation2 + $0xc8] sm:$0xff] %vm25, 0.0
    %52 = vst.msk [vmem:[#allocation2 + $0xd0] sm:$0xff] %vm25, 0.0
    %53 = vst.msk [vmem:[#allocation2 + $0xd8] sm:$0xff] %vm25, 0.0
    %54 = vst.msk [vmem:[#allocation2 + $0xe0] sm:$0xff] %vm25, 0.0
    %55 = vst.msk [vmem:[#allocation2 + $0xe8] sm:$0xff] %vm25, 0.0
    %56 = vst.msk [vmem:[#allocation2 + $0xf0] sm:$0xff] %vm25, 0.0
    %57 = vst.msk [vmem:[#allocation2 + $0xf8] sm:$0xff] %vm25, 0.0
  $region25: #{comga_forward.14} parent=0 // pred_fallthru
    _
  %v58 = vld [vmem:[%s1] sm:$0xff]
  %v59 = vld [vmem:[%s1 + $0x8] sm:$0xff]
  %v60 = vld [vmem:[%s1 + $0x10] sm:$0xff]
  %v61 = vld [vmem:[%s1 + $0x18] sm:$0xff]
  %v62 = vld [vmem:[%s1 + $0x20] sm:$0xff]
  %v63 = vld [vmem:[%s1 + $0x28] sm:$0xff]
  %v64 = vld [vmem:[%s1 + $0x30] sm:$0xff]
  %v65 = vld [vmem:[%s1 + $0x38] sm:$0xff]
  %v66 = vld [vmem:[%s1 + $0x40] sm:$0xff]
  %v67 = vld [vmem:[%s1 + $0x48] sm:$0xff]
  %v68 = vld [vmem:[%s1 + $0x50] sm:$0xff]
  %v69 = vld [vmem:[%s1 + $0x58] sm:$0xff]
  %v70 = vld [vmem:[%s1 + $0x60] sm:$0xff]
  %v71 = vld [vmem:[%s1 + $0x68] sm:$0xff]
  %v72 = vld [vmem:[%s1 + $0x70] sm:$0xff]
  %v73 = vld [vmem:[%s1 + $0x78] sm:$0xff]
  %v74 = vld [vmem:[%s1 + $0x80] sm:$0xff]
  %v75 = vld [vmem:[%s1 + $0x88] sm:$0xff]
  %v76 = vld [vmem:[%s1 + $0x90] sm:$0xff]
  %v77 = vld [vmem:[%s1 + $0x98] sm:$0xff]
  %v78 = vld [vmem:[%s1 + $0xa0] sm:$0xff]
  %v79 = vld [vmem:[%s1 + $0xa8] sm:$0xff]
  %v80 = vld [vmem:[%s1 + $0xb0] sm:$0xff]
  %v81 = vld [vmem:[%s1 + $0xb8] sm:$0xff]
  %v82 = vld [vmem:[%s1 + $0xc0] sm:$0xff]
  %v83 = vld [vmem:[%s1 + $0xc8] sm:$0xff]
  %v84 = vld [vmem:[%s1 + $0xd0] sm:$0xff]
  %v85 = vld [vmem:[%s1 + $0xd8] sm:$0xff]
  %v86 = vld [vmem:[%s1 + $0xe0] sm:$0xff]
  %v87 = vld [vmem:[%s1 + $0xe8] sm:$0xff]
  %v88 = vld [vmem:[%s1 + $0xf0] sm:$0xff]
  %v89 = vld [vmem:[%s1 + $0xf8] sm:$0xff]
  %v90 = vld [vmem:[%s2] sm:$0xff]
  %v91 = vld [vmem:[%s2 + $0x8] sm:$0xff]
  %v92 = vld [vmem:[%s2 + $0x10] sm:$0xff]
  %v93 = vld [vmem:[%s2 + $0x18] sm:$0xff]
  %v94 = vld [vmem:[%s2 + $0x20] sm:$0xff]
  %v95 = vld [vmem:[%s2 + $0x28] sm:$0xff]
  %v96 = vld [vmem:[%s2 + $0x30] sm:$0xff]
  %v97 = vld [vmem:[%s2 + $0x38] sm:$0xff]
  %v98 = vld [vmem:[%s2 + $0x40] sm:$0xff]
  %v99 = vld [vmem:[%s2 + $0x48] sm:$0xff]
  %v100 = vld [vmem:[%s2 + $0x50] sm:$0xff]
  %v101 = vld [vmem:[%s2 + $0x58] sm:$0xff]
  %v102 = vld [vmem:[%s2 + $0x60] sm:$0xff]
  %v103 = vld [vmem:[%s2 + $0x68] sm:$0xff]
  %v104 = vld [vmem:[%s2 + $0x70] sm:$0xff]
  %v105 = vld [vmem:[%s2 + $0x78] sm:$0xff]
  %v106 = vld [vmem:[%s2 + $0x80] sm:$0xff]
  %v107 = vld [vmem:[%s2 + $0x88] sm:$0xff]
  %v108 = vld [vmem:[%s2 + $0x90] sm:$0xff]
  %v109 = vld [vmem:[%s2 + $0x98] sm:$0xff]
  %v110 = vld [vmem:[%s2 + $0xa0] sm:$0xff]
  %v111 = vld [vmem:[%s2 + $0xa8] sm:$0xff]
  %v112 = vld [vmem:[%s2 + $0xb0] sm:$0xff]
  %v113 = vld [vmem:[%s2 + $0xb8] sm:$0xff]
  %v114 = vld [vmem:[%s2 + $0xc0] sm:$0xff]
  %v115 = vld [vmem:[%s2 + $0xc8] sm:$0xff]
  %v116 = vld [vmem:[%s2 + $0xd0] sm:$0xff]
  %v117 = vld [vmem:[%s2 + $0xd8] sm:$0xff]
  %v118 = vld [vmem:[%s2 + $0xe0] sm:$0xff]
  %v119 = vld [vmem:[%s2 + $0xe8] sm:$0xff]
  %v120 = vld [vmem:[%s2 + $0xf0] sm:$0xff]
  %v121 = vld [vmem:[%s2 + $0xf8] sm:$0xff]
  %v122 = vadd.f32 %v58, %v90
  %v123 = vadd.f32 %v59, %v91
  %v124 = vadd.f32 %v60, %v92
  %v125 = vadd.f32 %v61, %v93
  %v126 = vadd.f32 %v62, %v94
  %v127 = vadd.f32 %v63, %v95
  %v128 = vadd.f32 %v64, %v96
  %v129 = vadd.f32 %v65, %v97
  %v130 = vadd.f32 %v66, %v98
  %v131 = vadd.f32 %v67, %v99
  %v132 = vadd.f32 %v68, %v100
  %v133 = vadd.f32 %v69, %v101
  %v134 = vadd.f32 %v70, %v102
  %v135 = vadd.f32 %v71, %v103
  %v136 = vadd.f32 %v72, %v104
  %v137 = vadd.f32 %v73, %v105
  %v138 = vadd.f32 %v74, %v106
  %v139 = vadd.f32 %v75, %v107
  %v140 = vadd.f32 %v76, %v108
  %v141 = vadd.f32 %v77, %v109
  %v142 = vadd.f32 %v78, %v110
  %v143 = vadd.f32 %v79, %v111
  %v144 = vadd.f32 %v80, %v112
  %v145 = vadd.f32 %v81, %v113
  %v146 = vadd.f32 %v82, %v114
  %v147 = vadd.f32 %v83, %v115
  %v148 = vadd.f32 %v84, %v116
  %v149 = vadd.f32 %v85, %v117
  %v150 = vadd.f32 %v86, %v118
  %v151 = vadd.f32 %v87, %v119
  %v152 = vadd.f32 %v88, %v120
  %v153 = vadd.f32 %v89, %v121
  %v154 = vpack.c.bf16 %v123, %v122
  %v155 = vpack.c.bf16 %v125, %v124
  %v156 = vpack.c.bf16 %v127, %v126
  %v157 = vpack.c.bf16 %v129, %v128
  %v158 = vpack.c.bf16 %v131, %v130
  %v159 = vpack.c.bf16 %v133, %v132
  %v160 = vpack.c.bf16 %v135, %v134
  %v161 = vpack.c.bf16 %v137, %v136
  %v162 = vpack.c.bf16 %v139, %v138
  %v163 = vpack.c.bf16 %v141, %v140
  %v164 = vpack.c.bf16 %v143, %v142
  %v165 = vpack.c.bf16 %v145, %v144
  %v166 = vpack.c.bf16 %v147, %v146
  %v167 = vpack.c.bf16 %v149, %v148
  %v168 = vpack.c.bf16 %v151, %v150
  %v169 = vpack.c.bf16 %v153, %v152
  %v170 = vld [vmem:[%s3] sm:$0xf]
  %vm171 = vcmask 64512
  %v173 = vsel %vm171, %v154, 0
  %v176 = vsel %vm171, %v155, 0
  %v179 = vsel %vm171, %v156, 0
  %v182 = vsel %vm171, %v157, 0
  %v185 = vsel %vm171, %v158, 0
  %v188 = vsel %vm171, %v159, 0
  %v191 = vsel %vm171, %v160, 0
  %v194 = vsel %vm171, %v161, 0
  %v197 = vsel %vm171, %v162, 0
  %v200 = vsel %vm171, %v163, 0
  %v203 = vsel %vm171, %v164, 0
  %v206 = vsel %vm171, %v165, 0
  %v209 = vsel %vm171, %v166, 0
  %v212 = vsel %vm171, %v167, 0
  %v215 = vsel %vm171, %v168, 0
  %v218 = vsel %vm171, %v169, 0
  %vm220 = vcmask 1043456
  %v222 = vsel %vm220, %v170, 0
  %224 = vmatprep.subr.bf16.mxu0 0
  %225 = vmatpush1.bf16.msra.mxu0 0
  %226 = vmatprep.subr.bf16.mxu0 0
  %227 = vmatpush1.bf16.msra.mxu0 0
  %228 = vmatprep.subr.bf16.mxu0 0
  %229 = vmatpush1.bf16.msra.mxu0 0
  %230 = vmatprep.subr.bf16.mxu0 0
  %231 = vmatpush1.bf16.msra.mxu0 0
  %232 = vmatprep.subr.bf16.mxu0 0
  %233 = vmatpush1.bf16.msra.mxu0 0
  %234 = vmatprep.subr.bf16.mxu0 0
  %235 = vmatpush1.bf16.msra.mxu0 0
  %236 = vmatprep.subr.bf16.mxu0 0
  %237 = vmatpush1.bf16.msra.mxu0 0
  %238 = vmatprep.subr.bf16.mxu0 0
  %239 = vmatpush1.bf16.msra.mxu0 %v222
  %240 = vmatprep.subr.bf16.mxu0 0
  %241 = vmatpush2.bf16.msra.mxu0 0
  %242 = vmatprep.subr.bf16.mxu0 0
  %243 = vmatpush2.bf16.msra.mxu0 0
  %244 = vmatprep.subr.bf16.mxu0 0
  %245 = vmatpush2.bf16.msra.mxu0 0
  %246 = vmatprep.subr.bf16.mxu0 0
  %247 = vmatpush2.bf16.msra.mxu0 0
  %248 = vmatprep.subr.bf16.mxu0 0
  %249 = vmatpush2.bf16.msra.mxu0 0
  %250 = vmatprep.subr.bf16.mxu0 0
  %251 = vmatpush2.bf16.msra.mxu0 0
  %252 = vmatprep.subr.bf16.mxu0 0
  %253 = vmatpush2.bf16.msra.mxu0 0
  %254 = vmatprep.subr.bf16.mxu0 0
  %255 = vmatpush2.bf16.msra.mxu0 0
  %256 = vmatprep.mubr.bf16.mxu0 0
  %257 = vmatmul.mubr.bf16.gmra.mxu0 %v173
  %v258 = vpop.f32.mrf.mxu0
  %v259 = vadd.f32 0.0, %v258
  %v260 = vpop.f32.mrf.mxu0
  %v261 = vpop.f32.mrf.mxu0
  %v262 = vadd.f32 0.0, %v261
  %v263 = vpop.f32.mrf.mxu0
  %264 = vmatprep.mubr.bf16.mxu0 0
  %265 = vmatmul.mubr.bf16.gmra.mxu0 %v176
  %v266 = vpop.f32.mrf.mxu0
  %v267 = vadd.f32 0.0, %v266
  %v268 = vpop.f32.mrf.mxu0
  %v269 = vpop.f32.mrf.mxu0
  %v270 = vadd.f32 0.0, %v269
  %v271 = vpop.f32.mrf.mxu0
  %272 = vmatprep.mubr.bf16.mxu0 0
  %273 = vmatmul.mubr.bf16.gmra.mxu0 %v179
  %v274 = vpop.f32.mrf.mxu0
  %v275 = vadd.f32 0.0, %v274
  %v276 = vpop.f32.mrf.mxu0
  %v277 = vpop.f32.mrf.mxu0
  %v278 = vadd.f32 0.0, %v277
  %v279 = vpop.f32.mrf.mxu0
  %280 = vmatprep.mubr.bf16.mxu0 0
  %281 = vmatmul.mubr.bf16.gmra.mxu0 %v182
  %v282 = vpop.f32.mrf.mxu0
  %v283 = vadd.f32 0.0, %v282
  %v284 = vpop.f32.mrf.mxu0
  %v285 = vpop.f32.mrf.mxu0
  %v286 = vadd.f32 0.0, %v285
  %v287 = vpop.f32.mrf.mxu0
  %288 = vmatprep.mubr.bf16.mxu0 0
  %289 = vmatmul.mubr.bf16.gmra.mxu0 %v185
  %v290 = vpop.f32.mrf.mxu0
  %v291 = vadd.f32 0.0, %v290
  %v292 = vpop.f32.mrf.mxu0
  %v293 = vpop.f32.mrf.mxu0
  %v294 = vadd.f32 0.0, %v293
  %v295 = vpop.f32.mrf.mxu0
  %296 = vmatprep.mubr.bf16.mxu0 0
  %297 = vmatmul.mubr.bf16.gmra.mxu0 %v188
  %v298 = vpop.f32.mrf.mxu0
  %v299 = vadd.f32 0.0, %v298
  %v300 = vpop.f32.mrf.mxu0
  %v301 = vpop.f32.mrf.mxu0
  %v302 = vadd.f32 0.0, %v301
  %v303 = vpop.f32.mrf.mxu0
  %304 = vmatprep.mubr.bf16.mxu0 0
  %305 = vmatmul.mubr.bf16.gmra.mxu0 %v191
  %v306 = vpop.f32.mrf.mxu0
  %v307 = vadd.f32 0.0, %v306
  %v308 = vpop.f32.mrf.mxu0
  %v309 = vpop.f32.mrf.mxu0
  %v310 = vadd.f32 0.0, %v309
  %v311 = vpop.f32.mrf.mxu0
  %312 = vmatprep.mubr.bf16.mxu0 0
  %313 = vmatmul.mubr.bf16.gmra.mxu0 %v194
  %v314 = vpop.f32.mrf.mxu0
  %v315 = vadd.f32 0.0, %v314
  %v316 = vpop.f32.mrf.mxu0
  %v317 = vpop.f32.mrf.mxu0
  %v318 = vadd.f32 0.0, %v317
  %v319 = vpop.f32.mrf.mxu0
  %320 = vmatprep.mubr.bf16.mxu0 0
  %321 = vmatmul.mubr.bf16.gmra.mxu0 %v197
  %v322 = vpop.f32.mrf.mxu0
  %v323 = vadd.f32 0.0, %v322
  %v324 = vpop.f32.mrf.mxu0
  %v325 = vpop.f32.mrf.mxu0
  %v326 = vadd.f32 0.0, %v325
  %v327 = vpop.f32.mrf.mxu0
  %328 = vmatprep.mubr.bf16.mxu0 0
  %329 = vmatmul.mubr.bf16.gmra.mxu0 %v200
  %v330 = vpop.f32.mrf.mxu0
  %v331 = vadd.f32 0.0, %v330
  %v332 = vpop.f32.mrf.mxu0
  %v333 = vpop.f32.mrf.mxu0
  %v334 = vadd.f32 0.0, %v333
  %v335 = vpop.f32.mrf.mxu0
  %336 = vmatprep.mubr.bf16.mxu0 0
  %337 = vmatmul.mubr.bf16.gmra.mxu0 %v203
  %v338 = vpop.f32.mrf.mxu0
  %v339 = vadd.f32 0.0, %v338
  %v340 = vpop.f32.mrf.mxu0
  %v341 = vpop.f32.mrf.mxu0
  %v342 = vadd.f32 0.0, %v341
  %v343 = vpop.f32.mrf.mxu0
  %344 = vmatprep.mubr.bf16.mxu0 0
  %345 = vmatmul.mubr.bf16.gmra.mxu0 %v206
  %v346 = vpop.f32.mrf.mxu0
  %v347 = vadd.f32 0.0, %v346
  %v348 = vpop.f32.mrf.mxu0
  %v349 = vpop.f32.mrf.mxu0
  %v350 = vadd.f32 0.0, %v349
  %v351 = vpop.f32.mrf.mxu0
  %352 = vmatprep.mubr.bf16.mxu0 0
  %353 = vmatmul.mubr.bf16.gmra.mxu0 %v209
  %v354 = vpop.f32.mrf.mxu0
  %v355 = vadd.f32 0.0, %v354
  %v356 = vpop.f32.mrf.mxu0
  %v357 = vpop.f32.mrf.mxu0
  %v358 = vadd.f32 0.0, %v357
  %v359 = vpop.f32.mrf.mxu0
  %360 = vmatprep.mubr.bf16.mxu0 0
  %361 = vmatmul.mubr.bf16.gmra.mxu0 %v212
  %v362 = vpop.f32.mrf.mxu0
  %v363 = vadd.f32 0.0, %v362
  %v364 = vpop.f32.mrf.mxu0
  %v365 = vpop.f32.mrf.mxu0
  %v366 = vadd.f32 0.0, %v365
  %v367 = vpop.f32.mrf.mxu0
  %368 = vmatprep.mubr.bf16.mxu0 0
  %369 = vmatmul.mubr.bf16.gmra.mxu0 %v215
  %v370 = vpop.f32.mrf.mxu0
  %v371 = vadd.f32 0.0, %v370
  %v372 = vpop.f32.mrf.mxu0
  %v373 = vpop.f32.mrf.mxu0
  %v374 = vadd.f32 0.0, %v373
  %v375 = vpop.f32.mrf.mxu0
  %376 = vmatprep.mubr.bf16.mxu0 0
  %377 = vmatmul.mubr.bf16.gmra.mxu0 %v218
  %v378 = vpop.f32.mrf.mxu0
  %v379 = vadd.f32 0.0, %v378
  %v380 = vpop.f32.mrf.mxu0
  %v381 = vpop.f32.mrf.mxu0
  %v382 = vadd.f32 0.0, %v381
  %v383 = vpop.f32.mrf.mxu0
  %384 = vdwg.mxu0
  %v385 = vld [vmem:[#allocation2] sm:$0xff]
  %v386 = vld [vmem:[#allocation2 + $0x8] sm:$0xff]
  %v387 = vld [vmem:[#allocation2 + $0x10] sm:$0xff]
  %v388 = vld [vmem:[#allocation2 + $0x18] sm:$0xff]
  %v389 = vld [vmem:[#allocation2 + $0x20] sm:$0xff]
  %v390 = vld [vmem:[#allocation2 + $0x28] sm:$0xff]
  %v391 = vld [vmem:[#allocation2 + $0x30] sm:$0xff]
  %v392 = vld [vmem:[#allocation2 + $0x38] sm:$0xff]
  %v393 = vld [vmem:[#allocation2 + $0x40] sm:$0xff]
  %v394 = vld [vmem:[#allocation2 + $0x48] sm:$0xff]
  %v395 = vld [vmem:[#allocation2 + $0x50] sm:$0xff]
  %v396 = vld [vmem:[#allocation2 + $0x58] sm:$0xff]
  %v397 = vld [vmem:[#allocation2 + $0x60] sm:$0xff]
  %v398 = vld [vmem:[#allocation2 + $0x68] sm:$0xff]
  %v399 = vld [vmem:[#allocation2 + $0x70] sm:$0xff]
  %v400 = vld [vmem:[#allocation2 + $0x78] sm:$0xff]
  %v401 = vld [vmem:[#allocation2 + $0x80] sm:$0xff]
  %v402 = vld [vmem:[#allocation2 + $0x88] sm:$0xff]
  %v403 = vld [vmem:[#allocation2 + $0x90] sm:$0xff]
  %v404 = vld [vmem:[#allocation2 + $0x98] sm:$0xff]
  %v405 = vld [vmem:[#allocation2 + $0xa0] sm:$0xff]
  %v406 = vld [vmem:[#allocation2 + $0xa8] sm:$0xff]
  %v407 = vld [vmem:[#allocation2 + $0xb0] sm:$0xff]
  %v408 = vld [vmem:[#allocation2 + $0xb8] sm:$0xff]
  %v409 = vld [vmem:[#allocation2 + $0xc0] sm:$0xff]
  %v410 = vld [vmem:[#allocation2 + $0xc8] sm:$0xff]
  %v411 = vld [vmem:[#allocation2 + $0xd0] sm:$0xff]
  %v412 = vld [vmem:[#allocation2 + $0xd8] sm:$0xff]
  %v413 = vld [vmem:[#allocation2 + $0xe0] sm:$0xff]
  %v414 = vld [vmem:[#allocation2 + $0xe8] sm:$0xff]
  %v415 = vld [vmem:[#allocation2 + $0xf0] sm:$0xff]
  %v416 = vld [vmem:[#allocation2 + $0xf8] sm:$0xff]
  %v417 = vld [vmem:[%s0] sm:$0xff]
  %v418 = vld [vmem:[%s0 + $0x8] sm:$0xff]
  %v419 = vld [vmem:[%s0 + $0x10] sm:$0xff]
  %v420 = vld [vmem:[%s0 + $0x18] sm:$0xff]
  %v421 = vld [vmem:[%s0 + $0x20] sm:$0xff]
  %v422 = vld [vmem:[%s0 + $0x28] sm:$0xff]
  %v423 = vld [vmem:[%s0 + $0x30] sm:$0xff]
  %v424 = vld [vmem:[%s0 + $0x38] sm:$0xff]
  %v425 = vld [vmem:[%s0 + $0x40] sm:$0xff]
  %v426 = vld [vmem:[%s0 + $0x48] sm:$0xff]
  %v427 = vld [vmem:[%s0 + $0x50] sm:$0xff]
  %v428 = vld [vmem:[%s0 + $0x58] sm:$0xff]
  %v429 = vld [vmem:[%s0 + $0x60] sm:$0xff]
  %v430 = vld [vmem:[%s0 + $0x68] sm:$0xff]
  %v431 = vld [vmem:[%s0 + $0x70] sm:$0xff]
  %v432 = vld [vmem:[%s0 + $0x78] sm:$0xff]
  %v433 = vld [vmem:[%s0 + $0x80] sm:$0xff]
  %v434 = vld [vmem:[%s0 + $0x88] sm:$0xff]
  %v435 = vld [vmem:[%s0 + $0x90] sm:$0xff]
  %v436 = vld [vmem:[%s0 + $0x98] sm:$0xff]
  %v437 = vld [vmem:[%s0 + $0xa0] sm:$0xff]
  %v438 = vld [vmem:[%s0 + $0xa8] sm:$0xff]
  %v439 = vld [vmem:[%s0 + $0xb0] sm:$0xff]
  %v440 = vld [vmem:[%s0 + $0xb8] sm:$0xff]
  %v441 = vld [vmem:[%s0 + $0xc0] sm:$0xff]
  %v442 = vld [vmem:[%s0 + $0xc8] sm:$0xff]
  %v443 = vld [vmem:[%s0 + $0xd0] sm:$0xff]
  %v444 = vld [vmem:[%s0 + $0xd8] sm:$0xff]
  %v445 = vld [vmem:[%s0 + $0xe0] sm:$0xff]
  %v446 = vld [vmem:[%s0 + $0xe8] sm:$0xff]
  %v447 = vld [vmem:[%s0 + $0xf0] sm:$0xff]
  %v448 = vld [vmem:[%s0 + $0xf8] sm:$0xff]
  %v449 = vpack.c.bf16 %v262, %v259
  %v450 = vpack.c.bf16 %v270, %v267
  %v451 = vpack.c.bf16 %v278, %v275
  %v452 = vpack.c.bf16 %v286, %v283
  %v453 = vpack.c.bf16 %v294, %v291
  %v454 = vpack.c.bf16 %v302, %v299
  %v455 = vpack.c.bf16 %v310, %v307
  %v456 = vpack.c.bf16 %v318, %v315
  %v457 = vpack.c.bf16 %v326, %v323
  %v458 = vpack.c.bf16 %v334, %v331
  %v459 = vpack.c.bf16 %v342, %v339
  %v460 = vpack.c.bf16 %v350, %v347
  %v461 = vpack.c.bf16 %v358, %v355
  %v462 = vpack.c.bf16 %v366, %v363
  %v463 = vpack.c.bf16 %v374, %v371
  %v464 = vpack.c.bf16 %v382, %v379
  %v497 = vunpack.c.l.b16 %v417
  %v498 = vunpack.c.h.b16 %v417
  %v499 = vunpack.c.l.b16 %v418
  %v500 = vunpack.c.h.b16 %v418
  %v501 = vunpack.c.l.b16 %v419
  %v502 = vunpack.c.h.b16 %v419
  %v503 = vunpack.c.l.b16 %v420
  %v504 = vunpack.c.h.b16 %v420
  %v505 = vunpack.c.l.b16 %v421
  %v506 = vunpack.c.h.b16 %v421
  %v507 = vunpack.c.l.b16 %v422
  %v508 = vunpack.c.h.b16 %v422
  %v509 = vunpack.c.l.b16 %v423
  %v510 = vunpack.c.h.b16 %v423
  %v511 = vunpack.c.l.b16 %v424
  %v512 = vunpack.c.h.b16 %v424
  %v513 = vunpack.c.l.b16 %v425
  %v514 = vunpack.c.h.b16 %v425
  %v515 = vunpack.c.l.b16 %v426
  %v516 = vunpack.c.h.b16 %v426
  %v517 = vunpack.c.l.b16 %v427
  %v518 = vunpack.c.h.b16 %v427
  %v519 = vunpack.c.l.b16 %v428
  %v520 = vunpack.c.h.b16 %v428
  %v521 = vunpack.c.l.b16 %v429
  %v522 = vunpack.c.h.b16 %v429
  %v523 = vunpack.c.l.b16 %v430
  %v524 = vunpack.c.h.b16 %v430
  %v525 = vunpack.c.l.b16 %v431
  %v526 = vunpack.c.h.b16 %v431
  %v527 = vunpack.c.l.b16 %v432
  %v528 = vunpack.c.h.b16 %v432
  %v529 = vunpack.c.l.b16 %v433
  %v530 = vunpack.c.h.b16 %v433
  %v531 = vunpack.c.l.b16 %v434
  %v532 = vunpack.c.h.b16 %v434
  %v533 = vunpack.c.l.b16 %v435
  %v534 = vunpack.c.h.b16 %v435
  %v535 = vunpack.c.l.b16 %v436
  %v536 = vunpack.c.h.b16 %v436
  %v537 = vunpack.c.l.b16 %v437
  %v538 = vunpack.c.h.b16 %v437
  %v539 = vunpack.c.l.b16 %v438
  %v540 = vunpack.c.h.b16 %v438
  %v541 = vunpack.c.l.b16 %v439
  %v542 = vunpack.c.h.b16 %v439
  %v543 = vunpack.c.l.b16 %v440
  %v544 = vunpack.c.h.b16 %v440
  %v545 = vunpack.c.l.b16 %v441
  %v546 = vunpack.c.h.b16 %v441
  %v547 = vunpack.c.l.b16 %v442
  %v548 = vunpack.c.h.b16 %v442
  %v549 = vunpack.c.l.b16 %v443
  %v550 = vunpack.c.h.b16 %v443
  %v551 = vunpack.c.l.b16 %v444
  %v552 = vunpack.c.h.b16 %v444
  %v553 = vunpack.c.l.b16 %v445
  %v554 = vunpack.c.h.b16 %v445
  %v555 = vunpack.c.l.b16 %v446
  %v556 = vunpack.c.h.b16 %v446
  %v557 = vunpack.c.l.b16 %v447
  %v558 = vunpack.c.h.b16 %v447
  %v559 = vunpack.c.l.b16 %v448
  %v560 = vunpack.c.h.b16 %v448
  %v561 = vpack.c.b16 %v499, %v497
  %v562 = vpack.c.b16 %v500, %v498
  %v563 = vpack.c.b16 %v503, %v501
  %v564 = vpack.c.b16 %v504, %v502
  %v565 = vpack.c.b16 %v507, %v505
  %v566 = vpack.c.b16 %v508, %v506
  %v567 = vpack.c.b16 %v511, %v509
  %v568 = vpack.c.b16 %v512, %v510
  %v569 = vpack.c.b16 %v515, %v513
  %v570 = vpack.c.b16 %v516, %v514
  %v571 = vpack.c.b16 %v519, %v517
  %v572 = vpack.c.b16 %v520, %v518
  %v573 = vpack.c.b16 %v523, %v521
  %v574 = vpack.c.b16 %v524, %v522
  %v575 = vpack.c.b16 %v527, %v525
  %v576 = vpack.c.b16 %v528, %v526
  %v577 = vpack.c.b16 %v531, %v529
  %v578 = vpack.c.b16 %v532, %v530
  %v579 = vpack.c.b16 %v535, %v533
  %v580 = vpack.c.b16 %v536, %v534
  %v581 = vpack.c.b16 %v539, %v537
  %v582 = vpack.c.b16 %v540, %v538
  %v583 = vpack.c.b16 %v543, %v541
  %v584 = vpack.c.b16 %v544, %v542
  %v585 = vpack.c.b16 %v547, %v545
  %v586 = vpack.c.b16 %v548, %v546
  %v587 = vpack.c.b16 %v551, %v549
  %v588 = vpack.c.b16 %v552, %v550
  %v589 = vpack.c.b16 %v555, %v553
  %v590 = vpack.c.b16 %v556, %v554
  %v591 = vpack.c.b16 %v559, %v557
  %v592 = vpack.c.b16 %v560, %v558
  %625 = vmatprep.subr.bf16.mxu0 0
  %626 = vmatpush1.bf16.msra.mxu0 %v456
  %627 = vmatprep.subr.bf16.mxu0 0
  %628 = vmatpush1.bf16.msra.mxu0 %v455
  %629 = vmatprep.subr.bf16.mxu0 0
  %630 = vmatpush1.bf16.msra.mxu0 %v454
  %631 = vmatprep.subr.bf16.mxu0 0
  %632 = vmatpush1.bf16.msra.mxu0 %v453
  %633 = vmatprep.subr.bf16.mxu0 0
  %634 = vmatpush1.bf16.msra.mxu0 %v452
  %635 = vmatprep.subr.bf16.mxu0 0
  %636 = vmatpush1.bf16.msra.mxu0 %v451
  %637 = vmatprep.subr.bf16.mxu0 0
  %638 = vmatpush1.bf16.msra.mxu0 %v450
  %639 = vmatprep.subr.bf16.mxu0 0
  %640 = vmatpush1.bf16.msra.mxu0 %v449
  %641 = vmatprep.subr.bf16.mxu0 0
  %642 = vmatpush2.bf16.msra.mxu0 %v464
  %643 = vmatprep.subr.bf16.mxu0 0
  %644 = vmatpush2.bf16.msra.mxu0 %v463
  %645 = vmatprep.subr.bf16.mxu0 0
  %646 = vmatpush2.bf16.msra.mxu0 %v462
  %647 = vmatprep.subr.bf16.mxu0 0
  %648 = vmatpush2.bf16.msra.mxu0 %v461
  %649 = vmatprep.subr.bf16.mxu0 0
  %650 = vmatpush2.bf16.msra.mxu0 %v460
  %651 = vmatprep.subr.bf16.mxu0 0
  %652 = vmatpush2.bf16.msra.mxu0 %v459
  %653 = vmatprep.subr.bf16.mxu0 0
  %654 = vmatpush2.bf16.msra.mxu0 %v458
  %655 = vmatprep.subr.bf16.mxu0 0
  %656 = vmatpush2.bf16.msra.mxu0 %v457
  %657 = vmatprep.mubr.bf16.mxu0 %v562
  %658 = vmatmul.mubr.bf16.gmra.mxu0 %v561
  %v659 = vpop.f32.mrf.mxu0
  %v660 = vadd.f32 0.0, %v659
  %v661 = vpop.f32.mrf.mxu0
  %v662 = vpop.f32.mrf.mxu0
  %v663 = vadd.f32 0.0, %v662
  %v664 = vpop.f32.mrf.mxu0
  %665 = vmatprep.mubr.bf16.mxu0 %v564
  %666 = vmatmul.mubr.bf16.gmra.mxu0 %v563
  %v667 = vpop.f32.mrf.mxu0
  %v668 = vadd.f32 0.0, %v667
  %v669 = vpop.f32.mrf.mxu0
  %v670 = vpop.f32.mrf.mxu0
  %v671 = vadd.f32 0.0, %v670
  %v672 = vpop.f32.mrf.mxu0
  %673 = vmatprep.mubr.bf16.mxu0 %v566
  %674 = vmatmul.mubr.bf16.gmra.mxu0 %v565
  %v675 = vpop.f32.mrf.mxu0
  %v676 = vadd.f32 0.0, %v675
  %v677 = vpop.f32.mrf.mxu0
  %v678 = vpop.f32.mrf.mxu0
  %v679 = vadd.f32 0.0, %v678
  %v680 = vpop.f32.mrf.mxu0
  %681 = vmatprep.mubr.bf16.mxu0 %v568
  %682 = vmatmul.mubr.bf16.gmra.mxu0 %v567
  %v683 = vpop.f32.mrf.mxu0
  %v684 = vadd.f32 0.0, %v683
  %v685 = vpop.f32.mrf.mxu0
  %v686 = vpop.f32.mrf.mxu0
  %v687 = vadd.f32 0.0, %v686
  %v688 = vpop.f32.mrf.mxu0
  %689 = vmatprep.mubr.bf16.mxu0 %v570
  %690 = vmatmul.mubr.bf16.gmra.mxu0 %v569
  %v691 = vpop.f32.mrf.mxu0
  %v692 = vadd.f32 0.0, %v691
  %v693 = vpop.f32.mrf.mxu0
  %v694 = vpop.f32.mrf.mxu0
  %v695 = vadd.f32 0.0, %v694
  %v696 = vpop.f32.mrf.mxu0
  %697 = vmatprep.mubr.bf16.mxu0 %v572
  %698 = vmatmul.mubr.bf16.gmra.mxu0 %v571
  %v699 = vpop.f32.mrf.mxu0
  %v700 = vadd.f32 0.0, %v699
  %v701 = vpop.f32.mrf.mxu0
  %v702 = vpop.f32.mrf.mxu0
  %v703 = vadd.f32 0.0, %v702
  %v704 = vpop.f32.mrf.mxu0
  %705 = vmatprep.mubr.bf16.mxu0 %v574
  %706 = vmatmul.mubr.bf16.gmra.mxu0 %v573
  %v707 = vpop.f32.mrf.mxu0
  %v708 = vadd.f32 0.0, %v707
  %v709 = vpop.f32.mrf.mxu0
  %v710 = vpop.f32.mrf.mxu0
  %v711 = vadd.f32 0.0, %v710
  %v712 = vpop.f32.mrf.mxu0
  %713 = vmatprep.mubr.bf16.mxu0 %v576
  %714 = vmatmul.mubr.bf16.gmra.mxu0 %v575
  %v715 = vpop.f32.mrf.mxu0
  %v716 = vadd.f32 0.0, %v715
  %v717 = vpop.f32.mrf.mxu0
  %v718 = vpop.f32.mrf.mxu0
  %v719 = vadd.f32 0.0, %v718
  %v720 = vpop.f32.mrf.mxu0
  %721 = vmatprep.mubr.bf16.mxu0 %v578
  %722 = vmatmul.mubr.bf16.gmra.mxu0 %v577
  %v723 = vpop.f32.mrf.mxu0
  %v724 = vadd.f32 0.0, %v723
  %v725 = vpop.f32.mrf.mxu0
  %v726 = vpop.f32.mrf.mxu0
  %v727 = vadd.f32 0.0, %v726
  %v728 = vpop.f32.mrf.mxu0
  %729 = vmatprep.mubr.bf16.mxu0 %v580
  %730 = vmatmul.mubr.bf16.gmra.mxu0 %v579
  %v731 = vpop.f32.mrf.mxu0
  %v732 = vadd.f32 0.0, %v731
  %v733 = vpop.f32.mrf.mxu0
  %v734 = vpop.f32.mrf.mxu0
  %v735 = vadd.f32 0.0, %v734
  %v736 = vpop.f32.mrf.mxu0
  %737 = vmatprep.mubr.bf16.mxu0 %v582
  %738 = vmatmul.mubr.bf16.gmra.mxu0 %v581
  %v739 = vpop.f32.mrf.mxu0
  %v740 = vadd.f32 0.0, %v739
  %v741 = vpop.f32.mrf.mxu0
  %v742 = vpop.f32.mrf.mxu0
  %v743 = vadd.f32 0.0, %v742
  %v744 = vpop.f32.mrf.mxu0
  %745 = vmatprep.mubr.bf16.mxu0 %v584
  %746 = vmatmul.mubr.bf16.gmra.mxu0 %v583
  %v747 = vpop.f32.mrf.mxu0
  %v748 = vadd.f32 0.0, %v747
  %v749 = vpop.f32.mrf.mxu0
  %v750 = vpop.f32.mrf.mxu0
  %v751 = vadd.f32 0.0, %v750
  %v752 = vpop.f32.mrf.mxu0
  %753 = vmatprep.mubr.bf16.mxu0 %v586
  %754 = vmatmul.mubr.bf16.gmra.mxu0 %v585
  %v755 = vpop.f32.mrf.mxu0
  %v756 = vadd.f32 0.0, %v755
  %v757 = vpop.f32.mrf.mxu0
  %v758 = vpop.f32.mrf.mxu0
  %v759 = vadd.f32 0.0, %v758
  %v760 = vpop.f32.mrf.mxu0
  %761 = vmatprep.mubr.bf16.mxu0 %v588
  %762 = vmatmul.mubr.bf16.gmra.mxu0 %v587
  %v763 = vpop.f32.mrf.mxu0
  %v764 = vadd.f32 0.0, %v763
  %v765 = vpop.f32.mrf.mxu0
  %v766 = vpop.f32.mrf.mxu0
  %v767 = vadd.f32 0.0, %v766
  %v768 = vpop.f32.mrf.mxu0
  %769 = vmatprep.mubr.bf16.mxu0 %v590
  %770 = vmatmul.mubr.bf16.gmra.mxu0 %v589
  %v771 = vpop.f32.mrf.mxu0
  %v772 = vadd.f32 0.0, %v771
  %v773 = vpop.f32.mrf.mxu0
  %v774 = vpop.f32.mrf.mxu0
  %v775 = vadd.f32 0.0, %v774
  %v776 = vpop.f32.mrf.mxu0
  %777 = vmatprep.mubr.bf16.mxu0 %v592
  %778 = vmatmul.mubr.bf16.gmra.mxu0 %v591
  %v779 = vpop.f32.mrf.mxu0
  %v780 = vadd.f32 0.0, %v779
  %v781 = vpop.f32.mrf.mxu0
  %v782 = vpop.f32.mrf.mxu0
  %v783 = vadd.f32 0.0, %v782
  %v784 = vpop.f32.mrf.mxu0
  %785 = vdwg.mxu0
  %v786 = vadd.f32 %v385, %v660
  %v787 = vadd.f32 %v386, %v663
  %v788 = vadd.f32 %v387, %v668
  %v789 = vadd.f32 %v388, %v671
  %v790 = vadd.f32 %v389, %v676
  %v791 = vadd.f32 %v390, %v679
  %v792 = vadd.f32 %v391, %v684
  %v793 = vadd.f32 %v392, %v687
  %v794 = vadd.f32 %v393, %v692
  %v795 = vadd.f32 %v394, %v695
  %v796 = vadd.f32 %v395, %v700
  %v797 = vadd.f32 %v396, %v703
  %v798 = vadd.f32 %v397, %v708
  %v799 = vadd.f32 %v398, %v711
  %v800 = vadd.f32 %v399, %v716
  %v801 = vadd.f32 %v400, %v719
  %v802 = vadd.f32 %v401, %v724
  %v803 = vadd.f32 %v402, %v727
  %v804 = vadd.f32 %v403, %v732
  %v805 = vadd.f32 %v404, %v735
  %v806 = vadd.f32 %v405, %v740
  %v807 = vadd.f32 %v406, %v743
  %v808 = vadd.f32 %v407, %v748
  %v809 = vadd.f32 %v408, %v751
  %v810 = vadd.f32 %v409, %v756
  %v811 = vadd.f32 %v410, %v759
  %v812 = vadd.f32 %v411, %v764
  %v813 = vadd.f32 %v412, %v767
  %v814 = vadd.f32 %v413, %v772
  %v815 = vadd.f32 %v414, %v775
  %v816 = vadd.f32 %v415, %v780
  %v817 = vadd.f32 %v416, %v783
  %818 = vst.msk [vmem:[#allocation2] sm:$0xff] %vm171, %v786
  %819 = vst.msk [vmem:[#allocation2 + $0x8] sm:$0xff] %vm171, %v787
  %820 = vst.msk [vmem:[#allocation2 + $0x10] sm:$0xff] %vm171, %v788
  %821 = vst.msk [vmem:[#allocation2 + $0x18] sm:$0xff] %vm171, %v789
  %822 = vst.msk [vmem:[#allocation2 + $0x20] sm:$0xff] %vm171, %v790
  %823 = vst.msk [vmem:[#allocation2 + $0x28] sm:$0xff] %vm171, %v791
  %824 = vst.msk [vmem:[#allocation2 + $0x30] sm:$0xff] %vm171, %v792
  %825 = vst.msk [vmem:[#allocation2 + $0x38] sm:$0xff] %vm171, %v793
  %826 = vst.msk [vmem:[#allocation2 + $0x40] sm:$0xff] %vm171, %v794
  %827 = vst.msk [vmem:[#allocation2 + $0x48] sm:$0xff] %vm171, %v795
  %828 = vst.msk [vmem:[#allocation2 + $0x50] sm:$0xff] %vm171, %v796
  %829 = vst.msk [vmem:[#allocation2 + $0x58] sm:$0xff] %vm171, %v797
  %830 = vst.msk [vmem:[#allocation2 + $0x60] sm:$0xff] %vm171, %v798
  %831 = vst.msk [vmem:[#allocation2 + $0x68] sm:$0xff] %vm171, %v799
  %832 = vst.msk [vmem:[#allocation2 + $0x70] sm:$0xff] %vm171, %v800
  %833 = vst.msk [vmem:[#allocation2 + $0x78] sm:$0xff] %vm171, %v801
  %834 = vst.msk [vmem:[#allocation2 + $0x80] sm:$0xff] %vm171, %v802
  %835 = vst.msk [vmem:[#allocation2 + $0x88] sm:$0xff] %vm171, %v803
  %836 = vst.msk [vmem:[#allocation2 + $0x90] sm:$0xff] %vm171, %v804
  %837 = vst.msk [vmem:[#allocation2 + $0x98] sm:$0xff] %vm171, %v805
  %838 = vst.msk [vmem:[#allocation2 + $0xa0] sm:$0xff] %vm171, %v806
  %839 = vst.msk [vmem:[#allocation2 + $0xa8] sm:$0xff] %vm171, %v807
  %840 = vst.msk [vmem:[#allocation2 + $0xb0] sm:$0xff] %vm171, %v808
  %841 = vst.msk [vmem:[#allocation2 + $0xb8] sm:$0xff] %vm171, %v809
  %842 = vst.msk [vmem:[#allocation2 + $0xc0] sm:$0xff] %vm171, %v810
  %843 = vst.msk [vmem:[#allocation2 + $0xc8] sm:$0xff] %vm171, %v811
  %844 = vst.msk [vmem:[#allocation2 + $0xd0] sm:$0xff] %vm171, %v812
  %845 = vst.msk [vmem:[#allocation2 + $0xd8] sm:$0xff] %vm171, %v813
  %846 = vst.msk [vmem:[#allocation2 + $0xe0] sm:$0xff] %vm171, %v814
  %847 = vst.msk [vmem:[#allocation2 + $0xe8] sm:$0xff] %vm171, %v815
  %848 = vst.msk [vmem:[#allocation2 + $0xf0] sm:$0xff] %vm171, %v816
  %849 = vst.msk [vmem:[#allocation2 + $0xf8] sm:$0xff] %vm171, %v817
  // Predicated region
  $region26: #{comga_forward.14} parent=0 // pred_check
    %p850 = pneg %p21
  $region27: #{comga_forward.14} parent=0 // pred_check_branch
    %852 = sbr.rel (%p850) target = $region29
  $region28: #{comga_forward.14} parent=0 // pred_region
    %v853 = vld [vmem:[#allocation2] sm:$0xff]
    %v854 = vld [vmem:[#allocation2 + $0x8] sm:$0xff]
    %v855 = vld [vmem:[#allocation2 + $0x10] sm:$0xff]
    %v856 = vld [vmem:[#allocation2 + $0x18] sm:$0xff]
    %v857 = vld [vmem:[#allocation2 + $0x20] sm:$0xff]
    %v858 = vld [vmem:[#allocation2 + $0x28] sm:$0xff]
    %v859 = vld [vmem:[#allocation2 + $0x30] sm:$0xff]
    %v860 = vld [vmem:[#allocation2 + $0x38] sm:$0xff]
    %v861 = vld [vmem:[#allocation2 + $0x40] sm:$0xff]
    %v862 = vld [vmem:[#allocation2 + $0x48] sm:$0xff]
    %v863 = vld [vmem:[#allocation2 + $0x50] sm:$0xff]
    %v864 = vld [vmem:[#allocation2 + $0x58] sm:$0xff]
    %v865 = vld [vmem:[#allocation2 + $0x60] sm:$0xff]
    %v866 = vld [vmem:[#allocation2 + $0x68] sm:$0xff]
    %v867 = vld [vmem:[#allocation2 + $0x70] sm:$0xff]
    %v868 = vld [vmem:[#allocation2 + $0x78] sm:$0xff]
    %v869 = vld [vmem:[#allocation2 + $0x80] sm:$0xff]
    %v870 = vld [vmem:[#allocation2 + $0x88] sm:$0xff]
    %v871 = vld [vmem:[#allocation2 + $0x90] sm:$0xff]
    %v872 = vld [vmem:[#allocation2 + $0x98] sm:$0xff]
    %v873 = vld [vmem:[#allocation2 + $0xa0] sm:$0xff]
    %v874 = vld [vmem:[#allocation2 + $0xa8] sm:$0xff]
    %v875 = vld [vmem:[#allocation2 + $0xb0] sm:$0xff]
    %v876 = vld [vmem:[#allocation2 + $0xb8] sm:$0xff]
    %v877 = vld [vmem:[#allocation2 + $0xc0] sm:$0xff]
    %v878 = vld [vmem:[#allocation2 + $0xc8] sm:$0xff]
    %v879 = vld [vmem:[#allocation2 + $0xd0] sm:$0xff]
    %v880 = vld [vmem:[#allocation2 + $0xd8] sm:$0xff]
    %v881 = vld [vmem:[#allocation2 + $0xe0] sm:$0xff]
    %v882 = vld [vmem:[#allocation2 + $0xe8] sm:$0xff]
    %v883 = vld [vmem:[#allocation2 + $0xf0] sm:$0xff]
    %v884 = vld [vmem:[#allocation2 + $0xf8] sm:$0xff]
    %v885 = vld [vmem:[%s4] sm:$0x1]
    %v887 = vlaneseq
    %v888 = vshrl.u32 %v887, 7
    %v889 = vsub.s32 0, %v888
    %v890 = vrot.slane %v885, %v889
    %v892 = vadd.f32 %v853, %v890
    %v893 = vadd.f32 %v854, %v890
    %v894 = vadd.f32 %v855, %v890
    %v895 = vadd.f32 %v856, %v890
    %v896 = vadd.f32 %v857, %v890
    %v897 = vadd.f32 %v858, %v890
    %v898 = vadd.f32 %v859, %v890
    %v899 = vadd.f32 %v860, %v890
    %v900 = vadd.f32 %v861, %v890
    %v901 = vadd.f32 %v862, %v890
    %v902 = vadd.f32 %v863, %v890
    %v903 = vadd.f32 %v864, %v890
    %v904 = vadd.f32 %v865, %v890
    %v905 = vadd.f32 %v866, %v890
    %v906 = vadd.f32 %v867, %v890
    %v907 = vadd.f32 %v868, %v890
    %v908 = vadd.f32 %v869, %v890
    %v909 = vadd.f32 %v870, %v890
    %v910 = vadd.f32 %v871, %v890
    %v911 = vadd.f32 %v872, %v890
    %v912 = vadd.f32 %v873, %v890
    %v913 = vadd.f32 %v874, %v890
    %v914 = vadd.f32 %v875, %v890
    %v915 = vadd.f32 %v876, %v890
    %v916 = vadd.f32 %v877, %v890
    %v917 = vadd.f32 %v878, %v890
    %v918 = vadd.f32 %v879, %v890
    %v919 = vadd.f32 %v880, %v890
    %v920 = vadd.f32 %v881, %v890
    %v921 = vadd.f32 %v882, %v890
    %v922 = vadd.f32 %v883, %v890
    %v923 = vadd.f32 %v884, %v890
    %v924 = vmax.f32 %v892, 0.0
    %v925 = vmax.f32 %v893, 0.0
    %v926 = vmax.f32 %v894, 0.0
    %v927 = vmax.f32 %v895, 0.0
    %v928 = vmax.f32 %v896, 0.0
    %v929 = vmax.f32 %v897, 0.0
    %v930 = vmax.f32 %v898, 0.0
    %v931 = vmax.f32 %v899, 0.0
    %v932 = vmax.f32 %v900, 0.0
    %v933 = vmax.f32 %v901, 0.0
    %v934 = vmax.f32 %v902, 0.0
    %v935 = vmax.f32 %v903, 0.0
    %v936 = vmax.f32 %v904, 0.0
    %v937 = vmax.f32 %v905, 0.0
    %v938 = vmax.f32 %v906, 0.0
    %v939 = vmax.f32 %v907, 0.0
    %v940 = vmax.f32 %v908, 0.0
    %v941 = vmax.f32 %v909, 0.0
    %v942 = vmax.f32 %v910, 0.0
    %v943 = vmax.f32 %v911, 0.0
    %v944 = vmax.f32 %v912, 0.0
    %v945 = vmax.f32 %v913, 0.0
    %v946 = vmax.f32 %v914, 0.0
    %v947 = vmax.f32 %v915, 0.0
    %v948 = vmax.f32 %v916, 0.0
    %v949 = vmax.f32 %v917, 0.0
    %v950 = vmax.f32 %v918, 0.0
    %v951 = vmax.f32 %v919, 0.0
    %v952 = vmax.f32 %v920, 0.0
    %v953 = vmax.f32 %v921, 0.0
    %v954 = vmax.f32 %v922, 0.0
    %v955 = vmax.f32 %v923, 0.0
    %956 = vst.msk [vmem:[%s5] sm:$0xff] %vm171, %v924
    %957 = vst.msk [vmem:[%s5 + $0x8] sm:$0xff] %vm171, %v925
    %958 = vst.msk [vmem:[%s5 + $0x10] sm:$0xff] %vm171, %v926
    %959 = vst.msk [vmem:[%s5 + $0x18] sm:$0xff] %vm171, %v927
    %960 = vst.msk [vmem:[%s5 + $0x20] sm:$0xff] %vm171, %v928
    %961 = vst.msk [vmem:[%s5 + $0x28] sm:$0xff] %vm171, %v929
    %962 = vst.msk [vmem:[%s5 + $0x30] sm:$0xff] %vm171, %v930
    %963 = vst.msk [vmem:[%s5 + $0x38] sm:$0xff] %vm171, %v931
    %964 = vst.msk [vmem:[%s5 + $0x40] sm:$0xff] %vm171, %v932
    %965 = vst.msk [vmem:[%s5 + $0x48] sm:$0xff] %vm171, %v933
    %966 = vst.msk [vmem:[%s5 + $0x50] sm:$0xff] %vm171, %v934
    %967 = vst.msk [vmem:[%s5 + $0x58] sm:$0xff] %vm171, %v935
    %968 = vst.msk [vmem:[%s5 + $0x60] sm:$0xff] %vm171, %v936
    %969 = vst.msk [vmem:[%s5 + $0x68] sm:$0xff] %vm171, %v937
    %970 = vst.msk [vmem:[%s5 + $0x70] sm:$0xff] %vm171, %v938
    %971 = vst.msk [vmem:[%s5 + $0x78] sm:$0xff] %vm171, %v939
    %972 = vst.msk [vmem:[%s5 + $0x80] sm:$0xff] %vm171, %v940
    %973 = vst.msk [vmem:[%s5 + $0x88] sm:$0xff] %vm171, %v941
    %974 = vst.msk [vmem:[%s5 + $0x90] sm:$0xff] %vm171, %v942
    %975 = vst.msk [vmem:[%s5 + $0x98] sm:$0xff] %vm171, %v943
    %976 = vst.msk [vmem:[%s5 + $0xa0] sm:$0xff] %vm171, %v944
    %977 = vst.msk [vmem:[%s5 + $0xa8] sm:$0xff] %vm171, %v945
    %978 = vst.msk [vmem:[%s5 + $0xb0] sm:$0xff] %vm171, %v946
    %979 = vst.msk [vmem:[%s5 + $0xb8] sm:$0xff] %vm171, %v947
    %980 = vst.msk [vmem:[%s5 + $0xc0] sm:$0xff] %vm171, %v948
    %981 = vst.msk [vmem:[%s5 + $0xc8] sm:$0xff] %vm171, %v949
    %982 = vst.msk [vmem:[%s5 + $0xd0] sm:$0xff] %vm171, %v950
    %983 = vst.msk [vmem:[%s5 + $0xd8] sm:$0xff] %vm171, %v951
    %984 = vst.msk [vmem:[%s5 + $0xe0] sm:$0xff] %vm171, %v952
    %985 = vst.msk [vmem:[%s5 + $0xe8] sm:$0xff] %vm171, %v953
    %986 = vst.msk [vmem:[%s5 + $0xf0] sm:$0xff] %vm171, %v954
    %987 = vst.msk [vmem:[%s5 + $0xf8] sm:$0xff] %vm171, %v955
  $region29: #{comga_forward.14} parent=0 // pred_fallthru
    _
  // Predicated region
  $region30: #{comga_forward.14} parent=0 // pred_check
    _
  $region31: #{comga_forward.14} parent=0 // pred_check_branch
    %989 = sbr.rel (0) target = $region33
  $region32: #{comga_forward.14} parent=0 // pred_region
    _
  $region33: #{comga_forward.14} parent=0 // pred_fallthru
    _
  // Predicated region
  $region34: #{comga_forward.14} parent=0 // pred_check
    _
  $region35: #{comga_forward.14} parent=0 // pred_check_branch
    %991 = sbr.rel (0) target = $region37
  $region36: #{comga_forward.14} parent=0 // pred_region
    _
  $region37: #{comga_forward.14} parent=0 // pred_fallthru
    _

// kernel: comga_forward.16
$region0: #{comga_forward.16}
  #allocation0 [shape = 'u32[]', space=smem, size = 0x4, offset = 0x4, fixed_abs, tag = 'smem constant byte address 0x4 - core index']
  #allocation1 [shape = 'u32[144,128]{1,0:T(1,128)}', space=vmem, size = 0x12000, scoped, tag = 'internal scratch']
  #allocation2 [shape = 'f32[256,16]{1,0:T(8,128)}', space=vmem, size = 0x20000, scoped, tag = 'scratch operand']
  %s0 = inlined_call_operand.vmem [shape: bf16[256,256], index: 0, kind: input, shape index: {}]
  %s1 = inlined_call_operand.vmem [shape: f32[256,8], index: 1, kind: input, shape index: {}]
  %s2 = inlined_call_operand.vmem [shape: bf16[8,16], index: 2, kind: input, shape index: {}]
  %s3 = inlined_call_operand.vmem [shape: f32[1,16], index: 3, kind: input, shape index: {}]
  %s4 = inlined_call_operand.vmem [shape: f32[256,16], index: 4, kind: output, shape index: {}]
  %s5 = sld [smem:[#allocation0]]
  $region34: #{comga_forward.16} parent=0
    _
  %s7 = ssub.s32 1, %s5
  %s8 = scalar_select 0, %s7, %s5
  // Predicated region
  $region2: #{comga_forward.16} parent=0 // pred_check
    _
  $region3: #{comga_forward.16} parent=0 // pred_check_branch
    %10 = sbr.rel (0) target = $region5
  $region4: #{comga_forward.16} parent=0 // pred_region
    _
  $region5: #{comga_forward.16} parent=0 // pred_fallthru
    _
  // Predicated region
  $region6: #{comga_forward.16} parent=0 // pred_check
    _
  $region7: #{comga_forward.16} parent=0 // pred_check_branch
    %12 = sbr.rel (0) target = $region9
  $region8: #{comga_forward.16} parent=0 // pred_region
    _
  $region9: #{comga_forward.16} parent=0 // pred_fallthru
    _
  // Predicated region
  $region10: #{comga_forward.16} parent=0 // pred_check
    _
  $region11: #{comga_forward.16} parent=0 // pred_check_branch
    %14 = sbr.rel (0) target = $region13
  $region12: #{comga_forward.16} parent=0 // pred_region
    _
  $region13: #{comga_forward.16} parent=0 // pred_fallthru
    _
  // Predicated region
  $region14: #{comga_forward.16} parent=0 // pred_check
    _
  $region15: #{comga_forward.16} parent=0 // pred_check_branch
    %16 = sbr.rel (0) target = $region17
  $region16: #{comga_forward.16} parent=0 // pred_region
    _
  $region17: #{comga_forward.16} parent=0 // pred_fallthru
    _
  %p18 = scmp.eq.s32.totalorder 0, 0
  // Predicated region
  $region18: #{comga_forward.16} parent=0 // pred_check
    %p19 = pneg %p18
  $region19: #{comga_forward.16} parent=0 // pred_check_branch
    %21 = sbr.rel (%p19) target = $region21
  $region20: #{comga_forward.16} parent=0 // pred_region
    %vm22 = vcmask 130048
    %23 = vst.msk [vmem:[#allocation2] sm:$0xff] %vm22, 0.0
    %24 = vst.msk [vmem:[#allocation2 + $0x8] sm:$0xff] %vm22, 0.0
    %25 = vst.msk [vmem:[#allocation2 + $0x10] sm:$0xff] %vm22, 0.0
    %26 = vst.msk [vmem:[#allocation2 + $0x18] sm:$0xff] %vm22, 0.0
    %27 = vst.msk [vmem:[#allocation2 + $0x20] sm:$0xff] %vm22, 0.0
    %28 = vst.msk [vmem:[#allocation2 + $0x28] sm:$0xff] %vm22, 0.0
    %29 = vst.msk [vmem:[#allocation2 + $0x30] sm:$0xff] %vm22, 0.0
    %30 = vst.msk [vmem:[#allocation2 + $0x38] sm:$0xff] %vm22, 0.0
    %31 = vst.msk [vmem:[#allocation2 + $0x40] sm:$0xff] %vm22, 0.0
    %32 = vst.msk [vmem:[#allocation2 + $0x48] sm:$0xff] %vm22, 0.0
    %33 = vst.msk [vmem:[#allocation2 + $0x50] sm:$0xff] %vm22, 0.0
    %34 = vst.msk [vmem:[#allocation2 + $0x58] sm:$0xff] %vm22, 0.0
    %35 = vst.msk [vmem:[#allocation2 + $0x60] sm:$0xff] %vm22, 0.0
    %36 = vst.msk [vmem:[#allocation2 + $0x68] sm:$0xff] %vm22, 0.0
    %37 = vst.msk [vmem:[#allocation2 + $0x70] sm:$0xff] %vm22, 0.0
    %38 = vst.msk [vmem:[#allocation2 + $0x78] sm:$0xff] %vm22, 0.0
    %39 = vst.msk [vmem:[#allocation2 + $0x80] sm:$0xff] %vm22, 0.0
    %40 = vst.msk [vmem:[#allocation2 + $0x88] sm:$0xff] %vm22, 0.0
    %41 = vst.msk [vmem:[#allocation2 + $0x90] sm:$0xff] %vm22, 0.0
    %42 = vst.msk [vmem:[#allocation2 + $0x98] sm:$0xff] %vm22, 0.0
    %43 = vst.msk [vmem:[#allocation2 + $0xa0] sm:$0xff] %vm22, 0.0
    %44 = vst.msk [vmem:[#allocation2 + $0xa8] sm:$0xff] %vm22, 0.0
    %45 = vst.msk [vmem:[#allocation2 + $0xb0] sm:$0xff] %vm22, 0.0
    %46 = vst.msk [vmem:[#allocation2 + $0xb8] sm:$0xff] %vm22, 0.0
    %47 = vst.msk [vmem:[#allocation2 + $0xc0] sm:$0xff] %vm22, 0.0
    %48 = vst.msk [vmem:[#allocation2 + $0xc8] sm:$0xff] %vm22, 0.0
    %49 = vst.msk [vmem:[#allocation2 + $0xd0] sm:$0xff] %vm22, 0.0
    %50 = vst.msk [vmem:[#allocation2 + $0xd8] sm:$0xff] %vm22, 0.0
    %51 = vst.msk [vmem:[#allocation2 + $0xe0] sm:$0xff] %vm22, 0.0
    %52 = vst.msk [vmem:[#allocation2 + $0xe8] sm:$0xff] %vm22, 0.0
    %53 = vst.msk [vmem:[#allocation2 + $0xf0] sm:$0xff] %vm22, 0.0
    %54 = vst.msk [vmem:[#allocation2 + $0xf8] sm:$0xff] %vm22, 0.0
  $region21: #{comga_forward.16} parent=0 // pred_fallthru
    _
  %v55 = vld [vmem:[%s1] sm:$0xff]
  %v56 = vld [vmem:[%s1 + $0x8] sm:$0xff]
  %v57 = vld [vmem:[%s1 + $0x10] sm:$0xff]
  %v58 = vld [vmem:[%s1 + $0x18] sm:$0xff]
  %v59 = vld [vmem:[%s1 + $0x20] sm:$0xff]
  %v60 = vld [vmem:[%s1 + $0x28] sm:$0xff]
  %v61 = vld [vmem:[%s1 + $0x30] sm:$0xff]
  %v62 = vld [vmem:[%s1 + $0x38] sm:$0xff]
  %v63 = vld [vmem:[%s1 + $0x40] sm:$0xff]
  %v64 = vld [vmem:[%s1 + $0x48] sm:$0xff]
  %v65 = vld [vmem:[%s1 + $0x50] sm:$0xff]
  %v66 = vld [vmem:[%s1 + $0x58] sm:$0xff]
  %v67 = vld [vmem:[%s1 + $0x60] sm:$0xff]
  %v68 = vld [vmem:[%s1 + $0x68] sm:$0xff]
  %v69 = vld [vmem:[%s1 + $0x70] sm:$0xff]
  %v70 = vld [vmem:[%s1 + $0x78] sm:$0xff]
  %v71 = vld [vmem:[%s1 + $0x80] sm:$0xff]
  %v72 = vld [vmem:[%s1 + $0x88] sm:$0xff]
  %v73 = vld [vmem:[%s1 + $0x90] sm:$0xff]
  %v74 = vld [vmem:[%s1 + $0x98] sm:$0xff]
  %v75 = vld [vmem:[%s1 + $0xa0] sm:$0xff]
  %v76 = vld [vmem:[%s1 + $0xa8] sm:$0xff]
  %v77 = vld [vmem:[%s1 + $0xb0] sm:$0xff]
  %v78 = vld [vmem:[%s1 + $0xb8] sm:$0xff]
  %v79 = vld [vmem:[%s1 + $0xc0] sm:$0xff]
  %v80 = vld [vmem:[%s1 + $0xc8] sm:$0xff]
  %v81 = vld [vmem:[%s1 + $0xd0] sm:$0xff]
  %v82 = vld [vmem:[%s1 + $0xd8] sm:$0xff]
  %v83 = vld [vmem:[%s1 + $0xe0] sm:$0xff]
  %v84 = vld [vmem:[%s1 + $0xe8] sm:$0xff]
  %v85 = vld [vmem:[%s1 + $0xf0] sm:$0xff]
  %v86 = vld [vmem:[%s1 + $0xf8] sm:$0xff]
  %v87 = vpack.c.bf16 %v56, %v55
  %v88 = vpack.c.bf16 %v58, %v57
  %v89 = vpack.c.bf16 %v60, %v59
  %v90 = vpack.c.bf16 %v62, %v61
  %v91 = vpack.c.bf16 %v64, %v63
  %v92 = vpack.c.bf16 %v66, %v65
  %v93 = vpack.c.bf16 %v68, %v67
  %v94 = vpack.c.bf16 %v70, %v69
  %v95 = vpack.c.bf16 %v72, %v71
  %v96 = vpack.c.bf16 %v74, %v73
  %v97 = vpack.c.bf16 %v76, %v75
  %v98 = vpack.c.bf16 %v78, %v77
  %v99 = vpack.c.bf16 %v80, %v79
  %v100 = vpack.c.bf16 %v82, %v81
  %v101 = vpack.c.bf16 %v84, %v83
  %v102 = vpack.c.bf16 %v86, %v85
  %v103 = vld [vmem:[%s2] sm:$0xf]
  %vm104 = vcmask 64512
  %v106 = vsel %vm104, %v87, 0
  %v109 = vsel %vm104, %v88, 0
  %v112 = vsel %vm104, %v89, 0
  %v115 = vsel %vm104, %v90, 0
  %v118 = vsel %vm104, %v91, 0
  %v121 = vsel %vm104, %v92, 0
  %v124 = vsel %vm104, %v93, 0
  %v127 = vsel %vm104, %v94, 0
  %v130 = vsel %vm104, %v95, 0
  %v133 = vsel %vm104, %v96, 0
  %v136 = vsel %vm104, %v97, 0
  %v139 = vsel %vm104, %v98, 0
  %v142 = vsel %vm104, %v99, 0
  %v145 = vsel %vm104, %v100, 0
  %v148 = vsel %vm104, %v101, 0
  %v151 = vsel %vm104, %v102, 0
  %vm153 = vcmask 1043456
  %v155 = vsel %vm153, %v103, 0
  %157 = vmatprep.subr.bf16.mxu0 0
  %158 = vmatpush1.bf16.msra.mxu0 0
  %159 = vmatprep.subr.bf16.mxu0 0
  %160 = vmatpush1.bf16.msra.mxu0 0
  %161 = vmatprep.subr.bf16.mxu0 0
  %162 = vmatpush1.bf16.msra.mxu0 0
  %163 = vmatprep.subr.bf16.mxu0 0
  %164 = vmatpush1.bf16.msra.mxu0 0
  %165 = vmatprep.subr.bf16.mxu0 0
  %166 = vmatpush1.bf16.msra.mxu0 0
  %167 = vmatprep.subr.bf16.mxu0 0
  %168 = vmatpush1.bf16.msra.mxu0 0
  %169 = vmatprep.subr.bf16.mxu0 0
  %170 = vmatpush1.bf16.msra.mxu0 0
  %171 = vmatprep.subr.bf16.mxu0 0
  %172 = vmatpush1.bf16.msra.mxu0 %v155
  %173 = vmatprep.subr.bf16.mxu0 0
  %174 = vmatpush2.bf16.msra.mxu0 0
  %175 = vmatprep.subr.bf16.mxu0 0
  %176 = vmatpush2.bf16.msra.mxu0 0
  %177 = vmatprep.subr.bf16.mxu0 0
  %178 = vmatpush2.bf16.msra.mxu0 0
  %179 = vmatprep.subr.bf16.mxu0 0
  %180 = vmatpush2.bf16.msra.mxu0 0
  %181 = vmatprep.subr.bf16.mxu0 0
  %182 = vmatpush2.bf16.msra.mxu0 0
  %183 = vmatprep.subr.bf16.mxu0 0
  %184 = vmatpush2.bf16.msra.mxu0 0
  %185 = vmatprep.subr.bf16.mxu0 0
  %186 = vmatpush2.bf16.msra.mxu0 0
  %187 = vmatprep.subr.bf16.mxu0 0
  %188 = vmatpush2.bf16.msra.mxu0 0
  %189 = vmatprep.mubr.bf16.mxu0 0
  %190 = vmatmul.mubr.bf16.gmra.mxu0 %v106
  %v191 = vpop.f32.mrf.mxu0
  %v192 = vadd.f32 0.0, %v191
  %v193 = vpop.f32.mrf.mxu0
  %v194 = vpop.f32.mrf.mxu0
  %v195 = vadd.f32 0.0, %v194
  %v196 = vpop.f32.mrf.mxu0
  %197 = vmatprep.mubr.bf16.mxu0 0
  %198 = vmatmul.mubr.bf16.gmra.mxu0 %v109
  %v199 = vpop.f32.mrf.mxu0
  %v200 = vadd.f32 0.0, %v199
  %v201 = vpop.f32.mrf.mxu0
  %v202 = vpop.f32.mrf.mxu0
  %v203 = vadd.f32 0.0, %v202
  %v204 = vpop.f32.mrf.mxu0
  %205 = vmatprep.mubr.bf16.mxu0 0
  %206 = vmatmul.mubr.bf16.gmra.mxu0 %v112
  %v207 = vpop.f32.mrf.mxu0
  %v208 = vadd.f32 0.0, %v207
  %v209 = vpop.f32.mrf.mxu0
  %v210 = vpop.f32.mrf.mxu0
  %v211 = vadd.f32 0.0, %v210
  %v212 = vpop.f32.mrf.mxu0
  %213 = vmatprep.mubr.bf16.mxu0 0
  %214 = vmatmul.mubr.bf16.gmra.mxu0 %v115
  %v215 = vpop.f32.mrf.mxu0
  %v216 = vadd.f32 0.0, %v215
  %v217 = vpop.f32.mrf.mxu0
  %v218 = vpop.f32.mrf.mxu0
  %v219 = vadd.f32 0.0, %v218
  %v220 = vpop.f32.mrf.mxu0
  %221 = vmatprep.mubr.bf16.mxu0 0
  %222 = vmatmul.mubr.bf16.gmra.mxu0 %v118
  %v223 = vpop.f32.mrf.mxu0
  %v224 = vadd.f32 0.0, %v223
  %v225 = vpop.f32.mrf.mxu0
  %v226 = vpop.f32.mrf.mxu0
  %v227 = vadd.f32 0.0, %v226
  %v228 = vpop.f32.mrf.mxu0
  %229 = vmatprep.mubr.bf16.mxu0 0
  %230 = vmatmul.mubr.bf16.gmra.mxu0 %v121
  %v231 = vpop.f32.mrf.mxu0
  %v232 = vadd.f32 0.0, %v231
  %v233 = vpop.f32.mrf.mxu0
  %v234 = vpop.f32.mrf.mxu0
  %v235 = vadd.f32 0.0, %v234
  %v236 = vpop.f32.mrf.mxu0
  %237 = vmatprep.mubr.bf16.mxu0 0
  %238 = vmatmul.mubr.bf16.gmra.mxu0 %v124
  %v239 = vpop.f32.mrf.mxu0
  %v240 = vadd.f32 0.0, %v239
  %v241 = vpop.f32.mrf.mxu0
  %v242 = vpop.f32.mrf.mxu0
  %v243 = vadd.f32 0.0, %v242
  %v244 = vpop.f32.mrf.mxu0
  %245 = vmatprep.mubr.bf16.mxu0 0
  %246 = vmatmul.mubr.bf16.gmra.mxu0 %v127
  %v247 = vpop.f32.mrf.mxu0
  %v248 = vadd.f32 0.0, %v247
  %v249 = vpop.f32.mrf.mxu0
  %v250 = vpop.f32.mrf.mxu0
  %v251 = vadd.f32 0.0, %v250
  %v252 = vpop.f32.mrf.mxu0
  %253 = vmatprep.mubr.bf16.mxu0 0
  %254 = vmatmul.mubr.bf16.gmra.mxu0 %v130
  %v255 = vpop.f32.mrf.mxu0
  %v256 = vadd.f32 0.0, %v255
  %v257 = vpop.f32.mrf.mxu0
  %v258 = vpop.f32.mrf.mxu0
  %v259 = vadd.f32 0.0, %v258
  %v260 = vpop.f32.mrf.mxu0
  %261 = vmatprep.mubr.bf16.mxu0 0
  %262 = vmatmul.mubr.bf16.gmra.mxu0 %v133
  %v263 = vpop.f32.mrf.mxu0
  %v264 = vadd.f32 0.0, %v263
  %v265 = vpop.f32.mrf.mxu0
  %v266 = vpop.f32.mrf.mxu0
  %v267 = vadd.f32 0.0, %v266
  %v268 = vpop.f32.mrf.mxu0
  %269 = vmatprep.mubr.bf16.mxu0 0
  %270 = vmatmul.mubr.bf16.gmra.mxu0 %v136
  %v271 = vpop.f32.mrf.mxu0
  %v272 = vadd.f32 0.0, %v271
  %v273 = vpop.f32.mrf.mxu0
  %v274 = vpop.f32.mrf.mxu0
  %v275 = vadd.f32 0.0, %v274
  %v276 = vpop.f32.mrf.mxu0
  %277 = vmatprep.mubr.bf16.mxu0 0
  %278 = vmatmul.mubr.bf16.gmra.mxu0 %v139
  %v279 = vpop.f32.mrf.mxu0
  %v280 = vadd.f32 0.0, %v279
  %v281 = vpop.f32.mrf.mxu0
  %v282 = vpop.f32.mrf.mxu0
  %v283 = vadd.f32 0.0, %v282
  %v284 = vpop.f32.mrf.mxu0
  %285 = vmatprep.mubr.bf16.mxu0 0
  %286 = vmatmul.mubr.bf16.gmra.mxu0 %v142
  %v287 = vpop.f32.mrf.mxu0
  %v288 = vadd.f32 0.0, %v287
  %v289 = vpop.f32.mrf.mxu0
  %v290 = vpop.f32.mrf.mxu0
  %v291 = vadd.f32 0.0, %v290
  %v292 = vpop.f32.mrf.mxu0
  %293 = vmatprep.mubr.bf16.mxu0 0
  %294 = vmatmul.mubr.bf16.gmra.mxu0 %v145
  %v295 = vpop.f32.mrf.mxu0
  %v296 = vadd.f32 0.0, %v295
  %v297 = vpop.f32.mrf.mxu0
  %v298 = vpop.f32.mrf.mxu0
  %v299 = vadd.f32 0.0, %v298
  %v300 = vpop.f32.mrf.mxu0
  %301 = vmatprep.mubr.bf16.mxu0 0
  %302 = vmatmul.mubr.bf16.gmra.mxu0 %v148
  %v303 = vpop.f32.mrf.mxu0
  %v304 = vadd.f32 0.0, %v303
  %v305 = vpop.f32.mrf.mxu0
  %v306 = vpop.f32.mrf.mxu0
  %v307 = vadd.f32 0.0, %v306
  %v308 = vpop.f32.mrf.mxu0
  %309 = vmatprep.mubr.bf16.mxu0 0
  %310 = vmatmul.mubr.bf16.gmra.mxu0 %v151
  %v311 = vpop.f32.mrf.mxu0
  %v312 = vadd.f32 0.0, %v311
  %v313 = vpop.f32.mrf.mxu0
  %v314 = vpop.f32.mrf.mxu0
  %v315 = vadd.f32 0.0, %v314
  %v316 = vpop.f32.mrf.mxu0
  %317 = vdwg.mxu0
  %v318 = vld [vmem:[#allocation2] sm:$0xff]
  %v319 = vld [vmem:[#allocation2 + $0x8] sm:$0xff]
  %v320 = vld [vmem:[#allocation2 + $0x10] sm:$0xff]
  %v321 = vld [vmem:[#allocation2 + $0x18] sm:$0xff]
  %v322 = vld [vmem:[#allocation2 + $0x20] sm:$0xff]
  %v323 = vld [vmem:[#allocation2 + $0x28] sm:$0xff]
  %v324 = vld [vmem:[#allocation2 + $0x30] sm:$0xff]
  %v325 = vld [vmem:[#allocation2 + $0x38] sm:$0xff]
  %v326 = vld [vmem:[#allocation2 + $0x40] sm:$0xff]
  %v327 = vld [vmem:[#allocation2 + $0x48] sm:$0xff]
  %v328 = vld [vmem:[#allocation2 + $0x50] sm:$0xff]
  %v329 = vld [vmem:[#allocation2 + $0x58] sm:$0xff]
  %v330 = vld [vmem:[#allocation2 + $0x60] sm:$0xff]
  %v331 = vld [vmem:[#allocation2 + $0x68] sm:$0xff]
  %v332 = vld [vmem:[#allocation2 + $0x70] sm:$0xff]
  %v333 = vld [vmem:[#allocation2 + $0x78] sm:$0xff]
  %v334 = vld [vmem:[#allocation2 + $0x80] sm:$0xff]
  %v335 = vld [vmem:[#allocation2 + $0x88] sm:$0xff]
  %v336 = vld [vmem:[#allocation2 + $0x90] sm:$0xff]
  %v337 = vld [vmem:[#allocation2 + $0x98] sm:$0xff]
  %v338 = vld [vmem:[#allocation2 + $0xa0] sm:$0xff]
  %v339 = vld [vmem:[#allocation2 + $0xa8] sm:$0xff]
  %v340 = vld [vmem:[#allocation2 + $0xb0] sm:$0xff]
  %v341 = vld [vmem:[#allocation2 + $0xb8] sm:$0xff]
  %v342 = vld [vmem:[#allocation2 + $0xc0] sm:$0xff]
  %v343 = vld [vmem:[#allocation2 + $0xc8] sm:$0xff]
  %v344 = vld [vmem:[#allocation2 + $0xd0] sm:$0xff]
  %v345 = vld [vmem:[#allocation2 + $0xd8] sm:$0xff]
  %v346 = vld [vmem:[#allocation2 + $0xe0] sm:$0xff]
  %v347 = vld [vmem:[#allocation2 + $0xe8] sm:$0xff]
  %v348 = vld [vmem:[#allocation2 + $0xf0] sm:$0xff]
  %v349 = vld [vmem:[#allocation2 + $0xf8] sm:$0xff]
  %v350 = vld [vmem:[%s0] sm:$0xff]
  %v351 = vld [vmem:[%s0 + $0x8] sm:$0xff]
  %v352 = vld [vmem:[%s0 + $0x10] sm:$0xff]
  %v353 = vld [vmem:[%s0 + $0x18] sm:$0xff]
  %v354 = vld [vmem:[%s0 + $0x20] sm:$0xff]
  %v355 = vld [vmem:[%s0 + $0x28] sm:$0xff]
  %v356 = vld [vmem:[%s0 + $0x30] sm:$0xff]
  %v357 = vld [vmem:[%s0 + $0x38] sm:$0xff]
  %v358 = vld [vmem:[%s0 + $0x40] sm:$0xff]
  %v359 = vld [vmem:[%s0 + $0x48] sm:$0xff]
  %v360 = vld [vmem:[%s0 + $0x50] sm:$0xff]
  %v361 = vld [vmem:[%s0 + $0x58] sm:$0xff]
  %v362 = vld [vmem:[%s0 + $0x60] sm:$0xff]
  %v363 = vld [vmem:[%s0 + $0x68] sm:$0xff]
  %v364 = vld [vmem:[%s0 + $0x70] sm:$0xff]
  %v365 = vld [vmem:[%s0 + $0x78] sm:$0xff]
  %v366 = vld [vmem:[%s0 + $0x80] sm:$0xff]
  %v367 = vld [vmem:[%s0 + $0x88] sm:$0xff]
  %v368 = vld [vmem:[%s0 + $0x90] sm:$0xff]
  %v369 = vld [vmem:[%s0 + $0x98] sm:$0xff]
  %v370 = vld [vmem:[%s0 + $0xa0] sm:$0xff]
  %v371 = vld [vmem:[%s0 + $0xa8] sm:$0xff]
  %v372 = vld [vmem:[%s0 + $0xb0] sm:$0xff]
  %v373 = vld [vmem:[%s0 + $0xb8] sm:$0xff]
  %v374 = vld [vmem:[%s0 + $0xc0] sm:$0xff]
  %v375 = vld [vmem:[%s0 + $0xc8] sm:$0xff]
  %v376 = vld [vmem:[%s0 + $0xd0] sm:$0xff]
  %v377 = vld [vmem:[%s0 + $0xd8] sm:$0xff]
  %v378 = vld [vmem:[%s0 + $0xe0] sm:$0xff]
  %v379 = vld [vmem:[%s0 + $0xe8] sm:$0xff]
  %v380 = vld [vmem:[%s0 + $0xf0] sm:$0xff]
  %v381 = vld [vmem:[%s0 + $0xf8] sm:$0xff]
  %v382 = vpack.c.bf16 %v195, %v192
  %v383 = vpack.c.bf16 %v203, %v200
  %v384 = vpack.c.bf16 %v211, %v208
  %v385 = vpack.c.bf16 %v219, %v216
  %v386 = vpack.c.bf16 %v227, %v224
  %v387 = vpack.c.bf16 %v235, %v232
  %v388 = vpack.c.bf16 %v243, %v240
  %v389 = vpack.c.bf16 %v251, %v248
  %v390 = vpack.c.bf16 %v259, %v256
  %v391 = vpack.c.bf16 %v267, %v264
  %v392 = vpack.c.bf16 %v275, %v272
  %v393 = vpack.c.bf16 %v283, %v280
  %v394 = vpack.c.bf16 %v291, %v288
  %v395 = vpack.c.bf16 %v299, %v296
  %v396 = vpack.c.bf16 %v307, %v304
  %v397 = vpack.c.bf16 %v315, %v312
  %v430 = vunpack.c.l.b16 %v350
  %v431 = vunpack.c.h.b16 %v350
  %v432 = vunpack.c.l.b16 %v351
  %v433 = vunpack.c.h.b16 %v351
  %v434 = vunpack.c.l.b16 %v352
  %v435 = vunpack.c.h.b16 %v352
  %v436 = vunpack.c.l.b16 %v353
  %v437 = vunpack.c.h.b16 %v353
  %v438 = vunpack.c.l.b16 %v354
  %v439 = vunpack.c.h.b16 %v354
  %v440 = vunpack.c.l.b16 %v355
  %v441 = vunpack.c.h.b16 %v355
  %v442 = vunpack.c.l.b16 %v356
  %v443 = vunpack.c.h.b16 %v356
  %v444 = vunpack.c.l.b16 %v357
  %v445 = vunpack.c.h.b16 %v357
  %v446 = vunpack.c.l.b16 %v358
  %v447 = vunpack.c.h.b16 %v358
  %v448 = vunpack.c.l.b16 %v359
  %v449 = vunpack.c.h.b16 %v359
  %v450 = vunpack.c.l.b16 %v360
  %v451 = vunpack.c.h.b16 %v360
  %v452 = vunpack.c.l.b16 %v361
  %v453 = vunpack.c.h.b16 %v361
  %v454 = vunpack.c.l.b16 %v362
  %v455 = vunpack.c.h.b16 %v362
  %v456 = vunpack.c.l.b16 %v363
  %v457 = vunpack.c.h.b16 %v363
  %v458 = vunpack.c.l.b16 %v364
  %v459 = vunpack.c.h.b16 %v364
  %v460 = vunpack.c.l.b16 %v365
  %v461 = vunpack.c.h.b16 %v365
  %v462 = vunpack.c.l.b16 %v366
  %v463 = vunpack.c.h.b16 %v366
  %v464 = vunpack.c.l.b16 %v367
  %v465 = vunpack.c.h.b16 %v367
  %v466 = vunpack.c.l.b16 %v368
  %v467 = vunpack.c.h.b16 %v368
  %v468 = vunpack.c.l.b16 %v369
  %v469 = vunpack.c.h.b16 %v369
  %v470 = vunpack.c.l.b16 %v370
  %v471 = vunpack.c.h.b16 %v370
  %v472 = vunpack.c.l.b16 %v371
  %v473 = vunpack.c.h.b16 %v371
  %v474 = vunpack.c.l.b16 %v372
  %v475 = vunpack.c.h.b16 %v372
  %v476 = vunpack.c.l.b16 %v373
  %v477 = vunpack.c.h.b16 %v373
  %v478 = vunpack.c.l.b16 %v374
  %v479 = vunpack.c.h.b16 %v374
  %v480 = vunpack.c.l.b16 %v375
  %v481 = vunpack.c.h.b16 %v375
  %v482 = vunpack.c.l.b16 %v376
  %v483 = vunpack.c.h.b16 %v376
  %v484 = vunpack.c.l.b16 %v377
  %v485 = vunpack.c.h.b16 %v377
  %v486 = vunpack.c.l.b16 %v378
  %v487 = vunpack.c.h.b16 %v378
  %v488 = vunpack.c.l.b16 %v379
  %v489 = vunpack.c.h.b16 %v379
  %v490 = vunpack.c.l.b16 %v380
  %v491 = vunpack.c.h.b16 %v380
  %v492 = vunpack.c.l.b16 %v381
  %v493 = vunpack.c.h.b16 %v381
  %v494 = vpack.c.b16 %v432, %v430
  %v495 = vpack.c.b16 %v433, %v431
  %v496 = vpack.c.b16 %v436, %v434
  %v497 = vpack.c.b16 %v437, %v435
  %v498 = vpack.c.b16 %v440, %v438
  %v499 = vpack.c.b16 %v441, %v439
  %v500 = vpack.c.b16 %v444, %v442
  %v501 = vpack.c.b16 %v445, %v443
  %v502 = vpack.c.b16 %v448, %v446
  %v503 = vpack.c.b16 %v449, %v447
  %v504 = vpack.c.b16 %v452, %v450
  %v505 = vpack.c.b16 %v453, %v451
  %v506 = vpack.c.b16 %v456, %v454
  %v507 = vpack.c.b16 %v457, %v455
  %v508 = vpack.c.b16 %v460, %v458
  %v509 = vpack.c.b16 %v461, %v459
  %v510 = vpack.c.b16 %v464, %v462
  %v511 = vpack.c.b16 %v465, %v463
  %v512 = vpack.c.b16 %v468, %v466
  %v513 = vpack.c.b16 %v469, %v467
  %v514 = vpack.c.b16 %v472, %v470
  %v515 = vpack.c.b16 %v473, %v471
  %v516 = vpack.c.b16 %v476, %v474
  %v517 = vpack.c.b16 %v477, %v475
  %v518 = vpack.c.b16 %v480, %v478
  %v519 = vpack.c.b16 %v481, %v479
  %v520 = vpack.c.b16 %v484, %v482
  %v521 = vpack.c.b16 %v485, %v483
  %v522 = vpack.c.b16 %v488, %v486
  %v523 = vpack.c.b16 %v489, %v487
  %v524 = vpack.c.b16 %v492, %v490
  %v525 = vpack.c.b16 %v493, %v491
  %558 = vmatprep.subr.bf16.mxu0 0
  %559 = vmatpush1.bf16.msra.mxu0 %v389
  %560 = vmatprep.subr.bf16.mxu0 0
  %561 = vmatpush1.bf16.msra.mxu0 %v388
  %562 = vmatprep.subr.bf16.mxu0 0
  %563 = vmatpush1.bf16.msra.mxu0 %v387
  %564 = vmatprep.subr.bf16.mxu0 0
  %565 = vmatpush1.bf16.msra.mxu0 %v386
  %566 = vmatprep.subr.bf16.mxu0 0
  %567 = vmatpush1.bf16.msra.mxu0 %v385
  %568 = vmatprep.subr.bf16.mxu0 0
  %569 = vmatpush1.bf16.msra.mxu0 %v384
  %570 = vmatprep.subr.bf16.mxu0 0
  %571 = vmatpush1.bf16.msra.mxu0 %v383
  %572 = vmatprep.subr.bf16.mxu0 0
  %573 = vmatpush1.bf16.msra.mxu0 %v382
  %574 = vmatprep.subr.bf16.mxu0 0
  %575 = vmatpush2.bf16.msra.mxu0 %v397
  %576 = vmatprep.subr.bf16.mxu0 0
  %577 = vmatpush2.bf16.msra.mxu0 %v396
  %578 = vmatprep.subr.bf16.mxu0 0
  %579 = vmatpush2.bf16.msra.mxu0 %v395
  %580 = vmatprep.subr.bf16.mxu0 0
  %581 = vmatpush2.bf16.msra.mxu0 %v394
  %582 = vmatprep.subr.bf16.mxu0 0
  %583 = vmatpush2.bf16.msra.mxu0 %v393
  %584 = vmatprep.subr.bf16.mxu0 0
  %585 = vmatpush2.bf16.msra.mxu0 %v392
  %586 = vmatprep.subr.bf16.mxu0 0
  %587 = vmatpush2.bf16.msra.mxu0 %v391
  %588 = vmatprep.subr.bf16.mxu0 0
  %589 = vmatpush2.bf16.msra.mxu0 %v390
  %590 = vmatprep.mubr.bf16.mxu0 %v495
  %591 = vmatmul.mubr.bf16.gmra.mxu0 %v494
  %v592 = vpop.f32.mrf.mxu0
  %v593 = vadd.f32 0.0, %v592
  %v594 = vpop.f32.mrf.mxu0
  %v595 = vpop.f32.mrf.mxu0
  %v596 = vadd.f32 0.0, %v595
  %v597 = vpop.f32.mrf.mxu0
  %598 = vmatprep.mubr.bf16.mxu0 %v497
  %599 = vmatmul.mubr.bf16.gmra.mxu0 %v496
  %v600 = vpop.f32.mrf.mxu0
  %v601 = vadd.f32 0.0, %v600
  %v602 = vpop.f32.mrf.mxu0
  %v603 = vpop.f32.mrf.mxu0
  %v604 = vadd.f32 0.0, %v603
  %v605 = vpop.f32.mrf.mxu0
  %606 = vmatprep.mubr.bf16.mxu0 %v499
  %607 = vmatmul.mubr.bf16.gmra.mxu0 %v498
  %v608 = vpop.f32.mrf.mxu0
  %v609 = vadd.f32 0.0, %v608
  %v610 = vpop.f32.mrf.mxu0
  %v611 = vpop.f32.mrf.mxu0
  %v612 = vadd.f32 0.0, %v611
  %v613 = vpop.f32.mrf.mxu0
  %614 = vmatprep.mubr.bf16.mxu0 %v501
  %615 = vmatmul.mubr.bf16.gmra.mxu0 %v500
  %v616 = vpop.f32.mrf.mxu0
  %v617 = vadd.f32 0.0, %v616
  %v618 = vpop.f32.mrf.mxu0
  %v619 = vpop.f32.mrf.mxu0
  %v620 = vadd.f32 0.0, %v619
  %v621 = vpop.f32.mrf.mxu0
  %622 = vmatprep.mubr.bf16.mxu0 %v503
  %623 = vmatmul.mubr.bf16.gmra.mxu0 %v502
  %v624 = vpop.f32.mrf.mxu0
  %v625 = vadd.f32 0.0, %v624
  %v626 = vpop.f32.mrf.mxu0
  %v627 = vpop.f32.mrf.mxu0
  %v628 = vadd.f32 0.0, %v627
  %v629 = vpop.f32.mrf.mxu0
  %630 = vmatprep.mubr.bf16.mxu0 %v505
  %631 = vmatmul.mubr.bf16.gmra.mxu0 %v504
  %v632 = vpop.f32.mrf.mxu0
  %v633 = vadd.f32 0.0, %v632
  %v634 = vpop.f32.mrf.mxu0
  %v635 = vpop.f32.mrf.mxu0
  %v636 = vadd.f32 0.0, %v635
  %v637 = vpop.f32.mrf.mxu0
  %638 = vmatprep.mubr.bf16.mxu0 %v507
  %639 = vmatmul.mubr.bf16.gmra.mxu0 %v506
  %v640 = vpop.f32.mrf.mxu0
  %v641 = vadd.f32 0.0, %v640
  %v642 = vpop.f32.mrf.mxu0
  %v643 = vpop.f32.mrf.mxu0
  %v644 = vadd.f32 0.0, %v643
  %v645 = vpop.f32.mrf.mxu0
  %646 = vmatprep.mubr.bf16.mxu0 %v509
  %647 = vmatmul.mubr.bf16.gmra.mxu0 %v508
  %v648 = vpop.f32.mrf.mxu0
  %v649 = vadd.f32 0.0, %v648
  %v650 = vpop.f32.mrf.mxu0
  %v651 = vpop.f32.mrf.mxu0
  %v652 = vadd.f32 0.0, %v651
  %v653 = vpop.f32.mrf.mxu0
  %654 = vmatprep.mubr.bf16.mxu0 %v511
  %655 = vmatmul.mubr.bf16.gmra.mxu0 %v510
  %v656 = vpop.f32.mrf.mxu0
  %v657 = vadd.f32 0.0, %v656
  %v658 = vpop.f32.mrf.mxu0
  %v659 = vpop.f32.mrf.mxu0
  %v660 = vadd.f32 0.0, %v659
  %v661 = vpop.f32.mrf.mxu0
  %662 = vmatprep.mubr.bf16.mxu0 %v513
  %663 = vmatmul.mubr.bf16.gmra.mxu0 %v512
  %v664 = vpop.f32.mrf.mxu0
  %v665 = vadd.f32 0.0, %v664
  %v666 = vpop.f32.mrf.mxu0
  %v667 = vpop.f32.mrf.mxu0
  %v668 = vadd.f32 0.0, %v667
  %v669 = vpop.f32.mrf.mxu0
  %670 = vmatprep.mubr.bf16.mxu0 %v515
  %671 = vmatmul.mubr.bf16.gmra.mxu0 %v514
  %v672 = vpop.f32.mrf.mxu0
  %v673 = vadd.f32 0.0, %v672
  %v674 = vpop.f32.mrf.mxu0
  %v675 = vpop.f32.mrf.mxu0
  %v676 = vadd.f32 0.0, %v675
  %v677 = vpop.f32.mrf.mxu0
  %678 = vmatprep.mubr.bf16.mxu0 %v517
  %679 = vmatmul.mubr.bf16.gmra.mxu0 %v516
  %v680 = vpop.f32.mrf.mxu0
  %v681 = vadd.f32 0.0, %v680
  %v682 = vpop.f32.mrf.mxu0
  %v683 = vpop.f32.mrf.mxu0
  %v684 = vadd.f32 0.0, %v683
  %v685 = vpop.f32.mrf.mxu0
  %686 = vmatprep.mubr.bf16.mxu0 %v519
  %687 = vmatmul.mubr.bf16.gmra.mxu0 %v518
  %v688 = vpop.f32.mrf.mxu0
  %v689 = vadd.f32 0.0, %v688
  %v690 = vpop.f32.mrf.mxu0
  %v691 = vpop.f32.mrf.mxu0
  %v692 = vadd.f32 0.0, %v691
  %v693 = vpop.f32.mrf.mxu0
  %694 = vmatprep.mubr.bf16.mxu0 %v521
  %695 = vmatmul.mubr.bf16.gmra.mxu0 %v520
  %v696 = vpop.f32.mrf.mxu0
  %v697 = vadd.f32 0.0, %v696
  %v698 = vpop.f32.mrf.mxu0
  %v699 = vpop.f32.mrf.mxu0
  %v700 = vadd.f32 0.0, %v699
  %v701 = vpop.f32.mrf.mxu0
  %702 = vmatprep.mubr.bf16.mxu0 %v523
  %703 = vmatmul.mubr.bf16.gmra.mxu0 %v522
  %v704 = vpop.f32.mrf.mxu0
  %v705 = vadd.f32 0.0, %v704
  %v706 = vpop.f32.mrf.mxu0
  %v707 = vpop.f32.mrf.mxu0
  %v708 = vadd.f32 0.0, %v707
  %v709 = vpop.f32.mrf.mxu0
  %710 = vmatprep.mubr.bf16.mxu0 %v525
  %711 = vmatmul.mubr.bf16.gmra.mxu0 %v524
  %v712 = vpop.f32.mrf.mxu0
  %v713 = vadd.f32 0.0, %v712
  %v714 = vpop.f32.mrf.mxu0
  %v715 = vpop.f32.mrf.mxu0
  %v716 = vadd.f32 0.0, %v715
  %v717 = vpop.f32.mrf.mxu0
  %718 = vdwg.mxu0
  %v719 = vadd.f32 %v318, %v593
  %v720 = vadd.f32 %v319, %v596
  %v721 = vadd.f32 %v320, %v601
  %v722 = vadd.f32 %v321, %v604
  %v723 = vadd.f32 %v322, %v609
  %v724 = vadd.f32 %v323, %v612
  %v725 = vadd.f32 %v324, %v617
  %v726 = vadd.f32 %v325, %v620
  %v727 = vadd.f32 %v326, %v625
  %v728 = vadd.f32 %v327, %v628
  %v729 = vadd.f32 %v328, %v633
  %v730 = vadd.f32 %v329, %v636
  %v731 = vadd.f32 %v330, %v641
  %v732 = vadd.f32 %v331, %v644
  %v733 = vadd.f32 %v332, %v649
  %v734 = vadd.f32 %v333, %v652
  %v735 = vadd.f32 %v334, %v657
  %v736 = vadd.f32 %v335, %v660
  %v737 = vadd.f32 %v336, %v665
  %v738 = vadd.f32 %v337, %v668
  %v739 = vadd.f32 %v338, %v673
  %v740 = vadd.f32 %v339, %v676
  %v741 = vadd.f32 %v340, %v681
  %v742 = vadd.f32 %v341, %v684
  %v743 = vadd.f32 %v342, %v689
  %v744 = vadd.f32 %v343, %v692
  %v745 = vadd.f32 %v344, %v697
  %v746 = vadd.f32 %v345, %v700
  %v747 = vadd.f32 %v346, %v705
  %v748 = vadd.f32 %v347, %v708
  %v749 = vadd.f32 %v348, %v713
  %v750 = vadd.f32 %v349, %v716
  %vm751 = vcmask 130048
  %752 = vst.msk [vmem:[#allocation2] sm:$0xff] %vm751, %v719
  %753 = vst.msk [vmem:[#allocation2 + $0x8] sm:$0xff] %vm751, %v720
  %754 = vst.msk [vmem:[#allocation2 + $0x10] sm:$0xff] %vm751, %v721
  %755 = vst.msk [vmem:[#allocation2 + $0x18] sm:$0xff] %vm751, %v722
  %756 = vst.msk [vmem:[#allocation2 + $0x20] sm:$0xff] %vm751, %v723
  %757 = vst.msk [vmem:[#allocation2 + $0x28] sm:$0xff] %vm751, %v724
  %758 = vst.msk [vmem:[#allocation2 + $0x30] sm:$0xff] %vm751, %v725
  %759 = vst.msk [vmem:[#allocation2 + $0x38] sm:$0xff] %vm751, %v726
  %760 = vst.msk [vmem:[#allocation2 + $0x40] sm:$0xff] %vm751, %v727
  %761 = vst.msk [vmem:[#allocation2 + $0x48] sm:$0xff] %vm751, %v728
  %762 = vst.msk [vmem:[#allocation2 + $0x50] sm:$0xff] %vm751, %v729
  %763 = vst.msk [vmem:[#allocation2 + $0x58] sm:$0xff] %vm751, %v730
  %764 = vst.msk [vmem:[#allocation2 + $0x60] sm:$0xff] %vm751, %v731
  %765 = vst.msk [vmem:[#allocation2 + $0x68] sm:$0xff] %vm751, %v732
  %766 = vst.msk [vmem:[#allocation2 + $0x70] sm:$0xff] %vm751, %v733
  %767 = vst.msk [vmem:[#allocation2 + $0x78] sm:$0xff] %vm751, %v734
  %768 = vst.msk [vmem:[#allocation2 + $0x80] sm:$0xff] %vm751, %v735
  %769 = vst.msk [vmem:[#allocation2 + $0x88] sm:$0xff] %vm751, %v736
  %770 = vst.msk [vmem:[#allocation2 + $0x90] sm:$0xff] %vm751, %v737
  %771 = vst.msk [vmem:[#allocation2 + $0x98] sm:$0xff] %vm751, %v738
  %772 = vst.msk [vmem:[#allocation2 + $0xa0] sm:$0xff] %vm751, %v739
  %773 = vst.msk [vmem:[#allocation2 + $0xa8] sm:$0xff] %vm751, %v740
  %774 = vst.msk [vmem:[#allocation2 + $0xb0] sm:$0xff] %vm751, %v741
  %775 = vst.msk [vmem:[#allocation2 + $0xb8] sm:$0xff] %vm751, %v742
  %776 = vst.msk [vmem:[#allocation2 + $0xc0] sm:$0xff] %vm751, %v743
  %777 = vst.msk [vmem:[#allocation2 + $0xc8] sm:$0xff] %vm751, %v744
  %778 = vst.msk [vmem:[#allocation2 + $0xd0] sm:$0xff] %vm751, %v745
  %779 = vst.msk [vmem:[#allocation2 + $0xd8] sm:$0xff] %vm751, %v746
  %780 = vst.msk [vmem:[#allocation2 + $0xe0] sm:$0xff] %vm751, %v747
  %781 = vst.msk [vmem:[#allocation2 + $0xe8] sm:$0xff] %vm751, %v748
  %782 = vst.msk [vmem:[#allocation2 + $0xf0] sm:$0xff] %vm751, %v749
  %783 = vst.msk [vmem:[#allocation2 + $0xf8] sm:$0xff] %vm751, %v750
  // Predicated region
  $region22: #{comga_forward.16} parent=0 // pred_check
    %p784 = pneg %p18
  $region23: #{comga_forward.16} parent=0 // pred_check_branch
    %786 = sbr.rel (%p784) target = $region25
  $region24: #{comga_forward.16} parent=0 // pred_region
    %v787 = vld [vmem:[#allocation2] sm:$0xff]
    %v788 = vld [vmem:[#allocation2 + $0x8] sm:$0xff]
    %v789 = vld [vmem:[#allocation2 + $0x10] sm:$0xff]
    %v790 = vld [vmem:[#allocation2 + $0x18] sm:$0xff]
    %v791 = vld [vmem:[#allocation2 + $0x20] sm:$0xff]
    %v792 = vld [vmem:[#allocation2 + $0x28] sm:$0xff]
    %v793 = vld [vmem:[#allocation2 + $0x30] sm:$0xff]
    %v794 = vld [vmem:[#allocation2 + $0x38] sm:$0xff]
    %v795 = vld [vmem:[#allocation2 + $0x40] sm:$0xff]
    %v796 = vld [vmem:[#allocation2 + $0x48] sm:$0xff]
    %v797 = vld [vmem:[#allocation2 + $0x50] sm:$0xff]
    %v798 = vld [vmem:[#allocation2 + $0x58] sm:$0xff]
    %v799 = vld [vmem:[#allocation2 + $0x60] sm:$0xff]
    %v800 = vld [vmem:[#allocation2 + $0x68] sm:$0xff]
    %v801 = vld [vmem:[#allocation2 + $0x70] sm:$0xff]
    %v802 = vld [vmem:[#allocation2 + $0x78] sm:$0xff]
    %v803 = vld [vmem:[#allocation2 + $0x80] sm:$0xff]
    %v804 = vld [vmem:[#allocation2 + $0x88] sm:$0xff]
    %v805 = vld [vmem:[#allocation2 + $0x90] sm:$0xff]
    %v806 = vld [vmem:[#allocation2 + $0x98] sm:$0xff]
    %v807 = vld [vmem:[#allocation2 + $0xa0] sm:$0xff]
    %v808 = vld [vmem:[#allocation2 + $0xa8] sm:$0xff]
    %v809 = vld [vmem:[#allocation2 + $0xb0] sm:$0xff]
    %v810 = vld [vmem:[#allocation2 + $0xb8] sm:$0xff]
    %v811 = vld [vmem:[#allocation2 + $0xc0] sm:$0xff]
    %v812 = vld [vmem:[#allocation2 + $0xc8] sm:$0xff]
    %v813 = vld [vmem:[#allocation2 + $0xd0] sm:$0xff]
    %v814 = vld [vmem:[#allocation2 + $0xd8] sm:$0xff]
    %v815 = vld [vmem:[#allocation2 + $0xe0] sm:$0xff]
    %v816 = vld [vmem:[#allocation2 + $0xe8] sm:$0xff]
    %v817 = vld [vmem:[#allocation2 + $0xf0] sm:$0xff]
    %v818 = vld [vmem:[#allocation2 + $0xf8] sm:$0xff]
    %v819 = vld [vmem:[%s3] sm:$0x1]
    %v821 = vlaneseq
    %v822 = vshrl.u32 %v821, 7
    %v823 = vsub.s32 0, %v822
    %v824 = vrot.slane %v819, %v823
    %v826 = vadd.f32 %v787, %v824
    %v827 = vadd.f32 %v788, %v824
    %v828 = vadd.f32 %v789, %v824
    %v829 = vadd.f32 %v790, %v824
    %v830 = vadd.f32 %v791, %v824
    %v831 = vadd.f32 %v792, %v824
    %v832 = vadd.f32 %v793, %v824
    %v833 = vadd.f32 %v794, %v824
    %v834 = vadd.f32 %v795, %v824
    %v835 = vadd.f32 %v796, %v824
    %v836 = vadd.f32 %v797, %v824
    %v837 = vadd.f32 %v798, %v824
    %v838 = vadd.f32 %v799, %v824
    %v839 = vadd.f32 %v800, %v824
    %v840 = vadd.f32 %v801, %v824
    %v841 = vadd.f32 %v802, %v824
    %v842 = vadd.f32 %v803, %v824
    %v843 = vadd.f32 %v804, %v824
    %v844 = vadd.f32 %v805, %v824
    %v845 = vadd.f32 %v806, %v824
    %v846 = vadd.f32 %v807, %v824
    %v847 = vadd.f32 %v808, %v824
    %v848 = vadd.f32 %v809, %v824
    %v849 = vadd.f32 %v810, %v824
    %v850 = vadd.f32 %v811, %v824
    %v851 = vadd.f32 %v812, %v824
    %v852 = vadd.f32 %v813, %v824
    %v853 = vadd.f32 %v814, %v824
    %v854 = vadd.f32 %v815, %v824
    %v855 = vadd.f32 %v816, %v824
    %v856 = vadd.f32 %v817, %v824
    %v857 = vadd.f32 %v818, %v824
    %v858 = vmax.f32 %v826, 0.0
    %v859 = vmax.f32 %v827, 0.0
    %v860 = vmax.f32 %v828, 0.0
    %v861 = vmax.f32 %v829, 0.0
    %v862 = vmax.f32 %v830, 0.0
    %v863 = vmax.f32 %v831, 0.0
    %v864 = vmax.f32 %v832, 0.0
    %v865 = vmax.f32 %v833, 0.0
    %v866 = vmax.f32 %v834, 0.0
    %v867 = vmax.f32 %v835, 0.0
    %v868 = vmax.f32 %v836, 0.0
    %v869 = vmax.f32 %v837, 0.0
    %v870 = vmax.f32 %v838, 0.0
    %v871 = vmax.f32 %v839, 0.0
    %v872 = vmax.f32 %v840, 0.0
    %v873 = vmax.f32 %v841, 0.0
    %v874 = vmax.f32 %v842, 0.0
    %v875 = vmax.f32 %v843, 0.0
    %v876 = vmax.f32 %v844, 0.0
    %v877 = vmax.f32 %v845, 0.0
    %v878 = vmax.f32 %v846, 0.0
    %v879 = vmax.f32 %v847, 0.0
    %v880 = vmax.f32 %v848, 0.0
    %v881 = vmax.f32 %v849, 0.0
    %v882 = vmax.f32 %v850, 0.0
    %v883 = vmax.f32 %v851, 0.0
    %v884 = vmax.f32 %v852, 0.0
    %v885 = vmax.f32 %v853, 0.0
    %v886 = vmax.f32 %v854, 0.0
    %v887 = vmax.f32 %v855, 0.0
    %v888 = vmax.f32 %v856, 0.0
    %v889 = vmax.f32 %v857, 0.0
    %890 = vst.msk [vmem:[%s4] sm:$0xff] %vm751, %v858
    %891 = vst.msk [vmem:[%s4 + $0x8] sm:$0xff] %vm751, %v859
    %892 = vst.msk [vmem:[%s4 + $0x10] sm:$0xff] %vm751, %v860
    %893 = vst.msk [vmem:[%s4 + $0x18] sm:$0xff] %vm751, %v861
    %894 = vst.msk [vmem:[%s4 + $0x20] sm:$0xff] %vm751, %v862
    %895 = vst.msk [vmem:[%s4 + $0x28] sm:$0xff] %vm751, %v863
    %896 = vst.msk [vmem:[%s4 + $0x30] sm:$0xff] %vm751, %v864
    %897 = vst.msk [vmem:[%s4 + $0x38] sm:$0xff] %vm751, %v865
    %898 = vst.msk [vmem:[%s4 + $0x40] sm:$0xff] %vm751, %v866
    %899 = vst.msk [vmem:[%s4 + $0x48] sm:$0xff] %vm751, %v867
    %900 = vst.msk [vmem:[%s4 + $0x50] sm:$0xff] %vm751, %v868
    %901 = vst.msk [vmem:[%s4 + $0x58] sm:$0xff] %vm751, %v869
    %902 = vst.msk [vmem:[%s4 + $0x60] sm:$0xff] %vm751, %v870
    %903 = vst.msk [vmem:[%s4 + $0x68] sm:$0xff] %vm751, %v871
    %904 = vst.msk [vmem:[%s4 + $0x70] sm:$0xff] %vm751, %v872
    %905 = vst.msk [vmem:[%s4 + $0x78] sm:$0xff] %vm751, %v873
    %906 = vst.msk [vmem:[%s4 + $0x80] sm:$0xff] %vm751, %v874
    %907 = vst.msk [vmem:[%s4 + $0x88] sm:$0xff] %vm751, %v875
    %908 = vst.msk [vmem:[%s4 + $0x90] sm:$0xff] %vm751, %v876
    %909 = vst.msk [vmem:[%s4 + $0x98] sm:$0xff] %vm751, %v877
    %910 = vst.msk [vmem:[%s4 + $0xa0] sm:$0xff] %vm751, %v878
    %911 = vst.msk [vmem:[%s4 + $0xa8] sm:$0xff] %vm751, %v879
    %912 = vst.msk [vmem:[%s4 + $0xb0] sm:$0xff] %vm751, %v880
    %913 = vst.msk [vmem:[%s4 + $0xb8] sm:$0xff] %vm751, %v881
    %914 = vst.msk [vmem:[%s4 + $0xc0] sm:$0xff] %vm751, %v882
    %915 = vst.msk [vmem:[%s4 + $0xc8] sm:$0xff] %vm751, %v883
    %916 = vst.msk [vmem:[%s4 + $0xd0] sm:$0xff] %vm751, %v884
    %917 = vst.msk [vmem:[%s4 + $0xd8] sm:$0xff] %vm751, %v885
    %918 = vst.msk [vmem:[%s4 + $0xe0] sm:$0xff] %vm751, %v886
    %919 = vst.msk [vmem:[%s4 + $0xe8] sm:$0xff] %vm751, %v887
    %920 = vst.msk [vmem:[%s4 + $0xf0] sm:$0xff] %vm751, %v888
    %921 = vst.msk [vmem:[%s4 + $0xf8] sm:$0xff] %vm751, %v889
  $region25: #{comga_forward.16} parent=0 // pred_fallthru
    _
  // Predicated region
  $region26: #{comga_forward.16} parent=0 // pred_check
    _
  $region27: #{comga_forward.16} parent=0 // pred_check_branch
    %923 = sbr.rel (0) target = $region29
  $region28: #{comga_forward.16} parent=0 // pred_region
    _
  $region29: #{comga_forward.16} parent=0 // pred_fallthru
    _
  // Predicated region
  $region30: #{comga_forward.16} parent=0 // pred_check
    _
  $region31: #{comga_forward.16} parent=0 // pred_check_branch
    %925 = sbr.rel (0) target = $region33
  $region32: #{comga_forward.16} parent=0 // pred_region
    _
  $region33: #{comga_forward.16} parent=0 // pred_fallthru
    _

// kernel: comga_forward.17
$region0: #{comga_forward.17}
  #allocation0 [shape = 'u32[]', space=smem, size = 0x4, offset = 0x4, fixed_abs, tag = 'smem constant byte address 0x4 - core index']
  #allocation1 [shape = 'u32[144,128]{1,0:T(1,128)}', space=vmem, size = 0x12000, scoped, tag = 'internal scratch']
  #allocation2 [shape = 'f32[256,32]{1,0:T(8,128)}', space=vmem, size = 0x20000, scoped, tag = 'scratch operand']
  %s0 = inlined_call_operand.vmem [shape: bf16[256,256], index: 0, kind: input, shape index: {}]
  %s1 = inlined_call_operand.vmem [shape: f32[256,16], index: 1, kind: input, shape index: {}]
  %s2 = inlined_call_operand.vmem [shape: bf16[16,32], index: 2, kind: input, shape index: {}]
  %s3 = inlined_call_operand.vmem [shape: f32[1,32], index: 3, kind: input, shape index: {}]
  %s4 = inlined_call_operand.vmem [shape: f32[256,32], index: 4, kind: output, shape index: {}]
  %s5 = sld [smem:[#allocation0]]
  $region34: #{comga_forward.17} parent=0
    _
  %s7 = ssub.s32 1, %s5
  %s8 = scalar_select 0, %s7, %s5
  // Predicated region
  $region2: #{comga_forward.17} parent=0 // pred_check
    _
  $region3: #{comga_forward.17} parent=0 // pred_check_branch
    %10 = sbr.rel (0) target = $region5
  $region4: #{comga_forward.17} parent=0 // pred_region
    _
  $region5: #{comga_forward.17} parent=0 // pred_fallthru
    _
  // Predicated region
  $region6: #{comga_forward.17} parent=0 // pred_check
    _
  $region7: #{comga_forward.17} parent=0 // pred_check_branch
    %12 = sbr.rel (0) target = $region9
  $region8: #{comga_forward.17} parent=0 // pred_region
    _
  $region9: #{comga_forward.17} parent=0 // pred_fallthru
    _
  // Predicated region
  $region10: #{comga_forward.17} parent=0 // pred_check
    _
  $region11: #{comga_forward.17} parent=0 // pred_check_branch
    %14 = sbr.rel (0) target = $region13
  $region12: #{comga_forward.17} parent=0 // pred_region
    _
  $region13: #{comga_forward.17} parent=0 // pred_fallthru
    _
  // Predicated region
  $region14: #{comga_forward.17} parent=0 // pred_check
    _
  $region15: #{comga_forward.17} parent=0 // pred_check_branch
    %16 = sbr.rel (0) target = $region17
  $region16: #{comga_forward.17} parent=0 // pred_region
    _
  $region17: #{comga_forward.17} parent=0 // pred_fallthru
    _
  %p18 = scmp.eq.s32.totalorder 0, 0
  // Predicated region
  $region18: #{comga_forward.17} parent=0 // pred_check
    %p19 = pneg %p18
  $region19: #{comga_forward.17} parent=0 // pred_check_branch
    %21 = sbr.rel (%p19) target = $region21
  $region20: #{comga_forward.17} parent=0 // pred_region
    %vm22 = vcmask 261120
    %23 = vst.msk [vmem:[#allocation2] sm:$0xff] %vm22, 0.0
    %24 = vst.msk [vmem:[#allocation2 + $0x8] sm:$0xff] %vm22, 0.0
    %25 = vst.msk [vmem:[#allocation2 + $0x10] sm:$0xff] %vm22, 0.0
    %26 = vst.msk [vmem:[#allocation2 + $0x18] sm:$0xff] %vm22, 0.0
    %27 = vst.msk [vmem:[#allocation2 + $0x20] sm:$0xff] %vm22, 0.0
    %28 = vst.msk [vmem:[#allocation2 + $0x28] sm:$0xff] %vm22, 0.0
    %29 = vst.msk [vmem:[#allocation2 + $0x30] sm:$0xff] %vm22, 0.0
    %30 = vst.msk [vmem:[#allocation2 + $0x38] sm:$0xff] %vm22, 0.0
    %31 = vst.msk [vmem:[#allocation2 + $0x40] sm:$0xff] %vm22, 0.0
    %32 = vst.msk [vmem:[#allocation2 + $0x48] sm:$0xff] %vm22, 0.0
    %33 = vst.msk [vmem:[#allocation2 + $0x50] sm:$0xff] %vm22, 0.0
    %34 = vst.msk [vmem:[#allocation2 + $0x58] sm:$0xff] %vm22, 0.0
    %35 = vst.msk [vmem:[#allocation2 + $0x60] sm:$0xff] %vm22, 0.0
    %36 = vst.msk [vmem:[#allocation2 + $0x68] sm:$0xff] %vm22, 0.0
    %37 = vst.msk [vmem:[#allocation2 + $0x70] sm:$0xff] %vm22, 0.0
    %38 = vst.msk [vmem:[#allocation2 + $0x78] sm:$0xff] %vm22, 0.0
    %39 = vst.msk [vmem:[#allocation2 + $0x80] sm:$0xff] %vm22, 0.0
    %40 = vst.msk [vmem:[#allocation2 + $0x88] sm:$0xff] %vm22, 0.0
    %41 = vst.msk [vmem:[#allocation2 + $0x90] sm:$0xff] %vm22, 0.0
    %42 = vst.msk [vmem:[#allocation2 + $0x98] sm:$0xff] %vm22, 0.0
    %43 = vst.msk [vmem:[#allocation2 + $0xa0] sm:$0xff] %vm22, 0.0
    %44 = vst.msk [vmem:[#allocation2 + $0xa8] sm:$0xff] %vm22, 0.0
    %45 = vst.msk [vmem:[#allocation2 + $0xb0] sm:$0xff] %vm22, 0.0
    %46 = vst.msk [vmem:[#allocation2 + $0xb8] sm:$0xff] %vm22, 0.0
    %47 = vst.msk [vmem:[#allocation2 + $0xc0] sm:$0xff] %vm22, 0.0
    %48 = vst.msk [vmem:[#allocation2 + $0xc8] sm:$0xff] %vm22, 0.0
    %49 = vst.msk [vmem:[#allocation2 + $0xd0] sm:$0xff] %vm22, 0.0
    %50 = vst.msk [vmem:[#allocation2 + $0xd8] sm:$0xff] %vm22, 0.0
    %51 = vst.msk [vmem:[#allocation2 + $0xe0] sm:$0xff] %vm22, 0.0
    %52 = vst.msk [vmem:[#allocation2 + $0xe8] sm:$0xff] %vm22, 0.0
    %53 = vst.msk [vmem:[#allocation2 + $0xf0] sm:$0xff] %vm22, 0.0
    %54 = vst.msk [vmem:[#allocation2 + $0xf8] sm:$0xff] %vm22, 0.0
  $region21: #{comga_forward.17} parent=0 // pred_fallthru
    _
  %v55 = vld [vmem:[%s1] sm:$0xff]
  %v56 = vld [vmem:[%s1 + $0x8] sm:$0xff]
  %v57 = vld [vmem:[%s1 + $0x10] sm:$0xff]
  %v58 = vld [vmem:[%s1 + $0x18] sm:$0xff]
  %v59 = vld [vmem:[%s1 + $0x20] sm:$0xff]
  %v60 = vld [vmem:[%s1 + $0x28] sm:$0xff]
  %v61 = vld [vmem:[%s1 + $0x30] sm:$0xff]
  %v62 = vld [vmem:[%s1 + $0x38] sm:$0xff]
  %v63 = vld [vmem:[%s1 + $0x40] sm:$0xff]
  %v64 = vld [vmem:[%s1 + $0x48] sm:$0xff]
  %v65 = vld [vmem:[%s1 + $0x50] sm:$0xff]
  %v66 = vld [vmem:[%s1 + $0x58] sm:$0xff]
  %v67 = vld [vmem:[%s1 + $0x60] sm:$0xff]
  %v68 = vld [vmem:[%s1 + $0x68] sm:$0xff]
  %v69 = vld [vmem:[%s1 + $0x70] sm:$0xff]
  %v70 = vld [vmem:[%s1 + $0x78] sm:$0xff]
  %v71 = vld [vmem:[%s1 + $0x80] sm:$0xff]
  %v72 = vld [vmem:[%s1 + $0x88] sm:$0xff]
  %v73 = vld [vmem:[%s1 + $0x90] sm:$0xff]
  %v74 = vld [vmem:[%s1 + $0x98] sm:$0xff]
  %v75 = vld [vmem:[%s1 + $0xa0] sm:$0xff]
  %v76 = vld [vmem:[%s1 + $0xa8] sm:$0xff]
  %v77 = vld [vmem:[%s1 + $0xb0] sm:$0xff]
  %v78 = vld [vmem:[%s1 + $0xb8] sm:$0xff]
  %v79 = vld [vmem:[%s1 + $0xc0] sm:$0xff]
  %v80 = vld [vmem:[%s1 + $0xc8] sm:$0xff]
  %v81 = vld [vmem:[%s1 + $0xd0] sm:$0xff]
  %v82 = vld [vmem:[%s1 + $0xd8] sm:$0xff]
  %v83 = vld [vmem:[%s1 + $0xe0] sm:$0xff]
  %v84 = vld [vmem:[%s1 + $0xe8] sm:$0xff]
  %v85 = vld [vmem:[%s1 + $0xf0] sm:$0xff]
  %v86 = vld [vmem:[%s1 + $0xf8] sm:$0xff]
  %v87 = vpack.c.bf16 %v56, %v55
  %v88 = vpack.c.bf16 %v58, %v57
  %v89 = vpack.c.bf16 %v60, %v59
  %v90 = vpack.c.bf16 %v62, %v61
  %v91 = vpack.c.bf16 %v64, %v63
  %v92 = vpack.c.bf16 %v66, %v65
  %v93 = vpack.c.bf16 %v68, %v67
  %v94 = vpack.c.bf16 %v70, %v69
  %v95 = vpack.c.bf16 %v72, %v71
  %v96 = vpack.c.bf16 %v74, %v73
  %v97 = vpack.c.bf16 %v76, %v75
  %v98 = vpack.c.bf16 %v78, %v77
  %v99 = vpack.c.bf16 %v80, %v79
  %v100 = vpack.c.bf16 %v82, %v81
  %v101 = vpack.c.bf16 %v84, %v83
  %v102 = vpack.c.bf16 %v86, %v85
  %v103 = vld [vmem:[%s2] sm:$0xf]
  %v104 = vld [vmem:[%s2 + $0x4] sm:$0xf]
  %v107 = vunpack.c.l.b16 %v103
  %v108 = vunpack.c.l.b16 %v104
  %v109 = vpack.c.b16 %v108, %v107
  %vm111 = vcmask 130048
  %v113 = vsel %vm111, %v87, 0
  %v116 = vsel %vm111, %v88, 0
  %v119 = vsel %vm111, %v89, 0
  %v122 = vsel %vm111, %v90, 0
  %v125 = vsel %vm111, %v91, 0
  %v128 = vsel %vm111, %v92, 0
  %v131 = vsel %vm111, %v93, 0
  %v134 = vsel %vm111, %v94, 0
  %v137 = vsel %vm111, %v95, 0
  %v140 = vsel %vm111, %v96, 0
  %v143 = vsel %vm111, %v97, 0
  %v146 = vsel %vm111, %v98, 0
  %v149 = vsel %vm111, %v99, 0
  %v152 = vsel %vm111, %v100, 0
  %v155 = vsel %vm111, %v101, 0
  %v158 = vsel %vm111, %v102, 0
  %160 = vmatprep.subr.bf16.mxu0 0
  %161 = vmatpush1.bf16.msra.mxu0 0
  %162 = vmatprep.subr.bf16.mxu0 0
  %163 = vmatpush1.bf16.msra.mxu0 0
  %164 = vmatprep.subr.bf16.mxu0 0
  %165 = vmatpush1.bf16.msra.mxu0 0
  %166 = vmatprep.subr.bf16.mxu0 0
  %167 = vmatpush1.bf16.msra.mxu0 0
  %168 = vmatprep.subr.bf16.mxu0 0
  %169 = vmatpush1.bf16.msra.mxu0 0
  %170 = vmatprep.subr.bf16.mxu0 0
  %171 = vmatpush1.bf16.msra.mxu0 0
  %172 = vmatprep.subr.bf16.mxu0 0
  %173 = vmatpush1.bf16.msra.mxu0 0
  %174 = vmatprep.subr.bf16.mxu0 0
  %175 = vmatpush1.bf16.msra.mxu0 %v109
  %176 = vmatprep.subr.bf16.mxu0 0
  %177 = vmatpush2.bf16.msra.mxu0 0
  %178 = vmatprep.subr.bf16.mxu0 0
  %179 = vmatpush2.bf16.msra.mxu0 0
  %180 = vmatprep.subr.bf16.mxu0 0
  %181 = vmatpush2.bf16.msra.mxu0 0
  %182 = vmatprep.subr.bf16.mxu0 0
  %183 = vmatpush2.bf16.msra.mxu0 0
  %184 = vmatprep.subr.bf16.mxu0 0
  %185 = vmatpush2.bf16.msra.mxu0 0
  %186 = vmatprep.subr.bf16.mxu0 0
  %187 = vmatpush2.bf16.msra.mxu0 0
  %188 = vmatprep.subr.bf16.mxu0 0
  %189 = vmatpush2.bf16.msra.mxu0 0
  %190 = vmatprep.subr.bf16.mxu0 0
  %191 = vmatpush2.bf16.msra.mxu0 0
  %192 = vmatprep.mubr.bf16.mxu0 0
  %193 = vmatmul.mubr.bf16.gmra.mxu0 %v113
  %v194 = vpop.f32.mrf.mxu0
  %v195 = vadd.f32 0.0, %v194
  %v196 = vpop.f32.mrf.mxu0
  %v197 = vpop.f32.mrf.mxu0
  %v198 = vadd.f32 0.0, %v197
  %v199 = vpop.f32.mrf.mxu0
  %200 = vmatprep.mubr.bf16.mxu0 0
  %201 = vmatmul.mubr.bf16.gmra.mxu0 %v116
  %v202 = vpop.f32.mrf.mxu0
  %v203 = vadd.f32 0.0, %v202
  %v204 = vpop.f32.mrf.mxu0
  %v205 = vpop.f32.mrf.mxu0
  %v206 = vadd.f32 0.0, %v205
  %v207 = vpop.f32.mrf.mxu0
  %208 = vmatprep.mubr.bf16.mxu0 0
  %209 = vmatmul.mubr.bf16.gmra.mxu0 %v119
  %v210 = vpop.f32.mrf.mxu0
  %v211 = vadd.f32 0.0, %v210
  %v212 = vpop.f32.mrf.mxu0
  %v213 = vpop.f32.mrf.mxu0
  %v214 = vadd.f32 0.0, %v213
  %v215 = vpop.f32.mrf.mxu0
  %216 = vmatprep.mubr.bf16.mxu0 0
  %217 = vmatmul.mubr.bf16.gmra.mxu0 %v122
  %v218 = vpop.f32.mrf.mxu0
  %v219 = vadd.f32 0.0, %v218
  %v220 = vpop.f32.mrf.mxu0
  %v221 = vpop.f32.mrf.mxu0
  %v222 = vadd.f32 0.0, %v221
  %v223 = vpop.f32.mrf.mxu0
  %224 = vmatprep.mubr.bf16.mxu0 0
  %225 = vmatmul.mubr.bf16.gmra.mxu0 %v125
  %v226 = vpop.f32.mrf.mxu0
  %v227 = vadd.f32 0.0, %v226
  %v228 = vpop.f32.mrf.mxu0
  %v229 = vpop.f32.mrf.mxu0
  %v230 = vadd.f32 0.0, %v229
  %v231 = vpop.f32.mrf.mxu0
  %232 = vmatprep.mubr.bf16.mxu0 0
  %233 = vmatmul.mubr.bf16.gmra.mxu0 %v128
  %v234 = vpop.f32.mrf.mxu0
  %v235 = vadd.f32 0.0, %v234
  %v236 = vpop.f32.mrf.mxu0
  %v237 = vpop.f32.mrf.mxu0
  %v238 = vadd.f32 0.0, %v237
  %v239 = vpop.f32.mrf.mxu0
  %240 = vmatprep.mubr.bf16.mxu0 0
  %241 = vmatmul.mubr.bf16.gmra.mxu0 %v131
  %v242 = vpop.f32.mrf.mxu0
  %v243 = vadd.f32 0.0, %v242
  %v244 = vpop.f32.mrf.mxu0
  %v245 = vpop.f32.mrf.mxu0
  %v246 = vadd.f32 0.0, %v245
  %v247 = vpop.f32.mrf.mxu0
  %248 = vmatprep.mubr.bf16.mxu0 0
  %249 = vmatmul.mubr.bf16.gmra.mxu0 %v134
  %v250 = vpop.f32.mrf.mxu0
  %v251 = vadd.f32 0.0, %v250
  %v252 = vpop.f32.mrf.mxu0
  %v253 = vpop.f32.mrf.mxu0
  %v254 = vadd.f32 0.0, %v253
  %v255 = vpop.f32.mrf.mxu0
  %256 = vmatprep.mubr.bf16.mxu0 0
  %257 = vmatmul.mubr.bf16.gmra.mxu0 %v137
  %v258 = vpop.f32.mrf.mxu0
  %v259 = vadd.f32 0.0, %v258
  %v260 = vpop.f32.mrf.mxu0
  %v261 = vpop.f32.mrf.mxu0
  %v262 = vadd.f32 0.0, %v261
  %v263 = vpop.f32.mrf.mxu0
  %264 = vmatprep.mubr.bf16.mxu0 0
  %265 = vmatmul.mubr.bf16.gmra.mxu0 %v140
  %v266 = vpop.f32.mrf.mxu0
  %v267 = vadd.f32 0.0, %v266
  %v268 = vpop.f32.mrf.mxu0
  %v269 = vpop.f32.mrf.mxu0
  %v270 = vadd.f32 0.0, %v269
  %v271 = vpop.f32.mrf.mxu0
  %272 = vmatprep.mubr.bf16.mxu0 0
  %273 = vmatmul.mubr.bf16.gmra.mxu0 %v143
  %v274 = vpop.f32.mrf.mxu0
  %v275 = vadd.f32 0.0, %v274
  %v276 = vpop.f32.mrf.mxu0
  %v277 = vpop.f32.mrf.mxu0
  %v278 = vadd.f32 0.0, %v277
  %v279 = vpop.f32.mrf.mxu0
  %280 = vmatprep.mubr.bf16.mxu0 0
  %281 = vmatmul.mubr.bf16.gmra.mxu0 %v146
  %v282 = vpop.f32.mrf.mxu0
  %v283 = vadd.f32 0.0, %v282
  %v284 = vpop.f32.mrf.mxu0
  %v285 = vpop.f32.mrf.mxu0
  %v286 = vadd.f32 0.0, %v285
  %v287 = vpop.f32.mrf.mxu0
  %288 = vmatprep.mubr.bf16.mxu0 0
  %289 = vmatmul.mubr.bf16.gmra.mxu0 %v149
  %v290 = vpop.f32.mrf.mxu0
  %v291 = vadd.f32 0.0, %v290
  %v292 = vpop.f32.mrf.mxu0
  %v293 = vpop.f32.mrf.mxu0
  %v294 = vadd.f32 0.0, %v293
  %v295 = vpop.f32.mrf.mxu0
  %296 = vmatprep.mubr.bf16.mxu0 0
  %297 = vmatmul.mubr.bf16.gmra.mxu0 %v152
  %v298 = vpop.f32.mrf.mxu0
  %v299 = vadd.f32 0.0, %v298
  %v300 = vpop.f32.mrf.mxu0
  %v301 = vpop.f32.mrf.mxu0
  %v302 = vadd.f32 0.0, %v301
  %v303 = vpop.f32.mrf.mxu0
  %304 = vmatprep.mubr.bf16.mxu0 0
  %305 = vmatmul.mubr.bf16.gmra.mxu0 %v155
  %v306 = vpop.f32.mrf.mxu0
  %v307 = vadd.f32 0.0, %v306
  %v308 = vpop.f32.mrf.mxu0
  %v309 = vpop.f32.mrf.mxu0
  %v310 = vadd.f32 0.0, %v309
  %v311 = vpop.f32.mrf.mxu0
  %312 = vmatprep.mubr.bf16.mxu0 0
  %313 = vmatmul.mubr.bf16.gmra.mxu0 %v158
  %v314 = vpop.f32.mrf.mxu0
  %v315 = vadd.f32 0.0, %v314
  %v316 = vpop.f32.mrf.mxu0
  %v317 = vpop.f32.mrf.mxu0
  %v318 = vadd.f32 0.0, %v317
  %v319 = vpop.f32.mrf.mxu0
  %320 = vdwg.mxu0
  %v321 = vld [vmem:[#allocation2] sm:$0xff]
  %v322 = vld [vmem:[#allocation2 + $0x8] sm:$0xff]
  %v323 = vld [vmem:[#allocation2 + $0x10] sm:$0xff]
  %v324 = vld [vmem:[#allocation2 + $0x18] sm:$0xff]
  %v325 = vld [vmem:[#allocation2 + $0x20] sm:$0xff]
  %v326 = vld [vmem:[#allocation2 + $0x28] sm:$0xff]
  %v327 = vld [vmem:[#allocation2 + $0x30] sm:$0xff]
  %v328 = vld [vmem:[#allocation2 + $0x38] sm:$0xff]
  %v329 = vld [vmem:[#allocation2 + $0x40] sm:$0xff]
  %v330 = vld [vmem:[#allocation2 + $0x48] sm:$0xff]
  %v331 = vld [vmem:[#allocation2 + $0x50] sm:$0xff]
  %v332 = vld [vmem:[#allocation2 + $0x58] sm:$0xff]
  %v333 = vld [vmem:[#allocation2 + $0x60] sm:$0xff]
  %v334 = vld [vmem:[#allocation2 + $0x68] sm:$0xff]
  %v335 = vld [vmem:[#allocation2 + $0x70] sm:$0xff]
  %v336 = vld [vmem:[#allocation2 + $0x78] sm:$0xff]
  %v337 = vld [vmem:[#allocation2 + $0x80] sm:$0xff]
  %v338 = vld [vmem:[#allocation2 + $0x88] sm:$0xff]
  %v339 = vld [vmem:[#allocation2 + $0x90] sm:$0xff]
  %v340 = vld [vmem:[#allocation2 + $0x98] sm:$0xff]
  %v341 = vld [vmem:[#allocation2 + $0xa0] sm:$0xff]
  %v342 = vld [vmem:[#allocation2 + $0xa8] sm:$0xff]
  %v343 = vld [vmem:[#allocation2 + $0xb0] sm:$0xff]
  %v344 = vld [vmem:[#allocation2 + $0xb8] sm:$0xff]
  %v345 = vld [vmem:[#allocation2 + $0xc0] sm:$0xff]
  %v346 = vld [vmem:[#allocation2 + $0xc8] sm:$0xff]
  %v347 = vld [vmem:[#allocation2 + $0xd0] sm:$0xff]
  %v348 = vld [vmem:[#allocation2 + $0xd8] sm:$0xff]
  %v349 = vld [vmem:[#allocation2 + $0xe0] sm:$0xff]
  %v350 = vld [vmem:[#allocation2 + $0xe8] sm:$0xff]
  %v351 = vld [vmem:[#allocation2 + $0xf0] sm:$0xff]
  %v352 = vld [vmem:[#allocation2 + $0xf8] sm:$0xff]
  %v353 = vld [vmem:[%s0] sm:$0xff]
  %v354 = vld [vmem:[%s0 + $0x8] sm:$0xff]
  %v355 = vld [vmem:[%s0 + $0x10] sm:$0xff]
  %v356 = vld [vmem:[%s0 + $0x18] sm:$0xff]
  %v357 = vld [vmem:[%s0 + $0x20] sm:$0xff]
  %v358 = vld [vmem:[%s0 + $0x28] sm:$0xff]
  %v359 = vld [vmem:[%s0 + $0x30] sm:$0xff]
  %v360 = vld [vmem:[%s0 + $0x38] sm:$0xff]
  %v361 = vld [vmem:[%s0 + $0x40] sm:$0xff]
  %v362 = vld [vmem:[%s0 + $0x48] sm:$0xff]
  %v363 = vld [vmem:[%s0 + $0x50] sm:$0xff]
  %v364 = vld [vmem:[%s0 + $0x58] sm:$0xff]
  %v365 = vld [vmem:[%s0 + $0x60] sm:$0xff]
  %v366 = vld [vmem:[%s0 + $0x68] sm:$0xff]
  %v367 = vld [vmem:[%s0 + $0x70] sm:$0xff]
  %v368 = vld [vmem:[%s0 + $0x78] sm:$0xff]
  %v369 = vld [vmem:[%s0 + $0x80] sm:$0xff]
  %v370 = vld [vmem:[%s0 + $0x88] sm:$0xff]
  %v371 = vld [vmem:[%s0 + $0x90] sm:$0xff]
  %v372 = vld [vmem:[%s0 + $0x98] sm:$0xff]
  %v373 = vld [vmem:[%s0 + $0xa0] sm:$0xff]
  %v374 = vld [vmem:[%s0 + $0xa8] sm:$0xff]
  %v375 = vld [vmem:[%s0 + $0xb0] sm:$0xff]
  %v376 = vld [vmem:[%s0 + $0xb8] sm:$0xff]
  %v377 = vld [vmem:[%s0 + $0xc0] sm:$0xff]
  %v378 = vld [vmem:[%s0 + $0xc8] sm:$0xff]
  %v379 = vld [vmem:[%s0 + $0xd0] sm:$0xff]
  %v380 = vld [vmem:[%s0 + $0xd8] sm:$0xff]
  %v381 = vld [vmem:[%s0 + $0xe0] sm:$0xff]
  %v382 = vld [vmem:[%s0 + $0xe8] sm:$0xff]
  %v383 = vld [vmem:[%s0 + $0xf0] sm:$0xff]
  %v384 = vld [vmem:[%s0 + $0xf8] sm:$0xff]
  %v385 = vpack.c.bf16 %v198, %v195
  %v386 = vpack.c.bf16 %v206, %v203
  %v387 = vpack.c.bf16 %v214, %v211
  %v388 = vpack.c.bf16 %v222, %v219
  %v389 = vpack.c.bf16 %v230, %v227
  %v390 = vpack.c.bf16 %v238, %v235
  %v391 = vpack.c.bf16 %v246, %v243
  %v392 = vpack.c.bf16 %v254, %v251
  %v393 = vpack.c.bf16 %v262, %v259
  %v394 = vpack.c.bf16 %v270, %v267
  %v395 = vpack.c.bf16 %v278, %v275
  %v396 = vpack.c.bf16 %v286, %v283
  %v397 = vpack.c.bf16 %v294, %v291
  %v398 = vpack.c.bf16 %v302, %v299
  %v399 = vpack.c.bf16 %v310, %v307
  %v400 = vpack.c.bf16 %v318, %v315
  %v433 = vunpack.c.l.b16 %v353
  %v434 = vunpack.c.h.b16 %v353
  %v435 = vunpack.c.l.b16 %v354
  %v436 = vunpack.c.h.b16 %v354
  %v437 = vunpack.c.l.b16 %v355
  %v438 = vunpack.c.h.b16 %v355
  %v439 = vunpack.c.l.b16 %v356
  %v440 = vunpack.c.h.b16 %v356
  %v441 = vunpack.c.l.b16 %v357
  %v442 = vunpack.c.h.b16 %v357
  %v443 = vunpack.c.l.b16 %v358
  %v444 = vunpack.c.h.b16 %v358
  %v445 = vunpack.c.l.b16 %v359
  %v446 = vunpack.c.h.b16 %v359
  %v447 = vunpack.c.l.b16 %v360
  %v448 = vunpack.c.h.b16 %v360
  %v449 = vunpack.c.l.b16 %v361
  %v450 = vunpack.c.h.b16 %v361
  %v451 = vunpack.c.l.b16 %v362
  %v452 = vunpack.c.h.b16 %v362
  %v453 = vunpack.c.l.b16 %v363
  %v454 = vunpack.c.h.b16 %v363
  %v455 = vunpack.c.l.b16 %v364
  %v456 = vunpack.c.h.b16 %v364
  %v457 = vunpack.c.l.b16 %v365
  %v458 = vunpack.c.h.b16 %v365
  %v459 = vunpack.c.l.b16 %v366
  %v460 = vunpack.c.h.b16 %v366
  %v461 = vunpack.c.l.b16 %v367
  %v462 = vunpack.c.h.b16 %v367
  %v463 = vunpack.c.l.b16 %v368
  %v464 = vunpack.c.h.b16 %v368
  %v465 = vunpack.c.l.b16 %v369
  %v466 = vunpack.c.h.b16 %v369
  %v467 = vunpack.c.l.b16 %v370
  %v468 = vunpack.c.h.b16 %v370
  %v469 = vunpack.c.l.b16 %v371
  %v470 = vunpack.c.h.b16 %v371
  %v471 = vunpack.c.l.b16 %v372
  %v472 = vunpack.c.h.b16 %v372
  %v473 = vunpack.c.l.b16 %v373
  %v474 = vunpack.c.h.b16 %v373
  %v475 = vunpack.c.l.b16 %v374
  %v476 = vunpack.c.h.b16 %v374
  %v477 = vunpack.c.l.b16 %v375
  %v478 = vunpack.c.h.b16 %v375
  %v479 = vunpack.c.l.b16 %v376
  %v480 = vunpack.c.h.b16 %v376
  %v481 = vunpack.c.l.b16 %v377
  %v482 = vunpack.c.h.b16 %v377
  %v483 = vunpack.c.l.b16 %v378
  %v484 = vunpack.c.h.b16 %v378
  %v485 = vunpack.c.l.b16 %v379
  %v486 = vunpack.c.h.b16 %v379
  %v487 = vunpack.c.l.b16 %v380
  %v488 = vunpack.c.h.b16 %v380
  %v489 = vunpack.c.l.b16 %v381
  %v490 = vunpack.c.h.b16 %v381
  %v491 = vunpack.c.l.b16 %v382
  %v492 = vunpack.c.h.b16 %v382
  %v493 = vunpack.c.l.b16 %v383
  %v494 = vunpack.c.h.b16 %v383
  %v495 = vunpack.c.l.b16 %v384
  %v496 = vunpack.c.h.b16 %v384
  %v497 = vpack.c.b16 %v435, %v433
  %v498 = vpack.c.b16 %v436, %v434
  %v499 = vpack.c.b16 %v439, %v437
  %v500 = vpack.c.b16 %v440, %v438
  %v501 = vpack.c.b16 %v443, %v441
  %v502 = vpack.c.b16 %v444, %v442
  %v503 = vpack.c.b16 %v447, %v445
  %v504 = vpack.c.b16 %v448, %v446
  %v505 = vpack.c.b16 %v451, %v449
  %v506 = vpack.c.b16 %v452, %v450
  %v507 = vpack.c.b16 %v455, %v453
  %v508 = vpack.c.b16 %v456, %v454
  %v509 = vpack.c.b16 %v459, %v457
  %v510 = vpack.c.b16 %v460, %v458
  %v511 = vpack.c.b16 %v463, %v461
  %v512 = vpack.c.b16 %v464, %v462
  %v513 = vpack.c.b16 %v467, %v465
  %v514 = vpack.c.b16 %v468, %v466
  %v515 = vpack.c.b16 %v471, %v469
  %v516 = vpack.c.b16 %v472, %v470
  %v517 = vpack.c.b16 %v475, %v473
  %v518 = vpack.c.b16 %v476, %v474
  %v519 = vpack.c.b16 %v479, %v477
  %v520 = vpack.c.b16 %v480, %v478
  %v521 = vpack.c.b16 %v483, %v481
  %v522 = vpack.c.b16 %v484, %v482
  %v523 = vpack.c.b16 %v487, %v485
  %v524 = vpack.c.b16 %v488, %v486
  %v525 = vpack.c.b16 %v491, %v489
  %v526 = vpack.c.b16 %v492, %v490
  %v527 = vpack.c.b16 %v495, %v493
  %v528 = vpack.c.b16 %v496, %v494
  %561 = vmatprep.subr.bf16.mxu0 0
  %562 = vmatpush1.bf16.msra.mxu0 %v392
  %563 = vmatprep.subr.bf16.mxu0 0
  %564 = vmatpush1.bf16.msra.mxu0 %v391
  %565 = vmatprep.subr.bf16.mxu0 0
  %566 = vmatpush1.bf16.msra.mxu0 %v390
  %567 = vmatprep.subr.bf16.mxu0 0
  %568 = vmatpush1.bf16.msra.mxu0 %v389
  %569 = vmatprep.subr.bf16.mxu0 0
  %570 = vmatpush1.bf16.msra.mxu0 %v388
  %571 = vmatprep.subr.bf16.mxu0 0
  %572 = vmatpush1.bf16.msra.mxu0 %v387
  %573 = vmatprep.subr.bf16.mxu0 0
  %574 = vmatpush1.bf16.msra.mxu0 %v386
  %575 = vmatprep.subr.bf16.mxu0 0
  %576 = vmatpush1.bf16.msra.mxu0 %v385
  %577 = vmatprep.subr.bf16.mxu0 0
  %578 = vmatpush2.bf16.msra.mxu0 %v400
  %579 = vmatprep.subr.bf16.mxu0 0
  %580 = vmatpush2.bf16.msra.mxu0 %v399
  %581 = vmatprep.subr.bf16.mxu0 0
  %582 = vmatpush2.bf16.msra.mxu0 %v398
  %583 = vmatprep.subr.bf16.mxu0 0
  %584 = vmatpush2.bf16.msra.mxu0 %v397
  %585 = vmatprep.subr.bf16.mxu0 0
  %586 = vmatpush2.bf16.msra.mxu0 %v396
  %587 = vmatprep.subr.bf16.mxu0 0
  %588 = vmatpush2.bf16.msra.mxu0 %v395
  %589 = vmatprep.subr.bf16.mxu0 0
  %590 = vmatpush2.bf16.msra.mxu0 %v394
  %591 = vmatprep.subr.bf16.mxu0 0
  %592 = vmatpush2.bf16.msra.mxu0 %v393
  %593 = vmatprep.mubr.bf16.mxu0 %v498
  %594 = vmatmul.mubr.bf16.gmra.mxu0 %v497
  %v595 = vpop.f32.mrf.mxu0
  %v596 = vadd.f32 0.0, %v595
  %v597 = vpop.f32.mrf.mxu0
  %v598 = vpop.f32.mrf.mxu0
  %v599 = vadd.f32 0.0, %v598
  %v600 = vpop.f32.mrf.mxu0
  %601 = vmatprep.mubr.bf16.mxu0 %v500
  %602 = vmatmul.mubr.bf16.gmra.mxu0 %v499
  %v603 = vpop.f32.mrf.mxu0
  %v604 = vadd.f32 0.0, %v603
  %v605 = vpop.f32.mrf.mxu0
  %v606 = vpop.f32.mrf.mxu0
  %v607 = vadd.f32 0.0, %v606
  %v608 = vpop.f32.mrf.mxu0
  %609 = vmatprep.mubr.bf16.mxu0 %v502
  %610 = vmatmul.mubr.bf16.gmra.mxu0 %v501
  %v611 = vpop.f32.mrf.mxu0
  %v612 = vadd.f32 0.0, %v611
  %v613 = vpop.f32.mrf.mxu0
  %v614 = vpop.f32.mrf.mxu0
  %v615 = vadd.f32 0.0, %v614
  %v616 = vpop.f32.mrf.mxu0
  %617 = vmatprep.mubr.bf16.mxu0 %v504
  %618 = vmatmul.mubr.bf16.gmra.mxu0 %v503
  %v619 = vpop.f32.mrf.mxu0
  %v620 = vadd.f32 0.0, %v619
  %v621 = vpop.f32.mrf.mxu0
  %v622 = vpop.f32.mrf.mxu0
  %v623 = vadd.f32 0.0, %v622
  %v624 = vpop.f32.mrf.mxu0
  %625 = vmatprep.mubr.bf16.mxu0 %v506
  %626 = vmatmul.mubr.bf16.gmra.mxu0 %v505
  %v627 = vpop.f32.mrf.mxu0
  %v628 = vadd.f32 0.0, %v627
  %v629 = vpop.f32.mrf.mxu0
  %v630 = vpop.f32.mrf.mxu0
  %v631 = vadd.f32 0.0, %v630
  %v632 = vpop.f32.mrf.mxu0
  %633 = vmatprep.mubr.bf16.mxu0 %v508
  %634 = vmatmul.mubr.bf16.gmra.mxu0 %v507
  %v635 = vpop.f32.mrf.mxu0
  %v636 = vadd.f32 0.0, %v635
  %v637 = vpop.f32.mrf.mxu0
  %v638 = vpop.f32.mrf.mxu0
  %v639 = vadd.f32 0.0, %v638
  %v640 = vpop.f32.mrf.mxu0
  %641 = vmatprep.mubr.bf16.mxu0 %v510
  %642 = vmatmul.mubr.bf16.gmra.mxu0 %v509
  %v643 = vpop.f32.mrf.mxu0
  %v644 = vadd.f32 0.0, %v643
  %v645 = vpop.f32.mrf.mxu0
  %v646 = vpop.f32.mrf.mxu0
  %v647 = vadd.f32 0.0, %v646
  %v648 = vpop.f32.mrf.mxu0
  %649 = vmatprep.mubr.bf16.mxu0 %v512
  %650 = vmatmul.mubr.bf16.gmra.mxu0 %v511
  %v651 = vpop.f32.mrf.mxu0
  %v652 = vadd.f32 0.0, %v651
  %v653 = vpop.f32.mrf.mxu0
  %v654 = vpop.f32.mrf.mxu0
  %v655 = vadd.f32 0.0, %v654
  %v656 = vpop.f32.mrf.mxu0
  %657 = vmatprep.mubr.bf16.mxu0 %v514
  %658 = vmatmul.mubr.bf16.gmra.mxu0 %v513
  %v659 = vpop.f32.mrf.mxu0
  %v660 = vadd.f32 0.0, %v659
  %v661 = vpop.f32.mrf.mxu0
  %v662 = vpop.f32.mrf.mxu0
  %v663 = vadd.f32 0.0, %v662
  %v664 = vpop.f32.mrf.mxu0
  %665 = vmatprep.mubr.bf16.mxu0 %v516
  %666 = vmatmul.mubr.bf16.gmra.mxu0 %v515
  %v667 = vpop.f32.mrf.mxu0
  %v668 = vadd.f32 0.0, %v667
  %v669 = vpop.f32.mrf.mxu0
  %v670 = vpop.f32.mrf.mxu0
  %v671 = vadd.f32 0.0, %v670
  %v672 = vpop.f32.mrf.mxu0
  %673 = vmatprep.mubr.bf16.mxu0 %v518
  %674 = vmatmul.mubr.bf16.gmra.mxu0 %v517
  %v675 = vpop.f32.mrf.mxu0
  %v676 = vadd.f32 0.0, %v675
  %v677 = vpop.f32.mrf.mxu0
  %v678 = vpop.f32.mrf.mxu0
  %v679 = vadd.f32 0.0, %v678
  %v680 = vpop.f32.mrf.mxu0
  %681 = vmatprep.mubr.bf16.mxu0 %v520
  %682 = vmatmul.mubr.bf16.gmra.mxu0 %v519
  %v683 = vpop.f32.mrf.mxu0
  %v684 = vadd.f32 0.0, %v683
  %v685 = vpop.f32.mrf.mxu0
  %v686 = vpop.f32.mrf.mxu0
  %v687 = vadd.f32 0.0, %v686
  %v688 = vpop.f32.mrf.mxu0
  %689 = vmatprep.mubr.bf16.mxu0 %v522
  %690 = vmatmul.mubr.bf16.gmra.mxu0 %v521
  %v691 = vpop.f32.mrf.mxu0
  %v692 = vadd.f32 0.0, %v691
  %v693 = vpop.f32.mrf.mxu0
  %v694 = vpop.f32.mrf.mxu0
  %v695 = vadd.f32 0.0, %v694
  %v696 = vpop.f32.mrf.mxu0
  %697 = vmatprep.mubr.bf16.mxu0 %v524
  %698 = vmatmul.mubr.bf16.gmra.mxu0 %v523
  %v699 = vpop.f32.mrf.mxu0
  %v700 = vadd.f32 0.0, %v699
  %v701 = vpop.f32.mrf.mxu0
  %v702 = vpop.f32.mrf.mxu0
  %v703 = vadd.f32 0.0, %v702
  %v704 = vpop.f32.mrf.mxu0
  %705 = vmatprep.mubr.bf16.mxu0 %v526
  %706 = vmatmul.mubr.bf16.gmra.mxu0 %v525
  %v707 = vpop.f32.mrf.mxu0
  %v708 = vadd.f32 0.0, %v707
  %v709 = vpop.f32.mrf.mxu0
  %v710 = vpop.f32.mrf.mxu0
  %v711 = vadd.f32 0.0, %v710
  %v712 = vpop.f32.mrf.mxu0
  %713 = vmatprep.mubr.bf16.mxu0 %v528
  %714 = vmatmul.mubr.bf16.gmra.mxu0 %v527
  %v715 = vpop.f32.mrf.mxu0
  %v716 = vadd.f32 0.0, %v715
  %v717 = vpop.f32.mrf.mxu0
  %v718 = vpop.f32.mrf.mxu0
  %v719 = vadd.f32 0.0, %v718
  %v720 = vpop.f32.mrf.mxu0
  %721 = vdwg.mxu0
  %v722 = vadd.f32 %v321, %v596
  %v723 = vadd.f32 %v322, %v599
  %v724 = vadd.f32 %v323, %v604
  %v725 = vadd.f32 %v324, %v607
  %v726 = vadd.f32 %v325, %v612
  %v727 = vadd.f32 %v326, %v615
  %v728 = vadd.f32 %v327, %v620
  %v729 = vadd.f32 %v328, %v623
  %v730 = vadd.f32 %v329, %v628
  %v731 = vadd.f32 %v330, %v631
  %v732 = vadd.f32 %v331, %v636
  %v733 = vadd.f32 %v332, %v639
  %v734 = vadd.f32 %v333, %v644
  %v735 = vadd.f32 %v334, %v647
  %v736 = vadd.f32 %v335, %v652
  %v737 = vadd.f32 %v336, %v655
  %v738 = vadd.f32 %v337, %v660
  %v739 = vadd.f32 %v338, %v663
  %v740 = vadd.f32 %v339, %v668
  %v741 = vadd.f32 %v340, %v671
  %v742 = vadd.f32 %v341, %v676
  %v743 = vadd.f32 %v342, %v679
  %v744 = vadd.f32 %v343, %v684
  %v745 = vadd.f32 %v344, %v687
  %v746 = vadd.f32 %v345, %v692
  %v747 = vadd.f32 %v346, %v695
  %v748 = vadd.f32 %v347, %v700
  %v749 = vadd.f32 %v348, %v703
  %v750 = vadd.f32 %v349, %v708
  %v751 = vadd.f32 %v350, %v711
  %v752 = vadd.f32 %v351, %v716
  %v753 = vadd.f32 %v352, %v719
  %vm754 = vcmask 261120
  %755 = vst.msk [vmem:[#allocation2] sm:$0xff] %vm754, %v722
  %756 = vst.msk [vmem:[#allocation2 + $0x8] sm:$0xff] %vm754, %v723
  %757 = vst.msk [vmem:[#allocation2 + $0x10] sm:$0xff] %vm754, %v724
  %758 = vst.msk [vmem:[#allocation2 + $0x18] sm:$0xff] %vm754, %v725
  %759 = vst.msk [vmem:[#allocation2 + $0x20] sm:$0xff] %vm754, %v726
  %760 = vst.msk [vmem:[#allocation2 + $0x28] sm:$0xff] %vm754, %v727
  %761 = vst.msk [vmem:[#allocation2 + $0x30] sm:$0xff] %vm754, %v728
  %762 = vst.msk [vmem:[#allocation2 + $0x38] sm:$0xff] %vm754, %v729
  %763 = vst.msk [vmem:[#allocation2 + $0x40] sm:$0xff] %vm754, %v730
  %764 = vst.msk [vmem:[#allocation2 + $0x48] sm:$0xff] %vm754, %v731
  %765 = vst.msk [vmem:[#allocation2 + $0x50] sm:$0xff] %vm754, %v732
  %766 = vst.msk [vmem:[#allocation2 + $0x58] sm:$0xff] %vm754, %v733
  %767 = vst.msk [vmem:[#allocation2 + $0x60] sm:$0xff] %vm754, %v734
  %768 = vst.msk [vmem:[#allocation2 + $0x68] sm:$0xff] %vm754, %v735
  %769 = vst.msk [vmem:[#allocation2 + $0x70] sm:$0xff] %vm754, %v736
  %770 = vst.msk [vmem:[#allocation2 + $0x78] sm:$0xff] %vm754, %v737
  %771 = vst.msk [vmem:[#allocation2 + $0x80] sm:$0xff] %vm754, %v738
  %772 = vst.msk [vmem:[#allocation2 + $0x88] sm:$0xff] %vm754, %v739
  %773 = vst.msk [vmem:[#allocation2 + $0x90] sm:$0xff] %vm754, %v740
  %774 = vst.msk [vmem:[#allocation2 + $0x98] sm:$0xff] %vm754, %v741
  %775 = vst.msk [vmem:[#allocation2 + $0xa0] sm:$0xff] %vm754, %v742
  %776 = vst.msk [vmem:[#allocation2 + $0xa8] sm:$0xff] %vm754, %v743
  %777 = vst.msk [vmem:[#allocation2 + $0xb0] sm:$0xff] %vm754, %v744
  %778 = vst.msk [vmem:[#allocation2 + $0xb8] sm:$0xff] %vm754, %v745
  %779 = vst.msk [vmem:[#allocation2 + $0xc0] sm:$0xff] %vm754, %v746
  %780 = vst.msk [vmem:[#allocation2 + $0xc8] sm:$0xff] %vm754, %v747
  %781 = vst.msk [vmem:[#allocation2 + $0xd0] sm:$0xff] %vm754, %v748
  %782 = vst.msk [vmem:[#allocation2 + $0xd8] sm:$0xff] %vm754, %v749
  %783 = vst.msk [vmem:[#allocation2 + $0xe0] sm:$0xff] %vm754, %v750
  %784 = vst.msk [vmem:[#allocation2 + $0xe8] sm:$0xff] %vm754, %v751
  %785 = vst.msk [vmem:[#allocation2 + $0xf0] sm:$0xff] %vm754, %v752
  %786 = vst.msk [vmem:[#allocation2 + $0xf8] sm:$0xff] %vm754, %v753
  // Predicated region
  $region22: #{comga_forward.17} parent=0 // pred_check
    %p787 = pneg %p18
  $region23: #{comga_forward.17} parent=0 // pred_check_branch
    %789 = sbr.rel (%p787) target = $region25
  $region24: #{comga_forward.17} parent=0 // pred_region
    %v790 = vld [vmem:[#allocation2] sm:$0xff]
    %v791 = vld [vmem:[#allocation2 + $0x8] sm:$0xff]
    %v792 = vld [vmem:[#allocation2 + $0x10] sm:$0xff]
    %v793 = vld [vmem:[#allocation2 + $0x18] sm:$0xff]
    %v794 = vld [vmem:[#allocation2 + $0x20] sm:$0xff]
    %v795 = vld [vmem:[#allocation2 + $0x28] sm:$0xff]
    %v796 = vld [vmem:[#allocation2 + $0x30] sm:$0xff]
    %v797 = vld [vmem:[#allocation2 + $0x38] sm:$0xff]
    %v798 = vld [vmem:[#allocation2 + $0x40] sm:$0xff]
    %v799 = vld [vmem:[#allocation2 + $0x48] sm:$0xff]
    %v800 = vld [vmem:[#allocation2 + $0x50] sm:$0xff]
    %v801 = vld [vmem:[#allocation2 + $0x58] sm:$0xff]
    %v802 = vld [vmem:[#allocation2 + $0x60] sm:$0xff]
    %v803 = vld [vmem:[#allocation2 + $0x68] sm:$0xff]
    %v804 = vld [vmem:[#allocation2 + $0x70] sm:$0xff]
    %v805 = vld [vmem:[#allocation2 + $0x78] sm:$0xff]
    %v806 = vld [vmem:[#allocation2 + $0x80] sm:$0xff]
    %v807 = vld [vmem:[#allocation2 + $0x88] sm:$0xff]
    %v808 = vld [vmem:[#allocation2 + $0x90] sm:$0xff]
    %v809 = vld [vmem:[#allocation2 + $0x98] sm:$0xff]
    %v810 = vld [vmem:[#allocation2 + $0xa0] sm:$0xff]
    %v811 = vld [vmem:[#allocation2 + $0xa8] sm:$0xff]
    %v812 = vld [vmem:[#allocation2 + $0xb0] sm:$0xff]
    %v813 = vld [vmem:[#allocation2 + $0xb8] sm:$0xff]
    %v814 = vld [vmem:[#allocation2 + $0xc0] sm:$0xff]
    %v815 = vld [vmem:[#allocation2 + $0xc8] sm:$0xff]
    %v816 = vld [vmem:[#allocation2 + $0xd0] sm:$0xff]
    %v817 = vld [vmem:[#allocation2 + $0xd8] sm:$0xff]
    %v818 = vld [vmem:[#allocation2 + $0xe0] sm:$0xff]
    %v819 = vld [vmem:[#allocation2 + $0xe8] sm:$0xff]
    %v820 = vld [vmem:[#allocation2 + $0xf0] sm:$0xff]
    %v821 = vld [vmem:[#allocation2 + $0xf8] sm:$0xff]
    %v822 = vld [vmem:[%s3] sm:$0x1]
    %v824 = vlaneseq
    %v825 = vshrl.u32 %v824, 7
    %v826 = vsub.s32 0, %v825
    %v827 = vrot.slane %v822, %v826
    %v829 = vadd.f32 %v790, %v827
    %v830 = vadd.f32 %v791, %v827
    %v831 = vadd.f32 %v792, %v827
    %v832 = vadd.f32 %v793, %v827
    %v833 = vadd.f32 %v794, %v827
    %v834 = vadd.f32 %v795, %v827
    %v835 = vadd.f32 %v796, %v827
    %v836 = vadd.f32 %v797, %v827
    %v837 = vadd.f32 %v798, %v827
    %v838 = vadd.f32 %v799, %v827
    %v839 = vadd.f32 %v800, %v827
    %v840 = vadd.f32 %v801, %v827
    %v841 = vadd.f32 %v802, %v827
    %v842 = vadd.f32 %v803, %v827
    %v843 = vadd.f32 %v804, %v827
    %v844 = vadd.f32 %v805, %v827
    %v845 = vadd.f32 %v806, %v827
    %v846 = vadd.f32 %v807, %v827
    %v847 = vadd.f32 %v808, %v827
    %v848 = vadd.f32 %v809, %v827
    %v849 = vadd.f32 %v810, %v827
    %v850 = vadd.f32 %v811, %v827
    %v851 = vadd.f32 %v812, %v827
    %v852 = vadd.f32 %v813, %v827
    %v853 = vadd.f32 %v814, %v827
    %v854 = vadd.f32 %v815, %v827
    %v855 = vadd.f32 %v816, %v827
    %v856 = vadd.f32 %v817, %v827
    %v857 = vadd.f32 %v818, %v827
    %v858 = vadd.f32 %v819, %v827
    %v859 = vadd.f32 %v820, %v827
    %v860 = vadd.f32 %v821, %v827
    %v861 = vmax.f32 %v829, 0.0
    %v862 = vmax.f32 %v830, 0.0
    %v863 = vmax.f32 %v831, 0.0
    %v864 = vmax.f32 %v832, 0.0
    %v865 = vmax.f32 %v833, 0.0
    %v866 = vmax.f32 %v834, 0.0
    %v867 = vmax.f32 %v835, 0.0
    %v868 = vmax.f32 %v836, 0.0
    %v869 = vmax.f32 %v837, 0.0
    %v870 = vmax.f32 %v838, 0.0
    %v871 = vmax.f32 %v839, 0.0
    %v872 = vmax.f32 %v840, 0.0
    %v873 = vmax.f32 %v841, 0.0
    %v874 = vmax.f32 %v842, 0.0
    %v875 = vmax.f32 %v843, 0.0
    %v876 = vmax.f32 %v844, 0.0
    %v877 = vmax.f32 %v845, 0.0
    %v878 = vmax.f32 %v846, 0.0
    %v879 = vmax.f32 %v847, 0.0
    %v880 = vmax.f32 %v848, 0.0
    %v881 = vmax.f32 %v849, 0.0
    %v882 = vmax.f32 %v850, 0.0
    %v883 = vmax.f32 %v851, 0.0
    %v884 = vmax.f32 %v852, 0.0
    %v885 = vmax.f32 %v853, 0.0
    %v886 = vmax.f32 %v854, 0.0
    %v887 = vmax.f32 %v855, 0.0
    %v888 = vmax.f32 %v856, 0.0
    %v889 = vmax.f32 %v857, 0.0
    %v890 = vmax.f32 %v858, 0.0
    %v891 = vmax.f32 %v859, 0.0
    %v892 = vmax.f32 %v860, 0.0
    %893 = vst.msk [vmem:[%s4] sm:$0xff] %vm754, %v861
    %894 = vst.msk [vmem:[%s4 + $0x8] sm:$0xff] %vm754, %v862
    %895 = vst.msk [vmem:[%s4 + $0x10] sm:$0xff] %vm754, %v863
    %896 = vst.msk [vmem:[%s4 + $0x18] sm:$0xff] %vm754, %v864
    %897 = vst.msk [vmem:[%s4 + $0x20] sm:$0xff] %vm754, %v865
    %898 = vst.msk [vmem:[%s4 + $0x28] sm:$0xff] %vm754, %v866
    %899 = vst.msk [vmem:[%s4 + $0x30] sm:$0xff] %vm754, %v867
    %900 = vst.msk [vmem:[%s4 + $0x38] sm:$0xff] %vm754, %v868
    %901 = vst.msk [vmem:[%s4 + $0x40] sm:$0xff] %vm754, %v869
    %902 = vst.msk [vmem:[%s4 + $0x48] sm:$0xff] %vm754, %v870
    %903 = vst.msk [vmem:[%s4 + $0x50] sm:$0xff] %vm754, %v871
    %904 = vst.msk [vmem:[%s4 + $0x58] sm:$0xff] %vm754, %v872
    %905 = vst.msk [vmem:[%s4 + $0x60] sm:$0xff] %vm754, %v873
    %906 = vst.msk [vmem:[%s4 + $0x68] sm:$0xff] %vm754, %v874
    %907 = vst.msk [vmem:[%s4 + $0x70] sm:$0xff] %vm754, %v875
    %908 = vst.msk [vmem:[%s4 + $0x78] sm:$0xff] %vm754, %v876
    %909 = vst.msk [vmem:[%s4 + $0x80] sm:$0xff] %vm754, %v877
    %910 = vst.msk [vmem:[%s4 + $0x88] sm:$0xff] %vm754, %v878
    %911 = vst.msk [vmem:[%s4 + $0x90] sm:$0xff] %vm754, %v879
    %912 = vst.msk [vmem:[%s4 + $0x98] sm:$0xff] %vm754, %v880
    %913 = vst.msk [vmem:[%s4 + $0xa0] sm:$0xff] %vm754, %v881
    %914 = vst.msk [vmem:[%s4 + $0xa8] sm:$0xff] %vm754, %v882
    %915 = vst.msk [vmem:[%s4 + $0xb0] sm:$0xff] %vm754, %v883
    %916 = vst.msk [vmem:[%s4 + $0xb8] sm:$0xff] %vm754, %v884
    %917 = vst.msk [vmem:[%s4 + $0xc0] sm:$0xff] %vm754, %v885
    %918 = vst.msk [vmem:[%s4 + $0xc8] sm:$0xff] %vm754, %v886
    %919 = vst.msk [vmem:[%s4 + $0xd0] sm:$0xff] %vm754, %v887
    %920 = vst.msk [vmem:[%s4 + $0xd8] sm:$0xff] %vm754, %v888
    %921 = vst.msk [vmem:[%s4 + $0xe0] sm:$0xff] %vm754, %v889
    %922 = vst.msk [vmem:[%s4 + $0xe8] sm:$0xff] %vm754, %v890
    %923 = vst.msk [vmem:[%s4 + $0xf0] sm:$0xff] %vm754, %v891
    %924 = vst.msk [vmem:[%s4 + $0xf8] sm:$0xff] %vm754, %v892
  $region25: #{comga_forward.17} parent=0 // pred_fallthru
    _
  // Predicated region
  $region26: #{comga_forward.17} parent=0 // pred_check
    _
  $region27: #{comga_forward.17} parent=0 // pred_check_branch
    %926 = sbr.rel (0) target = $region29
  $region28: #{comga_forward.17} parent=0 // pred_region
    _
  $region29: #{comga_forward.17} parent=0 // pred_fallthru
    _
  // Predicated region
  $region30: #{comga_forward.17} parent=0 // pred_check
    _
  $region31: #{comga_forward.17} parent=0 // pred_check_branch
    %928 = sbr.rel (0) target = $region33
  $region32: #{comga_forward.17} parent=0 // pred_region
    _
  $region33: #{comga_forward.17} parent=0 // pred_fallthru
    _

// kernel: comga_forward.19
$region0: #{comga_forward.19}
  #allocation0 [shape = 'u32[]', space=smem, size = 0x4, offset = 0x4, fixed_abs, tag = 'smem constant byte address 0x4 - core index']
  #allocation1 [shape = 'u32[144,128]{1,0:T(1,128)}', space=vmem, size = 0x12000, scoped, tag = 'internal scratch']
  %s0 = inlined_call_operand.vmem [shape: f32[256,8], index: 0, kind: input, shape index: {}, may-alias: {0,1}]
  %s1 = inlined_call_operand.vmem [shape: f32[256,8], index: 1, kind: input, shape index: {}, may-alias: {0,1}]
  %s2 = inlined_call_operand.vmem [shape: f32[256,256], index: 2, kind: output, shape index: {}]
  %s3 = sld [smem:[#allocation0]]
  $region18: #{comga_forward.19} parent=0
    _
  %s5 = ssub.s32 1, %s3
  %s6 = scalar_select 0, %s5, %s3
  // Predicated region
  $region2: #{comga_forward.19} parent=0 // pred_check
    _
  $region3: #{comga_forward.19} parent=0 // pred_check_branch
    %8 = sbr.rel (0) target = $region5
  $region4: #{comga_forward.19} parent=0 // pred_region
    _
  $region5: #{comga_forward.19} parent=0 // pred_fallthru
    _
  // Predicated region
  $region6: #{comga_forward.19} parent=0 // pred_check
    _
  $region7: #{comga_forward.19} parent=0 // pred_check_branch
    %10 = sbr.rel (0) target = $region9
  $region8: #{comga_forward.19} parent=0 // pred_region
    _
  $region9: #{comga_forward.19} parent=0 // pred_fallthru
    _
  %v11 = vld [vmem:[%s0] sm:$0xff]
  %v12 = vld [vmem:[%s0 + $0x8] sm:$0xff]
  %v13 = vld [vmem:[%s0 + $0x10] sm:$0xff]
  %v14 = vld [vmem:[%s0 + $0x18] sm:$0xff]
  %v15 = vld [vmem:[%s0 + $0x20] sm:$0xff]
  %v16 = vld [vmem:[%s0 + $0x28] sm:$0xff]
  %v17 = vld [vmem:[%s0 + $0x30] sm:$0xff]
  %v18 = vld [vmem:[%s0 + $0x38] sm:$0xff]
  %v19 = vld [vmem:[%s0 + $0x40] sm:$0xff]
  %v20 = vld [vmem:[%s0 + $0x48] sm:$0xff]
  %v21 = vld [vmem:[%s0 + $0x50] sm:$0xff]
  %v22 = vld [vmem:[%s0 + $0x58] sm:$0xff]
  %v23 = vld [vmem:[%s0 + $0x60] sm:$0xff]
  %v24 = vld [vmem:[%s0 + $0x68] sm:$0xff]
  %v25 = vld [vmem:[%s0 + $0x70] sm:$0xff]
  %v26 = vld [vmem:[%s0 + $0x78] sm:$0xff]
  %v27 = vld [vmem:[%s0 + $0x80] sm:$0xff]
  %v28 = vld [vmem:[%s0 + $0x88] sm:$0xff]
  %v29 = vld [vmem:[%s0 + $0x90] sm:$0xff]
  %v30 = vld [vmem:[%s0 + $0x98] sm:$0xff]
  %v31 = vld [vmem:[%s0 + $0xa0] sm:$0xff]
  %v32 = vld [vmem:[%s0 + $0xa8] sm:$0xff]
  %v33 = vld [vmem:[%s0 + $0xb0] sm:$0xff]
  %v34 = vld [vmem:[%s0 + $0xb8] sm:$0xff]
  %v35 = vld [vmem:[%s0 + $0xc0] sm:$0xff]
  %v36 = vld [vmem:[%s0 + $0xc8] sm:$0xff]
  %v37 = vld [vmem:[%s0 + $0xd0] sm:$0xff]
  %v38 = vld [vmem:[%s0 + $0xd8] sm:$0xff]
  %v39 = vld [vmem:[%s0 + $0xe0] sm:$0xff]
  %v40 = vld [vmem:[%s0 + $0xe8] sm:$0xff]
  %v41 = vld [vmem:[%s0 + $0xf0] sm:$0xff]
  %v42 = vld [vmem:[%s0 + $0xf8] sm:$0xff]
  %v43 = vld [vmem:[%s1] sm:$0xff]
  %v44 = vld [vmem:[%s1 + $0x8] sm:$0xff]
  %v45 = vld [vmem:[%s1 + $0x10] sm:$0xff]
  %v46 = vld [vmem:[%s1 + $0x18] sm:$0xff]
  %v47 = vld [vmem:[%s1 + $0x20] sm:$0xff]
  %v48 = vld [vmem:[%s1 + $0x28] sm:$0xff]
  %v49 = vld [vmem:[%s1 + $0x30] sm:$0xff]
  %v50 = vld [vmem:[%s1 + $0x38] sm:$0xff]
  %v51 = vld [vmem:[%s1 + $0x40] sm:$0xff]
  %v52 = vld [vmem:[%s1 + $0x48] sm:$0xff]
  %v53 = vld [vmem:[%s1 + $0x50] sm:$0xff]
  %v54 = vld [vmem:[%s1 + $0x58] sm:$0xff]
  %v55 = vld [vmem:[%s1 + $0x60] sm:$0xff]
  %v56 = vld [vmem:[%s1 + $0x68] sm:$0xff]
  %v57 = vld [vmem:[%s1 + $0x70] sm:$0xff]
  %v58 = vld [vmem:[%s1 + $0x78] sm:$0xff]
  %v59 = vld [vmem:[%s1 + $0x80] sm:$0xff]
  %v60 = vld [vmem:[%s1 + $0x88] sm:$0xff]
  %v61 = vld [vmem:[%s1 + $0x90] sm:$0xff]
  %v62 = vld [vmem:[%s1 + $0x98] sm:$0xff]
  %v63 = vld [vmem:[%s1 + $0xa0] sm:$0xff]
  %v64 = vld [vmem:[%s1 + $0xa8] sm:$0xff]
  %v65 = vld [vmem:[%s1 + $0xb0] sm:$0xff]
  %v66 = vld [vmem:[%s1 + $0xb8] sm:$0xff]
  %v67 = vld [vmem:[%s1 + $0xc0] sm:$0xff]
  %v68 = vld [vmem:[%s1 + $0xc8] sm:$0xff]
  %v69 = vld [vmem:[%s1 + $0xd0] sm:$0xff]
  %v70 = vld [vmem:[%s1 + $0xd8] sm:$0xff]
  %v71 = vld [vmem:[%s1 + $0xe0] sm:$0xff]
  %v72 = vld [vmem:[%s1 + $0xe8] sm:$0xff]
  %v73 = vld [vmem:[%s1 + $0xf0] sm:$0xff]
  %v74 = vld [vmem:[%s1 + $0xf8] sm:$0xff]
  %vm75 = vcmask 64512
  %v77 = vsel %vm75, %v11, 0
  %v80 = vsel %vm75, %v12, 0
  %v83 = vsel %vm75, %v13, 0
  %v86 = vsel %vm75, %v14, 0
  %v89 = vsel %vm75, %v15, 0
  %v92 = vsel %vm75, %v16, 0
  %v95 = vsel %vm75, %v17, 0
  %v98 = vsel %vm75, %v18, 0
  %v101 = vsel %vm75, %v19, 0
  %v104 = vsel %vm75, %v20, 0
  %v107 = vsel %vm75, %v21, 0
  %v110 = vsel %vm75, %v22, 0
  %v113 = vsel %vm75, %v23, 0
  %v116 = vsel %vm75, %v24, 0
  %v119 = vsel %vm75, %v25, 0
  %v122 = vsel %vm75, %v26, 0
  %v125 = vsel %vm75, %v27, 0
  %v128 = vsel %vm75, %v28, 0
  %v131 = vsel %vm75, %v29, 0
  %v134 = vsel %vm75, %v30, 0
  %v137 = vsel %vm75, %v31, 0
  %v140 = vsel %vm75, %v32, 0
  %v143 = vsel %vm75, %v33, 0
  %v146 = vsel %vm75, %v34, 0
  %v149 = vsel %vm75, %v35, 0
  %v152 = vsel %vm75, %v36, 0
  %v155 = vsel %vm75, %v37, 0
  %v158 = vsel %vm75, %v38, 0
  %v161 = vsel %vm75, %v39, 0
  %v164 = vsel %vm75, %v40, 0
  %v167 = vsel %vm75, %v41, 0
  %v170 = vsel %vm75, %v42, 0
  %v173 = vsel %vm75, %v43, 0
  %v176 = vsel %vm75, %v44, 0
  %v179 = vsel %vm75, %v45, 0
  %v182 = vsel %vm75, %v46, 0
  %v185 = vsel %vm75, %v47, 0
  %v188 = vsel %vm75, %v48, 0
  %v191 = vsel %vm75, %v49, 0
  %v194 = vsel %vm75, %v50, 0
  %v197 = vsel %vm75, %v51, 0
  %v200 = vsel %vm75, %v52, 0
  %v203 = vsel %vm75, %v53, 0
  %v206 = vsel %vm75, %v54, 0
  %v209 = vsel %vm75, %v55, 0
  %v212 = vsel %vm75, %v56, 0
  %v215 = vsel %vm75, %v57, 0
  %v218 = vsel %vm75, %v58, 0
  %v221 = vsel %vm75, %v59, 0
  %v224 = vsel %vm75, %v60, 0
  %v227 = vsel %vm75, %v61, 0
  %v230 = vsel %vm75, %v62, 0
  %v233 = vsel %vm75, %v63, 0
  %v236 = vsel %vm75, %v64, 0
  %v239 = vsel %vm75, %v65, 0
  %v242 = vsel %vm75, %v66, 0
  %v245 = vsel %vm75, %v67, 0
  %v248 = vsel %vm75, %v68, 0
  %v251 = vsel %vm75, %v69, 0
  %v254 = vsel %vm75, %v70, 0
  %v257 = vsel %vm75, %v71, 0
  %v260 = vsel %vm75, %v72, 0
  %v263 = vsel %vm75, %v73, 0
  %v266 = vsel %vm75, %v74, 0
  %268 = vmatprep.subr.mxu0 0.0
  %269 = vmatpush1.xpose.msra.mxu0 %v218
  %270 = vmatprep.subr.mxu0 0.0
  %271 = vmatpush1.xpose.msra.mxu0 %v215
  %272 = vmatprep.subr.mxu0 0.0
  %273 = vmatpush1.xpose.msra.mxu0 %v212
  %274 = vmatprep.subr.mxu0 0.0
  %275 = vmatpush1.xpose.msra.mxu0 %v209
  %276 = vmatprep.subr.mxu0 0.0
  %277 = vmatpush1.xpose.msra.mxu0 %v206
  %278 = vmatprep.subr.mxu0 0.0
  %279 = vmatpush1.xpose.msra.mxu0 %v203
  %280 = vmatprep.subr.mxu0 0.0
  %281 = vmatpush1.xpose.msra.mxu0 %v200
  %282 = vmatprep.subr.mxu0 0.0
  %283 = vmatpush1.xpose.msra.mxu0 %v197
  %284 = vmatprep.subr.mxu0 0.0
  %285 = vmatpush1.xpose.msra.mxu0 %v194
  %286 = vmatprep.subr.mxu0 0.0
  %287 = vmatpush1.xpose.msra.mxu0 %v191
  %288 = vmatprep.subr.mxu0 0.0
  %289 = vmatpush1.xpose.msra.mxu0 %v188
  %290 = vmatprep.subr.mxu0 0.0
  %291 = vmatpush1.xpose.msra.mxu0 %v185
  %292 = vmatprep.subr.mxu0 0.0
  %293 = vmatpush1.xpose.msra.mxu0 %v182
  %294 = vmatprep.subr.mxu0 0.0
  %295 = vmatpush1.xpose.msra.mxu0 %v179
  %296 = vmatprep.subr.mxu0 0.0
  %297 = vmatpush1.xpose.msra.mxu0 %v176
  %298 = vmatprep.subr.mxu0 0.0
  %299 = vmatpush1.xpose.msra.mxu0 %v173
  %300 = vmatprep.subr.mxu0 0.0
  %301 = vmatpush2.xpose.msra.mxu0 %v266
  %302 = vmatprep.subr.mxu0 0.0
  %303 = vmatpush2.xpose.msra.mxu0 %v263
  %304 = vmatprep.subr.mxu0 0.0
  %305 = vmatpush2.xpose.msra.mxu0 %v260
  %306 = vmatprep.subr.mxu0 0.0
  %307 = vmatpush2.xpose.msra.mxu0 %v257
  %308 = vmatprep.subr.mxu0 0.0
  %309 = vmatpush2.xpose.msra.mxu0 %v254
  %310 = vmatprep.subr.mxu0 0.0
  %311 = vmatpush2.xpose.msra.mxu0 %v251
  %312 = vmatprep.subr.mxu0 0.0
  %313 = vmatpush2.xpose.msra.mxu0 %v248
  %314 = vmatprep.subr.mxu0 0.0
  %315 = vmatpush2.xpose.msra.mxu0 %v245
  %316 = vmatprep.subr.mxu0 0.0
  %317 = vmatpush2.xpose.msra.mxu0 %v242
  %318 = vmatprep.subr.mxu0 0.0
  %319 = vmatpush2.xpose.msra.mxu0 %v239
  %320 = vmatprep.subr.mxu0 0.0
  %321 = vmatpush2.xpose.msra.mxu0 %v236
  %322 = vmatprep.subr.mxu0 0.0
  %323 = vmatpush2.xpose.msra.mxu0 %v233
  %324 = vmatprep.subr.mxu0 0.0
  %325 = vmatpush2.xpose.msra.mxu0 %v230
  %326 = vmatprep.subr.mxu0 0.0
  %327 = vmatpush2.xpose.msra.mxu0 %v227
  %328 = vmatprep.subr.mxu0 0.0
  %329 = vmatpush2.xpose.msra.mxu0 %v224
  %330 = vmatprep.subr.mxu0 0.0
  %331 = vmatpush2.xpose.msra.mxu0 %v221
  %332 = vmatprep.mubr.f32.mxu0 0.0
  %333 = vmatmul.mubr.f32.gmra.mxu0 %v77
  %v334 = vpop.f32.mrf.mxu0
  %v335 = vadd.f32 0.0, %v334
  %v336 = vpop.f32.mrf.mxu0
  %v337 = vadd.f32 0.0, %v336
  %338 = vmatprep.mubr.f32.mxu0 0.0
  %339 = vmatmul.mubr.f32.gmra.mxu0 %v80
  %v340 = vpop.f32.mrf.mxu0
  %v341 = vadd.f32 0.0, %v340
  %v342 = vpop.f32.mrf.mxu0
  %v343 = vadd.f32 0.0, %v342
  %344 = vmatprep.mubr.f32.mxu0 0.0
  %345 = vmatmul.mubr.f32.gmra.mxu0 %v83
  %v346 = vpop.f32.mrf.mxu0
  %v347 = vadd.f32 0.0, %v346
  %v348 = vpop.f32.mrf.mxu0
  %v349 = vadd.f32 0.0, %v348
  %350 = vmatprep.mubr.f32.mxu0 0.0
  %351 = vmatmul.mubr.f32.gmra.mxu0 %v86
  %v352 = vpop.f32.mrf.mxu0
  %v353 = vadd.f32 0.0, %v352
  %v354 = vpop.f32.mrf.mxu0
  %v355 = vadd.f32 0.0, %v354
  %356 = vmatprep.mubr.f32.mxu0 0.0
  %357 = vmatmul.mubr.f32.gmra.mxu0 %v89
  %v358 = vpop.f32.mrf.mxu0
  %v359 = vadd.f32 0.0, %v358
  %v360 = vpop.f32.mrf.mxu0
  %v361 = vadd.f32 0.0, %v360
  %362 = vmatprep.mubr.f32.mxu0 0.0
  %363 = vmatmul.mubr.f32.gmra.mxu0 %v92
  %v364 = vpop.f32.mrf.mxu0
  %v365 = vadd.f32 0.0, %v364
  %v366 = vpop.f32.mrf.mxu0
  %v367 = vadd.f32 0.0, %v366
  %368 = vmatprep.mubr.f32.mxu0 0.0
  %369 = vmatmul.mubr.f32.gmra.mxu0 %v95
  %v370 = vpop.f32.mrf.mxu0
  %v371 = vadd.f32 0.0, %v370
  %v372 = vpop.f32.mrf.mxu0
  %v373 = vadd.f32 0.0, %v372
  %374 = vmatprep.mubr.f32.mxu0 0.0
  %375 = vmatmul.mubr.f32.gmra.mxu0 %v98
  %v376 = vpop.f32.mrf.mxu0
  %v377 = vadd.f32 0.0, %v376
  %v378 = vpop.f32.mrf.mxu0
  %v379 = vadd.f32 0.0, %v378
  %380 = vmatprep.mubr.f32.mxu0 0.0
  %381 = vmatmul.mubr.f32.gmra.mxu0 %v101
  %v382 = vpop.f32.mrf.mxu0
  %v383 = vadd.f32 0.0, %v382
  %v384 = vpop.f32.mrf.mxu0
  %v385 = vadd.f32 0.0, %v384
  %386 = vmatprep.mubr.f32.mxu0 0.0
  %387 = vmatmul.mubr.f32.gmra.mxu0 %v104
  %v388 = vpop.f32.mrf.mxu0
  %v389 = vadd.f32 0.0, %v388
  %v390 = vpop.f32.mrf.mxu0
  %v391 = vadd.f32 0.0, %v390
  %392 = vmatprep.mubr.f32.mxu0 0.0
  %393 = vmatmul.mubr.f32.gmra.mxu0 %v107
  %v394 = vpop.f32.mrf.mxu0
  %v395 = vadd.f32 0.0, %v394
  %v396 = vpop.f32.mrf.mxu0
  %v397 = vadd.f32 0.0, %v396
  %398 = vmatprep.mubr.f32.mxu0 0.0
  %399 = vmatmul.mubr.f32.gmra.mxu0 %v110
  %v400 = vpop.f32.mrf.mxu0
  %v401 = vadd.f32 0.0, %v400
  %v402 = vpop.f32.mrf.mxu0
  %v403 = vadd.f32 0.0, %v402
  %404 = vmatprep.mubr.f32.mxu0 0.0
  %405 = vmatmul.mubr.f32.gmra.mxu0 %v113
  %v406 = vpop.f32.mrf.mxu0
  %v407 = vadd.f32 0.0, %v406
  %v408 = vpop.f32.mrf.mxu0
  %v409 = vadd.f32 0.0, %v408
  %410 = vmatprep.mubr.f32.mxu0 0.0
  %411 = vmatmul.mubr.f32.gmra.mxu0 %v116
  %v412 = vpop.f32.mrf.mxu0
  %v413 = vadd.f32 0.0, %v412
  %v414 = vpop.f32.mrf.mxu0
  %v415 = vadd.f32 0.0, %v414
  %416 = vmatprep.mubr.f32.mxu0 0.0
  %417 = vmatmul.mubr.f32.gmra.mxu0 %v119
  %v418 = vpop.f32.mrf.mxu0
  %v419 = vadd.f32 0.0, %v418
  %v420 = vpop.f32.mrf.mxu0
  %v421 = vadd.f32 0.0, %v420
  %422 = vmatprep.mubr.f32.mxu0 0.0
  %423 = vmatmul.mubr.f32.gmra.mxu0 %v122
  %v424 = vpop.f32.mrf.mxu0
  %v425 = vadd.f32 0.0, %v424
  %v426 = vpop.f32.mrf.mxu0
  %v427 = vadd.f32 0.0, %v426
  %428 = vmatprep.mubr.f32.mxu0 0.0
  %429 = vmatmul.mubr.f32.gmra.mxu0 %v125
  %v430 = vpop.f32.mrf.mxu0
  %v431 = vadd.f32 0.0, %v430
  %v432 = vpop.f32.mrf.mxu0
  %v433 = vadd.f32 0.0, %v432
  %434 = vmatprep.mubr.f32.mxu0 0.0
  %435 = vmatmul.mubr.f32.gmra.mxu0 %v128
  %v436 = vpop.f32.mrf.mxu0
  %v437 = vadd.f32 0.0, %v436
  %v438 = vpop.f32.mrf.mxu0
  %v439 = vadd.f32 0.0, %v438
  %440 = vmatprep.mubr.f32.mxu0 0.0
  %441 = vmatmul.mubr.f32.gmra.mxu0 %v131
  %v442 = vpop.f32.mrf.mxu0
  %v443 = vadd.f32 0.0, %v442
  %v444 = vpop.f32.mrf.mxu0
  %v445 = vadd.f32 0.0, %v444
  %446 = vmatprep.mubr.f32.mxu0 0.0
  %447 = vmatmul.mubr.f32.gmra.mxu0 %v134
  %v448 = vpop.f32.mrf.mxu0
  %v449 = vadd.f32 0.0, %v448
  %v450 = vpop.f32.mrf.mxu0
  %v451 = vadd.f32 0.0, %v450
  %452 = vmatprep.mubr.f32.mxu0 0.0
  %453 = vmatmul.mubr.f32.gmra.mxu0 %v137
  %v454 = vpop.f32.mrf.mxu0
  %v455 = vadd.f32 0.0, %v454
  %v456 = vpop.f32.mrf.mxu0
  %v457 = vadd.f32 0.0, %v456
  %458 = vmatprep.mubr.f32.mxu0 0.0
  %459 = vmatmul.mubr.f32.gmra.mxu0 %v140
  %v460 = vpop.f32.mrf.mxu0
  %v461 = vadd.f32 0.0, %v460
  %v462 = vpop.f32.mrf.mxu0
  %v463 = vadd.f32 0.0, %v462
  %464 = vmatprep.mubr.f32.mxu0 0.0
  %465 = vmatmul.mubr.f32.gmra.mxu0 %v143
  %v466 = vpop.f32.mrf.mxu0
  %v467 = vadd.f32 0.0, %v466
  %v468 = vpop.f32.mrf.mxu0
  %v469 = vadd.f32 0.0, %v468
  %470 = vmatprep.mubr.f32.mxu0 0.0
  %471 = vmatmul.mubr.f32.gmra.mxu0 %v146
  %v472 = vpop.f32.mrf.mxu0
  %v473 = vadd.f32 0.0, %v472
  %v474 = vpop.f32.mrf.mxu0
  %v475 = vadd.f32 0.0, %v474
  %476 = vmatprep.mubr.f32.mxu0 0.0
  %477 = vmatmul.mubr.f32.gmra.mxu0 %v149
  %v478 = vpop.f32.mrf.mxu0
  %v479 = vadd.f32 0.0, %v478
  %v480 = vpop.f32.mrf.mxu0
  %v481 = vadd.f32 0.0, %v480
  %482 = vmatprep.mubr.f32.mxu0 0.0
  %483 = vmatmul.mubr.f32.gmra.mxu0 %v152
  %v484 = vpop.f32.mrf.mxu0
  %v485 = vadd.f32 0.0, %v484
  %v486 = vpop.f32.mrf.mxu0
  %v487 = vadd.f32 0.0, %v486
  %488 = vmatprep.mubr.f32.mxu0 0.0
  %489 = vmatmul.mubr.f32.gmra.mxu0 %v155
  %v490 = vpop.f32.mrf.mxu0
  %v491 = vadd.f32 0.0, %v490
  %v492 = vpop.f32.mrf.mxu0
  %v493 = vadd.f32 0.0, %v492
  %494 = vmatprep.mubr.f32.mxu0 0.0
  %495 = vmatmul.mubr.f32.gmra.mxu0 %v158
  %v496 = vpop.f32.mrf.mxu0
  %v497 = vadd.f32 0.0, %v496
  %v498 = vpop.f32.mrf.mxu0
  %v499 = vadd.f32 0.0, %v498
  %500 = vmatprep.mubr.f32.mxu0 0.0
  %501 = vmatmul.mubr.f32.gmra.mxu0 %v161
  %v502 = vpop.f32.mrf.mxu0
  %v503 = vadd.f32 0.0, %v502
  %v504 = vpop.f32.mrf.mxu0
  %v505 = vadd.f32 0.0, %v504
  %506 = vmatprep.mubr.f32.mxu0 0.0
  %507 = vmatmul.mubr.f32.gmra.mxu0 %v164
  %v508 = vpop.f32.mrf.mxu0
  %v509 = vadd.f32 0.0, %v508
  %v510 = vpop.f32.mrf.mxu0
  %v511 = vadd.f32 0.0, %v510
  %512 = vmatprep.mubr.f32.mxu0 0.0
  %513 = vmatmul.mubr.f32.gmra.mxu0 %v167
  %v514 = vpop.f32.mrf.mxu0
  %v515 = vadd.f32 0.0, %v514
  %v516 = vpop.f32.mrf.mxu0
  %v517 = vadd.f32 0.0, %v516
  %518 = vmatprep.mubr.f32.mxu0 0.0
  %519 = vmatmul.mubr.f32.gmra.mxu0 %v170
  %v520 = vpop.f32.mrf.mxu0
  %v521 = vadd.f32 0.0, %v520
  %v522 = vpop.f32.mrf.mxu0
  %v523 = vadd.f32 0.0, %v522
  %524 = vdwg.mxu0
  %v525 = vxor.u32 %v335, 2147483648
  %v526 = vxor.u32 %v337, 2147483648
  %v527 = vxor.u32 %v341, 2147483648
  %v528 = vxor.u32 %v343, 2147483648
  %v529 = vxor.u32 %v347, 2147483648
  %v530 = vxor.u32 %v349, 2147483648
  %v531 = vxor.u32 %v353, 2147483648
  %v532 = vxor.u32 %v355, 2147483648
  %v533 = vxor.u32 %v359, 2147483648
  %v534 = vxor.u32 %v361, 2147483648
  %v535 = vxor.u32 %v365, 2147483648
  %v536 = vxor.u32 %v367, 2147483648
  %v537 = vxor.u32 %v371, 2147483648
  %v538 = vxor.u32 %v373, 2147483648
  %v539 = vxor.u32 %v377, 2147483648
  %v540 = vxor.u32 %v379, 2147483648
  %v541 = vxor.u32 %v383, 2147483648
  %v542 = vxor.u32 %v385, 2147483648
  %v543 = vxor.u32 %v389, 2147483648
  %v544 = vxor.u32 %v391, 2147483648
  %v545 = vxor.u32 %v395, 2147483648
  %v546 = vxor.u32 %v397, 2147483648
  %v547 = vxor.u32 %v401, 2147483648
  %v548 = vxor.u32 %v403, 2147483648
  %v549 = vxor.u32 %v407, 2147483648
  %v550 = vxor.u32 %v409, 2147483648
  %v551 = vxor.u32 %v413, 2147483648
  %v552 = vxor.u32 %v415, 2147483648
  %v553 = vxor.u32 %v419, 2147483648
  %v554 = vxor.u32 %v421, 2147483648
  %v555 = vxor.u32 %v425, 2147483648
  %v556 = vxor.u32 %v427, 2147483648
  %v557 = vxor.u32 %v431, 2147483648
  %v558 = vxor.u32 %v433, 2147483648
  %v559 = vxor.u32 %v437, 2147483648
  %v560 = vxor.u32 %v439, 2147483648
  %v561 = vxor.u32 %v443, 2147483648
  %v562 = vxor.u32 %v445, 2147483648
  %v563 = vxor.u32 %v449, 2147483648
  %v564 = vxor.u32 %v451, 2147483648
  %v565 = vxor.u32 %v455, 2147483648
  %v566 = vxor.u32 %v457, 2147483648
  %v567 = vxor.u32 %v461, 2147483648
  %v568 = vxor.u32 %v463, 2147483648
  %v569 = vxor.u32 %v467, 2147483648
  %v570 = vxor.u32 %v469, 2147483648
  %v571 = vxor.u32 %v473, 2147483648
  %v572 = vxor.u32 %v475, 2147483648
  %v573 = vxor.u32 %v479, 2147483648
  %v574 = vxor.u32 %v481, 2147483648
  %v575 = vxor.u32 %v485, 2147483648
  %v576 = vxor.u32 %v487, 2147483648
  %v577 = vxor.u32 %v491, 2147483648
  %v578 = vxor.u32 %v493, 2147483648
  %v579 = vxor.u32 %v497, 2147483648
  %v580 = vxor.u32 %v499, 2147483648
  %v581 = vxor.u32 %v503, 2147483648
  %v582 = vxor.u32 %v505, 2147483648
  %v583 = vxor.u32 %v509, 2147483648
  %v584 = vxor.u32 %v511, 2147483648
  %v585 = vxor.u32 %v515, 2147483648
  %v586 = vxor.u32 %v517, 2147483648
  %v587 = vxor.u32 %v521, 2147483648
  %v588 = vxor.u32 %v523, 2147483648
  %v589 = vmul.f32 %v525, 1.442695
  %v590 = vpow.pop %v589
  %v591 = vmul.f32 %v526, 1.442695
  %v592 = vpow.pop %v591
  %v593 = vmul.f32 %v527, 1.442695
  %v594 = vpow.pop %v593
  %v595 = vmul.f32 %v528, 1.442695
  %v596 = vpow.pop %v595
  %v597 = vmul.f32 %v529, 1.442695
  %v598 = vpow.pop %v597
  %v599 = vmul.f32 %v530, 1.442695
  %v600 = vpow.pop %v599
  %v601 = vmul.f32 %v531, 1.442695
  %v602 = vpow.pop %v601
  %v603 = vmul.f32 %v532, 1.442695
  %v604 = vpow.pop %v603
  %v605 = vmul.f32 %v533, 1.442695
  %v606 = vpow.pop %v605
  %v607 = vmul.f32 %v534, 1.442695
  %v608 = vpow.pop %v607
  %v609 = vmul.f32 %v535, 1.442695
  %v610 = vpow.pop %v609
  %v611 = vmul.f32 %v536, 1.442695
  %v612 = vpow.pop %v611
  %v613 = vmul.f32 %v537, 1.442695
  %v614 = vpow.pop %v613
  %v615 = vmul.f32 %v538, 1.442695
  %v616 = vpow.pop %v615
  %v617 = vmul.f32 %v539, 1.442695
  %v618 = vpow.pop %v617
  %v619 = vmul.f32 %v540, 1.442695
  %v620 = vpow.pop %v619
  %v621 = vmul.f32 %v541, 1.442695
  %v622 = vpow.pop %v621
  %v623 = vmul.f32 %v542, 1.442695
  %v624 = vpow.pop %v623
  %v625 = vmul.f32 %v543, 1.442695
  %v626 = vpow.pop %v625
  %v627 = vmul.f32 %v544, 1.442695
  %v628 = vpow.pop %v627
  %v629 = vmul.f32 %v545, 1.442695
  %v630 = vpow.pop %v629
  %v631 = vmul.f32 %v546, 1.442695
  %v632 = vpow.pop %v631
  %v633 = vmul.f32 %v547, 1.442695
  %v634 = vpow.pop %v633
  %v635 = vmul.f32 %v548, 1.442695
  %v636 = vpow.pop %v635
  %v637 = vmul.f32 %v549, 1.442695
  %v638 = vpow.pop %v637
  %v639 = vmul.f32 %v550, 1.442695
  %v640 = vpow.pop %v639
  %v641 = vmul.f32 %v551, 1.442695
  %v642 = vpow.pop %v641
  %v643 = vmul.f32 %v552, 1.442695
  %v644 = vpow.pop %v643
  %v645 = vmul.f32 %v553, 1.442695
  %v646 = vpow.pop %v645
  %v647 = vmul.f32 %v554, 1.442695
  %v648 = vpow.pop %v647
  %v649 = vmul.f32 %v555, 1.442695
  %v650 = vpow.pop %v649
  %v651 = vmul.f32 %v556, 1.442695
  %v652 = vpow.pop %v651
  %v653 = vmul.f32 %v557, 1.442695
  %v654 = vpow.pop %v653
  %v655 = vmul.f32 %v558, 1.442695
  %v656 = vpow.pop %v655
  %v657 = vmul.f32 %v559, 1.442695
  %v658 = vpow.pop %v657
  %v659 = vmul.f32 %v560, 1.442695
  %v660 = vpow.pop %v659
  %v661 = vmul.f32 %v561, 1.442695
  %v662 = vpow.pop %v661
  %v663 = vmul.f32 %v562, 1.442695
  %v664 = vpow.pop %v663
  %v665 = vmul.f32 %v563, 1.442695
  %v666 = vpow.pop %v665
  %v667 = vmul.f32 %v564, 1.442695
  %v668 = vpow.pop %v667
  %v669 = vmul.f32 %v565, 1.442695
  %v670 = vpow.pop %v669
  %v671 = vmul.f32 %v566, 1.442695
  %v672 = vpow.pop %v671
  %v673 = vmul.f32 %v567, 1.442695
  %v674 = vpow.pop %v673
  %v675 = vmul.f32 %v568, 1.442695
  %v676 = vpow.pop %v675
  %v677 = vmul.f32 %v569, 1.442695
  %v678 = vpow.pop %v677
  %v679 = vmul.f32 %v570, 1.442695
  %v680 = vpow.pop %v679
  %v681 = vmul.f32 %v571, 1.442695
  %v682 = vpow.pop %v681
  %v683 = vmul.f32 %v572, 1.442695
  %v684 = vpow.pop %v683
  %v685 = vmul.f32 %v573, 1.442695
  %v686 = vpow.pop %v685
  %v687 = vmul.f32 %v574, 1.442695
  %v688 = vpow.pop %v687
  %v689 = vmul.f32 %v575, 1.442695
  %v690 = vpow.pop %v689
  %v691 = vmul.f32 %v576, 1.442695
  %v692 = vpow.pop %v691
  %v693 = vmul.f32 %v577, 1.442695
  %v694 = vpow.pop %v693
  %v695 = vmul.f32 %v578, 1.442695
  %v696 = vpow.pop %v695
  %v697 = vmul.f32 %v579, 1.442695
  %v698 = vpow.pop %v697
  %v699 = vmul.f32 %v580, 1.442695
  %v700 = vpow.pop %v699
  %v701 = vmul.f32 %v581, 1.442695
  %v702 = vpow.pop %v701
  %v703 = vmul.f32 %v582, 1.442695
  %v704 = vpow.pop %v703
  %v705 = vmul.f32 %v583, 1.442695
  %v706 = vpow.pop %v705
  %v707 = vmul.f32 %v584, 1.442695
  %v708 = vpow.pop %v707
  %v709 = vmul.f32 %v585, 1.442695
  %v710 = vpow.pop %v709
  %v711 = vmul.f32 %v586, 1.442695
  %v712 = vpow.pop %v711
  %v713 = vmul.f32 %v587, 1.442695
  %v714 = vpow.pop %v713
  %v715 = vmul.f32 %v588, 1.442695
  %v716 = vpow.pop %v715
  %v717 = vadd.f32 %v590, 1.0
  %v718 = vadd.f32 %v592, 1.0
  %v719 = vadd.f32 %v594, 1.0
  %v720 = vadd.f32 %v596, 1.0
  %v721 = vadd.f32 %v598, 1.0
  %v722 = vadd.f32 %v600, 1.0
  %v723 = vadd.f32 %v602, 1.0
  %v724 = vadd.f32 %v604, 1.0
  %v725 = vadd.f32 %v606, 1.0
  %v726 = vadd.f32 %v608, 1.0
  %v727 = vadd.f32 %v610, 1.0
  %v728 = vadd.f32 %v612, 1.0
  %v729 = vadd.f32 %v614, 1.0
  %v730 = vadd.f32 %v616, 1.0
  %v731 = vadd.f32 %v618, 1.0
  %v732 = vadd.f32 %v620, 1.0
  %v733 = vadd.f32 %v622, 1.0
  %v734 = vadd.f32 %v624, 1.0
  %v735 = vadd.f32 %v626, 1.0
  %v736 = vadd.f32 %v628, 1.0
  %v737 = vadd.f32 %v630, 1.0
  %v738 = vadd.f32 %v632, 1.0
  %v739 = vadd.f32 %v634, 1.0
  %v740 = vadd.f32 %v636, 1.0
  %v741 = vadd.f32 %v638, 1.0
  %v742 = vadd.f32 %v640, 1.0
  %v743 = vadd.f32 %v642, 1.0
  %v744 = vadd.f32 %v644, 1.0
  %v745 = vadd.f32 %v646, 1.0
  %v746 = vadd.f32 %v648, 1.0
  %v747 = vadd.f32 %v650, 1.0
  %v748 = vadd.f32 %v652, 1.0
  %v749 = vadd.f32 %v654, 1.0
  %v750 = vadd.f32 %v656, 1.0
  %v751 = vadd.f32 %v658, 1.0
  %v752 = vadd.f32 %v660, 1.0
  %v753 = vadd.f32 %v662, 1.0
  %v754 = vadd.f32 %v664, 1.0
  %v755 = vadd.f32 %v666, 1.0
  %v756 = vadd.f32 %v668, 1.0
  %v757 = vadd.f32 %v670, 1.0
  %v758 = vadd.f32 %v672, 1.0
  %v759 = vadd.f32 %v674, 1.0
  %v760 = vadd.f32 %v676, 1.0
  %v761 = vadd.f32 %v678, 1.0
  %v762 = vadd.f32 %v680, 1.0
  %v763 = vadd.f32 %v682, 1.0
  %v764 = vadd.f32 %v684, 1.0
  %v765 = vadd.f32 %v686, 1.0
  %v766 = vadd.f32 %v688, 1.0
  %v767 = vadd.f32 %v690, 1.0
  %v768 = vadd.f32 %v692, 1.0
  %v769 = vadd.f32 %v694, 1.0
  %v770 = vadd.f32 %v696, 1.0
  %v771 = vadd.f32 %v698, 1.0
  %v772 = vadd.f32 %v700, 1.0
  %v773 = vadd.f32 %v702, 1.0
  %v774 = vadd.f32 %v704, 1.0
  %v775 = vadd.f32 %v706, 1.0
  %v776 = vadd.f32 %v708, 1.0
  %v777 = vadd.f32 %v710, 1.0
  %v778 = vadd.f32 %v712, 1.0
  %v779 = vadd.f32 %v714, 1.0
  %v780 = vadd.f32 %v716, 1.0
  %v781 = vrcp.pop %v717
  %v782 = vmul.f32 1.0, %v781
  %v783 = vrcp.pop %v718
  %v784 = vmul.f32 1.0, %v783
  %v785 = vrcp.pop %v719
  %v786 = vmul.f32 1.0, %v785
  %v787 = vrcp.pop %v720
  %v788 = vmul.f32 1.0, %v787
  %v789 = vrcp.pop %v721
  %v790 = vmul.f32 1.0, %v789
  %v791 = vrcp.pop %v722
  %v792 = vmul.f32 1.0, %v791
  %v793 = vrcp.pop %v723
  %v794 = vmul.f32 1.0, %v793
  %v795 = vrcp.pop %v724
  %v796 = vmul.f32 1.0, %v795
  %v797 = vrcp.pop %v725
  %v798 = vmul.f32 1.0, %v797
  %v799 = vrcp.pop %v726
  %v800 = vmul.f32 1.0, %v799
  %v801 = vrcp.pop %v727
  %v802 = vmul.f32 1.0, %v801
  %v803 = vrcp.pop %v728
  %v804 = vmul.f32 1.0, %v803
  %v805 = vrcp.pop %v729
  %v806 = vmul.f32 1.0, %v805
  %v807 = vrcp.pop %v730
  %v808 = vmul.f32 1.0, %v807
  %v809 = vrcp.pop %v731
  %v810 = vmul.f32 1.0, %v809
  %v811 = vrcp.pop %v732
  %v812 = vmul.f32 1.0, %v811
  %v813 = vrcp.pop %v733
  %v814 = vmul.f32 1.0, %v813
  %v815 = vrcp.pop %v734
  %v816 = vmul.f32 1.0, %v815
  %v817 = vrcp.pop %v735
  %v818 = vmul.f32 1.0, %v817
  %v819 = vrcp.pop %v736
  %v820 = vmul.f32 1.0, %v819
  %v821 = vrcp.pop %v737
  %v822 = vmul.f32 1.0, %v821
  %v823 = vrcp.pop %v738
  %v824 = vmul.f32 1.0, %v823
  %v825 = vrcp.pop %v739
  %v826 = vmul.f32 1.0, %v825
  %v827 = vrcp.pop %v740
  %v828 = vmul.f32 1.0, %v827
  %v829 = vrcp.pop %v741
  %v830 = vmul.f32 1.0, %v829
  %v831 = vrcp.pop %v742
  %v832 = vmul.f32 1.0, %v831
  %v833 = vrcp.pop %v743
  %v834 = vmul.f32 1.0, %v833
  %v835 = vrcp.pop %v744
  %v836 = vmul.f32 1.0, %v835
  %v837 = vrcp.pop %v745
  %v838 = vmul.f32 1.0, %v837
  %v839 = vrcp.pop %v746
  %v840 = vmul.f32 1.0, %v839
  %v841 = vrcp.pop %v747
  %v842 = vmul.f32 1.0, %v841
  %v843 = vrcp.pop %v748
  %v844 = vmul.f32 1.0, %v843
  %v845 = vrcp.pop %v749
  %v846 = vmul.f32 1.0, %v845
  %v847 = vrcp.pop %v750
  %v848 = vmul.f32 1.0, %v847
  %v849 = vrcp.pop %v751
  %v850 = vmul.f32 1.0, %v849
  %v851 = vrcp.pop %v752
  %v852 = vmul.f32 1.0, %v851
  %v853 = vrcp.pop %v753
  %v854 = vmul.f32 1.0, %v853
  %v855 = vrcp.pop %v754
  %v856 = vmul.f32 1.0, %v855
  %v857 = vrcp.pop %v755
  %v858 = vmul.f32 1.0, %v857
  %v859 = vrcp.pop %v756
  %v860 = vmul.f32 1.0, %v859
  %v861 = vrcp.pop %v757
  %v862 = vmul.f32 1.0, %v861
  %v863 = vrcp.pop %v758
  %v864 = vmul.f32 1.0, %v863
  %v865 = vrcp.pop %v759
  %v866 = vmul.f32 1.0, %v865
  %v867 = vrcp.pop %v760
  %v868 = vmul.f32 1.0, %v867
  %v869 = vrcp.pop %v761
  %v870 = vmul.f32 1.0, %v869
  %v871 = vrcp.pop %v762
  %v872 = vmul.f32 1.0, %v871
  %v873 = vrcp.pop %v763
  %v874 = vmul.f32 1.0, %v873
  %v875 = vrcp.pop %v764
  %v876 = vmul.f32 1.0, %v875
  %v877 = vrcp.pop %v765
  %v878 = vmul.f32 1.0, %v877
  %v879 = vrcp.pop %v766
  %v880 = vmul.f32 1.0, %v879
  %v881 = vrcp.pop %v767
  %v882 = vmul.f32 1.0, %v881
  %v883 = vrcp.pop %v768
  %v884 = vmul.f32 1.0, %v883
  %v885 = vrcp.pop %v769
  %v886 = vmul.f32 1.0, %v885
  %v887 = vrcp.pop %v770
  %v888 = vmul.f32 1.0, %v887
  %v889 = vrcp.pop %v771
  %v890 = vmul.f32 1.0, %v889
  %v891 = vrcp.pop %v772
  %v892 = vmul.f32 1.0, %v891
  %v893 = vrcp.pop %v773
  %v894 = vmul.f32 1.0, %v893
  %v895 = vrcp.pop %v774
  %v896 = vmul.f32 1.0, %v895
  %v897 = vrcp.pop %v775
  %v898 = vmul.f32 1.0, %v897
  %v899 = vrcp.pop %v776
  %v900 = vmul.f32 1.0, %v899
  %v901 = vrcp.pop %v777
  %v902 = vmul.f32 1.0, %v901
  %v903 = vrcp.pop %v778
  %v904 = vmul.f32 1.0, %v903
  %v905 = vrcp.pop %v779
  %v906 = vmul.f32 1.0, %v905
  %v907 = vrcp.pop %v780
  %v908 = vmul.f32 1.0, %v907
  %909 = vst [vmem:[%s2] sm:$0xff] %v782
  %910 = vst [vmem:[%s2 + $0x8] sm:$0xff] %v784
  %911 = vst [vmem:[%s2 + $0x10] sm:$0xff] %v786
  %912 = vst [vmem:[%s2 + $0x18] sm:$0xff] %v788
  %913 = vst [vmem:[%s2 + $0x20] sm:$0xff] %v790
  %914 = vst [vmem:[%s2 + $0x28] sm:$0xff] %v792
  %915 = vst [vmem:[%s2 + $0x30] sm:$0xff] %v794
  %916 = vst [vmem:[%s2 + $0x38] sm:$0xff] %v796
  %917 = vst [vmem:[%s2 + $0x40] sm:$0xff] %v798
  %918 = vst [vmem:[%s2 + $0x48] sm:$0xff] %v800
  %919 = vst [vmem:[%s2 + $0x50] sm:$0xff] %v802
  %920 = vst [vmem:[%s2 + $0x58] sm:$0xff] %v804
  %921 = vst [vmem:[%s2 + $0x60] sm:$0xff] %v806
  %922 = vst [vmem:[%s2 + $0x68] sm:$0xff] %v808
  %923 = vst [vmem:[%s2 + $0x70] sm:$0xff] %v810
  %924 = vst [vmem:[%s2 + $0x78] sm:$0xff] %v812
  %925 = vst [vmem:[%s2 + $0x80] sm:$0xff] %v814
  %926 = vst [vmem:[%s2 + $0x88] sm:$0xff] %v816
  %927 = vst [vmem:[%s2 + $0x90] sm:$0xff] %v818
  %928 = vst [vmem:[%s2 + $0x98] sm:$0xff] %v820
  %929 = vst [vmem:[%s2 + $0xa0] sm:$0xff] %v822
  %930 = vst [vmem:[%s2 + $0xa8] sm:$0xff] %v824
  %931 = vst [vmem:[%s2 + $0xb0] sm:$0xff] %v826
  %932 = vst [vmem:[%s2 + $0xb8] sm:$0xff] %v828
  %933 = vst [vmem:[%s2 + $0xc0] sm:$0xff] %v830
  %934 = vst [vmem:[%s2 + $0xc8] sm:$0xff] %v832
  %935 = vst [vmem:[%s2 + $0xd0] sm:$0xff] %v834
  %936 = vst [vmem:[%s2 + $0xd8] sm:$0xff] %v836
  %937 = vst [vmem:[%s2 + $0xe0] sm:$0xff] %v838
  %938 = vst [vmem:[%s2 + $0xe8] sm:$0xff] %v840
  %939 = vst [vmem:[%s2 + $0xf0] sm:$0xff] %v842
  %940 = vst [vmem:[%s2 + $0xf8] sm:$0xff] %v844
  %941 = vst [vmem:[%s2 + $0x100] sm:$0xff] %v846
  %942 = vst [vmem:[%s2 + $0x108] sm:$0xff] %v848
  %943 = vst [vmem:[%s2 + $0x110] sm:$0xff] %v850
  %944 = vst [vmem:[%s2 + $0x118] sm:$0xff] %v852
  %945 = vst [vmem:[%s2 + $0x120] sm:$0xff] %v854
  %946 = vst [vmem:[%s2 + $0x128] sm:$0xff] %v856
  %947 = vst [vmem:[%s2 + $0x130] sm:$0xff] %v858
  %948 = vst [vmem:[%s2 + $0x138] sm:$0xff] %v860
  %949 = vst [vmem:[%s2 + $0x140] sm:$0xff] %v862
  %950 = vst [vmem:[%s2 + $0x148] sm:$0xff] %v864
  %951 = vst [vmem:[%s2 + $0x150] sm:$0xff] %v866
  %952 = vst [vmem:[%s2 + $0x158] sm:$0xff] %v868
  %953 = vst [vmem:[%s2 + $0x160] sm:$0xff] %v870
  %954 = vst [vmem:[%s2 + $0x168] sm:$0xff] %v872
  %955 = vst [vmem:[%s2 + $0x170] sm:$0xff] %v874
  %956 = vst [vmem:[%s2 + $0x178] sm:$0xff] %v876
  %957 = vst [vmem:[%s2 + $0x180] sm:$0xff] %v878
  %958 = vst [vmem:[%s2 + $0x188] sm:$0xff] %v880
  %959 = vst [vmem:[%s2 + $0x190] sm:$0xff] %v882
  %960 = vst [vmem:[%s2 + $0x198] sm:$0xff] %v884
  %961 = vst [vmem:[%s2 + $0x1a0] sm:$0xff] %v886
  %962 = vst [vmem:[%s2 + $0x1a8] sm:$0xff] %v888
  %963 = vst [vmem:[%s2 + $0x1b0] sm:$0xff] %v890
  %964 = vst [vmem:[%s2 + $0x1b8] sm:$0xff] %v892
  %965 = vst [vmem:[%s2 + $0x1c0] sm:$0xff] %v894
  %966 = vst [vmem:[%s2 + $0x1c8] sm:$0xff] %v896
  %967 = vst [vmem:[%s2 + $0x1d0] sm:$0xff] %v898
  %968 = vst [vmem:[%s2 + $0x1d8] sm:$0xff] %v900
  %969 = vst [vmem:[%s2 + $0x1e0] sm:$0xff] %v902
  %970 = vst [vmem:[%s2 + $0x1e8] sm:$0xff] %v904
  %971 = vst [vmem:[%s2 + $0x1f0] sm:$0xff] %v906
  %972 = vst [vmem:[%s2 + $0x1f8] sm:$0xff] %v908
  // Predicated region
  $region10: #{comga_forward.19} parent=0 // pred_check
    _
  $region11: #{comga_forward.19} parent=0 // pred_check_branch
    %974 = sbr.rel (0) target = $region13
  $region12: #{comga_forward.19} parent=0 // pred_region
    _
  $region13: #{comga_forward.19} parent=0 // pred_fallthru
    _
  // Predicated region
  $region14: #{comga_forward.19} parent=0 // pred_check
    _
  $region15: #{comga_forward.19} parent=0 // pred_check_branch
    %976 = sbr.rel (0) target = $region17
  $region16: #{comga_forward.19} parent=0 // pred_region
    _
  $region17: #{comga_forward.19} parent=0 // pred_fallthru
    _

// kernel: comga_forward.18
$region0: #{comga_forward.18}
  #allocation0 [shape = 'u32[]', space=smem, size = 0x4, offset = 0x4, fixed_abs, tag = 'smem constant byte address 0x4 - core index']
  #allocation1 [shape = 'u32[144,128]{1,0:T(1,128)}', space=vmem, size = 0x12000, scoped, tag = 'internal scratch']
  #allocation2 [shape = 'f32[256,24]{1,0:T(8,128)}', space=vmem, size = 0x20000, scoped, tag = 'scratch operand']
  %s0 = inlined_call_operand.vmem [shape: bf16[256,256], index: 0, kind: input, shape index: {}]
  %s1 = inlined_call_operand.vmem [shape: f32[256,32], index: 1, kind: input, shape index: {}]
  %s2 = inlined_call_operand.vmem [shape: bf16[32,24], index: 2, kind: input, shape index: {}]
  %s3 = inlined_call_operand.vmem [shape: f32[1,24], index: 3, kind: input, shape index: {}]
  %s4 = inlined_call_operand.vmem [shape: f32[256,24], index: 4, kind: output, shape index: {}]
  %s5 = sld [smem:[#allocation0]]
  $region34: #{comga_forward.18} parent=0
    _
  %s7 = ssub.s32 1, %s5
  %s8 = scalar_select 0, %s7, %s5
  // Predicated region
  $region2: #{comga_forward.18} parent=0 // pred_check
    _
  $region3: #{comga_forward.18} parent=0 // pred_check_branch
    %10 = sbr.rel (0) target = $region5
  $region4: #{comga_forward.18} parent=0 // pred_region
    _
  $region5: #{comga_forward.18} parent=0 // pred_fallthru
    _
  // Predicated region
  $region6: #{comga_forward.18} parent=0 // pred_check
    _
  $region7: #{comga_forward.18} parent=0 // pred_check_branch
    %12 = sbr.rel (0) target = $region9
  $region8: #{comga_forward.18} parent=0 // pred_region
    _
  $region9: #{comga_forward.18} parent=0 // pred_fallthru
    _
  // Predicated region
  $region10: #{comga_forward.18} parent=0 // pred_check
    _
  $region11: #{comga_forward.18} parent=0 // pred_check_branch
    %14 = sbr.rel (0) target = $region13
  $region12: #{comga_forward.18} parent=0 // pred_region
    _
  $region13: #{comga_forward.18} parent=0 // pred_fallthru
    _
  // Predicated region
  $region14: #{comga_forward.18} parent=0 // pred_check
    _
  $region15: #{comga_forward.18} parent=0 // pred_check_branch
    %16 = sbr.rel (0) target = $region17
  $region16: #{comga_forward.18} parent=0 // pred_region
    _
  $region17: #{comga_forward.18} parent=0 // pred_fallthru
    _
  %p18 = scmp.eq.s32.totalorder 0, 0
  // Predicated region
  $region18: #{comga_forward.18} parent=0 // pred_check
    %p19 = pneg %p18
  $region19: #{comga_forward.18} parent=0 // pred_check_branch
    %21 = sbr.rel (%p19) target = $region21
  $region20: #{comga_forward.18} parent=0 // pred_region
    %vm22 = vcmask 195584
    %23 = vst.msk [vmem:[#allocation2] sm:$0xff] %vm22, 0.0
    %24 = vst.msk [vmem:[#allocation2 + $0x8] sm:$0xff] %vm22, 0.0
    %25 = vst.msk [vmem:[#allocation2 + $0x10] sm:$0xff] %vm22, 0.0
    %26 = vst.msk [vmem:[#allocation2 + $0x18] sm:$0xff] %vm22, 0.0
    %27 = vst.msk [vmem:[#allocation2 + $0x20] sm:$0xff] %vm22, 0.0
    %28 = vst.msk [vmem:[#allocation2 + $0x28] sm:$0xff] %vm22, 0.0
    %29 = vst.msk [vmem:[#allocation2 + $0x30] sm:$0xff] %vm22, 0.0
    %30 = vst.msk [vmem:[#allocation2 + $0x38] sm:$0xff] %vm22, 0.0
    %31 = vst.msk [vmem:[#allocation2 + $0x40] sm:$0xff] %vm22, 0.0
    %32 = vst.msk [vmem:[#allocation2 + $0x48] sm:$0xff] %vm22, 0.0
    %33 = vst.msk [vmem:[#allocation2 + $0x50] sm:$0xff] %vm22, 0.0
    %34 = vst.msk [vmem:[#allocation2 + $0x58] sm:$0xff] %vm22, 0.0
    %35 = vst.msk [vmem:[#allocation2 + $0x60] sm:$0xff] %vm22, 0.0
    %36 = vst.msk [vmem:[#allocation2 + $0x68] sm:$0xff] %vm22, 0.0
    %37 = vst.msk [vmem:[#allocation2 + $0x70] sm:$0xff] %vm22, 0.0
    %38 = vst.msk [vmem:[#allocation2 + $0x78] sm:$0xff] %vm22, 0.0
    %39 = vst.msk [vmem:[#allocation2 + $0x80] sm:$0xff] %vm22, 0.0
    %40 = vst.msk [vmem:[#allocation2 + $0x88] sm:$0xff] %vm22, 0.0
    %41 = vst.msk [vmem:[#allocation2 + $0x90] sm:$0xff] %vm22, 0.0
    %42 = vst.msk [vmem:[#allocation2 + $0x98] sm:$0xff] %vm22, 0.0
    %43 = vst.msk [vmem:[#allocation2 + $0xa0] sm:$0xff] %vm22, 0.0
    %44 = vst.msk [vmem:[#allocation2 + $0xa8] sm:$0xff] %vm22, 0.0
    %45 = vst.msk [vmem:[#allocation2 + $0xb0] sm:$0xff] %vm22, 0.0
    %46 = vst.msk [vmem:[#allocation2 + $0xb8] sm:$0xff] %vm22, 0.0
    %47 = vst.msk [vmem:[#allocation2 + $0xc0] sm:$0xff] %vm22, 0.0
    %48 = vst.msk [vmem:[#allocation2 + $0xc8] sm:$0xff] %vm22, 0.0
    %49 = vst.msk [vmem:[#allocation2 + $0xd0] sm:$0xff] %vm22, 0.0
    %50 = vst.msk [vmem:[#allocation2 + $0xd8] sm:$0xff] %vm22, 0.0
    %51 = vst.msk [vmem:[#allocation2 + $0xe0] sm:$0xff] %vm22, 0.0
    %52 = vst.msk [vmem:[#allocation2 + $0xe8] sm:$0xff] %vm22, 0.0
    %53 = vst.msk [vmem:[#allocation2 + $0xf0] sm:$0xff] %vm22, 0.0
    %54 = vst.msk [vmem:[#allocation2 + $0xf8] sm:$0xff] %vm22, 0.0
  $region21: #{comga_forward.18} parent=0 // pred_fallthru
    _
  %v55 = vld [vmem:[%s1] sm:$0xff]
  %v56 = vld [vmem:[%s1 + $0x8] sm:$0xff]
  %v57 = vld [vmem:[%s1 + $0x10] sm:$0xff]
  %v58 = vld [vmem:[%s1 + $0x18] sm:$0xff]
  %v59 = vld [vmem:[%s1 + $0x20] sm:$0xff]
  %v60 = vld [vmem:[%s1 + $0x28] sm:$0xff]
  %v61 = vld [vmem:[%s1 + $0x30] sm:$0xff]
  %v62 = vld [vmem:[%s1 + $0x38] sm:$0xff]
  %v63 = vld [vmem:[%s1 + $0x40] sm:$0xff]
  %v64 = vld [vmem:[%s1 + $0x48] sm:$0xff]
  %v65 = vld [vmem:[%s1 + $0x50] sm:$0xff]
  %v66 = vld [vmem:[%s1 + $0x58] sm:$0xff]
  %v67 = vld [vmem:[%s1 + $0x60] sm:$0xff]
  %v68 = vld [vmem:[%s1 + $0x68] sm:$0xff]
  %v69 = vld [vmem:[%s1 + $0x70] sm:$0xff]
  %v70 = vld [vmem:[%s1 + $0x78] sm:$0xff]
  %v71 = vld [vmem:[%s1 + $0x80] sm:$0xff]
  %v72 = vld [vmem:[%s1 + $0x88] sm:$0xff]
  %v73 = vld [vmem:[%s1 + $0x90] sm:$0xff]
  %v74 = vld [vmem:[%s1 + $0x98] sm:$0xff]
  %v75 = vld [vmem:[%s1 + $0xa0] sm:$0xff]
  %v76 = vld [vmem:[%s1 + $0xa8] sm:$0xff]
  %v77 = vld [vmem:[%s1 + $0xb0] sm:$0xff]
  %v78 = vld [vmem:[%s1 + $0xb8] sm:$0xff]
  %v79 = vld [vmem:[%s1 + $0xc0] sm:$0xff]
  %v80 = vld [vmem:[%s1 + $0xc8] sm:$0xff]
  %v81 = vld [vmem:[%s1 + $0xd0] sm:$0xff]
  %v82 = vld [vmem:[%s1 + $0xd8] sm:$0xff]
  %v83 = vld [vmem:[%s1 + $0xe0] sm:$0xff]
  %v84 = vld [vmem:[%s1 + $0xe8] sm:$0xff]
  %v85 = vld [vmem:[%s1 + $0xf0] sm:$0xff]
  %v86 = vld [vmem:[%s1 + $0xf8] sm:$0xff]
  %v87 = vpack.c.bf16 %v56, %v55
  %v88 = vpack.c.bf16 %v58, %v57
  %v89 = vpack.c.bf16 %v60, %v59
  %v90 = vpack.c.bf16 %v62, %v61
  %v91 = vpack.c.bf16 %v64, %v63
  %v92 = vpack.c.bf16 %v66, %v65
  %v93 = vpack.c.bf16 %v68, %v67
  %v94 = vpack.c.bf16 %v70, %v69
  %v95 = vpack.c.bf16 %v72, %v71
  %v96 = vpack.c.bf16 %v74, %v73
  %v97 = vpack.c.bf16 %v76, %v75
  %v98 = vpack.c.bf16 %v78, %v77
  %v99 = vpack.c.bf16 %v80, %v79
  %v100 = vpack.c.bf16 %v82, %v81
  %v101 = vpack.c.bf16 %v84, %v83
  %v102 = vpack.c.bf16 %v86, %v85
  %v103 = vld [vmem:[%s2] sm:$0xf]
  %v104 = vld [vmem:[%s2 + $0x4] sm:$0xf]
  %v105 = vld [vmem:[%s2 + $0x8] sm:$0xf]
  %v106 = vld [vmem:[%s2 + $0xc] sm:$0xf]
  %v111 = vunpack.c.l.b16 %v103
  %v112 = vunpack.c.l.b16 %v104
  %v113 = vunpack.c.l.b16 %v105
  %v114 = vunpack.c.l.b16 %v106
  %v115 = vpack.c.b16 %v112, %v111
  %v116 = vpack.c.b16 %v114, %v113
  %vm119 = vcmask 261120
  %v121 = vsel %vm119, %v87, 0
  %v124 = vsel %vm119, %v88, 0
  %v127 = vsel %vm119, %v89, 0
  %v130 = vsel %vm119, %v90, 0
  %v133 = vsel %vm119, %v91, 0
  %v136 = vsel %vm119, %v92, 0
  %v139 = vsel %vm119, %v93, 0
  %v142 = vsel %vm119, %v94, 0
  %v145 = vsel %vm119, %v95, 0
  %v148 = vsel %vm119, %v96, 0
  %v151 = vsel %vm119, %v97, 0
  %v154 = vsel %vm119, %v98, 0
  %v157 = vsel %vm119, %v99, 0
  %v160 = vsel %vm119, %v100, 0
  %v163 = vsel %vm119, %v101, 0
  %v166 = vsel %vm119, %v102, 0
  %168 = vmatprep.subr.bf16.mxu0 0
  %169 = vmatpush1.bf16.msra.mxu0 0
  %170 = vmatprep.subr.bf16.mxu0 0
  %171 = vmatpush1.bf16.msra.mxu0 0
  %172 = vmatprep.subr.bf16.mxu0 0
  %173 = vmatpush1.bf16.msra.mxu0 0
  %174 = vmatprep.subr.bf16.mxu0 0
  %175 = vmatpush1.bf16.msra.mxu0 0
  %176 = vmatprep.subr.bf16.mxu0 0
  %177 = vmatpush1.bf16.msra.mxu0 0
  %178 = vmatprep.subr.bf16.mxu0 0
  %179 = vmatpush1.bf16.msra.mxu0 0
  %180 = vmatprep.subr.bf16.mxu0 0
  %181 = vmatpush1.bf16.msra.mxu0 %v116
  %182 = vmatprep.subr.bf16.mxu0 0
  %183 = vmatpush1.bf16.msra.mxu0 %v115
  %184 = vmatprep.subr.bf16.mxu0 0
  %185 = vmatpush2.bf16.msra.mxu0 0
  %186 = vmatprep.subr.bf16.mxu0 0
  %187 = vmatpush2.bf16.msra.mxu0 0
  %188 = vmatprep.subr.bf16.mxu0 0
  %189 = vmatpush2.bf16.msra.mxu0 0
  %190 = vmatprep.subr.bf16.mxu0 0
  %191 = vmatpush2.bf16.msra.mxu0 0
  %192 = vmatprep.subr.bf16.mxu0 0
  %193 = vmatpush2.bf16.msra.mxu0 0
  %194 = vmatprep.subr.bf16.mxu0 0
  %195 = vmatpush2.bf16.msra.mxu0 0
  %196 = vmatprep.subr.bf16.mxu0 0
  %197 = vmatpush2.bf16.msra.mxu0 0
  %198 = vmatprep.subr.bf16.mxu0 0
  %199 = vmatpush2.bf16.msra.mxu0 0
  %200 = vmatprep.mubr.bf16.mxu0 0
  %201 = vmatmul.mubr.bf16.gmra.mxu0 %v121
  %v202 = vpop.f32.mrf.mxu0
  %v203 = vadd.f32 0.0, %v202
  %v204 = vpop.f32.mrf.mxu0
  %v205 = vpop.f32.mrf.mxu0
  %v206 = vadd.f32 0.0, %v205
  %v207 = vpop.f32.mrf.mxu0
  %208 = vmatprep.mubr.bf16.mxu0 0
  %209 = vmatmul.mubr.bf16.gmra.mxu0 %v124
  %v210 = vpop.f32.mrf.mxu0
  %v211 = vadd.f32 0.0, %v210
  %v212 = vpop.f32.mrf.mxu0
  %v213 = vpop.f32.mrf.mxu0
  %v214 = vadd.f32 0.0, %v213
  %v215 = vpop.f32.mrf.mxu0
  %216 = vmatprep.mubr.bf16.mxu0 0
  %217 = vmatmul.mubr.bf16.gmra.mxu0 %v127
  %v218 = vpop.f32.mrf.mxu0
  %v219 = vadd.f32 0.0, %v218
  %v220 = vpop.f32.mrf.mxu0
  %v221 = vpop.f32.mrf.mxu0
  %v222 = vadd.f32 0.0, %v221
  %v223 = vpop.f32.mrf.mxu0
  %224 = vmatprep.mubr.bf16.mxu0 0
  %225 = vmatmul.mubr.bf16.gmra.mxu0 %v130
  %v226 = vpop.f32.mrf.mxu0
  %v227 = vadd.f32 0.0, %v226
  %v228 = vpop.f32.mrf.mxu0
  %v229 = vpop.f32.mrf.mxu0
  %v230 = vadd.f32 0.0, %v229
  %v231 = vpop.f32.mrf.mxu0
  %232 = vmatprep.mubr.bf16.mxu0 0
  %233 = vmatmul.mubr.bf16.gmra.mxu0 %v133
  %v234 = vpop.f32.mrf.mxu0
  %v235 = vadd.f32 0.0, %v234
  %v236 = vpop.f32.mrf.mxu0
  %v237 = vpop.f32.mrf.mxu0
  %v238 = vadd.f32 0.0, %v237
  %v239 = vpop.f32.mrf.mxu0
  %240 = vmatprep.mubr.bf16.mxu0 0
  %241 = vmatmul.mubr.bf16.gmra.mxu0 %v136
  %v242 = vpop.f32.mrf.mxu0
  %v243 = vadd.f32 0.0, %v242
  %v244 = vpop.f32.mrf.mxu0
  %v245 = vpop.f32.mrf.mxu0
  %v246 = vadd.f32 0.0, %v245
  %v247 = vpop.f32.mrf.mxu0
  %248 = vmatprep.mubr.bf16.mxu0 0
  %249 = vmatmul.mubr.bf16.gmra.mxu0 %v139
  %v250 = vpop.f32.mrf.mxu0
  %v251 = vadd.f32 0.0, %v250
  %v252 = vpop.f32.mrf.mxu0
  %v253 = vpop.f32.mrf.mxu0
  %v254 = vadd.f32 0.0, %v253
  %v255 = vpop.f32.mrf.mxu0
  %256 = vmatprep.mubr.bf16.mxu0 0
  %257 = vmatmul.mubr.bf16.gmra.mxu0 %v142
  %v258 = vpop.f32.mrf.mxu0
  %v259 = vadd.f32 0.0, %v258
  %v260 = vpop.f32.mrf.mxu0
  %v261 = vpop.f32.mrf.mxu0
  %v262 = vadd.f32 0.0, %v261
  %v263 = vpop.f32.mrf.mxu0
  %264 = vmatprep.mubr.bf16.mxu0 0
  %265 = vmatmul.mubr.bf16.gmra.mxu0 %v145
  %v266 = vpop.f32.mrf.mxu0
  %v267 = vadd.f32 0.0, %v266
  %v268 = vpop.f32.mrf.mxu0
  %v269 = vpop.f32.mrf.mxu0
  %v270 = vadd.f32 0.0, %v269
  %v271 = vpop.f32.mrf.mxu0
  %272 = vmatprep.mubr.bf16.mxu0 0
  %273 = vmatmul.mubr.bf16.gmra.mxu0 %v148
  %v274 = vpop.f32.mrf.mxu0
  %v275 = vadd.f32 0.0, %v274
  %v276 = vpop.f32.mrf.mxu0
  %v277 = vpop.f32.mrf.mxu0
  %v278 = vadd.f32 0.0, %v277
  %v279 = vpop.f32.mrf.mxu0
  %280 = vmatprep.mubr.bf16.mxu0 0
  %281 = vmatmul.mubr.bf16.gmra.mxu0 %v151
  %v282 = vpop.f32.mrf.mxu0
  %v283 = vadd.f32 0.0, %v282
  %v284 = vpop.f32.mrf.mxu0
  %v285 = vpop.f32.mrf.mxu0
  %v286 = vadd.f32 0.0, %v285
  %v287 = vpop.f32.mrf.mxu0
  %288 = vmatprep.mubr.bf16.mxu0 0
  %289 = vmatmul.mubr.bf16.gmra.mxu0 %v154
  %v290 = vpop.f32.mrf.mxu0
  %v291 = vadd.f32 0.0, %v290
  %v292 = vpop.f32.mrf.mxu0
  %v293 = vpop.f32.mrf.mxu0
  %v294 = vadd.f32 0.0, %v293
  %v295 = vpop.f32.mrf.mxu0
  %296 = vmatprep.mubr.bf16.mxu0 0
  %297 = vmatmul.mubr.bf16.gmra.mxu0 %v157
  %v298 = vpop.f32.mrf.mxu0
  %v299 = vadd.f32 0.0, %v298
  %v300 = vpop.f32.mrf.mxu0
  %v301 = vpop.f32.mrf.mxu0
  %v302 = vadd.f32 0.0, %v301
  %v303 = vpop.f32.mrf.mxu0
  %304 = vmatprep.mubr.bf16.mxu0 0
  %305 = vmatmul.mubr.bf16.gmra.mxu0 %v160
  %v306 = vpop.f32.mrf.mxu0
  %v307 = vadd.f32 0.0, %v306
  %v308 = vpop.f32.mrf.mxu0
  %v309 = vpop.f32.mrf.mxu0
  %v310 = vadd.f32 0.0, %v309
  %v311 = vpop.f32.mrf.mxu0
  %312 = vmatprep.mubr.bf16.mxu0 0
  %313 = vmatmul.mubr.bf16.gmra.mxu0 %v163
  %v314 = vpop.f32.mrf.mxu0
  %v315 = vadd.f32 0.0, %v314
  %v316 = vpop.f32.mrf.mxu0
  %v317 = vpop.f32.mrf.mxu0
  %v318 = vadd.f32 0.0, %v317
  %v319 = vpop.f32.mrf.mxu0
  %320 = vmatprep.mubr.bf16.mxu0 0
  %321 = vmatmul.mubr.bf16.gmra.mxu0 %v166
  %v322 = vpop.f32.mrf.mxu0
  %v323 = vadd.f32 0.0, %v322
  %v324 = vpop.f32.mrf.mxu0
  %v325 = vpop.f32.mrf.mxu0
  %v326 = vadd.f32 0.0, %v325
  %v327 = vpop.f32.mrf.mxu0
  %328 = vdwg.mxu0
  %v329 = vld [vmem:[#allocation2] sm:$0xff]
  %v330 = vld [vmem:[#allocation2 + $0x8] sm:$0xff]
  %v331 = vld [vmem:[#allocation2 + $0x10] sm:$0xff]
  %v332 = vld [vmem:[#allocation2 + $0x18] sm:$0xff]
  %v333 = vld [vmem:[#allocation2 + $0x20] sm:$0xff]
  %v334 = vld [vmem:[#allocation2 + $0x28] sm:$0xff]
  %v335 = vld [vmem:[#allocation2 + $0x30] sm:$0xff]
  %v336 = vld [vmem:[#allocation2 + $0x38] sm:$0xff]
  %v337 = vld [vmem:[#allocation2 + $0x40] sm:$0xff]
  %v338 = vld [vmem:[#allocation2 + $0x48] sm:$0xff]
  %v339 = vld [vmem:[#allocation2 + $0x50] sm:$0xff]
  %v340 = vld [vmem:[#allocation2 + $0x58] sm:$0xff]
  %v341 = vld [vmem:[#allocation2 + $0x60] sm:$0xff]
  %v342 = vld [vmem:[#allocation2 + $0x68] sm:$0xff]
  %v343 = vld [vmem:[#allocation2 + $0x70] sm:$0xff]
  %v344 = vld [vmem:[#allocation2 + $0x78] sm:$0xff]
  %v345 = vld [vmem:[#allocation2 + $0x80] sm:$0xff]
  %v346 = vld [vmem:[#allocation2 + $0x88] sm:$0xff]
  %v347 = vld [vmem:[#allocation2 + $0x90] sm:$0xff]
  %v348 = vld [vmem:[#allocation2 + $0x98] sm:$0xff]
  %v349 = vld [vmem:[#allocation2 + $0xa0] sm:$0xff]
  %v350 = vld [vmem:[#allocation2 + $0xa8] sm:$0xff]
  %v351 = vld [vmem:[#allocation2 + $0xb0] sm:$0xff]
  %v352 = vld [vmem:[#allocation2 + $0xb8] sm:$0xff]
  %v353 = vld [vmem:[#allocation2 + $0xc0] sm:$0xff]
  %v354 = vld [vmem:[#allocation2 + $0xc8] sm:$0xff]
  %v355 = vld [vmem:[#allocation2 + $0xd0] sm:$0xff]
  %v356 = vld [vmem:[#allocation2 + $0xd8] sm:$0xff]
  %v357 = vld [vmem:[#allocation2 + $0xe0] sm:$0xff]
  %v358 = vld [vmem:[#allocation2 + $0xe8] sm:$0xff]
  %v359 = vld [vmem:[#allocation2 + $0xf0] sm:$0xff]
  %v360 = vld [vmem:[#allocation2 + $0xf8] sm:$0xff]
  %v361 = vld [vmem:[%s0] sm:$0xff]
  %v362 = vld [vmem:[%s0 + $0x8] sm:$0xff]
  %v363 = vld [vmem:[%s0 + $0x10] sm:$0xff]
  %v364 = vld [vmem:[%s0 + $0x18] sm:$0xff]
  %v365 = vld [vmem:[%s0 + $0x20] sm:$0xff]
  %v366 = vld [vmem:[%s0 + $0x28] sm:$0xff]
  %v367 = vld [vmem:[%s0 + $0x30] sm:$0xff]
  %v368 = vld [vmem:[%s0 + $0x38] sm:$0xff]
  %v369 = vld [vmem:[%s0 + $0x40] sm:$0xff]
  %v370 = vld [vmem:[%s0 + $0x48] sm:$0xff]
  %v371 = vld [vmem:[%s0 + $0x50] sm:$0xff]
  %v372 = vld [vmem:[%s0 + $0x58] sm:$0xff]
  %v373 = vld [vmem:[%s0 + $0x60] sm:$0xff]
  %v374 = vld [vmem:[%s0 + $0x68] sm:$0xff]
  %v375 = vld [vmem:[%s0 + $0x70] sm:$0xff]
  %v376 = vld [vmem:[%s0 + $0x78] sm:$0xff]
  %v377 = vld [vmem:[%s0 + $0x80] sm:$0xff]
  %v378 = vld [vmem:[%s0 + $0x88] sm:$0xff]
  %v379 = vld [vmem:[%s0 + $0x90] sm:$0xff]
  %v380 = vld [vmem:[%s0 + $0x98] sm:$0xff]
  %v381 = vld [vmem:[%s0 + $0xa0] sm:$0xff]
  %v382 = vld [vmem:[%s0 + $0xa8] sm:$0xff]
  %v383 = vld [vmem:[%s0 + $0xb0] sm:$0xff]
  %v384 = vld [vmem:[%s0 + $0xb8] sm:$0xff]
  %v385 = vld [vmem:[%s0 + $0xc0] sm:$0xff]
  %v386 = vld [vmem:[%s0 + $0xc8] sm:$0xff]
  %v387 = vld [vmem:[%s0 + $0xd0] sm:$0xff]
  %v388 = vld [vmem:[%s0 + $0xd8] sm:$0xff]
  %v389 = vld [vmem:[%s0 + $0xe0] sm:$0xff]
  %v390 = vld [vmem:[%s0 + $0xe8] sm:$0xff]
  %v391 = vld [vmem:[%s0 + $0xf0] sm:$0xff]
  %v392 = vld [vmem:[%s0 + $0xf8] sm:$0xff]
  %v393 = vpack.c.bf16 %v206, %v203
  %v394 = vpack.c.bf16 %v214, %v211
  %v395 = vpack.c.bf16 %v222, %v219
  %v396 = vpack.c.bf16 %v230, %v227
  %v397 = vpack.c.bf16 %v238, %v235
  %v398 = vpack.c.bf16 %v246, %v243
  %v399 = vpack.c.bf16 %v254, %v251
  %v400 = vpack.c.bf16 %v262, %v259
  %v401 = vpack.c.bf16 %v270, %v267
  %v402 = vpack.c.bf16 %v278, %v275
  %v403 = vpack.c.bf16 %v286, %v283
  %v404 = vpack.c.bf16 %v294, %v291
  %v405 = vpack.c.bf16 %v302, %v299
  %v406 = vpack.c.bf16 %v310, %v307
  %v407 = vpack.c.bf16 %v318, %v315
  %v408 = vpack.c.bf16 %v326, %v323
  %v441 = vunpack.c.l.b16 %v361
  %v442 = vunpack.c.h.b16 %v361
  %v443 = vunpack.c.l.b16 %v362
  %v444 = vunpack.c.h.b16 %v362
  %v445 = vunpack.c.l.b16 %v363
  %v446 = vunpack.c.h.b16 %v363
  %v447 = vunpack.c.l.b16 %v364
  %v448 = vunpack.c.h.b16 %v364
  %v449 = vunpack.c.l.b16 %v365
  %v450 = vunpack.c.h.b16 %v365
  %v451 = vunpack.c.l.b16 %v366
  %v452 = vunpack.c.h.b16 %v366
  %v453 = vunpack.c.l.b16 %v367
  %v454 = vunpack.c.h.b16 %v367
  %v455 = vunpack.c.l.b16 %v368
  %v456 = vunpack.c.h.b16 %v368
  %v457 = vunpack.c.l.b16 %v369
  %v458 = vunpack.c.h.b16 %v369
  %v459 = vunpack.c.l.b16 %v370
  %v460 = vunpack.c.h.b16 %v370
  %v461 = vunpack.c.l.b16 %v371
  %v462 = vunpack.c.h.b16 %v371
  %v463 = vunpack.c.l.b16 %v372
  %v464 = vunpack.c.h.b16 %v372
  %v465 = vunpack.c.l.b16 %v373
  %v466 = vunpack.c.h.b16 %v373
  %v467 = vunpack.c.l.b16 %v374
  %v468 = vunpack.c.h.b16 %v374
  %v469 = vunpack.c.l.b16 %v375
  %v470 = vunpack.c.h.b16 %v375
  %v471 = vunpack.c.l.b16 %v376
  %v472 = vunpack.c.h.b16 %v376
  %v473 = vunpack.c.l.b16 %v377
  %v474 = vunpack.c.h.b16 %v377
  %v475 = vunpack.c.l.b16 %v378
  %v476 = vunpack.c.h.b16 %v378
  %v477 = vunpack.c.l.b16 %v379
  %v478 = vunpack.c.h.b16 %v379
  %v479 = vunpack.c.l.b16 %v380
  %v480 = vunpack.c.h.b16 %v380
  %v481 = vunpack.c.l.b16 %v381
  %v482 = vunpack.c.h.b16 %v381
  %v483 = vunpack.c.l.b16 %v382
  %v484 = vunpack.c.h.b16 %v382
  %v485 = vunpack.c.l.b16 %v383
  %v486 = vunpack.c.h.b16 %v383
  %v487 = vunpack.c.l.b16 %v384
  %v488 = vunpack.c.h.b16 %v384
  %v489 = vunpack.c.l.b16 %v385
  %v490 = vunpack.c.h.b16 %v385
  %v491 = vunpack.c.l.b16 %v386
  %v492 = vunpack.c.h.b16 %v386
  %v493 = vunpack.c.l.b16 %v387
  %v494 = vunpack.c.h.b16 %v387
  %v495 = vunpack.c.l.b16 %v388
  %v496 = vunpack.c.h.b16 %v388
  %v497 = vunpack.c.l.b16 %v389
  %v498 = vunpack.c.h.b16 %v389
  %v499 = vunpack.c.l.b16 %v390
  %v500 = vunpack.c.h.b16 %v390
  %v501 = vunpack.c.l.b16 %v391
  %v502 = vunpack.c.h.b16 %v391
  %v503 = vunpack.c.l.b16 %v392
  %v504 = vunpack.c.h.b16 %v392
  %v505 = vpack.c.b16 %v443, %v441
  %v506 = vpack.c.b16 %v444, %v442
  %v507 = vpack.c.b16 %v447, %v445
  %v508 = vpack.c.b16 %v448, %v446
  %v509 = vpack.c.b16 %v451, %v449
  %v510 = vpack.c.b16 %v452, %v450
  %v511 = vpack.c.b16 %v455, %v453
  %v512 = vpack.c.b16 %v456, %v454
  %v513 = vpack.c.b16 %v459, %v457
  %v514 = vpack.c.b16 %v460, %v458
  %v515 = vpack.c.b16 %v463, %v461
  %v516 = vpack.c.b16 %v464, %v462
  %v517 = vpack.c.b16 %v467, %v465
  %v518 = vpack.c.b16 %v468, %v466
  %v519 = vpack.c.b16 %v471, %v469
  %v520 = vpack.c.b16 %v472, %v470
  %v521 = vpack.c.b16 %v475, %v473
  %v522 = vpack.c.b16 %v476, %v474
  %v523 = vpack.c.b16 %v479, %v477
  %v524 = vpack.c.b16 %v480, %v478
  %v525 = vpack.c.b16 %v483, %v481
  %v526 = vpack.c.b16 %v484, %v482
  %v527 = vpack.c.b16 %v487, %v485
  %v528 = vpack.c.b16 %v488, %v486
  %v529 = vpack.c.b16 %v491, %v489
  %v530 = vpack.c.b16 %v492, %v490
  %v531 = vpack.c.b16 %v495, %v493
  %v532 = vpack.c.b16 %v496, %v494
  %v533 = vpack.c.b16 %v499, %v497
  %v534 = vpack.c.b16 %v500, %v498
  %v535 = vpack.c.b16 %v503, %v501
  %v536 = vpack.c.b16 %v504, %v502
  %569 = vmatprep.subr.bf16.mxu0 0
  %570 = vmatpush1.bf16.msra.mxu0 %v400
  %571 = vmatprep.subr.bf16.mxu0 0
  %572 = vmatpush1.bf16.msra.mxu0 %v399
  %573 = vmatprep.subr.bf16.mxu0 0
  %574 = vmatpush1.bf16.msra.mxu0 %v398
  %575 = vmatprep.subr.bf16.mxu0 0
  %576 = vmatpush1.bf16.msra.mxu0 %v397
  %577 = vmatprep.subr.bf16.mxu0 0
  %578 = vmatpush1.bf16.msra.mxu0 %v396
  %579 = vmatprep.subr.bf16.mxu0 0
  %580 = vmatpush1.bf16.msra.mxu0 %v395
  %581 = vmatprep.subr.bf16.mxu0 0
  %582 = vmatpush1.bf16.msra.mxu0 %v394
  %583 = vmatprep.subr.bf16.mxu0 0
  %584 = vmatpush1.bf16.msra.mxu0 %v393
  %585 = vmatprep.subr.bf16.mxu0 0
  %586 = vmatpush2.bf16.msra.mxu0 %v408
  %587 = vmatprep.subr.bf16.mxu0 0
  %588 = vmatpush2.bf16.msra.mxu0 %v407
  %589 = vmatprep.subr.bf16.mxu0 0
  %590 = vmatpush2.bf16.msra.mxu0 %v406
  %591 = vmatprep.subr.bf16.mxu0 0
  %592 = vmatpush2.bf16.msra.mxu0 %v405
  %593 = vmatprep.subr.bf16.mxu0 0
  %594 = vmatpush2.bf16.msra.mxu0 %v404
  %595 = vmatprep.subr.bf16.mxu0 0
  %596 = vmatpush2.bf16.msra.mxu0 %v403
  %597 = vmatprep.subr.bf16.mxu0 0
  %598 = vmatpush2.bf16.msra.mxu0 %v402
  %599 = vmatprep.subr.bf16.mxu0 0
  %600 = vmatpush2.bf16.msra.mxu0 %v401
  %601 = vmatprep.mubr.bf16.mxu0 %v506
  %602 = vmatmul.mubr.bf16.gmra.mxu0 %v505
  %v603 = vpop.f32.mrf.mxu0
  %v604 = vadd.f32 0.0, %v603
  %v605 = vpop.f32.mrf.mxu0
  %v606 = vpop.f32.mrf.mxu0
  %v607 = vadd.f32 0.0, %v606
  %v608 = vpop.f32.mrf.mxu0
  %609 = vmatprep.mubr.bf16.mxu0 %v508
  %610 = vmatmul.mubr.bf16.gmra.mxu0 %v507
  %v611 = vpop.f32.mrf.mxu0
  %v612 = vadd.f32 0.0, %v611
  %v613 = vpop.f32.mrf.mxu0
  %v614 = vpop.f32.mrf.mxu0
  %v615 = vadd.f32 0.0, %v614
  %v616 = vpop.f32.mrf.mxu0
  %617 = vmatprep.mubr.bf16.mxu0 %v510
  %618 = vmatmul.mubr.bf16.gmra.mxu0 %v509
  %v619 = vpop.f32.mrf.mxu0
  %v620 = vadd.f32 0.0, %v619
  %v621 = vpop.f32.mrf.mxu0
  %v622 = vpop.f32.mrf.mxu0
  %v623 = vadd.f32 0.0, %v622
  %v624 = vpop.f32.mrf.mxu0
  %625 = vmatprep.mubr.bf16.mxu0 %v512
  %626 = vmatmul.mubr.bf16.gmra.mxu0 %v511
  %v627 = vpop.f32.mrf.mxu0
  %v628 = vadd.f32 0.0, %v627
  %v629 = vpop.f32.mrf.mxu0
  %v630 = vpop.f32.mrf.mxu0
  %v631 = vadd.f32 0.0, %v630
  %v632 = vpop.f32.mrf.mxu0
  %633 = vmatprep.mubr.bf16.mxu0 %v514
  %634 = vmatmul.mubr.bf16.gmra.mxu0 %v513
  %v635 = vpop.f32.mrf.mxu0
  %v636 = vadd.f32 0.0, %v635
  %v637 = vpop.f32.mrf.mxu0
  %v638 = vpop.f32.mrf.mxu0
  %v639 = vadd.f32 0.0, %v638
  %v640 = vpop.f32.mrf.mxu0
  %641 = vmatprep.mubr.bf16.mxu0 %v516
  %642 = vmatmul.mubr.bf16.gmra.mxu0 %v515
  %v643 = vpop.f32.mrf.mxu0
  %v644 = vadd.f32 0.0, %v643
  %v645 = vpop.f32.mrf.mxu0
  %v646 = vpop.f32.mrf.mxu0
  %v647 = vadd.f32 0.0, %v646
  %v648 = vpop.f32.mrf.mxu0
  %649 = vmatprep.mubr.bf16.mxu0 %v518
  %650 = vmatmul.mubr.bf16.gmra.mxu0 %v517
  %v651 = vpop.f32.mrf.mxu0
  %v652 = vadd.f32 0.0, %v651
  %v653 = vpop.f32.mrf.mxu0
  %v654 = vpop.f32.mrf.mxu0
  %v655 = vadd.f32 0.0, %v654
  %v656 = vpop.f32.mrf.mxu0
  %657 = vmatprep.mubr.bf16.mxu0 %v520
  %658 = vmatmul.mubr.bf16.gmra.mxu0 %v519
  %v659 = vpop.f32.mrf.mxu0
  %v660 = vadd.f32 0.0, %v659
  %v661 = vpop.f32.mrf.mxu0
  %v662 = vpop.f32.mrf.mxu0
  %v663 = vadd.f32 0.0, %v662
  %v664 = vpop.f32.mrf.mxu0
  %665 = vmatprep.mubr.bf16.mxu0 %v522
  %666 = vmatmul.mubr.bf16.gmra.mxu0 %v521
  %v667 = vpop.f32.mrf.mxu0
  %v668 = vadd.f32 0.0, %v667
  %v669 = vpop.f32.mrf.mxu0
  %v670 = vpop.f32.mrf.mxu0
  %v671 = vadd.f32 0.0, %v670
  %v672 = vpop.f32.mrf.mxu0
  %673 = vmatprep.mubr.bf16.mxu0 %v524
  %674 = vmatmul.mubr.bf16.gmra.mxu0 %v523
  %v675 = vpop.f32.mrf.mxu0
  %v676 = vadd.f32 0.0, %v675
  %v677 = vpop.f32.mrf.mxu0
  %v678 = vpop.f32.mrf.mxu0
  %v679 = vadd.f32 0.0, %v678
  %v680 = vpop.f32.mrf.mxu0
  %681 = vmatprep.mubr.bf16.mxu0 %v526
  %682 = vmatmul.mubr.bf16.gmra.mxu0 %v525
  %v683 = vpop.f32.mrf.mxu0
  %v684 = vadd.f32 0.0, %v683
  %v685 = vpop.f32.mrf.mxu0
  %v686 = vpop.f32.mrf.mxu0
  %v687 = vadd.f32 0.0, %v686
  %v688 = vpop.f32.mrf.mxu0
  %689 = vmatprep.mubr.bf16.mxu0 %v528
  %690 = vmatmul.mubr.bf16.gmra.mxu0 %v527
  %v691 = vpop.f32.mrf.mxu0
  %v692 = vadd.f32 0.0, %v691
  %v693 = vpop.f32.mrf.mxu0
  %v694 = vpop.f32.mrf.mxu0
  %v695 = vadd.f32 0.0, %v694
  %v696 = vpop.f32.mrf.mxu0
  %697 = vmatprep.mubr.bf16.mxu0 %v530
  %698 = vmatmul.mubr.bf16.gmra.mxu0 %v529
  %v699 = vpop.f32.mrf.mxu0
  %v700 = vadd.f32 0.0, %v699
  %v701 = vpop.f32.mrf.mxu0
  %v702 = vpop.f32.mrf.mxu0
  %v703 = vadd.f32 0.0, %v702
  %v704 = vpop.f32.mrf.mxu0
  %705 = vmatprep.mubr.bf16.mxu0 %v532
  %706 = vmatmul.mubr.bf16.gmra.mxu0 %v531
  %v707 = vpop.f32.mrf.mxu0
  %v708 = vadd.f32 0.0, %v707
  %v709 = vpop.f32.mrf.mxu0
  %v710 = vpop.f32.mrf.mxu0
  %v711 = vadd.f32 0.0, %v710
  %v712 = vpop.f32.mrf.mxu0
  %713 = vmatprep.mubr.bf16.mxu0 %v534
  %714 = vmatmul.mubr.bf16.gmra.mxu0 %v533
  %v715 = vpop.f32.mrf.mxu0
  %v716 = vadd.f32 0.0, %v715
  %v717 = vpop.f32.mrf.mxu0
  %v718 = vpop.f32.mrf.mxu0
  %v719 = vadd.f32 0.0, %v718
  %v720 = vpop.f32.mrf.mxu0
  %721 = vmatprep.mubr.bf16.mxu0 %v536
  %722 = vmatmul.mubr.bf16.gmra.mxu0 %v535
  %v723 = vpop.f32.mrf.mxu0
  %v724 = vadd.f32 0.0, %v723
  %v725 = vpop.f32.mrf.mxu0
  %v726 = vpop.f32.mrf.mxu0
  %v727 = vadd.f32 0.0, %v726
  %v728 = vpop.f32.mrf.mxu0
  %729 = vdwg.mxu0
  %v730 = vadd.f32 %v329, %v604
  %v731 = vadd.f32 %v330, %v607
  %v732 = vadd.f32 %v331, %v612
  %v733 = vadd.f32 %v332, %v615
  %v734 = vadd.f32 %v333, %v620
  %v735 = vadd.f32 %v334, %v623
  %v736 = vadd.f32 %v335, %v628
  %v737 = vadd.f32 %v336, %v631
  %v738 = vadd.f32 %v337, %v636
  %v739 = vadd.f32 %v338, %v639
  %v740 = vadd.f32 %v339, %v644
  %v741 = vadd.f32 %v340, %v647
  %v742 = vadd.f32 %v341, %v652
  %v743 = vadd.f32 %v342, %v655
  %v744 = vadd.f32 %v343, %v660
  %v745 = vadd.f32 %v344, %v663
  %v746 = vadd.f32 %v345, %v668
  %v747 = vadd.f32 %v346, %v671
  %v748 = vadd.f32 %v347, %v676
  %v749 = vadd.f32 %v348, %v679
  %v750 = vadd.f32 %v349, %v684
  %v751 = vadd.f32 %v350, %v687
  %v752 = vadd.f32 %v351, %v692
  %v753 = vadd.f32 %v352, %v695
  %v754 = vadd.f32 %v353, %v700
  %v755 = vadd.f32 %v354, %v703
  %v756 = vadd.f32 %v355, %v708
  %v757 = vadd.f32 %v356, %v711
  %v758 = vadd.f32 %v357, %v716
  %v759 = vadd.f32 %v358, %v719
  %v760 = vadd.f32 %v359, %v724
  %v761 = vadd.f32 %v360, %v727
  %vm762 = vcmask 195584
  %763 = vst.msk [vmem:[#allocation2] sm:$0xff] %vm762, %v730
  %764 = vst.msk [vmem:[#allocation2 + $0x8] sm:$0xff] %vm762, %v731
  %765 = vst.msk [vmem:[#allocation2 + $0x10] sm:$0xff] %vm762, %v732
  %766 = vst.msk [vmem:[#allocation2 + $0x18] sm:$0xff] %vm762, %v733
  %767 = vst.msk [vmem:[#allocation2 + $0x20] sm:$0xff] %vm762, %v734
  %768 = vst.msk [vmem:[#allocation2 + $0x28] sm:$0xff] %vm762, %v735
  %769 = vst.msk [vmem:[#allocation2 + $0x30] sm:$0xff] %vm762, %v736
  %770 = vst.msk [vmem:[#allocation2 + $0x38] sm:$0xff] %vm762, %v737
  %771 = vst.msk [vmem:[#allocation2 + $0x40] sm:$0xff] %vm762, %v738
  %772 = vst.msk [vmem:[#allocation2 + $0x48] sm:$0xff] %vm762, %v739
  %773 = vst.msk [vmem:[#allocation2 + $0x50] sm:$0xff] %vm762, %v740
  %774 = vst.msk [vmem:[#allocation2 + $0x58] sm:$0xff] %vm762, %v741
  %775 = vst.msk [vmem:[#allocation2 + $0x60] sm:$0xff] %vm762, %v742
  %776 = vst.msk [vmem:[#allocation2 + $0x68] sm:$0xff] %vm762, %v743
  %777 = vst.msk [vmem:[#allocation2 + $0x70] sm:$0xff] %vm762, %v744
  %778 = vst.msk [vmem:[#allocation2 + $0x78] sm:$0xff] %vm762, %v745
  %779 = vst.msk [vmem:[#allocation2 + $0x80] sm:$0xff] %vm762, %v746
  %780 = vst.msk [vmem:[#allocation2 + $0x88] sm:$0xff] %vm762, %v747
  %781 = vst.msk [vmem:[#allocation2 + $0x90] sm:$0xff] %vm762, %v748
  %782 = vst.msk [vmem:[#allocation2 + $0x98] sm:$0xff] %vm762, %v749
  %783 = vst.msk [vmem:[#allocation2 + $0xa0] sm:$0xff] %vm762, %v750
  %784 = vst.msk [vmem:[#allocation2 + $0xa8] sm:$0xff] %vm762, %v751
  %785 = vst.msk [vmem:[#allocation2 + $0xb0] sm:$0xff] %vm762, %v752
  %786 = vst.msk [vmem:[#allocation2 + $0xb8] sm:$0xff] %vm762, %v753
  %787 = vst.msk [vmem:[#allocation2 + $0xc0] sm:$0xff] %vm762, %v754
  %788 = vst.msk [vmem:[#allocation2 + $0xc8] sm:$0xff] %vm762, %v755
  %789 = vst.msk [vmem:[#allocation2 + $0xd0] sm:$0xff] %vm762, %v756
  %790 = vst.msk [vmem:[#allocation2 + $0xd8] sm:$0xff] %vm762, %v757
  %791 = vst.msk [vmem:[#allocation2 + $0xe0] sm:$0xff] %vm762, %v758
  %792 = vst.msk [vmem:[#allocation2 + $0xe8] sm:$0xff] %vm762, %v759
  %793 = vst.msk [vmem:[#allocation2 + $0xf0] sm:$0xff] %vm762, %v760
  %794 = vst.msk [vmem:[#allocation2 + $0xf8] sm:$0xff] %vm762, %v761
  // Predicated region
  $region22: #{comga_forward.18} parent=0 // pred_check
    %p795 = pneg %p18
  $region23: #{comga_forward.18} parent=0 // pred_check_branch
    %797 = sbr.rel (%p795) target = $region25
  $region24: #{comga_forward.18} parent=0 // pred_region
    %v798 = vld [vmem:[#allocation2] sm:$0xff]
    %v799 = vld [vmem:[#allocation2 + $0x8] sm:$0xff]
    %v800 = vld [vmem:[#allocation2 + $0x10] sm:$0xff]
    %v801 = vld [vmem:[#allocation2 + $0x18] sm:$0xff]
    %v802 = vld [vmem:[#allocation2 + $0x20] sm:$0xff]
    %v803 = vld [vmem:[#allocation2 + $0x28] sm:$0xff]
    %v804 = vld [vmem:[#allocation2 + $0x30] sm:$0xff]
    %v805 = vld [vmem:[#allocation2 + $0x38] sm:$0xff]
    %v806 = vld [vmem:[#allocation2 + $0x40] sm:$0xff]
    %v807 = vld [vmem:[#allocation2 + $0x48] sm:$0xff]
    %v808 = vld [vmem:[#allocation2 + $0x50] sm:$0xff]
    %v809 = vld [vmem:[#allocation2 + $0x58] sm:$0xff]
    %v810 = vld [vmem:[#allocation2 + $0x60] sm:$0xff]
    %v811 = vld [vmem:[#allocation2 + $0x68] sm:$0xff]
    %v812 = vld [vmem:[#allocation2 + $0x70] sm:$0xff]
    %v813 = vld [vmem:[#allocation2 + $0x78] sm:$0xff]
    %v814 = vld [vmem:[#allocation2 + $0x80] sm:$0xff]
    %v815 = vld [vmem:[#allocation2 + $0x88] sm:$0xff]
    %v816 = vld [vmem:[#allocation2 + $0x90] sm:$0xff]
    %v817 = vld [vmem:[#allocation2 + $0x98] sm:$0xff]
    %v818 = vld [vmem:[#allocation2 + $0xa0] sm:$0xff]
    %v819 = vld [vmem:[#allocation2 + $0xa8] sm:$0xff]
    %v820 = vld [vmem:[#allocation2 + $0xb0] sm:$0xff]
    %v821 = vld [vmem:[#allocation2 + $0xb8] sm:$0xff]
    %v822 = vld [vmem:[#allocation2 + $0xc0] sm:$0xff]
    %v823 = vld [vmem:[#allocation2 + $0xc8] sm:$0xff]
    %v824 = vld [vmem:[#allocation2 + $0xd0] sm:$0xff]
    %v825 = vld [vmem:[#allocation2 + $0xd8] sm:$0xff]
    %v826 = vld [vmem:[#allocation2 + $0xe0] sm:$0xff]
    %v827 = vld [vmem:[#allocation2 + $0xe8] sm:$0xff]
    %v828 = vld [vmem:[#allocation2 + $0xf0] sm:$0xff]
    %v829 = vld [vmem:[#allocation2 + $0xf8] sm:$0xff]
    %v830 = vld [vmem:[%s3] sm:$0x1]
    %v832 = vlaneseq
    %v833 = vshrl.u32 %v832, 7
    %v834 = vsub.s32 0, %v833
    %v835 = vrot.slane %v830, %v834
    %v837 = vadd.f32 %v798, %v835
    %v838 = vadd.f32 %v799, %v835
    %v839 = vadd.f32 %v800, %v835
    %v840 = vadd.f32 %v801, %v835
    %v841 = vadd.f32 %v802, %v835
    %v842 = vadd.f32 %v803, %v835
    %v843 = vadd.f32 %v804, %v835
    %v844 = vadd.f32 %v805, %v835
    %v845 = vadd.f32 %v806, %v835
    %v846 = vadd.f32 %v807, %v835
    %v847 = vadd.f32 %v808, %v835
    %v848 = vadd.f32 %v809, %v835
    %v849 = vadd.f32 %v810, %v835
    %v850 = vadd.f32 %v811, %v835
    %v851 = vadd.f32 %v812, %v835
    %v852 = vadd.f32 %v813, %v835
    %v853 = vadd.f32 %v814, %v835
    %v854 = vadd.f32 %v815, %v835
    %v855 = vadd.f32 %v816, %v835
    %v856 = vadd.f32 %v817, %v835
    %v857 = vadd.f32 %v818, %v835
    %v858 = vadd.f32 %v819, %v835
    %v859 = vadd.f32 %v820, %v835
    %v860 = vadd.f32 %v821, %v835
    %v861 = vadd.f32 %v822, %v835
    %v862 = vadd.f32 %v823, %v835
    %v863 = vadd.f32 %v824, %v835
    %v864 = vadd.f32 %v825, %v835
    %v865 = vadd.f32 %v826, %v835
    %v866 = vadd.f32 %v827, %v835
    %v867 = vadd.f32 %v828, %v835
    %v868 = vadd.f32 %v829, %v835
    %v869 = vmax.f32 %v837, 0.0
    %v870 = vmax.f32 %v838, 0.0
    %v871 = vmax.f32 %v839, 0.0
    %v872 = vmax.f32 %v840, 0.0
    %v873 = vmax.f32 %v841, 0.0
    %v874 = vmax.f32 %v842, 0.0
    %v875 = vmax.f32 %v843, 0.0
    %v876 = vmax.f32 %v844, 0.0
    %v877 = vmax.f32 %v845, 0.0
    %v878 = vmax.f32 %v846, 0.0
    %v879 = vmax.f32 %v847, 0.0
    %v880 = vmax.f32 %v848, 0.0
    %v881 = vmax.f32 %v849, 0.0
    %v882 = vmax.f32 %v850, 0.0
    %v883 = vmax.f32 %v851, 0.0
    %v884 = vmax.f32 %v852, 0.0
    %v885 = vmax.f32 %v853, 0.0
    %v886 = vmax.f32 %v854, 0.0
    %v887 = vmax.f32 %v855, 0.0
    %v888 = vmax.f32 %v856, 0.0
    %v889 = vmax.f32 %v857, 0.0
    %v890 = vmax.f32 %v858, 0.0
    %v891 = vmax.f32 %v859, 0.0
    %v892 = vmax.f32 %v860, 0.0
    %v893 = vmax.f32 %v861, 0.0
    %v894 = vmax.f32 %v862, 0.0
    %v895 = vmax.f32 %v863, 0.0
    %v896 = vmax.f32 %v864, 0.0
    %v897 = vmax.f32 %v865, 0.0
    %v898 = vmax.f32 %v866, 0.0
    %v899 = vmax.f32 %v867, 0.0
    %v900 = vmax.f32 %v868, 0.0
    %901 = vst.msk [vmem:[%s4] sm:$0xff] %vm762, %v869
    %902 = vst.msk [vmem:[%s4 + $0x8] sm:$0xff] %vm762, %v870
    %903 = vst.msk [vmem:[%s4 + $0x10] sm:$0xff] %vm762, %v871
    %904 = vst.msk [vmem:[%s4 + $0x18] sm:$0xff] %vm762, %v872
    %905 = vst.msk [vmem:[%s4 + $0x20] sm:$0xff] %vm762, %v873
    %906 = vst.msk [vmem:[%s4 + $0x28] sm:$0xff] %vm762, %v874
    %907 = vst.msk [vmem:[%s4 + $0x30] sm:$0xff] %vm762, %v875
    %908 = vst.msk [vmem:[%s4 + $0x38] sm:$0xff] %vm762, %v876
    %909 = vst.msk [vmem:[%s4 + $0x40] sm:$0xff] %vm762, %v877
    %910 = vst.msk [vmem:[%s4 + $0x48] sm:$0xff] %vm762, %v878
    %911 = vst.msk [vmem:[%s4 + $0x50] sm:$0xff] %vm762, %v879
    %912 = vst.msk [vmem:[%s4 + $0x58] sm:$0xff] %vm762, %v880
    %913 = vst.msk [vmem:[%s4 + $0x60] sm:$0xff] %vm762, %v881
    %914 = vst.msk [vmem:[%s4 + $0x68] sm:$0xff] %vm762, %v882
    %915 = vst.msk [vmem:[%s4 + $0x70] sm:$0xff] %vm762, %v883
    %916 = vst.msk [vmem:[%s4 + $0x78] sm:$0xff] %vm762, %v884
    %917 = vst.msk [vmem:[%s4 + $0x80] sm:$0xff] %vm762, %v885
    %918 = vst.msk [vmem:[%s4 + $0x88] sm:$0xff] %vm762, %v886
    %919 = vst.msk [vmem:[%s4 + $0x90] sm:$0xff] %vm762, %v887
    %920 = vst.msk [vmem:[%s4 + $0x98] sm:$0xff] %vm762, %v888
    %921 = vst.msk [vmem:[%s4 + $0xa0] sm:$0xff] %vm762, %v889
    %922 = vst.msk [vmem:[%s4 + $0xa8] sm:$0xff] %vm762, %v890
    %923 = vst.msk [vmem:[%s4 + $0xb0] sm:$0xff] %vm762, %v891
    %924 = vst.msk [vmem:[%s4 + $0xb8] sm:$0xff] %vm762, %v892
    %925 = vst.msk [vmem:[%s4 + $0xc0] sm:$0xff] %vm762, %v893
    %926 = vst.msk [vmem:[%s4 + $0xc8] sm:$0xff] %vm762, %v894
    %927 = vst.msk [vmem:[%s4 + $0xd0] sm:$0xff] %vm762, %v895
    %928 = vst.msk [vmem:[%s4 + $0xd8] sm:$0xff] %vm762, %v896
    %929 = vst.msk [vmem:[%s4 + $0xe0] sm:$0xff] %vm762, %v897
    %930 = vst.msk [vmem:[%s4 + $0xe8] sm:$0xff] %vm762, %v898
    %931 = vst.msk [vmem:[%s4 + $0xf0] sm:$0xff] %vm762, %v899
    %932 = vst.msk [vmem:[%s4 + $0xf8] sm:$0xff] %vm762, %v900
  $region25: #{comga_forward.18} parent=0 // pred_fallthru
    _
  // Predicated region
  $region26: #{comga_forward.18} parent=0 // pred_check
    _
  $region27: #{comga_forward.18} parent=0 // pred_check_branch
    %934 = sbr.rel (0) target = $region29
  $region28: #{comga_forward.18} parent=0 // pred_region
    _
  $region29: #{comga_forward.18} parent=0 // pred_fallthru
    _
  // Predicated region
  $region30: #{comga_forward.18} parent=0 // pred_check
    _
  $region31: #{comga_forward.18} parent=0 // pred_check_branch
    %936 = sbr.rel (0) target = $region33
  $region32: #{comga_forward.18} parent=0 // pred_region
    _
  $region33: #{comga_forward.18} parent=0 // pred_fallthru
    _

</llo_original>
